<compile_context>
chip_gen: v7x
topology: tpu7x:2x2x1
jax: 0.10.0
libtpu: 0.0.40
codegen_flags: <defaults>
</compile_context>

<pallas_src>
import jax
import jax.numpy as jnp
from jax import lax
from jax.experimental import pallas as pl
from jax.experimental.pallas import tpu as pltpu


MB = 1024 * 1024


def _largest_divisor_leq(n, cap):
    """Largest divisor of n that is <= cap (trace-time helper)."""
    best = 1
    for d in range(1, min(n, cap) + 1):
        if n % d == 0:
            best = d
    return best


# ---------------------------------------------------------------------------
# Fused matmul + bias + ReLU kernel (conv-as-im2col). Single K block, no
# accumulator scratch; M split into large exact-divisor blocks (free reshape).
# ---------------------------------------------------------------------------
def _conv_matmul_kernel(a_ref, b_ref, bias_ref, o_ref):
    # a_ref: (1, tm, K), b_ref: (K, Cout), bias_ref: (1, Cout), o_ref: (1, tm, Cout)
    acc = jnp.dot(a_ref[0], b_ref[...], preferred_element_type=jnp.float32)
    o_ref[0] = jnp.maximum(acc + bias_ref[...], 0.0).astype(o_ref.dtype)


def matmul_bias_relu(a, b, bias, *, block_bytes=3 * MB):
    """relu(a @ b + bias); a:(M,K), b:(K,Cout), bias:(Cout,). No padding."""
    M, K = a.shape
    Kb, Cout = b.shape
    assert K == Kb
    lane = 128
    row_bytes = 4 * lane * max(-(-K // lane), -(-Cout // lane))
    tm = _largest_divisor_leq(M, max(1, block_bytes // row_bytes))
    g = M // tm
    a3 = a.reshape(g, tm, K)                            # free (row-major) reshape
    out = pl.pallas_call(
        _conv_matmul_kernel,
        out_shape=jax.ShapeDtypeStruct((g, tm, Cout), jnp.float32),
        grid_spec=pltpu.PrefetchScalarGridSpec(
            num_scalar_prefetch=0,
            grid=(g,),
            in_specs=[
                pl.BlockSpec((1, tm, K), lambda i: (i, 0, 0)),
                pl.BlockSpec((K, Cout), lambda i: (0, 0)),
                pl.BlockSpec((1, Cout), lambda i: (0, 0)),
            ],
            out_specs=pl.BlockSpec((1, tm, Cout), lambda i: (i, 0, 0)),
        ),
        compiler_params=pltpu.CompilerParams(
            dimension_semantics=("parallel",),
            vmem_limit_bytes=32 * MB),
    )(a3, b, bias.reshape(1, Cout))
    return out.reshape(M, Cout)


# ---------------------------------------------------------------------------
# MaxPool2d(2, 2) kernel (OH-chunked so VMEM stays small on all generations)
# ---------------------------------------------------------------------------
def _maxpool_kernel(x_ref, o_ref):
    # x_ref: (1, 2, 2, bh, OW, C) -- leading 2x2 axes are the window offsets
    o_ref[0] = jnp.maximum(
        jnp.maximum(x_ref[0, 0, 0], x_ref[0, 0, 1]),
        jnp.maximum(x_ref[0, 1, 0], x_ref[0, 1, 1]))


def maxpool2x2(x):
    # x: (N, H, W, C); PyTorch MaxPool2d(2,2) floors odd spatial dims.
    N, H, W, C = x.shape
    if H % 2 or W % 2:
        x = x[:, :(H // 2) * 2, :(W // 2) * 2, :]
        N, H, W, C = x.shape
    OH, OW = H // 2, W // 2
    xr = x.reshape(N, OH, 2, OW, 2, C).transpose(0, 2, 4, 1, 3, 5)  # (N,2,2,OH,OW,C)
    bh = _largest_divisor_leq(OH, 16)
    return pl.pallas_call(
        _maxpool_kernel,
        out_shape=jax.ShapeDtypeStruct((N, OH, OW, C), x.dtype),
        grid_spec=pltpu.PrefetchScalarGridSpec(
            num_scalar_prefetch=0,
            grid=(N, OH // bh),
            in_specs=[pl.BlockSpec((1, 2, 2, bh, OW, C),
                                   lambda n, t: (n, 0, 0, t, 0, 0))],
            out_specs=pl.BlockSpec((1, bh, OW, C), lambda n, t: (n, t, 0, 0)),
        ),
        compiler_params=pltpu.CompilerParams(
            dimension_semantics=("parallel", "parallel"),
            vmem_limit_bytes=32 * MB),
    )(xr)


# ---------------------------------------------------------------------------
# Fused FC head: fc1 + bias + ReLU + fc2 + bias + ReLU + log_softmax.
# Single grid step; the 11 MB fc1 weight is streamed in one full-K block.
# ---------------------------------------------------------------------------
def _fc_head_kernel(x_ref, w1_ref, b1_ref, w2_ref, b2_ref, o_ref):
    h = jnp.dot(x_ref[...], w1_ref[...], preferred_element_type=jnp.float32)
    h = jnp.maximum(h + b1_ref[...], 0.0)                   # fc1 + ReLU
    z = jnp.dot(h, w2_ref[...], preferred_element_type=jnp.float32)
    z = jnp.maximum(z + b2_ref[...], 0.0)                   # fc2 + ReLU
    m = jnp.max(z, axis=-1, keepdims=True)                  # log_softmax(dim=1)
    e = jnp.exp(z - m)
    s = jnp.sum(e, axis=-1, keepdims=True)
    o_ref[...] = (z - m - jnp.log(s)).astype(o_ref.dtype)


def fc_head(x, w1t, b1, w2t, b2):
    M, K = x.shape
    K2, H = w1t.shape
    H2, C = w2t.shape
    assert K == K2 and H == H2
    return pl.pallas_call(
        _fc_head_kernel,
        out_shape=jax.ShapeDtypeStruct((M, C), jnp.float32),
        grid_spec=pltpu.PrefetchScalarGridSpec(
            num_scalar_prefetch=0,
            grid=(1,),
            in_specs=[
                pl.BlockSpec((M, K), lambda i: (0, 0)),
                pl.BlockSpec((K, H), lambda i: (0, 0)),
                pl.BlockSpec((1, H), lambda i: (0, 0)),
                pl.BlockSpec((H, C), lambda i: (0, 0)),
                pl.BlockSpec((1, C), lambda i: (0, 0)),
            ],
            out_specs=pl.BlockSpec((M, C), lambda i: (0, 0)),
        ),
        compiler_params=pltpu.CompilerParams(
            dimension_semantics=("arbitrary",),
            vmem_limit_bytes=40 * MB),
    )(x, w1t, b1.reshape(1, H), w2t, b2.reshape(1, C))


# ---------------------------------------------------------------------------
# im2col glue (plain JAX): patches ordered (kh, kw, C) along K
# TODO(synk): longer term, fold im2col into the conv kernel (kh,kw reduction
# grid axis over strided activation slabs) to avoid materializing patches.
# ---------------------------------------------------------------------------
def im2col(x, kh, kw, stride):
    N, H, W, C = x.shape
    OH = (H - kh) // stride + 1
    OW = (W - kw) // stride + 1
    cols = []
    for i in range(kh):
        for j in range(kw):
            sl = lax.slice(
                x,
                (0, i, j, 0),
                (N, i + (OH - 1) * stride + 1, j + (OW - 1) * stride + 1, C),
                (1, stride, stride, 1))
            cols.append(sl)                       # (N, OH, OW, C)
    patches = jnp.stack(cols, axis=3)             # (N, OH, OW, kh*kw, C)
    return patches.reshape(N * OH * OW, kh * kw * C), OH, OW


# ---------------------------------------------------------------------------
# Parameters (deterministic synthetic init; PyTorch weight layouts)
# ---------------------------------------------------------------------------
def init_params(key):
    ks = jax.random.split(key, 8)
    p = {}
    p["conv1_w"] = jax.random.normal(ks[0], (64, 3, 5, 5), jnp.float32) * 0.05
    p["conv1_b"] = jax.random.normal(ks[1], (64,), jnp.float32) * 0.05
    p["conv2_w"] = jax.random.normal(ks[2], (128, 64, 5, 5), jnp.float32) * 0.02
    p["conv2_b"] = jax.random.normal(ks[3], (128,), jnp.float32) * 0.02
    p["fc1_w"] = jax.random.normal(ks[4], (128, 128 * 13 * 13), jnp.float32) * 0.01
    p["fc1_b"] = jax.random.normal(ks[5], (128,), jnp.float32) * 0.01
    p["fc2_w"] = jax.random.normal(ks[6], (2, 128), jnp.float32) * 0.05
    p["fc2_b"] = jax.random.normal(ks[7], (2,), jnp.float32) * 0.05
    return p


# ---------------------------------------------------------------------------
# Forward pass (Pallas)
# ---------------------------------------------------------------------------
def cnn_forward(params, x_nchw):
    x = jnp.transpose(x_nchw, (0, 2, 3, 1))       # NCHW -> NHWC
    N = x.shape[0]

    # conv1 (5x5, stride 2) + ReLU : 224 -> 110
    w1 = jnp.transpose(params["conv1_w"], (2, 3, 1, 0)).reshape(5 * 5 * 3, 64)
    patches, oh, ow = im2col(x, 5, 5, 2)
    y = matmul_bias_relu(patches, w1, params["conv1_b"])
    y = y.reshape(N, oh, ow, 64)
    y = maxpool2x2(y)                             # 110 -> 55

    # conv2 (5x5, stride 2) + ReLU : 55 -> 26
    w2 = jnp.transpose(params["conv2_w"], (2, 3, 1, 0)).reshape(5 * 5 * 64, 128)
    patches, oh, ow = im2col(y, 5, 5, 2)
    y = matmul_bias_relu(patches, w2, params["conv2_b"])
    y = y.reshape(N, oh, ow, 128)
    y = maxpool2x2(y)                             # 26 -> 13

    # flatten exactly like torch's x.view(-1, 128*13*13) on an NCHW tensor
    y = jnp.transpose(y, (0, 3, 1, 2)).reshape(N, 128 * 13 * 13)

    # fc1 + ReLU + fc2 + ReLU + log_softmax, all fused into one kernel
    return fc_head(y, params["fc1_w"].T, params["fc1_b"],
                   params["fc2_w"].T, params["fc2_b"])


# ---------------------------------------------------------------------------
# Pure-JAX reference for correctness check
# ---------------------------------------------------------------------------
def _pool_ref(y):
    N, H, W, C = y.shape
    return y.reshape(N, H // 2, 2, W // 2, 2, C).max(axis=(2, 4))


def cnn_reference(params, x_nchw):
    x = jnp.transpose(x_nchw, (0, 2, 3, 1))
    w1 = jnp.transpose(params["conv1_w"], (2, 3, 1, 0))
    y = lax.conv_general_dilated(x, w1, (2, 2), "VALID",
                                 dimension_numbers=("NHWC", "HWIO", "NHWC"))
    y = jax.nn.relu(y + params["conv1_b"])
    y = _pool_ref(y)
    w2 = jnp.transpose(params["conv2_w"], (2, 3, 1, 0))
    y = lax.conv_general_dilated(y, w2, (2, 2), "VALID",
                                 dimension_numbers=("NHWC", "HWIO", "NHWC"))
    y = jax.nn.relu(y + params["conv2_b"])
    y = _pool_ref(y)
    y = jnp.transpose(y, (0, 3, 1, 2)).reshape(y.shape[0], 128 * 13 * 13)
    y = jax.nn.relu(y @ params["fc1_w"].T + params["fc1_b"])
    y = jax.nn.relu(y @ params["fc2_w"].T + params["fc2_b"])
    return jax.nn.log_softmax(y, axis=1)


if __name__ == "__main__":
    key = jax.random.PRNGKey(0)
    pkey, xkey = jax.random.split(key)
    params = init_params(pkey)
    # Input spatial size must be 224 so that the 128*13*13 flatten is valid.
    x = jax.random.normal(xkey, (2, 3, 224, 224), jnp.float32)

    out = jax.block_until_ready(cnn_forward(params, x))
    ref = jax.block_until_ready(cnn_reference(params, x))

    assert out.shape == (2, 2), out.shape
    assert out.dtype == jnp.float32
    assert bool(jnp.allclose(out, ref, atol=1e-3, rtol=1e-3)), (out, ref)
    print("KERNEL_OK")
</pallas_src>

<mosaic_0001>
module attributes {stable_mosaic.version = 11 : i64} {
  func.func @_conv_matmul_kernel(%arg0: i32, %arg1: memref<1x6050x75xf32, #tpu.memory_space<vmem>>, %arg2: memref<75x64xf32, #tpu.memory_space<vmem>>, %arg3: memref<1x64xf32, #tpu.memory_space<vmem>>, %arg4: memref<1x6050x64xf32, #tpu.memory_space<vmem>>) attributes {dimension_semantics = [#tpu.dimension_semantics<parallel>], iteration_bounds = array<i64: 4>, scalar_prefetch = 0 : i64, scratch_operands = 0 : i64, tpu.core_type = #tpu.core_type<tc>, window_params = [{transform_indices = @transform_0, window_bounds = array<i64: 1, 6050, 75>}, {pipeline_mode = #tpu.pipeline_mode<synchronous>, transform_indices = @transform_1, window_bounds = array<i64: 75, 64>}, {pipeline_mode = #tpu.pipeline_mode<synchronous>, transform_indices = @transform_2, window_bounds = array<i64: 1, 64>}, {transform_indices = @transform_3, window_bounds = array<i64: 1, 6050, 64>}]} {
    %c0 = arith.constant 0 : index
    %c0_0 = arith.constant 0 : index
    %c0_1 = arith.constant 0 : index
    %0 = vector.load %arg1[%c0, %c0_0, %c0_1] : memref<1x6050x75xf32, #tpu.memory_space<vmem>>, vector<1x6050x75xf32>
    %1 = vector.shape_cast %0 : vector<1x6050x75xf32> to vector<6050x75xf32>
    %c0_2 = arith.constant 0 : index
    %c0_3 = arith.constant 0 : index
    %2 = vector.load %arg2[%c0_2, %c0_3] : memref<75x64xf32, #tpu.memory_space<vmem>>, vector<75x64xf32>
    %cst = arith.constant dense<0.000000e+00> : vector<6050x64xf32>
    %3 = tpu.matmul %1, %2, %cst {dimension_numbers = #tpu.dot_dimension_numbers<[1], [0], [0], [1], [0, 0, 1, 1], [], []>} : vector<6050x75xf32>, vector<75x64xf32>, vector<6050x64xf32> -> vector<6050x64xf32>
    %c0_4 = arith.constant 0 : index
    %c0_5 = arith.constant 0 : index
    %4 = vector.load %arg3[%c0_4, %c0_5] : memref<1x64xf32, #tpu.memory_space<vmem>>, vector<1x64xf32>
    %5 = vector.broadcast %4 : vector<1x64xf32> to vector<6050x64xf32>
    %6 = arith.addf %3, %5 : vector<6050x64xf32>
    %cst_6 = arith.constant 0.000000e+00 : f32
    %7 = vector.broadcast %cst_6 : f32 to vector<6050x64xf32>
    %8 = arith.maximumf %6, %7 : vector<6050x64xf32>
    %c0_7 = arith.constant 0 : index
    %c0_8 = arith.constant 0 : index
    %c0_9 = arith.constant 0 : index
    %9 = vector.load %arg4[%c0_7, %c0_8, %c0_9] : memref<1x6050x64xf32, #tpu.memory_space<vmem>>, vector<1x6050x64xf32>
    %10 = vector.shape_cast %9 : vector<1x6050x64xf32> to vector<6050x64xf32>
    %11 = vector.shape_cast %8 : vector<6050x64xf32> to vector<1x6050x64xf32>
    tpu.vector_store %arg4[%c0_7, %c0_8, %c0_9], %11 {strides = array<i32>} : memref<1x6050x64xf32, #tpu.memory_space<vmem>>, vector<1x6050x64xf32>,
    return
  }
  func.func @transform_0(%arg0: i32) -> (i32, i32, i32) {
    %c0_i32 = arith.constant 0 : i32
    %c0_i32_0 = arith.constant 0 : i32
    %c0_i32_1 = arith.constant 0 : i32
    return %arg0, %c0_i32, %c0_i32_0 : i32, i32, i32
  }
  func.func @transform_1(%arg0: i32) -> (i32, i32) {
    %c0_i32 = arith.constant 0 : i32
    %c0_i32_0 = arith.constant 0 : i32
    %c0_i32_1 = arith.constant 0 : i32
    return %c0_i32, %c0_i32_0 : i32, i32
  }
  func.func @transform_2(%arg0: i32) -> (i32, i32) {
    %c0_i32 = arith.constant 0 : i32
    %c0_i32_0 = arith.constant 0 : i32
    %c0_i32_1 = arith.constant 0 : i32
    return %c0_i32, %c0_i32_0 : i32, i32
  }
  func.func @transform_3(%arg0: i32) -> (i32, i32, i32) {
    %c0_i32 = arith.constant 0 : i32
    %c0_i32_0 = arith.constant 0 : i32
    %c0_i32_1 = arith.constant 0 : i32
    return %arg0, %c0_i32, %c0_i32_0 : i32, i32, i32
  }
}

</mosaic_0001>

<llo_original>
// kernel: tpu_custom_call.1
$region0: #{tpu_custom_call.1}
  #allocation0 [shape = 'u32[]', space=smem, size = 0x4, offset = 0x4, fixed_abs, tag = 'smem constant byte address 0x4 - core index']
  #allocation1 [shape = 'u32[144,128]{1,0:T(1,128)}', space=vmem, size = 0x12000, scoped, tag = 'internal scratch']
  %s0 = inlined_call_operand.vmem [shape: f32[4,6050,75], index: 0, kind: input, shape index: {}]
  %s1 = inlined_call_operand.vmem [shape: f32[75,64], index: 1, kind: input, shape index: {}]
  %s2 = inlined_call_operand.vmem [shape: f32[1,64], index: 2, kind: input, shape index: {}]
  %s3 = inlined_call_operand.vmem [shape: f32[4,6050,64], index: 3, kind: output, shape index: {}]
  %s4 = sld [smem:[#allocation0]]
  $region45: #{tpu_custom_call.1} parent=0
    _
  %s6 = ssub.s32 1, %s4
  %s7 = scalar_select 0, %s6, %s4
  loop: start=0, step=1, limit=6
  $region2: #{tpu_custom_call.1} parent=0 // loop_pre_header
    _
  $region3: #{tpu_custom_call.1} parent=0 // loop_header
    %s9 = sphi 0, %s13
    %p10 = scmp.ge.s32.totalorder %s9, 6
    %s19 = sphi 0, %s21
    %s22 = sphi 0, %s19
    %s23 = sphi 0, %s22
    %s39 = sphi 0, %s23
    %s43 = sphi 0, %s43
    %s45 = sphi 0, %s43
    %s46 = sphi 0, %s45
    %s60 = sphi 0, %s46
    %s64 = sphi 0, %s64
    %s66 = sphi 0, %s64
    %s67 = sphi 0, %s66
    %s81 = sphi 0, %s67
    %s87 = sphi 0, %s89
    %s90 = sphi 0, %s87
    %s91 = sphi 0, %s90
    %s107 = sphi 0, %s91
  $region4: #{tpu_custom_call.1} parent=0 // loop_header_branch
    %12 = sbr.rel (%p10) target = $region8
  $region5: #{tpu_custom_call.1} parent=0 // loop_body
    %s14 = ssub.s32 %s9, 1
    %s15 = ssub.s32 %s9, 2
    %s16 = sadd.s32 %s9, 1
    %s17 = ssub.s32 %s9, %s16
    %p18 = scmp.eq.s32.totalorder %s17, 0
    %s20 = sadd.s32 %s19, 1
    %s21 = scalar_select %p18, %s19, %s20
    %p24 = pneg %p18
    %p25 = scmp.eq.s32.totalorder %s9, 3
    %p26 = por %p24, %p25
    %p27 = scmp.ne.s32.totalorder %s19, %s22
    %p28 = scmp.eq.s32.totalorder %s9, 0
    %p29 = por %p27, %p28
    %p30 = scmp.ne.s32.totalorder %s19, %s22
    %p31 = scmp.eq.s32.totalorder %s14, 3
    %p32 = por %p30, %p31
    %p33 = scmp.ne.s32.totalorder %s22, %s23
    %p34 = scmp.eq.s32.totalorder %s14, 0
    %p35 = por %p33, %p34
    %p36 = scmp.ne.s32.totalorder %s22, %s23
    %p37 = scmp.eq.s32.totalorder %s15, 3
    %p38 = por %p36, %p37
    %p40 = scmp.ne.s32.totalorder %s23, %s39
    %p41 = scmp.eq.s32.totalorder %s15, 0
    %p42 = por %p40, %p41
    %s44 = sadd.s32 %s43, 1
    %p47 = scmp.eq.s32.totalorder %s9, 3
    %p48 = scmp.ne.s32.totalorder %s43, %s45
    %p49 = scmp.eq.s32.totalorder %s9, 0
    %p50 = por %p48, %p49
    %p51 = scmp.ne.s32.totalorder %s43, %s45
    %p52 = scmp.eq.s32.totalorder %s14, 3
    %p53 = por %p51, %p52
    %p54 = scmp.ne.s32.totalorder %s45, %s46
    %p55 = scmp.eq.s32.totalorder %s14, 0
    %p56 = por %p54, %p55
    %p57 = scmp.ne.s32.totalorder %s45, %s46
    %p58 = scmp.eq.s32.totalorder %s15, 3
    %p59 = por %p57, %p58
    %p61 = scmp.ne.s32.totalorder %s46, %s60
    %p62 = scmp.eq.s32.totalorder %s15, 0
    %p63 = por %p61, %p62
    %s65 = sadd.s32 %s64, 1
    %p68 = scmp.eq.s32.totalorder %s9, 3
    %p69 = scmp.ne.s32.totalorder %s64, %s66
    %p70 = scmp.eq.s32.totalorder %s9, 0
    %p71 = por %p69, %p70
    %p72 = scmp.ne.s32.totalorder %s64, %s66
    %p73 = scmp.eq.s32.totalorder %s14, 3
    %p74 = por %p72, %p73
    %p75 = scmp.ne.s32.totalorder %s66, %s67
    %p76 = scmp.eq.s32.totalorder %s14, 0
    %p77 = por %p75, %p76
    %p78 = scmp.ne.s32.totalorder %s66, %s67
    %p79 = scmp.eq.s32.totalorder %s15, 3
    %p80 = por %p78, %p79
    %p82 = scmp.ne.s32.totalorder %s67, %s81
    %p83 = scmp.eq.s32.totalorder %s15, 0
    %p84 = por %p82, %p83
    %s85 = ssub.s32 %s9, %s16
    %p86 = scmp.eq.s32.totalorder %s85, 0
    %s88 = sadd.s32 %s87, 1
    %s89 = scalar_select %p86, %s87, %s88
    %p92 = pneg %p86
    %p93 = scmp.eq.s32.totalorder %s9, 3
    %p94 = por %p92, %p93
    %p95 = scmp.ne.s32.totalorder %s87, %s90
    %p96 = scmp.eq.s32.totalorder %s9, 0
    %p97 = por %p95, %p96
    %p98 = scmp.ne.s32.totalorder %s87, %s90
    %p99 = scmp.eq.s32.totalorder %s14, 3
    %p100 = por %p98, %p99
    %p101 = scmp.ne.s32.totalorder %s90, %s91
    %p102 = scmp.eq.s32.totalorder %s14, 0
    %p103 = por %p101, %p102
    %p104 = scmp.ne.s32.totalorder %s90, %s91
    %p105 = scmp.eq.s32.totalorder %s15, 3
    %p106 = por %p104, %p105
    %p108 = scmp.ne.s32.totalorder %s91, %s107
    %p109 = scmp.eq.s32.totalorder %s15, 0
    %p110 = por %p108, %p109
    %p111 = scmp.le.s32.totalorder 1, %s9
    %p112 = scmp.lt.s32.totalorder %s9, 5
    %p113 = pnand %p111, %p112
    %p114 = pneg %p113
    // Predicated region
    $region9: #{tpu_custom_call.1} parent=5 // pred_check
      _
    $region10: #{tpu_custom_call.1} parent=5 // pred_check_branch
      %116 = sbr.rel (%p113) target = $region12
    $region11: #{tpu_custom_call.1} parent=5 // pred_region
      %s117 = ssub.s32 %s9, 1
      // Predicated region
      $region13: #{tpu_custom_call.1} parent=11 // pred_check
        %p118 = pneg %p56
      $region14: #{tpu_custom_call.1} parent=11 // pred_check_branch
        %120 = sbr.rel (%p118) target = $region16
      $region15: #{tpu_custom_call.1} parent=11 // pred_region
        _
      $region16: #{tpu_custom_call.1} parent=11 // pred_fallthru
        _
      // Predicated region
      $region17: #{tpu_custom_call.1} parent=11 // pred_check
        %p121 = pneg %p77
      $region18: #{tpu_custom_call.1} parent=11 // pred_check_branch
        %123 = sbr.rel (%p121) target = $region20
      $region19: #{tpu_custom_call.1} parent=11 // pred_region
        _
      $region20: #{tpu_custom_call.1} parent=11 // pred_fallthru
        _
    $region12: #{tpu_custom_call.1} parent=5 // pred_fallthru
      _
    %p124 = scmp.lt.s32.totalorder %s9, 4
    // Predicated region
    $region21: #{tpu_custom_call.1} parent=5 // pred_check
      %p125 = pneg %p124
    $region22: #{tpu_custom_call.1} parent=5 // pred_check_branch
      %127 = sbr.rel (%p125) target = $region24
    $region23: #{tpu_custom_call.1} parent=5 // pred_region
      // Predicated region
      $region25: #{tpu_custom_call.1} parent=23 // pred_check
        %p128 = pneg %p29
      $region26: #{tpu_custom_call.1} parent=23 // pred_check_branch
        %130 = sbr.rel (%p128) target = $region28
      $region27: #{tpu_custom_call.1} parent=23 // pred_region
        %p131 = scmp.lt.s32.totalorder %s9, 3
        %s132 = scalar_select %p131, %s9, 3
        %s133 = smul.addr %s132, 757
        %s134 = smul.addr %s133, 8
        %s135 = scalar_lea.vmem %s0, %s134
      $region28: #{tpu_custom_call.1} parent=23 // pred_fallthru
        _
    $region24: #{tpu_custom_call.1} parent=5 // pred_fallthru
      _
    %p136 = scmp.le.s32.totalorder 1, %s9
    %p137 = scmp.lt.s32.totalorder %s9, 5
    %p138 = pnand %p136, %p137
    %p139 = pneg %p138
    // Predicated region
    $region29: #{tpu_custom_call.1} parent=5 // pred_check
      _
    $region30: #{tpu_custom_call.1} parent=5 // pred_check_branch
      %141 = sbr.rel (%p138) target = $region32
    $region31: #{tpu_custom_call.1} parent=5 // pred_region
      %s142 = ssub.s32 %s9, 1
      %p143 = scmp.lt.s32.totalorder %s14, 3
      %s144 = scalar_select %p143, %s14, 3
      %s145 = smul.addr %s144, 757
      %s146 = smul.addr %s145, 8
      %s147 = scalar_lea.vmem %s0, %s146
      %p148 = pneg %p35
      %p149 = pneg %p32
      %p150 = pneg %p56
      %p151 = pneg %p53
      %p152 = pneg %p77
      %p153 = pneg %p74
      %p154 = pneg %p103
      %p155 = pneg %p100
      %p156 = scmp.lt.s32.totalorder %s14, 3
      %s157 = scalar_select %p156, %s14, 3
      %s158 = smul.addr %s157, 757
      %s159 = smul.addr %s158, 8
      %s160 = scalar_lea.vmem %s3, %s159
      %p161 = scmp.lt.s32.totalorder %s14, 3
      %s162 = scalar_select %p161, %s14, 3
      %s163 = smul.addr %s162, 757
      %s164 = smul.addr %s163, 8
      %s165 = scalar_lea.vmem %s0, %s164
      %p166 = scmp.lt.s32.totalorder %s14, 3
      %s167 = scalar_select %p166, %s14, 3
      %s168 = smul.addr %s167, 757
      %s169 = smul.addr %s168, 8
      %s170 = scalar_lea.vmem %s3, %s169
      %v171 = vld [vmem:[%s165] sm:$0xff]
      %v172 = vld [vmem:[%s165 + $0x8] sm:$0xff]
      %v173 = vld [vmem:[%s165 + $0x10] sm:$0xff]
      %v174 = vld [vmem:[%s165 + $0x18] sm:$0xff]
      %v175 = vld [vmem:[%s165 + $0x20] sm:$0xff]
      %v176 = vld [vmem:[%s165 + $0x28] sm:$0xff]
      %v177 = vld [vmem:[%s165 + $0x30] sm:$0xff]
      %v178 = vld [vmem:[%s165 + $0x38] sm:$0xff]
      %v179 = vld [vmem:[%s165 + $0x40] sm:$0xff]
      %v180 = vld [vmem:[%s165 + $0x48] sm:$0xff]
      %v181 = vld [vmem:[%s165 + $0x50] sm:$0xff]
      %v182 = vld [vmem:[%s165 + $0x58] sm:$0xff]
      %v183 = vld [vmem:[%s165 + $0x60] sm:$0xff]
      %v184 = vld [vmem:[%s165 + $0x68] sm:$0xff]
      %v185 = vld [vmem:[%s165 + $0x70] sm:$0xff]
      %v186 = vld [vmem:[%s165 + $0x78] sm:$0xff]
      %v187 = vld [vmem:[%s165 + $0x80] sm:$0xff]
      %v188 = vld [vmem:[%s165 + $0x88] sm:$0xff]
      %v189 = vld [vmem:[%s165 + $0x90] sm:$0xff]
      %v190 = vld [vmem:[%s165 + $0x98] sm:$0xff]
      %v191 = vld [vmem:[%s165 + $0xa0] sm:$0xff]
      %v192 = vld [vmem:[%s165 + $0xa8] sm:$0xff]
      %v193 = vld [vmem:[%s165 + $0xb0] sm:$0xff]
      %v194 = vld [vmem:[%s165 + $0xb8] sm:$0xff]
      %v195 = vld [vmem:[%s165 + $0xc0] sm:$0xff]
      %v196 = vld [vmem:[%s165 + $0xc8] sm:$0xff]
      %v197 = vld [vmem:[%s165 + $0xd0] sm:$0xff]
      %v198 = vld [vmem:[%s165 + $0xd8] sm:$0xff]
      %v199 = vld [vmem:[%s165 + $0xe0] sm:$0xff]
      %v200 = vld [vmem:[%s165 + $0xe8] sm:$0xff]
      %v201 = vld [vmem:[%s165 + $0xf0] sm:$0xff]
      %v202 = vld [vmem:[%s165 + $0xf8] sm:$0xff]
      %v203 = vld [vmem:[%s165 + $0x100] sm:$0xff]
      %v204 = vld [vmem:[%s165 + $0x108] sm:$0xff]
      %v205 = vld [vmem:[%s165 + $0x110] sm:$0xff]
      %v206 = vld [vmem:[%s165 + $0x118] sm:$0xff]
      %v207 = vld [vmem:[%s165 + $0x120] sm:$0xff]
      %v208 = vld [vmem:[%s165 + $0x128] sm:$0xff]
      %v209 = vld [vmem:[%s165 + $0x130] sm:$0xff]
      %v210 = vld [vmem:[%s165 + $0x138] sm:$0xff]
      %v211 = vld [vmem:[%s165 + $0x140] sm:$0xff]
      %v212 = vld [vmem:[%s165 + $0x148] sm:$0xff]
      %v213 = vld [vmem:[%s165 + $0x150] sm:$0xff]
      %v214 = vld [vmem:[%s165 + $0x158] sm:$0xff]
      %v215 = vld [vmem:[%s165 + $0x160] sm:$0xff]
      %v216 = vld [vmem:[%s165 + $0x168] sm:$0xff]
      %v217 = vld [vmem:[%s165 + $0x170] sm:$0xff]
      %v218 = vld [vmem:[%s165 + $0x178] sm:$0xff]
      %v219 = vld [vmem:[%s165 + $0x180] sm:$0xff]
      %v220 = vld [vmem:[%s165 + $0x188] sm:$0xff]
      %v221 = vld [vmem:[%s165 + $0x190] sm:$0xff]
      %v222 = vld [vmem:[%s165 + $0x198] sm:$0xff]
      %v223 = vld [vmem:[%s165 + $0x1a0] sm:$0xff]
      %v224 = vld [vmem:[%s165 + $0x1a8] sm:$0xff]
      %v225 = vld [vmem:[%s165 + $0x1b0] sm:$0xff]
      %v226 = vld [vmem:[%s165 + $0x1b8] sm:$0xff]
      %v227 = vld [vmem:[%s165 + $0x1c0] sm:$0xff]
      %v228 = vld [vmem:[%s165 + $0x1c8] sm:$0xff]
      %v229 = vld [vmem:[%s165 + $0x1d0] sm:$0xff]
      %v230 = vld [vmem:[%s165 + $0x1d8] sm:$0xff]
      %v231 = vld [vmem:[%s165 + $0x1e0] sm:$0xff]
      %v232 = vld [vmem:[%s165 + $0x1e8] sm:$0xff]
      %v233 = vld [vmem:[%s165 + $0x1f0] sm:$0xff]
      %v234 = vld [vmem:[%s165 + $0x1f8] sm:$0xff]
      %v235 = vld [vmem:[%s165 + $0x200] sm:$0xff]
      %v236 = vld [vmem:[%s165 + $0x208] sm:$0xff]
      %v237 = vld [vmem:[%s165 + $0x210] sm:$0xff]
      %v238 = vld [vmem:[%s165 + $0x218] sm:$0xff]
      %v239 = vld [vmem:[%s165 + $0x220] sm:$0xff]
      %v240 = vld [vmem:[%s165 + $0x228] sm:$0xff]
      %v241 = vld [vmem:[%s165 + $0x230] sm:$0xff]
      %v242 = vld [vmem:[%s165 + $0x238] sm:$0xff]
      %v243 = vld [vmem:[%s165 + $0x240] sm:$0xff]
      %v244 = vld [vmem:[%s165 + $0x248] sm:$0xff]
      %v245 = vld [vmem:[%s165 + $0x250] sm:$0xff]
      %v246 = vld [vmem:[%s165 + $0x258] sm:$0xff]
      %v247 = vld [vmem:[%s165 + $0x260] sm:$0xff]
      %v248 = vld [vmem:[%s165 + $0x268] sm:$0xff]
      %v249 = vld [vmem:[%s165 + $0x270] sm:$0xff]
      %v250 = vld [vmem:[%s165 + $0x278] sm:$0xff]
      %v251 = vld [vmem:[%s165 + $0x280] sm:$0xff]
      %v252 = vld [vmem:[%s165 + $0x288] sm:$0xff]
      %v253 = vld [vmem:[%s165 + $0x290] sm:$0xff]
      %v254 = vld [vmem:[%s165 + $0x298] sm:$0xff]
      %v255 = vld [vmem:[%s165 + $0x2a0] sm:$0xff]
      %v256 = vld [vmem:[%s165 + $0x2a8] sm:$0xff]
      %v257 = vld [vmem:[%s165 + $0x2b0] sm:$0xff]
      %v258 = vld [vmem:[%s165 + $0x2b8] sm:$0xff]
      %v259 = vld [vmem:[%s165 + $0x2c0] sm:$0xff]
      %v260 = vld [vmem:[%s165 + $0x2c8] sm:$0xff]
      %v261 = vld [vmem:[%s165 + $0x2d0] sm:$0xff]
      %v262 = vld [vmem:[%s165 + $0x2d8] sm:$0xff]
      %v263 = vld [vmem:[%s165 + $0x2e0] sm:$0xff]
      %v264 = vld [vmem:[%s165 + $0x2e8] sm:$0xff]
      %v265 = vld [vmem:[%s165 + $0x2f0] sm:$0xff]
      %v266 = vld [vmem:[%s165 + $0x2f8] sm:$0xff]
      %v267 = vld [vmem:[%s165 + $0x300] sm:$0xff]
      %v268 = vld [vmem:[%s165 + $0x308] sm:$0xff]
      %v269 = vld [vmem:[%s165 + $0x310] sm:$0xff]
      %v270 = vld [vmem:[%s165 + $0x318] sm:$0xff]
      %v271 = vld [vmem:[%s165 + $0x320] sm:$0xff]
      %v272 = vld [vmem:[%s165 + $0x328] sm:$0xff]
      %v273 = vld [vmem:[%s165 + $0x330] sm:$0xff]
      %v274 = vld [vmem:[%s165 + $0x338] sm:$0xff]
      %v275 = vld [vmem:[%s165 + $0x340] sm:$0xff]
      %v276 = vld [vmem:[%s165 + $0x348] sm:$0xff]
      %v277 = vld [vmem:[%s165 + $0x350] sm:$0xff]
      %v278 = vld [vmem:[%s165 + $0x358] sm:$0xff]
      %v279 = vld [vmem:[%s165 + $0x360] sm:$0xff]
      %v280 = vld [vmem:[%s165 + $0x368] sm:$0xff]
      %v281 = vld [vmem:[%s165 + $0x370] sm:$0xff]
      %v282 = vld [vmem:[%s165 + $0x378] sm:$0xff]
      %v283 = vld [vmem:[%s165 + $0x380] sm:$0xff]
      %v284 = vld [vmem:[%s165 + $0x388] sm:$0xff]
      %v285 = vld [vmem:[%s165 + $0x390] sm:$0xff]
      %v286 = vld [vmem:[%s165 + $0x398] sm:$0xff]
      %v287 = vld [vmem:[%s165 + $0x3a0] sm:$0xff]
      %v288 = vld [vmem:[%s165 + $0x3a8] sm:$0xff]
      %v289 = vld [vmem:[%s165 + $0x3b0] sm:$0xff]
      %v290 = vld [vmem:[%s165 + $0x3b8] sm:$0xff]
      %v291 = vld [vmem:[%s165 + $0x3c0] sm:$0xff]
      %v292 = vld [vmem:[%s165 + $0x3c8] sm:$0xff]
      %v293 = vld [vmem:[%s165 + $0x3d0] sm:$0xff]
      %v294 = vld [vmem:[%s165 + $0x3d8] sm:$0xff]
      %v295 = vld [vmem:[%s165 + $0x3e0] sm:$0xff]
      %v296 = vld [vmem:[%s165 + $0x3e8] sm:$0xff]
      %v297 = vld [vmem:[%s165 + $0x3f0] sm:$0xff]
      %v298 = vld [vmem:[%s165 + $0x3f8] sm:$0xff]
      %v299 = vld [vmem:[%s165 + $0x400] sm:$0xff]
      %v300 = vld [vmem:[%s165 + $0x408] sm:$0xff]
      %v301 = vld [vmem:[%s165 + $0x410] sm:$0xff]
      %v302 = vld [vmem:[%s165 + $0x418] sm:$0xff]
      %v303 = vld [vmem:[%s165 + $0x420] sm:$0xff]
      %v304 = vld [vmem:[%s165 + $0x428] sm:$0xff]
      %v305 = vld [vmem:[%s165 + $0x430] sm:$0xff]
      %v306 = vld [vmem:[%s165 + $0x438] sm:$0xff]
      %v307 = vld [vmem:[%s165 + $0x440] sm:$0xff]
      %v308 = vld [vmem:[%s165 + $0x448] sm:$0xff]
      %v309 = vld [vmem:[%s165 + $0x450] sm:$0xff]
      %v310 = vld [vmem:[%s165 + $0x458] sm:$0xff]
      %v311 = vld [vmem:[%s165 + $0x460] sm:$0xff]
      %v312 = vld [vmem:[%s165 + $0x468] sm:$0xff]
      %v313 = vld [vmem:[%s165 + $0x470] sm:$0xff]
      %v314 = vld [vmem:[%s165 + $0x478] sm:$0xff]
      %v315 = vld [vmem:[%s165 + $0x480] sm:$0xff]
      %v316 = vld [vmem:[%s165 + $0x488] sm:$0xff]
      %v317 = vld [vmem:[%s165 + $0x490] sm:$0xff]
      %v318 = vld [vmem:[%s165 + $0x498] sm:$0xff]
      %v319 = vld [vmem:[%s165 + $0x4a0] sm:$0xff]
      %v320 = vld [vmem:[%s165 + $0x4a8] sm:$0xff]
      %v321 = vld [vmem:[%s165 + $0x4b0] sm:$0xff]
      %v322 = vld [vmem:[%s165 + $0x4b8] sm:$0xff]
      %v323 = vld [vmem:[%s165 + $0x4c0] sm:$0xff]
      %v324 = vld [vmem:[%s165 + $0x4c8] sm:$0xff]
      %v325 = vld [vmem:[%s165 + $0x4d0] sm:$0xff]
      %v326 = vld [vmem:[%s165 + $0x4d8] sm:$0xff]
      %v327 = vld [vmem:[%s165 + $0x4e0] sm:$0xff]
      %v328 = vld [vmem:[%s165 + $0x4e8] sm:$0xff]
      %v329 = vld [vmem:[%s165 + $0x4f0] sm:$0xff]
      %v330 = vld [vmem:[%s165 + $0x4f8] sm:$0xff]
      %v331 = vld [vmem:[%s165 + $0x500] sm:$0xff]
      %v332 = vld [vmem:[%s165 + $0x508] sm:$0xff]
      %v333 = vld [vmem:[%s165 + $0x510] sm:$0xff]
      %v334 = vld [vmem:[%s165 + $0x518] sm:$0xff]
      %v335 = vld [vmem:[%s165 + $0x520] sm:$0xff]
      %v336 = vld [vmem:[%s165 + $0x528] sm:$0xff]
      %v337 = vld [vmem:[%s165 + $0x530] sm:$0xff]
      %v338 = vld [vmem:[%s165 + $0x538] sm:$0xff]
      %v339 = vld [vmem:[%s165 + $0x540] sm:$0xff]
      %v340 = vld [vmem:[%s165 + $0x548] sm:$0xff]
      %v341 = vld [vmem:[%s165 + $0x550] sm:$0xff]
      %v342 = vld [vmem:[%s165 + $0x558] sm:$0xff]
      %v343 = vld [vmem:[%s165 + $0x560] sm:$0xff]
      %v344 = vld [vmem:[%s165 + $0x568] sm:$0xff]
      %v345 = vld [vmem:[%s165 + $0x570] sm:$0xff]
      %v346 = vld [vmem:[%s165 + $0x578] sm:$0xff]
      %v347 = vld [vmem:[%s165 + $0x580] sm:$0xff]
      %v348 = vld [vmem:[%s165 + $0x588] sm:$0xff]
      %v349 = vld [vmem:[%s165 + $0x590] sm:$0xff]
      %v350 = vld [vmem:[%s165 + $0x598] sm:$0xff]
      %v351 = vld [vmem:[%s165 + $0x5a0] sm:$0xff]
      %v352 = vld [vmem:[%s165 + $0x5a8] sm:$0xff]
      %v353 = vld [vmem:[%s165 + $0x5b0] sm:$0xff]
      %v354 = vld [vmem:[%s165 + $0x5b8] sm:$0xff]
      %v355 = vld [vmem:[%s165 + $0x5c0] sm:$0xff]
      %v356 = vld [vmem:[%s165 + $0x5c8] sm:$0xff]
      %v357 = vld [vmem:[%s165 + $0x5d0] sm:$0xff]
      %v358 = vld [vmem:[%s165 + $0x5d8] sm:$0xff]
      %v359 = vld [vmem:[%s165 + $0x5e0] sm:$0xff]
      %v360 = vld [vmem:[%s165 + $0x5e8] sm:$0xff]
      %v361 = vld [vmem:[%s165 + $0x5f0] sm:$0xff]
      %v362 = vld [vmem:[%s165 + $0x5f8] sm:$0xff]
      %v363 = vld [vmem:[%s165 + $0x600] sm:$0xff]
      %v364 = vld [vmem:[%s165 + $0x608] sm:$0xff]
      %v365 = vld [vmem:[%s165 + $0x610] sm:$0xff]
      %v366 = vld [vmem:[%s165 + $0x618] sm:$0xff]
      %v367 = vld [vmem:[%s165 + $0x620] sm:$0xff]
      %v368 = vld [vmem:[%s165 + $0x628] sm:$0xff]
      %v369 = vld [vmem:[%s165 + $0x630] sm:$0xff]
      %v370 = vld [vmem:[%s165 + $0x638] sm:$0xff]
      %v371 = vld [vmem:[%s165 + $0x640] sm:$0xff]
      %v372 = vld [vmem:[%s165 + $0x648] sm:$0xff]
      %v373 = vld [vmem:[%s165 + $0x650] sm:$0xff]
      %v374 = vld [vmem:[%s165 + $0x658] sm:$0xff]
      %v375 = vld [vmem:[%s165 + $0x660] sm:$0xff]
      %v376 = vld [vmem:[%s165 + $0x668] sm:$0xff]
      %v377 = vld [vmem:[%s165 + $0x670] sm:$0xff]
      %v378 = vld [vmem:[%s165 + $0x678] sm:$0xff]
      %v379 = vld [vmem:[%s165 + $0x680] sm:$0xff]
      %v380 = vld [vmem:[%s165 + $0x688] sm:$0xff]
      %v381 = vld [vmem:[%s165 + $0x690] sm:$0xff]
      %v382 = vld [vmem:[%s165 + $0x698] sm:$0xff]
      %v383 = vld [vmem:[%s165 + $0x6a0] sm:$0xff]
      %v384 = vld [vmem:[%s165 + $0x6a8] sm:$0xff]
      %v385 = vld [vmem:[%s165 + $0x6b0] sm:$0xff]
      %v386 = vld [vmem:[%s165 + $0x6b8] sm:$0xff]
      %v387 = vld [vmem:[%s165 + $0x6c0] sm:$0xff]
      %v388 = vld [vmem:[%s165 + $0x6c8] sm:$0xff]
      %v389 = vld [vmem:[%s165 + $0x6d0] sm:$0xff]
      %v390 = vld [vmem:[%s165 + $0x6d8] sm:$0xff]
      %v391 = vld [vmem:[%s165 + $0x6e0] sm:$0xff]
      %v392 = vld [vmem:[%s165 + $0x6e8] sm:$0xff]
      %v393 = vld [vmem:[%s165 + $0x6f0] sm:$0xff]
      %v394 = vld [vmem:[%s165 + $0x6f8] sm:$0xff]
      %v395 = vld [vmem:[%s165 + $0x700] sm:$0xff]
      %v396 = vld [vmem:[%s165 + $0x708] sm:$0xff]
      %v397 = vld [vmem:[%s165 + $0x710] sm:$0xff]
      %v398 = vld [vmem:[%s165 + $0x718] sm:$0xff]
      %v399 = vld [vmem:[%s165 + $0x720] sm:$0xff]
      %v400 = vld [vmem:[%s165 + $0x728] sm:$0xff]
      %v401 = vld [vmem:[%s165 + $0x730] sm:$0xff]
      %v402 = vld [vmem:[%s165 + $0x738] sm:$0xff]
      %v403 = vld [vmem:[%s165 + $0x740] sm:$0xff]
      %v404 = vld [vmem:[%s165 + $0x748] sm:$0xff]
      %v405 = vld [vmem:[%s165 + $0x750] sm:$0xff]
      %v406 = vld [vmem:[%s165 + $0x758] sm:$0xff]
      %v407 = vld [vmem:[%s165 + $0x760] sm:$0xff]
      %v408 = vld [vmem:[%s165 + $0x768] sm:$0xff]
      %v409 = vld [vmem:[%s165 + $0x770] sm:$0xff]
      %v410 = vld [vmem:[%s165 + $0x778] sm:$0xff]
      %v411 = vld [vmem:[%s165 + $0x780] sm:$0xff]
      %v412 = vld [vmem:[%s165 + $0x788] sm:$0xff]
      %v413 = vld [vmem:[%s165 + $0x790] sm:$0xff]
      %v414 = vld [vmem:[%s165 + $0x798] sm:$0xff]
      %v415 = vld [vmem:[%s165 + $0x7a0] sm:$0xff]
      %v416 = vld [vmem:[%s165 + $0x7a8] sm:$0xff]
      %v417 = vld [vmem:[%s165 + $0x7b0] sm:$0xff]
      %v418 = vld [vmem:[%s165 + $0x7b8] sm:$0xff]
      %v419 = vld [vmem:[%s165 + $0x7c0] sm:$0xff]
      %v420 = vld [vmem:[%s165 + $0x7c8] sm:$0xff]
      %v421 = vld [vmem:[%s165 + $0x7d0] sm:$0xff]
      %v422 = vld [vmem:[%s165 + $0x7d8] sm:$0xff]
      %v423 = vld [vmem:[%s165 + $0x7e0] sm:$0xff]
      %v424 = vld [vmem:[%s165 + $0x7e8] sm:$0xff]
      %v425 = vld [vmem:[%s165 + $0x7f0] sm:$0xff]
      %v426 = vld [vmem:[%s165 + $0x7f8] sm:$0xff]
      %v427 = vld [vmem:[%s165 + $0x800] sm:$0xff]
      %v428 = vld [vmem:[%s165 + $0x808] sm:$0xff]
      %v429 = vld [vmem:[%s165 + $0x810] sm:$0xff]
      %v430 = vld [vmem:[%s165 + $0x818] sm:$0xff]
      %v431 = vld [vmem:[%s165 + $0x820] sm:$0xff]
      %v432 = vld [vmem:[%s165 + $0x828] sm:$0xff]
      %v433 = vld [vmem:[%s165 + $0x830] sm:$0xff]
      %v434 = vld [vmem:[%s165 + $0x838] sm:$0xff]
      %v435 = vld [vmem:[%s165 + $0x840] sm:$0xff]
      %v436 = vld [vmem:[%s165 + $0x848] sm:$0xff]
      %v437 = vld [vmem:[%s165 + $0x850] sm:$0xff]
      %v438 = vld [vmem:[%s165 + $0x858] sm:$0xff]
      %v439 = vld [vmem:[%s165 + $0x860] sm:$0xff]
      %v440 = vld [vmem:[%s165 + $0x868] sm:$0xff]
      %v441 = vld [vmem:[%s165 + $0x870] sm:$0xff]
      %v442 = vld [vmem:[%s165 + $0x878] sm:$0xff]
      %v443 = vld [vmem:[%s165 + $0x880] sm:$0xff]
      %v444 = vld [vmem:[%s165 + $0x888] sm:$0xff]
      %v445 = vld [vmem:[%s165 + $0x890] sm:$0xff]
      %v446 = vld [vmem:[%s165 + $0x898] sm:$0xff]
      %v447 = vld [vmem:[%s165 + $0x8a0] sm:$0xff]
      %v448 = vld [vmem:[%s165 + $0x8a8] sm:$0xff]
      %v449 = vld [vmem:[%s165 + $0x8b0] sm:$0xff]
      %v450 = vld [vmem:[%s165 + $0x8b8] sm:$0xff]
      %v451 = vld [vmem:[%s165 + $0x8c0] sm:$0xff]
      %v452 = vld [vmem:[%s165 + $0x8c8] sm:$0xff]
      %v453 = vld [vmem:[%s165 + $0x8d0] sm:$0xff]
      %v454 = vld [vmem:[%s165 + $0x8d8] sm:$0xff]
      %v455 = vld [vmem:[%s165 + $0x8e0] sm:$0xff]
      %v456 = vld [vmem:[%s165 + $0x8e8] sm:$0xff]
      %v457 = vld [vmem:[%s165 + $0x8f0] sm:$0xff]
      %v458 = vld [vmem:[%s165 + $0x8f8] sm:$0xff]
      %v459 = vld [vmem:[%s165 + $0x900] sm:$0xff]
      %v460 = vld [vmem:[%s165 + $0x908] sm:$0xff]
      %v461 = vld [vmem:[%s165 + $0x910] sm:$0xff]
      %v462 = vld [vmem:[%s165 + $0x918] sm:$0xff]
      %v463 = vld [vmem:[%s165 + $0x920] sm:$0xff]
      %v464 = vld [vmem:[%s165 + $0x928] sm:$0xff]
      %v465 = vld [vmem:[%s165 + $0x930] sm:$0xff]
      %v466 = vld [vmem:[%s165 + $0x938] sm:$0xff]
      %v467 = vld [vmem:[%s165 + $0x940] sm:$0xff]
      %v468 = vld [vmem:[%s165 + $0x948] sm:$0xff]
      %v469 = vld [vmem:[%s165 + $0x950] sm:$0xff]
      %v470 = vld [vmem:[%s165 + $0x958] sm:$0xff]
      %v471 = vld [vmem:[%s165 + $0x960] sm:$0xff]
      %v472 = vld [vmem:[%s165 + $0x968] sm:$0xff]
      %v473 = vld [vmem:[%s165 + $0x970] sm:$0xff]
      %v474 = vld [vmem:[%s165 + $0x978] sm:$0xff]
      %v475 = vld [vmem:[%s165 + $0x980] sm:$0xff]
      %v476 = vld [vmem:[%s165 + $0x988] sm:$0xff]
      %v477 = vld [vmem:[%s165 + $0x990] sm:$0xff]
      %v478 = vld [vmem:[%s165 + $0x998] sm:$0xff]
      %v479 = vld [vmem:[%s165 + $0x9a0] sm:$0xff]
      %v480 = vld [vmem:[%s165 + $0x9a8] sm:$0xff]
      %v481 = vld [vmem:[%s165 + $0x9b0] sm:$0xff]
      %v482 = vld [vmem:[%s165 + $0x9b8] sm:$0xff]
      %v483 = vld [vmem:[%s165 + $0x9c0] sm:$0xff]
      %v484 = vld [vmem:[%s165 + $0x9c8] sm:$0xff]
      %v485 = vld [vmem:[%s165 + $0x9d0] sm:$0xff]
      %v486 = vld [vmem:[%s165 + $0x9d8] sm:$0xff]
      %v487 = vld [vmem:[%s165 + $0x9e0] sm:$0xff]
      %v488 = vld [vmem:[%s165 + $0x9e8] sm:$0xff]
      %v489 = vld [vmem:[%s165 + $0x9f0] sm:$0xff]
      %v490 = vld [vmem:[%s165 + $0x9f8] sm:$0xff]
      %v491 = vld [vmem:[%s165 + $0xa00] sm:$0xff]
      %v492 = vld [vmem:[%s165 + $0xa08] sm:$0xff]
      %v493 = vld [vmem:[%s165 + $0xa10] sm:$0xff]
      %v494 = vld [vmem:[%s165 + $0xa18] sm:$0xff]
      %v495 = vld [vmem:[%s165 + $0xa20] sm:$0xff]
      %v496 = vld [vmem:[%s165 + $0xa28] sm:$0xff]
      %v497 = vld [vmem:[%s165 + $0xa30] sm:$0xff]
      %v498 = vld [vmem:[%s165 + $0xa38] sm:$0xff]
      %v499 = vld [vmem:[%s165 + $0xa40] sm:$0xff]
      %v500 = vld [vmem:[%s165 + $0xa48] sm:$0xff]
      %v501 = vld [vmem:[%s165 + $0xa50] sm:$0xff]
      %v502 = vld [vmem:[%s165 + $0xa58] sm:$0xff]
      %v503 = vld [vmem:[%s165 + $0xa60] sm:$0xff]
      %v504 = vld [vmem:[%s165 + $0xa68] sm:$0xff]
      %v505 = vld [vmem:[%s165 + $0xa70] sm:$0xff]
      %v506 = vld [vmem:[%s165 + $0xa78] sm:$0xff]
      %v507 = vld [vmem:[%s165 + $0xa80] sm:$0xff]
      %v508 = vld [vmem:[%s165 + $0xa88] sm:$0xff]
      %v509 = vld [vmem:[%s165 + $0xa90] sm:$0xff]
      %v510 = vld [vmem:[%s165 + $0xa98] sm:$0xff]
      %v511 = vld [vmem:[%s165 + $0xaa0] sm:$0xff]
      %v512 = vld [vmem:[%s165 + $0xaa8] sm:$0xff]
      %v513 = vld [vmem:[%s165 + $0xab0] sm:$0xff]
      %v514 = vld [vmem:[%s165 + $0xab8] sm:$0xff]
      %v515 = vld [vmem:[%s165 + $0xac0] sm:$0xff]
      %v516 = vld [vmem:[%s165 + $0xac8] sm:$0xff]
      %v517 = vld [vmem:[%s165 + $0xad0] sm:$0xff]
      %v518 = vld [vmem:[%s165 + $0xad8] sm:$0xff]
      %v519 = vld [vmem:[%s165 + $0xae0] sm:$0xff]
      %v520 = vld [vmem:[%s165 + $0xae8] sm:$0xff]
      %v521 = vld [vmem:[%s165 + $0xaf0] sm:$0xff]
      %v522 = vld [vmem:[%s165 + $0xaf8] sm:$0xff]
      %v523 = vld [vmem:[%s165 + $0xb00] sm:$0xff]
      %v524 = vld [vmem:[%s165 + $0xb08] sm:$0xff]
      %v525 = vld [vmem:[%s165 + $0xb10] sm:$0xff]
      %v526 = vld [vmem:[%s165 + $0xb18] sm:$0xff]
      %v527 = vld [vmem:[%s165 + $0xb20] sm:$0xff]
      %v528 = vld [vmem:[%s165 + $0xb28] sm:$0xff]
      %v529 = vld [vmem:[%s165 + $0xb30] sm:$0xff]
      %v530 = vld [vmem:[%s165 + $0xb38] sm:$0xff]
      %v531 = vld [vmem:[%s165 + $0xb40] sm:$0xff]
      %v532 = vld [vmem:[%s165 + $0xb48] sm:$0xff]
      %v533 = vld [vmem:[%s165 + $0xb50] sm:$0xff]
      %v534 = vld [vmem:[%s165 + $0xb58] sm:$0xff]
      %v535 = vld [vmem:[%s165 + $0xb60] sm:$0xff]
      %v536 = vld [vmem:[%s165 + $0xb68] sm:$0xff]
      %v537 = vld [vmem:[%s165 + $0xb70] sm:$0xff]
      %v538 = vld [vmem:[%s165 + $0xb78] sm:$0xff]
      %v539 = vld [vmem:[%s165 + $0xb80] sm:$0xff]
      %v540 = vld [vmem:[%s165 + $0xb88] sm:$0xff]
      %v541 = vld [vmem:[%s165 + $0xb90] sm:$0xff]
      %v542 = vld [vmem:[%s165 + $0xb98] sm:$0xff]
      %v543 = vld [vmem:[%s165 + $0xba0] sm:$0xff]
      %v544 = vld [vmem:[%s165 + $0xba8] sm:$0xff]
      %v545 = vld [vmem:[%s165 + $0xbb0] sm:$0xff]
      %v546 = vld [vmem:[%s165 + $0xbb8] sm:$0xff]
      %v547 = vld [vmem:[%s165 + $0xbc0] sm:$0xff]
      %v548 = vld [vmem:[%s165 + $0xbc8] sm:$0xff]
      %v549 = vld [vmem:[%s165 + $0xbd0] sm:$0xff]
      %v550 = vld [vmem:[%s165 + $0xbd8] sm:$0xff]
      %v551 = vld [vmem:[%s165 + $0xbe0] sm:$0xff]
      %v552 = vld [vmem:[%s165 + $0xbe8] sm:$0xff]
      %v553 = vld [vmem:[%s165 + $0xbf0] sm:$0xff]
      %v554 = vld [vmem:[%s165 + $0xbf8] sm:$0xff]
      %v555 = vld [vmem:[%s165 + $0xc00] sm:$0xff]
      %v556 = vld [vmem:[%s165 + $0xc08] sm:$0xff]
      %v557 = vld [vmem:[%s165 + $0xc10] sm:$0xff]
      %v558 = vld [vmem:[%s165 + $0xc18] sm:$0xff]
      %v559 = vld [vmem:[%s165 + $0xc20] sm:$0xff]
      %v560 = vld [vmem:[%s165 + $0xc28] sm:$0xff]
      %v561 = vld [vmem:[%s165 + $0xc30] sm:$0xff]
      %v562 = vld [vmem:[%s165 + $0xc38] sm:$0xff]
      %v563 = vld [vmem:[%s165 + $0xc40] sm:$0xff]
      %v564 = vld [vmem:[%s165 + $0xc48] sm:$0xff]
      %v565 = vld [vmem:[%s165 + $0xc50] sm:$0xff]
      %v566 = vld [vmem:[%s165 + $0xc58] sm:$0xff]
      %v567 = vld [vmem:[%s165 + $0xc60] sm:$0xff]
      %v568 = vld [vmem:[%s165 + $0xc68] sm:$0xff]
      %v569 = vld [vmem:[%s165 + $0xc70] sm:$0xff]
      %v570 = vld [vmem:[%s165 + $0xc78] sm:$0xff]
      %v571 = vld [vmem:[%s165 + $0xc80] sm:$0xff]
      %v572 = vld [vmem:[%s165 + $0xc88] sm:$0xff]
      %v573 = vld [vmem:[%s165 + $0xc90] sm:$0xff]
      %v574 = vld [vmem:[%s165 + $0xc98] sm:$0xff]
      %v575 = vld [vmem:[%s165 + $0xca0] sm:$0xff]
      %v576 = vld [vmem:[%s165 + $0xca8] sm:$0xff]
      %v577 = vld [vmem:[%s165 + $0xcb0] sm:$0xff]
      %v578 = vld [vmem:[%s165 + $0xcb8] sm:$0xff]
      %v579 = vld [vmem:[%s165 + $0xcc0] sm:$0xff]
      %v580 = vld [vmem:[%s165 + $0xcc8] sm:$0xff]
      %v581 = vld [vmem:[%s165 + $0xcd0] sm:$0xff]
      %v582 = vld [vmem:[%s165 + $0xcd8] sm:$0xff]
      %v583 = vld [vmem:[%s165 + $0xce0] sm:$0xff]
      %v584 = vld [vmem:[%s165 + $0xce8] sm:$0xff]
      %v585 = vld [vmem:[%s165 + $0xcf0] sm:$0xff]
      %v586 = vld [vmem:[%s165 + $0xcf8] sm:$0xff]
      %v587 = vld [vmem:[%s165 + $0xd00] sm:$0xff]
      %v588 = vld [vmem:[%s165 + $0xd08] sm:$0xff]
      %v589 = vld [vmem:[%s165 + $0xd10] sm:$0xff]
      %v590 = vld [vmem:[%s165 + $0xd18] sm:$0xff]
      %v591 = vld [vmem:[%s165 + $0xd20] sm:$0xff]
      %v592 = vld [vmem:[%s165 + $0xd28] sm:$0xff]
      %v593 = vld [vmem:[%s165 + $0xd30] sm:$0xff]
      %v594 = vld [vmem:[%s165 + $0xd38] sm:$0xff]
      %v595 = vld [vmem:[%s165 + $0xd40] sm:$0xff]
      %v596 = vld [vmem:[%s165 + $0xd48] sm:$0xff]
      %v597 = vld [vmem:[%s165 + $0xd50] sm:$0xff]
      %v598 = vld [vmem:[%s165 + $0xd58] sm:$0xff]
      %v599 = vld [vmem:[%s165 + $0xd60] sm:$0xff]
      %v600 = vld [vmem:[%s165 + $0xd68] sm:$0xff]
      %v601 = vld [vmem:[%s165 + $0xd70] sm:$0xff]
      %v602 = vld [vmem:[%s165 + $0xd78] sm:$0xff]
      %v603 = vld [vmem:[%s165 + $0xd80] sm:$0xff]
      %v604 = vld [vmem:[%s165 + $0xd88] sm:$0xff]
      %v605 = vld [vmem:[%s165 + $0xd90] sm:$0xff]
      %v606 = vld [vmem:[%s165 + $0xd98] sm:$0xff]
      %v607 = vld [vmem:[%s165 + $0xda0] sm:$0xff]
      %v608 = vld [vmem:[%s165 + $0xda8] sm:$0xff]
      %v609 = vld [vmem:[%s165 + $0xdb0] sm:$0xff]
      %v610 = vld [vmem:[%s165 + $0xdb8] sm:$0xff]
      %v611 = vld [vmem:[%s165 + $0xdc0] sm:$0xff]
      %v612 = vld [vmem:[%s165 + $0xdc8] sm:$0xff]
      %v613 = vld [vmem:[%s165 + $0xdd0] sm:$0xff]
      %v614 = vld [vmem:[%s165 + $0xdd8] sm:$0xff]
      %v615 = vld [vmem:[%s165 + $0xde0] sm:$0xff]
      %v616 = vld [vmem:[%s165 + $0xde8] sm:$0xff]
      %v617 = vld [vmem:[%s165 + $0xdf0] sm:$0xff]
      %v618 = vld [vmem:[%s165 + $0xdf8] sm:$0xff]
      %v619 = vld [vmem:[%s165 + $0xe00] sm:$0xff]
      %v620 = vld [vmem:[%s165 + $0xe08] sm:$0xff]
      %v621 = vld [vmem:[%s165 + $0xe10] sm:$0xff]
      %v622 = vld [vmem:[%s165 + $0xe18] sm:$0xff]
      %v623 = vld [vmem:[%s165 + $0xe20] sm:$0xff]
      %v624 = vld [vmem:[%s165 + $0xe28] sm:$0xff]
      %v625 = vld [vmem:[%s165 + $0xe30] sm:$0xff]
      %v626 = vld [vmem:[%s165 + $0xe38] sm:$0xff]
      %v627 = vld [vmem:[%s165 + $0xe40] sm:$0xff]
      %v628 = vld [vmem:[%s165 + $0xe48] sm:$0xff]
      %v629 = vld [vmem:[%s165 + $0xe50] sm:$0xff]
      %v630 = vld [vmem:[%s165 + $0xe58] sm:$0xff]
      %v631 = vld [vmem:[%s165 + $0xe60] sm:$0xff]
      %v632 = vld [vmem:[%s165 + $0xe68] sm:$0xff]
      %v633 = vld [vmem:[%s165 + $0xe70] sm:$0xff]
      %v634 = vld [vmem:[%s165 + $0xe78] sm:$0xff]
      %v635 = vld [vmem:[%s165 + $0xe80] sm:$0xff]
      %v636 = vld [vmem:[%s165 + $0xe88] sm:$0xff]
      %v637 = vld [vmem:[%s165 + $0xe90] sm:$0xff]
      %v638 = vld [vmem:[%s165 + $0xe98] sm:$0xff]
      %v639 = vld [vmem:[%s165 + $0xea0] sm:$0xff]
      %v640 = vld [vmem:[%s165 + $0xea8] sm:$0xff]
      %v641 = vld [vmem:[%s165 + $0xeb0] sm:$0xff]
      %v642 = vld [vmem:[%s165 + $0xeb8] sm:$0xff]
      %v643 = vld [vmem:[%s165 + $0xec0] sm:$0xff]
      %v644 = vld [vmem:[%s165 + $0xec8] sm:$0xff]
      %v645 = vld [vmem:[%s165 + $0xed0] sm:$0xff]
      %v646 = vld [vmem:[%s165 + $0xed8] sm:$0xff]
      %v647 = vld [vmem:[%s165 + $0xee0] sm:$0xff]
      %v648 = vld [vmem:[%s165 + $0xee8] sm:$0xff]
      %v649 = vld [vmem:[%s165 + $0xef0] sm:$0xff]
      %v650 = vld [vmem:[%s165 + $0xef8] sm:$0xff]
      %v651 = vld [vmem:[%s165 + $0xf00] sm:$0xff]
      %v652 = vld [vmem:[%s165 + $0xf08] sm:$0xff]
      %v653 = vld [vmem:[%s165 + $0xf10] sm:$0xff]
      %v654 = vld [vmem:[%s165 + $0xf18] sm:$0xff]
      %v655 = vld [vmem:[%s165 + $0xf20] sm:$0xff]
      %v656 = vld [vmem:[%s165 + $0xf28] sm:$0xff]
      %v657 = vld [vmem:[%s165 + $0xf30] sm:$0xff]
      %v658 = vld [vmem:[%s165 + $0xf38] sm:$0xff]
      %v659 = vld [vmem:[%s165 + $0xf40] sm:$0xff]
      %v660 = vld [vmem:[%s165 + $0xf48] sm:$0xff]
      %v661 = vld [vmem:[%s165 + $0xf50] sm:$0xff]
      %v662 = vld [vmem:[%s165 + $0xf58] sm:$0xff]
      %v663 = vld [vmem:[%s165 + $0xf60] sm:$0xff]
      %v664 = vld [vmem:[%s165 + $0xf68] sm:$0xff]
      %v665 = vld [vmem:[%s165 + $0xf70] sm:$0xff]
      %v666 = vld [vmem:[%s165 + $0xf78] sm:$0xff]
      %v667 = vld [vmem:[%s165 + $0xf80] sm:$0xff]
      %v668 = vld [vmem:[%s165 + $0xf88] sm:$0xff]
      %v669 = vld [vmem:[%s165 + $0xf90] sm:$0xff]
      %v670 = vld [vmem:[%s165 + $0xf98] sm:$0xff]
      %v671 = vld [vmem:[%s165 + $0xfa0] sm:$0xff]
      %v672 = vld [vmem:[%s165 + $0xfa8] sm:$0xff]
      %v673 = vld [vmem:[%s165 + $0xfb0] sm:$0xff]
      %v674 = vld [vmem:[%s165 + $0xfb8] sm:$0xff]
      %v675 = vld [vmem:[%s165 + $0xfc0] sm:$0xff]
      %v676 = vld [vmem:[%s165 + $0xfc8] sm:$0xff]
      %v677 = vld [vmem:[%s165 + $0xfd0] sm:$0xff]
      %v678 = vld [vmem:[%s165 + $0xfd8] sm:$0xff]
      %v679 = vld [vmem:[%s165 + $0xfe0] sm:$0xff]
      %v680 = vld [vmem:[%s165 + $0xfe8] sm:$0xff]
      %v681 = vld [vmem:[%s165 + $0xff0] sm:$0xff]
      %v682 = vld [vmem:[%s165 + $0xff8] sm:$0xff]
      %v683 = vld [vmem:[%s165 + $0x1000] sm:$0xff]
      %v684 = vld [vmem:[%s165 + $0x1008] sm:$0xff]
      %v685 = vld [vmem:[%s165 + $0x1010] sm:$0xff]
      %v686 = vld [vmem:[%s165 + $0x1018] sm:$0xff]
      %v687 = vld [vmem:[%s165 + $0x1020] sm:$0xff]
      %v688 = vld [vmem:[%s165 + $0x1028] sm:$0xff]
      %v689 = vld [vmem:[%s165 + $0x1030] sm:$0xff]
      %v690 = vld [vmem:[%s165 + $0x1038] sm:$0xff]
      %v691 = vld [vmem:[%s165 + $0x1040] sm:$0xff]
      %v692 = vld [vmem:[%s165 + $0x1048] sm:$0xff]
      %v693 = vld [vmem:[%s165 + $0x1050] sm:$0xff]
      %v694 = vld [vmem:[%s165 + $0x1058] sm:$0xff]
      %v695 = vld [vmem:[%s165 + $0x1060] sm:$0xff]
      %v696 = vld [vmem:[%s165 + $0x1068] sm:$0xff]
      %v697 = vld [vmem:[%s165 + $0x1070] sm:$0xff]
      %v698 = vld [vmem:[%s165 + $0x1078] sm:$0xff]
      %v699 = vld [vmem:[%s165 + $0x1080] sm:$0xff]
      %v700 = vld [vmem:[%s165 + $0x1088] sm:$0xff]
      %v701 = vld [vmem:[%s165 + $0x1090] sm:$0xff]
      %v702 = vld [vmem:[%s165 + $0x1098] sm:$0xff]
      %v703 = vld [vmem:[%s165 + $0x10a0] sm:$0xff]
      %v704 = vld [vmem:[%s165 + $0x10a8] sm:$0xff]
      %v705 = vld [vmem:[%s165 + $0x10b0] sm:$0xff]
      %v706 = vld [vmem:[%s165 + $0x10b8] sm:$0xff]
      %v707 = vld [vmem:[%s165 + $0x10c0] sm:$0xff]
      %v708 = vld [vmem:[%s165 + $0x10c8] sm:$0xff]
      %v709 = vld [vmem:[%s165 + $0x10d0] sm:$0xff]
      %v710 = vld [vmem:[%s165 + $0x10d8] sm:$0xff]
      %v711 = vld [vmem:[%s165 + $0x10e0] sm:$0xff]
      %v712 = vld [vmem:[%s165 + $0x10e8] sm:$0xff]
      %v713 = vld [vmem:[%s165 + $0x10f0] sm:$0xff]
      %v714 = vld [vmem:[%s165 + $0x10f8] sm:$0xff]
      %v715 = vld [vmem:[%s165 + $0x1100] sm:$0xff]
      %v716 = vld [vmem:[%s165 + $0x1108] sm:$0xff]
      %v717 = vld [vmem:[%s165 + $0x1110] sm:$0xff]
      %v718 = vld [vmem:[%s165 + $0x1118] sm:$0xff]
      %v719 = vld [vmem:[%s165 + $0x1120] sm:$0xff]
      %v720 = vld [vmem:[%s165 + $0x1128] sm:$0xff]
      %v721 = vld [vmem:[%s165 + $0x1130] sm:$0xff]
      %v722 = vld [vmem:[%s165 + $0x1138] sm:$0xff]
      %v723 = vld [vmem:[%s165 + $0x1140] sm:$0xff]
      %v724 = vld [vmem:[%s165 + $0x1148] sm:$0xff]
      %v725 = vld [vmem:[%s165 + $0x1150] sm:$0xff]
      %v726 = vld [vmem:[%s165 + $0x1158] sm:$0xff]
      %v727 = vld [vmem:[%s165 + $0x1160] sm:$0xff]
      %v728 = vld [vmem:[%s165 + $0x1168] sm:$0xff]
      %v729 = vld [vmem:[%s165 + $0x1170] sm:$0xff]
      %v730 = vld [vmem:[%s165 + $0x1178] sm:$0xff]
      %v731 = vld [vmem:[%s165 + $0x1180] sm:$0xff]
      %v732 = vld [vmem:[%s165 + $0x1188] sm:$0xff]
      %v733 = vld [vmem:[%s165 + $0x1190] sm:$0xff]
      %v734 = vld [vmem:[%s165 + $0x1198] sm:$0xff]
      %v735 = vld [vmem:[%s165 + $0x11a0] sm:$0xff]
      %v736 = vld [vmem:[%s165 + $0x11a8] sm:$0xff]
      %v737 = vld [vmem:[%s165 + $0x11b0] sm:$0xff]
      %v738 = vld [vmem:[%s165 + $0x11b8] sm:$0xff]
      %v739 = vld [vmem:[%s165 + $0x11c0] sm:$0xff]
      %v740 = vld [vmem:[%s165 + $0x11c8] sm:$0xff]
      %v741 = vld [vmem:[%s165 + $0x11d0] sm:$0xff]
      %v742 = vld [vmem:[%s165 + $0x11d8] sm:$0xff]
      %v743 = vld [vmem:[%s165 + $0x11e0] sm:$0xff]
      %v744 = vld [vmem:[%s165 + $0x11e8] sm:$0xff]
      %v745 = vld [vmem:[%s165 + $0x11f0] sm:$0xff]
      %v746 = vld [vmem:[%s165 + $0x11f8] sm:$0xff]
      %v747 = vld [vmem:[%s165 + $0x1200] sm:$0xff]
      %v748 = vld [vmem:[%s165 + $0x1208] sm:$0xff]
      %v749 = vld [vmem:[%s165 + $0x1210] sm:$0xff]
      %v750 = vld [vmem:[%s165 + $0x1218] sm:$0xff]
      %v751 = vld [vmem:[%s165 + $0x1220] sm:$0xff]
      %v752 = vld [vmem:[%s165 + $0x1228] sm:$0xff]
      %v753 = vld [vmem:[%s165 + $0x1230] sm:$0xff]
      %v754 = vld [vmem:[%s165 + $0x1238] sm:$0xff]
      %v755 = vld [vmem:[%s165 + $0x1240] sm:$0xff]
      %v756 = vld [vmem:[%s165 + $0x1248] sm:$0xff]
      %v757 = vld [vmem:[%s165 + $0x1250] sm:$0xff]
      %v758 = vld [vmem:[%s165 + $0x1258] sm:$0xff]
      %v759 = vld [vmem:[%s165 + $0x1260] sm:$0xff]
      %v760 = vld [vmem:[%s165 + $0x1268] sm:$0xff]
      %v761 = vld [vmem:[%s165 + $0x1270] sm:$0xff]
      %v762 = vld [vmem:[%s165 + $0x1278] sm:$0xff]
      %v763 = vld [vmem:[%s165 + $0x1280] sm:$0xff]
      %v764 = vld [vmem:[%s165 + $0x1288] sm:$0xff]
      %v765 = vld [vmem:[%s165 + $0x1290] sm:$0xff]
      %v766 = vld [vmem:[%s165 + $0x1298] sm:$0xff]
      %v767 = vld [vmem:[%s165 + $0x12a0] sm:$0xff]
      %v768 = vld [vmem:[%s165 + $0x12a8] sm:$0xff]
      %v769 = vld [vmem:[%s165 + $0x12b0] sm:$0xff]
      %v770 = vld [vmem:[%s165 + $0x12b8] sm:$0xff]
      %v771 = vld [vmem:[%s165 + $0x12c0] sm:$0xff]
      %v772 = vld [vmem:[%s165 + $0x12c8] sm:$0xff]
      %v773 = vld [vmem:[%s165 + $0x12d0] sm:$0xff]
      %v774 = vld [vmem:[%s165 + $0x12d8] sm:$0xff]
      %v775 = vld [vmem:[%s165 + $0x12e0] sm:$0xff]
      %v776 = vld [vmem:[%s165 + $0x12e8] sm:$0xff]
      %v777 = vld [vmem:[%s165 + $0x12f0] sm:$0xff]
      %v778 = vld [vmem:[%s165 + $0x12f8] sm:$0xff]
      %v779 = vld [vmem:[%s165 + $0x1300] sm:$0xff]
      %v780 = vld [vmem:[%s165 + $0x1308] sm:$0xff]
      %v781 = vld [vmem:[%s165 + $0x1310] sm:$0xff]
      %v782 = vld [vmem:[%s165 + $0x1318] sm:$0xff]
      %v783 = vld [vmem:[%s165 + $0x1320] sm:$0xff]
      %v784 = vld [vmem:[%s165 + $0x1328] sm:$0xff]
      %v785 = vld [vmem:[%s165 + $0x1330] sm:$0xff]
      %v786 = vld [vmem:[%s165 + $0x1338] sm:$0xff]
      %v787 = vld [vmem:[%s165 + $0x1340] sm:$0xff]
      %v788 = vld [vmem:[%s165 + $0x1348] sm:$0xff]
      %v789 = vld [vmem:[%s165 + $0x1350] sm:$0xff]
      %v790 = vld [vmem:[%s165 + $0x1358] sm:$0xff]
      %v791 = vld [vmem:[%s165 + $0x1360] sm:$0xff]
      %v792 = vld [vmem:[%s165 + $0x1368] sm:$0xff]
      %v793 = vld [vmem:[%s165 + $0x1370] sm:$0xff]
      %v794 = vld [vmem:[%s165 + $0x1378] sm:$0xff]
      %v795 = vld [vmem:[%s165 + $0x1380] sm:$0xff]
      %v796 = vld [vmem:[%s165 + $0x1388] sm:$0xff]
      %v797 = vld [vmem:[%s165 + $0x1390] sm:$0xff]
      %v798 = vld [vmem:[%s165 + $0x1398] sm:$0xff]
      %v799 = vld [vmem:[%s165 + $0x13a0] sm:$0xff]
      %v800 = vld [vmem:[%s165 + $0x13a8] sm:$0xff]
      %v801 = vld [vmem:[%s165 + $0x13b0] sm:$0xff]
      %v802 = vld [vmem:[%s165 + $0x13b8] sm:$0xff]
      %v803 = vld [vmem:[%s165 + $0x13c0] sm:$0xff]
      %v804 = vld [vmem:[%s165 + $0x13c8] sm:$0xff]
      %v805 = vld [vmem:[%s165 + $0x13d0] sm:$0xff]
      %v806 = vld [vmem:[%s165 + $0x13d8] sm:$0xff]
      %v807 = vld [vmem:[%s165 + $0x13e0] sm:$0xff]
      %v808 = vld [vmem:[%s165 + $0x13e8] sm:$0xff]
      %v809 = vld [vmem:[%s165 + $0x13f0] sm:$0xff]
      %v810 = vld [vmem:[%s165 + $0x13f8] sm:$0xff]
      %v811 = vld [vmem:[%s165 + $0x1400] sm:$0xff]
      %v812 = vld [vmem:[%s165 + $0x1408] sm:$0xff]
      %v813 = vld [vmem:[%s165 + $0x1410] sm:$0xff]
      %v814 = vld [vmem:[%s165 + $0x1418] sm:$0xff]
      %v815 = vld [vmem:[%s165 + $0x1420] sm:$0xff]
      %v816 = vld [vmem:[%s165 + $0x1428] sm:$0xff]
      %v817 = vld [vmem:[%s165 + $0x1430] sm:$0xff]
      %v818 = vld [vmem:[%s165 + $0x1438] sm:$0xff]
      %v819 = vld [vmem:[%s165 + $0x1440] sm:$0xff]
      %v820 = vld [vmem:[%s165 + $0x1448] sm:$0xff]
      %v821 = vld [vmem:[%s165 + $0x1450] sm:$0xff]
      %v822 = vld [vmem:[%s165 + $0x1458] sm:$0xff]
      %v823 = vld [vmem:[%s165 + $0x1460] sm:$0xff]
      %v824 = vld [vmem:[%s165 + $0x1468] sm:$0xff]
      %v825 = vld [vmem:[%s165 + $0x1470] sm:$0xff]
      %v826 = vld [vmem:[%s165 + $0x1478] sm:$0xff]
      %v827 = vld [vmem:[%s165 + $0x1480] sm:$0xff]
      %v828 = vld [vmem:[%s165 + $0x1488] sm:$0xff]
      %v829 = vld [vmem:[%s165 + $0x1490] sm:$0xff]
      %v830 = vld [vmem:[%s165 + $0x1498] sm:$0xff]
      %v831 = vld [vmem:[%s165 + $0x14a0] sm:$0xff]
      %v832 = vld [vmem:[%s165 + $0x14a8] sm:$0xff]
      %v833 = vld [vmem:[%s165 + $0x14b0] sm:$0xff]
      %v834 = vld [vmem:[%s165 + $0x14b8] sm:$0xff]
      %v835 = vld [vmem:[%s165 + $0x14c0] sm:$0xff]
      %v836 = vld [vmem:[%s165 + $0x14c8] sm:$0xff]
      %v837 = vld [vmem:[%s165 + $0x14d0] sm:$0xff]
      %v838 = vld [vmem:[%s165 + $0x14d8] sm:$0xff]
      %v839 = vld [vmem:[%s165 + $0x14e0] sm:$0xff]
      %v840 = vld [vmem:[%s165 + $0x14e8] sm:$0xff]
      %v841 = vld [vmem:[%s165 + $0x14f0] sm:$0xff]
      %v842 = vld [vmem:[%s165 + $0x14f8] sm:$0xff]
      %v843 = vld [vmem:[%s165 + $0x1500] sm:$0xff]
      %v844 = vld [vmem:[%s165 + $0x1508] sm:$0xff]
      %v845 = vld [vmem:[%s165 + $0x1510] sm:$0xff]
      %v846 = vld [vmem:[%s165 + $0x1518] sm:$0xff]
      %v847 = vld [vmem:[%s165 + $0x1520] sm:$0xff]
      %v848 = vld [vmem:[%s165 + $0x1528] sm:$0xff]
      %v849 = vld [vmem:[%s165 + $0x1530] sm:$0xff]
      %v850 = vld [vmem:[%s165 + $0x1538] sm:$0xff]
      %v851 = vld [vmem:[%s165 + $0x1540] sm:$0xff]
      %v852 = vld [vmem:[%s165 + $0x1548] sm:$0xff]
      %v853 = vld [vmem:[%s165 + $0x1550] sm:$0xff]
      %v854 = vld [vmem:[%s165 + $0x1558] sm:$0xff]
      %v855 = vld [vmem:[%s165 + $0x1560] sm:$0xff]
      %v856 = vld [vmem:[%s165 + $0x1568] sm:$0xff]
      %v857 = vld [vmem:[%s165 + $0x1570] sm:$0xff]
      %v858 = vld [vmem:[%s165 + $0x1578] sm:$0xff]
      %v859 = vld [vmem:[%s165 + $0x1580] sm:$0xff]
      %v860 = vld [vmem:[%s165 + $0x1588] sm:$0xff]
      %v861 = vld [vmem:[%s165 + $0x1590] sm:$0xff]
      %v862 = vld [vmem:[%s165 + $0x1598] sm:$0xff]
      %v863 = vld [vmem:[%s165 + $0x15a0] sm:$0xff]
      %v864 = vld [vmem:[%s165 + $0x15a8] sm:$0xff]
      %v865 = vld [vmem:[%s165 + $0x15b0] sm:$0xff]
      %v866 = vld [vmem:[%s165 + $0x15b8] sm:$0xff]
      %v867 = vld [vmem:[%s165 + $0x15c0] sm:$0xff]
      %v868 = vld [vmem:[%s165 + $0x15c8] sm:$0xff]
      %v869 = vld [vmem:[%s165 + $0x15d0] sm:$0xff]
      %v870 = vld [vmem:[%s165 + $0x15d8] sm:$0xff]
      %v871 = vld [vmem:[%s165 + $0x15e0] sm:$0xff]
      %v872 = vld [vmem:[%s165 + $0x15e8] sm:$0xff]
      %v873 = vld [vmem:[%s165 + $0x15f0] sm:$0xff]
      %v874 = vld [vmem:[%s165 + $0x15f8] sm:$0xff]
      %v875 = vld [vmem:[%s165 + $0x1600] sm:$0xff]
      %v876 = vld [vmem:[%s165 + $0x1608] sm:$0xff]
      %v877 = vld [vmem:[%s165 + $0x1610] sm:$0xff]
      %v878 = vld [vmem:[%s165 + $0x1618] sm:$0xff]
      %v879 = vld [vmem:[%s165 + $0x1620] sm:$0xff]
      %v880 = vld [vmem:[%s165 + $0x1628] sm:$0xff]
      %v881 = vld [vmem:[%s165 + $0x1630] sm:$0xff]
      %v882 = vld [vmem:[%s165 + $0x1638] sm:$0xff]
      %v883 = vld [vmem:[%s165 + $0x1640] sm:$0xff]
      %v884 = vld [vmem:[%s165 + $0x1648] sm:$0xff]
      %v885 = vld [vmem:[%s165 + $0x1650] sm:$0xff]
      %v886 = vld [vmem:[%s165 + $0x1658] sm:$0xff]
      %v887 = vld [vmem:[%s165 + $0x1660] sm:$0xff]
      %v888 = vld [vmem:[%s165 + $0x1668] sm:$0xff]
      %v889 = vld [vmem:[%s165 + $0x1670] sm:$0xff]
      %v890 = vld [vmem:[%s165 + $0x1678] sm:$0xff]
      %v891 = vld [vmem:[%s165 + $0x1680] sm:$0xff]
      %v892 = vld [vmem:[%s165 + $0x1688] sm:$0xff]
      %v893 = vld [vmem:[%s165 + $0x1690] sm:$0xff]
      %v894 = vld [vmem:[%s165 + $0x1698] sm:$0xff]
      %v895 = vld [vmem:[%s165 + $0x16a0] sm:$0xff]
      %v896 = vld [vmem:[%s165 + $0x16a8] sm:$0xff]
      %v897 = vld [vmem:[%s165 + $0x16b0] sm:$0xff]
      %v898 = vld [vmem:[%s165 + $0x16b8] sm:$0xff]
      %v899 = vld [vmem:[%s165 + $0x16c0] sm:$0xff]
      %v900 = vld [vmem:[%s165 + $0x16c8] sm:$0xff]
      %v901 = vld [vmem:[%s165 + $0x16d0] sm:$0xff]
      %v902 = vld [vmem:[%s165 + $0x16d8] sm:$0xff]
      %v903 = vld [vmem:[%s165 + $0x16e0] sm:$0xff]
      %v904 = vld [vmem:[%s165 + $0x16e8] sm:$0xff]
      %v905 = vld [vmem:[%s165 + $0x16f0] sm:$0xff]
      %v906 = vld [vmem:[%s165 + $0x16f8] sm:$0xff]
      %v907 = vld [vmem:[%s165 + $0x1700] sm:$0xff]
      %v908 = vld [vmem:[%s165 + $0x1708] sm:$0xff]
      %v909 = vld [vmem:[%s165 + $0x1710] sm:$0xff]
      %v910 = vld [vmem:[%s165 + $0x1718] sm:$0xff]
      %v911 = vld [vmem:[%s165 + $0x1720] sm:$0xff]
      %v912 = vld [vmem:[%s165 + $0x1728] sm:$0xff]
      %v913 = vld [vmem:[%s165 + $0x1730] sm:$0xff]
      %v914 = vld [vmem:[%s165 + $0x1738] sm:$0xff]
      %v915 = vld [vmem:[%s165 + $0x1740] sm:$0xff]
      %v916 = vld [vmem:[%s165 + $0x1748] sm:$0xff]
      %v917 = vld [vmem:[%s165 + $0x1750] sm:$0xff]
      %v918 = vld [vmem:[%s165 + $0x1758] sm:$0xff]
      %v919 = vld [vmem:[%s165 + $0x1760] sm:$0xff]
      %v920 = vld [vmem:[%s165 + $0x1768] sm:$0xff]
      %v921 = vld [vmem:[%s165 + $0x1770] sm:$0xff]
      %v922 = vld [vmem:[%s165 + $0x1778] sm:$0xff]
      %v923 = vld [vmem:[%s165 + $0x1780] sm:$0xff]
      %v924 = vld [vmem:[%s165 + $0x1788] sm:$0xff]
      %v925 = vld [vmem:[%s165 + $0x1790] sm:$0xff]
      %v926 = vld [vmem:[%s165 + $0x1798] sm:$0xff]
      %v927 = vld [vmem:[%s165 + $0x17a0] sm:$0x3]
      %v928 = vld [vmem:[%s1] sm:$0xff]
      %v929 = vld [vmem:[%s1 + $0x8] sm:$0xff]
      %v930 = vld [vmem:[%s1 + $0x10] sm:$0xff]
      %v931 = vld [vmem:[%s1 + $0x18] sm:$0xff]
      %v932 = vld [vmem:[%s1 + $0x20] sm:$0xff]
      %v933 = vld [vmem:[%s1 + $0x28] sm:$0xff]
      %v934 = vld [vmem:[%s1 + $0x30] sm:$0xff]
      %v935 = vld [vmem:[%s1 + $0x38] sm:$0xff]
      %v936 = vld [vmem:[%s1 + $0x40] sm:$0xff]
      %v937 = vld [vmem:[%s1 + $0x48] sm:$0x7]
      %v938 = vld [vmem:[%s2] sm:$0x1]
      %v940 = vlaneseq
      %v941 = vshrl.u32 %v940, 7
      %v942 = vsub.s32 0, %v941
      %v943 = vrot.slane %v938, %v942
      %vm945 = vcmask 613376
      %v947 = vsel %vm945, %v171, 0
      %v950 = vsel %vm945, %v172, 0
      %v953 = vsel %vm945, %v173, 0
      %v956 = vsel %vm945, %v174, 0
      %v959 = vsel %vm945, %v175, 0
      %v962 = vsel %vm945, %v176, 0
      %v965 = vsel %vm945, %v177, 0
      %v968 = vsel %vm945, %v178, 0
      %v971 = vsel %vm945, %v179, 0
      %v974 = vsel %vm945, %v180, 0
      %v977 = vsel %vm945, %v181, 0
      %v980 = vsel %vm945, %v182, 0
      %v983 = vsel %vm945, %v183, 0
      %v986 = vsel %vm945, %v184, 0
      %v989 = vsel %vm945, %v185, 0
      %v992 = vsel %vm945, %v186, 0
      %v995 = vsel %vm945, %v187, 0
      %v998 = vsel %vm945, %v188, 0
      %v1001 = vsel %vm945, %v189, 0
      %v1004 = vsel %vm945, %v190, 0
      %v1007 = vsel %vm945, %v191, 0
      %v1010 = vsel %vm945, %v192, 0
      %v1013 = vsel %vm945, %v193, 0
      %v1016 = vsel %vm945, %v194, 0
      %v1019 = vsel %vm945, %v195, 0
      %v1022 = vsel %vm945, %v196, 0
      %v1025 = vsel %vm945, %v197, 0
      %v1028 = vsel %vm945, %v198, 0
      %v1031 = vsel %vm945, %v199, 0
      %v1034 = vsel %vm945, %v200, 0
      %v1037 = vsel %vm945, %v201, 0
      %v1040 = vsel %vm945, %v202, 0
      %v1043 = vsel %vm945, %v203, 0
      %v1046 = vsel %vm945, %v204, 0
      %v1049 = vsel %vm945, %v205, 0
      %v1052 = vsel %vm945, %v206, 0
      %v1055 = vsel %vm945, %v207, 0
      %v1058 = vsel %vm945, %v208, 0
      %v1061 = vsel %vm945, %v209, 0
      %v1064 = vsel %vm945, %v210, 0
      %v1067 = vsel %vm945, %v211, 0
      %v1070 = vsel %vm945, %v212, 0
      %v1073 = vsel %vm945, %v213, 0
      %v1076 = vsel %vm945, %v214, 0
      %v1079 = vsel %vm945, %v215, 0
      %v1082 = vsel %vm945, %v216, 0
      %v1085 = vsel %vm945, %v217, 0
      %v1088 = vsel %vm945, %v218, 0
      %v1091 = vsel %vm945, %v219, 0
      %v1094 = vsel %vm945, %v220, 0
      %v1097 = vsel %vm945, %v221, 0
      %v1100 = vsel %vm945, %v222, 0
      %v1103 = vsel %vm945, %v223, 0
      %v1106 = vsel %vm945, %v224, 0
      %v1109 = vsel %vm945, %v225, 0
      %v1112 = vsel %vm945, %v226, 0
      %v1115 = vsel %vm945, %v227, 0
      %v1118 = vsel %vm945, %v228, 0
      %v1121 = vsel %vm945, %v229, 0
      %v1124 = vsel %vm945, %v230, 0
      %v1127 = vsel %vm945, %v231, 0
      %v1130 = vsel %vm945, %v232, 0
      %v1133 = vsel %vm945, %v233, 0
      %v1136 = vsel %vm945, %v234, 0
      %v1139 = vsel %vm945, %v235, 0
      %v1142 = vsel %vm945, %v236, 0
      %v1145 = vsel %vm945, %v237, 0
      %v1148 = vsel %vm945, %v238, 0
      %v1151 = vsel %vm945, %v239, 0
      %v1154 = vsel %vm945, %v240, 0
      %v1157 = vsel %vm945, %v241, 0
      %v1160 = vsel %vm945, %v242, 0
      %v1163 = vsel %vm945, %v243, 0
      %v1166 = vsel %vm945, %v244, 0
      %v1169 = vsel %vm945, %v245, 0
      %v1172 = vsel %vm945, %v246, 0
      %v1175 = vsel %vm945, %v247, 0
      %v1178 = vsel %vm945, %v248, 0
      %v1181 = vsel %vm945, %v249, 0
      %v1184 = vsel %vm945, %v250, 0
      %v1187 = vsel %vm945, %v251, 0
      %v1190 = vsel %vm945, %v252, 0
      %v1193 = vsel %vm945, %v253, 0
      %v1196 = vsel %vm945, %v254, 0
      %v1199 = vsel %vm945, %v255, 0
      %v1202 = vsel %vm945, %v256, 0
      %v1205 = vsel %vm945, %v257, 0
      %v1208 = vsel %vm945, %v258, 0
      %v1211 = vsel %vm945, %v259, 0
      %v1214 = vsel %vm945, %v260, 0
      %v1217 = vsel %vm945, %v261, 0
      %v1220 = vsel %vm945, %v262, 0
      %v1223 = vsel %vm945, %v263, 0
      %v1226 = vsel %vm945, %v264, 0
      %v1229 = vsel %vm945, %v265, 0
      %v1232 = vsel %vm945, %v266, 0
      %v1235 = vsel %vm945, %v267, 0
      %v1238 = vsel %vm945, %v268, 0
      %v1241 = vsel %vm945, %v269, 0
      %v1244 = vsel %vm945, %v270, 0
      %v1247 = vsel %vm945, %v271, 0
      %v1250 = vsel %vm945, %v272, 0
      %v1253 = vsel %vm945, %v273, 0
      %v1256 = vsel %vm945, %v274, 0
      %v1259 = vsel %vm945, %v275, 0
      %v1262 = vsel %vm945, %v276, 0
      %v1265 = vsel %vm945, %v277, 0
      %v1268 = vsel %vm945, %v278, 0
      %v1271 = vsel %vm945, %v279, 0
      %v1274 = vsel %vm945, %v280, 0
      %v1277 = vsel %vm945, %v281, 0
      %v1280 = vsel %vm945, %v282, 0
      %v1283 = vsel %vm945, %v283, 0
      %v1286 = vsel %vm945, %v284, 0
      %v1289 = vsel %vm945, %v285, 0
      %v1292 = vsel %vm945, %v286, 0
      %v1295 = vsel %vm945, %v287, 0
      %v1298 = vsel %vm945, %v288, 0
      %v1301 = vsel %vm945, %v289, 0
      %v1304 = vsel %vm945, %v290, 0
      %v1307 = vsel %vm945, %v291, 0
      %v1310 = vsel %vm945, %v292, 0
      %v1313 = vsel %vm945, %v293, 0
      %v1316 = vsel %vm945, %v294, 0
      %v1319 = vsel %vm945, %v295, 0
      %v1322 = vsel %vm945, %v296, 0
      %v1325 = vsel %vm945, %v297, 0
      %v1328 = vsel %vm945, %v298, 0
      %v1331 = vsel %vm945, %v299, 0
      %v1334 = vsel %vm945, %v300, 0
      %v1337 = vsel %vm945, %v301, 0
      %v1340 = vsel %vm945, %v302, 0
      %v1343 = vsel %vm945, %v303, 0
      %v1346 = vsel %vm945, %v304, 0
      %v1349 = vsel %vm945, %v305, 0
      %v1352 = vsel %vm945, %v306, 0
      %v1355 = vsel %vm945, %v307, 0
      %v1358 = vsel %vm945, %v308, 0
      %v1361 = vsel %vm945, %v309, 0
      %v1364 = vsel %vm945, %v310, 0
      %v1367 = vsel %vm945, %v311, 0
      %v1370 = vsel %vm945, %v312, 0
      %v1373 = vsel %vm945, %v313, 0
      %v1376 = vsel %vm945, %v314, 0
      %v1379 = vsel %vm945, %v315, 0
      %v1382 = vsel %vm945, %v316, 0
      %v1385 = vsel %vm945, %v317, 0
      %v1388 = vsel %vm945, %v318, 0
      %v1391 = vsel %vm945, %v319, 0
      %v1394 = vsel %vm945, %v320, 0
      %v1397 = vsel %vm945, %v321, 0
      %v1400 = vsel %vm945, %v322, 0
      %v1403 = vsel %vm945, %v323, 0
      %v1406 = vsel %vm945, %v324, 0
      %v1409 = vsel %vm945, %v325, 0
      %v1412 = vsel %vm945, %v326, 0
      %v1415 = vsel %vm945, %v327, 0
      %v1418 = vsel %vm945, %v328, 0
      %v1421 = vsel %vm945, %v329, 0
      %v1424 = vsel %vm945, %v330, 0
      %v1427 = vsel %vm945, %v331, 0
      %v1430 = vsel %vm945, %v332, 0
      %v1433 = vsel %vm945, %v333, 0
      %v1436 = vsel %vm945, %v334, 0
      %v1439 = vsel %vm945, %v335, 0
      %v1442 = vsel %vm945, %v336, 0
      %v1445 = vsel %vm945, %v337, 0
      %v1448 = vsel %vm945, %v338, 0
      %v1451 = vsel %vm945, %v339, 0
      %v1454 = vsel %vm945, %v340, 0
      %v1457 = vsel %vm945, %v341, 0
      %v1460 = vsel %vm945, %v342, 0
      %v1463 = vsel %vm945, %v343, 0
      %v1466 = vsel %vm945, %v344, 0
      %v1469 = vsel %vm945, %v345, 0
      %v1472 = vsel %vm945, %v346, 0
      %v1475 = vsel %vm945, %v347, 0
      %v1478 = vsel %vm945, %v348, 0
      %v1481 = vsel %vm945, %v349, 0
      %v1484 = vsel %vm945, %v350, 0
      %v1487 = vsel %vm945, %v351, 0
      %v1490 = vsel %vm945, %v352, 0
      %v1493 = vsel %vm945, %v353, 0
      %v1496 = vsel %vm945, %v354, 0
      %v1499 = vsel %vm945, %v355, 0
      %v1502 = vsel %vm945, %v356, 0
      %v1505 = vsel %vm945, %v357, 0
      %v1508 = vsel %vm945, %v358, 0
      %v1511 = vsel %vm945, %v359, 0
      %v1514 = vsel %vm945, %v360, 0
      %v1517 = vsel %vm945, %v361, 0
      %v1520 = vsel %vm945, %v362, 0
      %v1523 = vsel %vm945, %v363, 0
      %v1526 = vsel %vm945, %v364, 0
      %v1529 = vsel %vm945, %v365, 0
      %v1532 = vsel %vm945, %v366, 0
      %v1535 = vsel %vm945, %v367, 0
      %v1538 = vsel %vm945, %v368, 0
      %v1541 = vsel %vm945, %v369, 0
      %v1544 = vsel %vm945, %v370, 0
      %v1547 = vsel %vm945, %v371, 0
      %v1550 = vsel %vm945, %v372, 0
      %v1553 = vsel %vm945, %v373, 0
      %v1556 = vsel %vm945, %v374, 0
      %v1559 = vsel %vm945, %v375, 0
      %v1562 = vsel %vm945, %v376, 0
      %v1565 = vsel %vm945, %v377, 0
      %v1568 = vsel %vm945, %v378, 0
      %v1571 = vsel %vm945, %v379, 0
      %v1574 = vsel %vm945, %v380, 0
      %v1577 = vsel %vm945, %v381, 0
      %v1580 = vsel %vm945, %v382, 0
      %v1583 = vsel %vm945, %v383, 0
      %v1586 = vsel %vm945, %v384, 0
      %v1589 = vsel %vm945, %v385, 0
      %v1592 = vsel %vm945, %v386, 0
      %v1595 = vsel %vm945, %v387, 0
      %v1598 = vsel %vm945, %v388, 0
      %v1601 = vsel %vm945, %v389, 0
      %v1604 = vsel %vm945, %v390, 0
      %v1607 = vsel %vm945, %v391, 0
      %v1610 = vsel %vm945, %v392, 0
      %v1613 = vsel %vm945, %v393, 0
      %v1616 = vsel %vm945, %v394, 0
      %v1619 = vsel %vm945, %v395, 0
      %v1622 = vsel %vm945, %v396, 0
      %v1625 = vsel %vm945, %v397, 0
      %v1628 = vsel %vm945, %v398, 0
      %v1631 = vsel %vm945, %v399, 0
      %v1634 = vsel %vm945, %v400, 0
      %v1637 = vsel %vm945, %v401, 0
      %v1640 = vsel %vm945, %v402, 0
      %v1643 = vsel %vm945, %v403, 0
      %v1646 = vsel %vm945, %v404, 0
      %v1649 = vsel %vm945, %v405, 0
      %v1652 = vsel %vm945, %v406, 0
      %v1655 = vsel %vm945, %v407, 0
      %v1658 = vsel %vm945, %v408, 0
      %v1661 = vsel %vm945, %v409, 0
      %v1664 = vsel %vm945, %v410, 0
      %v1667 = vsel %vm945, %v411, 0
      %v1670 = vsel %vm945, %v412, 0
      %v1673 = vsel %vm945, %v413, 0
      %v1676 = vsel %vm945, %v414, 0
      %v1679 = vsel %vm945, %v415, 0
      %v1682 = vsel %vm945, %v416, 0
      %v1685 = vsel %vm945, %v417, 0
      %v1688 = vsel %vm945, %v418, 0
      %v1691 = vsel %vm945, %v419, 0
      %v1694 = vsel %vm945, %v420, 0
      %v1697 = vsel %vm945, %v421, 0
      %v1700 = vsel %vm945, %v422, 0
      %v1703 = vsel %vm945, %v423, 0
      %v1706 = vsel %vm945, %v424, 0
      %v1709 = vsel %vm945, %v425, 0
      %v1712 = vsel %vm945, %v426, 0
      %v1715 = vsel %vm945, %v427, 0
      %v1718 = vsel %vm945, %v428, 0
      %v1721 = vsel %vm945, %v429, 0
      %v1724 = vsel %vm945, %v430, 0
      %v1727 = vsel %vm945, %v431, 0
      %v1730 = vsel %vm945, %v432, 0
      %v1733 = vsel %vm945, %v433, 0
      %v1736 = vsel %vm945, %v434, 0
      %v1739 = vsel %vm945, %v435, 0
      %v1742 = vsel %vm945, %v436, 0
      %v1745 = vsel %vm945, %v437, 0
      %v1748 = vsel %vm945, %v438, 0
      %v1751 = vsel %vm945, %v439, 0
      %v1754 = vsel %vm945, %v440, 0
      %v1757 = vsel %vm945, %v441, 0
      %v1760 = vsel %vm945, %v442, 0
      %v1763 = vsel %vm945, %v443, 0
      %v1766 = vsel %vm945, %v444, 0
      %v1769 = vsel %vm945, %v445, 0
      %v1772 = vsel %vm945, %v446, 0
      %v1775 = vsel %vm945, %v447, 0
      %v1778 = vsel %vm945, %v448, 0
      %v1781 = vsel %vm945, %v449, 0
      %v1784 = vsel %vm945, %v450, 0
      %v1787 = vsel %vm945, %v451, 0
      %v1790 = vsel %vm945, %v452, 0
      %v1793 = vsel %vm945, %v453, 0
      %v1796 = vsel %vm945, %v454, 0
      %v1799 = vsel %vm945, %v455, 0
      %v1802 = vsel %vm945, %v456, 0
      %v1805 = vsel %vm945, %v457, 0
      %v1808 = vsel %vm945, %v458, 0
      %v1811 = vsel %vm945, %v459, 0
      %v1814 = vsel %vm945, %v460, 0
      %v1817 = vsel %vm945, %v461, 0
      %v1820 = vsel %vm945, %v462, 0
      %v1823 = vsel %vm945, %v463, 0
      %v1826 = vsel %vm945, %v464, 0
      %v1829 = vsel %vm945, %v465, 0
      %v1832 = vsel %vm945, %v466, 0
      %v1835 = vsel %vm945, %v467, 0
      %v1838 = vsel %vm945, %v468, 0
      %v1841 = vsel %vm945, %v469, 0
      %v1844 = vsel %vm945, %v470, 0
      %v1847 = vsel %vm945, %v471, 0
      %v1850 = vsel %vm945, %v472, 0
      %v1853 = vsel %vm945, %v473, 0
      %v1856 = vsel %vm945, %v474, 0
      %v1859 = vsel %vm945, %v475, 0
      %v1862 = vsel %vm945, %v476, 0
      %v1865 = vsel %vm945, %v477, 0
      %v1868 = vsel %vm945, %v478, 0
      %v1871 = vsel %vm945, %v479, 0
      %v1874 = vsel %vm945, %v480, 0
      %v1877 = vsel %vm945, %v481, 0
      %v1880 = vsel %vm945, %v482, 0
      %v1883 = vsel %vm945, %v483, 0
      %v1886 = vsel %vm945, %v484, 0
      %v1889 = vsel %vm945, %v485, 0
      %v1892 = vsel %vm945, %v486, 0
      %v1895 = vsel %vm945, %v487, 0
      %v1898 = vsel %vm945, %v488, 0
      %v1901 = vsel %vm945, %v489, 0
      %v1904 = vsel %vm945, %v490, 0
      %v1907 = vsel %vm945, %v491, 0
      %v1910 = vsel %vm945, %v492, 0
      %v1913 = vsel %vm945, %v493, 0
      %v1916 = vsel %vm945, %v494, 0
      %v1919 = vsel %vm945, %v495, 0
      %v1922 = vsel %vm945, %v496, 0
      %v1925 = vsel %vm945, %v497, 0
      %v1928 = vsel %vm945, %v498, 0
      %v1931 = vsel %vm945, %v499, 0
      %v1934 = vsel %vm945, %v500, 0
      %v1937 = vsel %vm945, %v501, 0
      %v1940 = vsel %vm945, %v502, 0
      %v1943 = vsel %vm945, %v503, 0
      %v1946 = vsel %vm945, %v504, 0
      %v1949 = vsel %vm945, %v505, 0
      %v1952 = vsel %vm945, %v506, 0
      %v1955 = vsel %vm945, %v507, 0
      %v1958 = vsel %vm945, %v508, 0
      %v1961 = vsel %vm945, %v509, 0
      %v1964 = vsel %vm945, %v510, 0
      %v1967 = vsel %vm945, %v511, 0
      %v1970 = vsel %vm945, %v512, 0
      %v1973 = vsel %vm945, %v513, 0
      %v1976 = vsel %vm945, %v514, 0
      %v1979 = vsel %vm945, %v515, 0
      %v1982 = vsel %vm945, %v516, 0
      %v1985 = vsel %vm945, %v517, 0
      %v1988 = vsel %vm945, %v518, 0
      %v1991 = vsel %vm945, %v519, 0
      %v1994 = vsel %vm945, %v520, 0
      %v1997 = vsel %vm945, %v521, 0
      %v2000 = vsel %vm945, %v522, 0
      %v2003 = vsel %vm945, %v523, 0
      %v2006 = vsel %vm945, %v524, 0
      %v2009 = vsel %vm945, %v525, 0
      %v2012 = vsel %vm945, %v526, 0
      %v2015 = vsel %vm945, %v527, 0
      %v2018 = vsel %vm945, %v528, 0
      %v2021 = vsel %vm945, %v529, 0
      %v2024 = vsel %vm945, %v530, 0
      %v2027 = vsel %vm945, %v531, 0
      %v2030 = vsel %vm945, %v532, 0
      %v2033 = vsel %vm945, %v533, 0
      %v2036 = vsel %vm945, %v534, 0
      %v2039 = vsel %vm945, %v535, 0
      %v2042 = vsel %vm945, %v536, 0
      %v2045 = vsel %vm945, %v537, 0
      %v2048 = vsel %vm945, %v538, 0
      %v2051 = vsel %vm945, %v539, 0
      %v2054 = vsel %vm945, %v540, 0
      %v2057 = vsel %vm945, %v541, 0
      %v2060 = vsel %vm945, %v542, 0
      %v2063 = vsel %vm945, %v543, 0
      %v2066 = vsel %vm945, %v544, 0
      %v2069 = vsel %vm945, %v545, 0
      %v2072 = vsel %vm945, %v546, 0
      %v2075 = vsel %vm945, %v547, 0
      %v2078 = vsel %vm945, %v548, 0
      %v2081 = vsel %vm945, %v549, 0
      %v2084 = vsel %vm945, %v550, 0
      %v2087 = vsel %vm945, %v551, 0
      %v2090 = vsel %vm945, %v552, 0
      %v2093 = vsel %vm945, %v553, 0
      %v2096 = vsel %vm945, %v554, 0
      %v2099 = vsel %vm945, %v555, 0
      %v2102 = vsel %vm945, %v556, 0
      %v2105 = vsel %vm945, %v557, 0
      %v2108 = vsel %vm945, %v558, 0
      %v2111 = vsel %vm945, %v559, 0
      %v2114 = vsel %vm945, %v560, 0
      %v2117 = vsel %vm945, %v561, 0
      %v2120 = vsel %vm945, %v562, 0
      %v2123 = vsel %vm945, %v563, 0
      %v2126 = vsel %vm945, %v564, 0
      %v2129 = vsel %vm945, %v565, 0
      %v2132 = vsel %vm945, %v566, 0
      %v2135 = vsel %vm945, %v567, 0
      %v2138 = vsel %vm945, %v568, 0
      %v2141 = vsel %vm945, %v569, 0
      %v2144 = vsel %vm945, %v570, 0
      %v2147 = vsel %vm945, %v571, 0
      %v2150 = vsel %vm945, %v572, 0
      %v2153 = vsel %vm945, %v573, 0
      %v2156 = vsel %vm945, %v574, 0
      %v2159 = vsel %vm945, %v575, 0
      %v2162 = vsel %vm945, %v576, 0
      %v2165 = vsel %vm945, %v577, 0
      %v2168 = vsel %vm945, %v578, 0
      %v2171 = vsel %vm945, %v579, 0
      %v2174 = vsel %vm945, %v580, 0
      %v2177 = vsel %vm945, %v581, 0
      %v2180 = vsel %vm945, %v582, 0
      %v2183 = vsel %vm945, %v583, 0
      %v2186 = vsel %vm945, %v584, 0
      %v2189 = vsel %vm945, %v585, 0
      %v2192 = vsel %vm945, %v586, 0
      %v2195 = vsel %vm945, %v587, 0
      %v2198 = vsel %vm945, %v588, 0
      %v2201 = vsel %vm945, %v589, 0
      %v2204 = vsel %vm945, %v590, 0
      %v2207 = vsel %vm945, %v591, 0
      %v2210 = vsel %vm945, %v592, 0
      %v2213 = vsel %vm945, %v593, 0
      %v2216 = vsel %vm945, %v594, 0
      %v2219 = vsel %vm945, %v595, 0
      %v2222 = vsel %vm945, %v596, 0
      %v2225 = vsel %vm945, %v597, 0
      %v2228 = vsel %vm945, %v598, 0
      %v2231 = vsel %vm945, %v599, 0
      %v2234 = vsel %vm945, %v600, 0
      %v2237 = vsel %vm945, %v601, 0
      %v2240 = vsel %vm945, %v602, 0
      %v2243 = vsel %vm945, %v603, 0
      %v2246 = vsel %vm945, %v604, 0
      %v2249 = vsel %vm945, %v605, 0
      %v2252 = vsel %vm945, %v606, 0
      %v2255 = vsel %vm945, %v607, 0
      %v2258 = vsel %vm945, %v608, 0
      %v2261 = vsel %vm945, %v609, 0
      %v2264 = vsel %vm945, %v610, 0
      %v2267 = vsel %vm945, %v611, 0
      %v2270 = vsel %vm945, %v612, 0
      %v2273 = vsel %vm945, %v613, 0
      %v2276 = vsel %vm945, %v614, 0
      %v2279 = vsel %vm945, %v615, 0
      %v2282 = vsel %vm945, %v616, 0
      %v2285 = vsel %vm945, %v617, 0
      %v2288 = vsel %vm945, %v618, 0
      %v2291 = vsel %vm945, %v619, 0
      %v2294 = vsel %vm945, %v620, 0
      %v2297 = vsel %vm945, %v621, 0
      %v2300 = vsel %vm945, %v622, 0
      %v2303 = vsel %vm945, %v623, 0
      %v2306 = vsel %vm945, %v624, 0
      %v2309 = vsel %vm945, %v625, 0
      %v2312 = vsel %vm945, %v626, 0
      %v2315 = vsel %vm945, %v627, 0
      %v2318 = vsel %vm945, %v628, 0
      %v2321 = vsel %vm945, %v629, 0
      %v2324 = vsel %vm945, %v630, 0
      %v2327 = vsel %vm945, %v631, 0
      %v2330 = vsel %vm945, %v632, 0
      %v2333 = vsel %vm945, %v633, 0
      %v2336 = vsel %vm945, %v634, 0
      %v2339 = vsel %vm945, %v635, 0
      %v2342 = vsel %vm945, %v636, 0
      %v2345 = vsel %vm945, %v637, 0
      %v2348 = vsel %vm945, %v638, 0
      %v2351 = vsel %vm945, %v639, 0
      %v2354 = vsel %vm945, %v640, 0
      %v2357 = vsel %vm945, %v641, 0
      %v2360 = vsel %vm945, %v642, 0
      %v2363 = vsel %vm945, %v643, 0
      %v2366 = vsel %vm945, %v644, 0
      %v2369 = vsel %vm945, %v645, 0
      %v2372 = vsel %vm945, %v646, 0
      %v2375 = vsel %vm945, %v647, 0
      %v2378 = vsel %vm945, %v648, 0
      %v2381 = vsel %vm945, %v649, 0
      %v2384 = vsel %vm945, %v650, 0
      %v2387 = vsel %vm945, %v651, 0
      %v2390 = vsel %vm945, %v652, 0
      %v2393 = vsel %vm945, %v653, 0
      %v2396 = vsel %vm945, %v654, 0
      %v2399 = vsel %vm945, %v655, 0
      %v2402 = vsel %vm945, %v656, 0
      %v2405 = vsel %vm945, %v657, 0
      %v2408 = vsel %vm945, %v658, 0
      %v2411 = vsel %vm945, %v659, 0
      %v2414 = vsel %vm945, %v660, 0
      %v2417 = vsel %vm945, %v661, 0
      %v2420 = vsel %vm945, %v662, 0
      %v2423 = vsel %vm945, %v663, 0
      %v2426 = vsel %vm945, %v664, 0
      %v2429 = vsel %vm945, %v665, 0
      %v2432 = vsel %vm945, %v666, 0
      %v2435 = vsel %vm945, %v667, 0
      %v2438 = vsel %vm945, %v668, 0
      %v2441 = vsel %vm945, %v669, 0
      %v2444 = vsel %vm945, %v670, 0
      %v2447 = vsel %vm945, %v671, 0
      %v2450 = vsel %vm945, %v672, 0
      %v2453 = vsel %vm945, %v673, 0
      %v2456 = vsel %vm945, %v674, 0
      %v2459 = vsel %vm945, %v675, 0
      %v2462 = vsel %vm945, %v676, 0
      %v2465 = vsel %vm945, %v677, 0
      %v2468 = vsel %vm945, %v678, 0
      %v2471 = vsel %vm945, %v679, 0
      %v2474 = vsel %vm945, %v680, 0
      %v2477 = vsel %vm945, %v681, 0
      %v2480 = vsel %vm945, %v682, 0
      %v2483 = vsel %vm945, %v683, 0
      %v2486 = vsel %vm945, %v684, 0
      %v2489 = vsel %vm945, %v685, 0
      %v2492 = vsel %vm945, %v686, 0
      %v2495 = vsel %vm945, %v687, 0
      %v2498 = vsel %vm945, %v688, 0
      %v2501 = vsel %vm945, %v689, 0
      %v2504 = vsel %vm945, %v690, 0
      %v2507 = vsel %vm945, %v691, 0
      %v2510 = vsel %vm945, %v692, 0
      %v2513 = vsel %vm945, %v693, 0
      %v2516 = vsel %vm945, %v694, 0
      %v2519 = vsel %vm945, %v695, 0
      %v2522 = vsel %vm945, %v696, 0
      %v2525 = vsel %vm945, %v697, 0
      %v2528 = vsel %vm945, %v698, 0
      %v2531 = vsel %vm945, %v699, 0
      %v2534 = vsel %vm945, %v700, 0
      %v2537 = vsel %vm945, %v701, 0
      %v2540 = vsel %vm945, %v702, 0
      %v2543 = vsel %vm945, %v703, 0
      %v2546 = vsel %vm945, %v704, 0
      %v2549 = vsel %vm945, %v705, 0
      %v2552 = vsel %vm945, %v706, 0
      %v2555 = vsel %vm945, %v707, 0
      %v2558 = vsel %vm945, %v708, 0
      %v2561 = vsel %vm945, %v709, 0
      %v2564 = vsel %vm945, %v710, 0
      %v2567 = vsel %vm945, %v711, 0
      %v2570 = vsel %vm945, %v712, 0
      %v2573 = vsel %vm945, %v713, 0
      %v2576 = vsel %vm945, %v714, 0
      %v2579 = vsel %vm945, %v715, 0
      %v2582 = vsel %vm945, %v716, 0
      %v2585 = vsel %vm945, %v717, 0
      %v2588 = vsel %vm945, %v718, 0
      %v2591 = vsel %vm945, %v719, 0
      %v2594 = vsel %vm945, %v720, 0
      %v2597 = vsel %vm945, %v721, 0
      %v2600 = vsel %vm945, %v722, 0
      %v2603 = vsel %vm945, %v723, 0
      %v2606 = vsel %vm945, %v724, 0
      %v2609 = vsel %vm945, %v725, 0
      %v2612 = vsel %vm945, %v726, 0
      %v2615 = vsel %vm945, %v727, 0
      %v2618 = vsel %vm945, %v728, 0
      %v2621 = vsel %vm945, %v729, 0
      %v2624 = vsel %vm945, %v730, 0
      %v2627 = vsel %vm945, %v731, 0
      %v2630 = vsel %vm945, %v732, 0
      %v2633 = vsel %vm945, %v733, 0
      %v2636 = vsel %vm945, %v734, 0
      %v2639 = vsel %vm945, %v735, 0
      %v2642 = vsel %vm945, %v736, 0
      %v2645 = vsel %vm945, %v737, 0
      %v2648 = vsel %vm945, %v738, 0
      %v2651 = vsel %vm945, %v739, 0
      %v2654 = vsel %vm945, %v740, 0
      %v2657 = vsel %vm945, %v741, 0
      %v2660 = vsel %vm945, %v742, 0
      %v2663 = vsel %vm945, %v743, 0
      %v2666 = vsel %vm945, %v744, 0
      %v2669 = vsel %vm945, %v745, 0
      %v2672 = vsel %vm945, %v746, 0
      %v2675 = vsel %vm945, %v747, 0
      %v2678 = vsel %vm945, %v748, 0
      %v2681 = vsel %vm945, %v749, 0
      %v2684 = vsel %vm945, %v750, 0
      %v2687 = vsel %vm945, %v751, 0
      %v2690 = vsel %vm945, %v752, 0
      %v2693 = vsel %vm945, %v753, 0
      %v2696 = vsel %vm945, %v754, 0
      %v2699 = vsel %vm945, %v755, 0
      %v2702 = vsel %vm945, %v756, 0
      %v2705 = vsel %vm945, %v757, 0
      %v2708 = vsel %vm945, %v758, 0
      %v2711 = vsel %vm945, %v759, 0
      %v2714 = vsel %vm945, %v760, 0
      %v2717 = vsel %vm945, %v761, 0
      %v2720 = vsel %vm945, %v762, 0
      %v2723 = vsel %vm945, %v763, 0
      %v2726 = vsel %vm945, %v764, 0
      %v2729 = vsel %vm945, %v765, 0
      %v2732 = vsel %vm945, %v766, 0
      %v2735 = vsel %vm945, %v767, 0
      %v2738 = vsel %vm945, %v768, 0
      %v2741 = vsel %vm945, %v769, 0
      %v2744 = vsel %vm945, %v770, 0
      %v2747 = vsel %vm945, %v771, 0
      %v2750 = vsel %vm945, %v772, 0
      %v2753 = vsel %vm945, %v773, 0
      %v2756 = vsel %vm945, %v774, 0
      %v2759 = vsel %vm945, %v775, 0
      %v2762 = vsel %vm945, %v776, 0
      %v2765 = vsel %vm945, %v777, 0
      %v2768 = vsel %vm945, %v778, 0
      %v2771 = vsel %vm945, %v779, 0
      %v2774 = vsel %vm945, %v780, 0
      %v2777 = vsel %vm945, %v781, 0
      %v2780 = vsel %vm945, %v782, 0
      %v2783 = vsel %vm945, %v783, 0
      %v2786 = vsel %vm945, %v784, 0
      %v2789 = vsel %vm945, %v785, 0
      %v2792 = vsel %vm945, %v786, 0
      %v2795 = vsel %vm945, %v787, 0
      %v2798 = vsel %vm945, %v788, 0
      %v2801 = vsel %vm945, %v789, 0
      %v2804 = vsel %vm945, %v790, 0
      %v2807 = vsel %vm945, %v791, 0
      %v2810 = vsel %vm945, %v792, 0
      %v2813 = vsel %vm945, %v793, 0
      %v2816 = vsel %vm945, %v794, 0
      %v2819 = vsel %vm945, %v795, 0
      %v2822 = vsel %vm945, %v796, 0
      %v2825 = vsel %vm945, %v797, 0
      %v2828 = vsel %vm945, %v798, 0
      %v2831 = vsel %vm945, %v799, 0
      %v2834 = vsel %vm945, %v800, 0
      %v2837 = vsel %vm945, %v801, 0
      %v2840 = vsel %vm945, %v802, 0
      %v2843 = vsel %vm945, %v803, 0
      %v2846 = vsel %vm945, %v804, 0
      %v2849 = vsel %vm945, %v805, 0
      %v2852 = vsel %vm945, %v806, 0
      %v2855 = vsel %vm945, %v807, 0
      %v2858 = vsel %vm945, %v808, 0
      %v2861 = vsel %vm945, %v809, 0
      %v2864 = vsel %vm945, %v810, 0
      %v2867 = vsel %vm945, %v811, 0
      %v2870 = vsel %vm945, %v812, 0
      %v2873 = vsel %vm945, %v813, 0
      %v2876 = vsel %vm945, %v814, 0
      %v2879 = vsel %vm945, %v815, 0
      %v2882 = vsel %vm945, %v816, 0
      %v2885 = vsel %vm945, %v817, 0
      %v2888 = vsel %vm945, %v818, 0
      %v2891 = vsel %vm945, %v819, 0
      %v2894 = vsel %vm945, %v820, 0
      %v2897 = vsel %vm945, %v821, 0
      %v2900 = vsel %vm945, %v822, 0
      %v2903 = vsel %vm945, %v823, 0
      %v2906 = vsel %vm945, %v824, 0
      %v2909 = vsel %vm945, %v825, 0
      %v2912 = vsel %vm945, %v826, 0
      %v2915 = vsel %vm945, %v827, 0
      %v2918 = vsel %vm945, %v828, 0
      %v2921 = vsel %vm945, %v829, 0
      %v2924 = vsel %vm945, %v830, 0
      %v2927 = vsel %vm945, %v831, 0
      %v2930 = vsel %vm945, %v832, 0
      %v2933 = vsel %vm945, %v833, 0
      %v2936 = vsel %vm945, %v834, 0
      %v2939 = vsel %vm945, %v835, 0
      %v2942 = vsel %vm945, %v836, 0
      %v2945 = vsel %vm945, %v837, 0
      %v2948 = vsel %vm945, %v838, 0
      %v2951 = vsel %vm945, %v839, 0
      %v2954 = vsel %vm945, %v840, 0
      %v2957 = vsel %vm945, %v841, 0
      %v2960 = vsel %vm945, %v842, 0
      %v2963 = vsel %vm945, %v843, 0
      %v2966 = vsel %vm945, %v844, 0
      %v2969 = vsel %vm945, %v845, 0
      %v2972 = vsel %vm945, %v846, 0
      %v2975 = vsel %vm945, %v847, 0
      %v2978 = vsel %vm945, %v848, 0
      %v2981 = vsel %vm945, %v849, 0
      %v2984 = vsel %vm945, %v850, 0
      %v2987 = vsel %vm945, %v851, 0
      %v2990 = vsel %vm945, %v852, 0
      %v2993 = vsel %vm945, %v853, 0
      %v2996 = vsel %vm945, %v854, 0
      %v2999 = vsel %vm945, %v855, 0
      %v3002 = vsel %vm945, %v856, 0
      %v3005 = vsel %vm945, %v857, 0
      %v3008 = vsel %vm945, %v858, 0
      %v3011 = vsel %vm945, %v859, 0
      %v3014 = vsel %vm945, %v860, 0
      %v3017 = vsel %vm945, %v861, 0
      %v3020 = vsel %vm945, %v862, 0
      %v3023 = vsel %vm945, %v863, 0
      %v3026 = vsel %vm945, %v864, 0
      %v3029 = vsel %vm945, %v865, 0
      %v3032 = vsel %vm945, %v866, 0
      %v3035 = vsel %vm945, %v867, 0
      %v3038 = vsel %vm945, %v868, 0
      %v3041 = vsel %vm945, %v869, 0
      %v3044 = vsel %vm945, %v870, 0
      %v3047 = vsel %vm945, %v871, 0
      %v3050 = vsel %vm945, %v872, 0
      %v3053 = vsel %vm945, %v873, 0
      %v3056 = vsel %vm945, %v874, 0
      %v3059 = vsel %vm945, %v875, 0
      %v3062 = vsel %vm945, %v876, 0
      %v3065 = vsel %vm945, %v877, 0
      %v3068 = vsel %vm945, %v878, 0
      %v3071 = vsel %vm945, %v879, 0
      %v3074 = vsel %vm945, %v880, 0
      %v3077 = vsel %vm945, %v881, 0
      %v3080 = vsel %vm945, %v882, 0
      %v3083 = vsel %vm945, %v883, 0
      %v3086 = vsel %vm945, %v884, 0
      %v3089 = vsel %vm945, %v885, 0
      %v3092 = vsel %vm945, %v886, 0
      %v3095 = vsel %vm945, %v887, 0
      %v3098 = vsel %vm945, %v888, 0
      %v3101 = vsel %vm945, %v889, 0
      %v3104 = vsel %vm945, %v890, 0
      %v3107 = vsel %vm945, %v891, 0
      %v3110 = vsel %vm945, %v892, 0
      %v3113 = vsel %vm945, %v893, 0
      %v3116 = vsel %vm945, %v894, 0
      %v3119 = vsel %vm945, %v895, 0
      %v3122 = vsel %vm945, %v896, 0
      %v3125 = vsel %vm945, %v897, 0
      %v3128 = vsel %vm945, %v898, 0
      %v3131 = vsel %vm945, %v899, 0
      %v3134 = vsel %vm945, %v900, 0
      %v3137 = vsel %vm945, %v901, 0
      %v3140 = vsel %vm945, %v902, 0
      %v3143 = vsel %vm945, %v903, 0
      %v3146 = vsel %vm945, %v904, 0
      %v3149 = vsel %vm945, %v905, 0
      %v3152 = vsel %vm945, %v906, 0
      %v3155 = vsel %vm945, %v907, 0
      %v3158 = vsel %vm945, %v908, 0
      %v3161 = vsel %vm945, %v909, 0
      %v3164 = vsel %vm945, %v910, 0
      %v3167 = vsel %vm945, %v911, 0
      %v3170 = vsel %vm945, %v912, 0
      %v3173 = vsel %vm945, %v913, 0
      %v3176 = vsel %vm945, %v914, 0
      %v3179 = vsel %vm945, %v915, 0
      %v3182 = vsel %vm945, %v916, 0
      %v3185 = vsel %vm945, %v917, 0
      %v3188 = vsel %vm945, %v918, 0
      %v3191 = vsel %vm945, %v919, 0
      %v3194 = vsel %vm945, %v920, 0
      %v3197 = vsel %vm945, %v921, 0
      %v3200 = vsel %vm945, %v922, 0
      %v3203 = vsel %vm945, %v923, 0
      %v3206 = vsel %vm945, %v924, 0
      %v3209 = vsel %vm945, %v925, 0
      %v3212 = vsel %vm945, %v926, 0
      %v3215 = vsel %vm945, %v927, 0
      %vm3217 = vcmask 1042432
      %v3219 = vsel %vm3217, %v937, 0
      %3221 = vmatprep.subr.mxu0 0.0
      %3222 = vmatpush1.msra.mxu0 %v928
      %3223 = vmatprep.subr.mxu0 0.0
      %3224 = vmatpush1.msra.mxu0 %v929
      %3225 = vmatprep.subr.mxu0 0.0
      %3226 = vmatpush1.msra.mxu0 %v930
      %3227 = vmatprep.subr.mxu0 0.0
      %3228 = vmatpush1.msra.mxu0 %v931
      %3229 = vmatprep.subr.mxu0 0.0
      %3230 = vmatpush1.msra.mxu0 %v932
      %3231 = vmatprep.subr.mxu0 0.0
      %3232 = vmatpush1.msra.mxu0 %v933
      %3233 = vmatprep.subr.mxu0 0.0
      %3234 = vmatpush1.msra.mxu0 %v934
      %3235 = vmatprep.subr.mxu0 0.0
      %3236 = vmatpush1.msra.mxu0 %v935
      %3237 = vmatprep.subr.mxu0 0.0
      %3238 = vmatpush1.msra.mxu0 %v936
      %3239 = vmatprep.subr.mxu0 0.0
      %3240 = vmatpush1.msra.mxu0 %v3219
      %3241 = vmatprep.subr.mxu0 0.0
      %3242 = vmatpush1.msra.mxu0 0.0
      %3243 = vmatprep.subr.mxu0 0.0
      %3244 = vmatpush1.msra.mxu0 0.0
      %3245 = vmatprep.subr.mxu0 0.0
      %3246 = vmatpush1.msra.mxu0 0.0
      %3247 = vmatprep.subr.mxu0 0.0
      %3248 = vmatpush1.msra.mxu0 0.0
      %3249 = vmatprep.subr.mxu0 0.0
      %3250 = vmatpush1.msra.mxu0 0.0
      %3251 = vmatprep.subr.mxu0 0.0
      %3252 = vmatpush1.msra.mxu0 0.0
      %3253 = vmatprep.subr.mxu0 0.0
      %3254 = vmatpush1.msra.mxu0 0.0
      %3255 = vmatprep.subr.mxu0 0.0
      %3256 = vmatpush1.msra.mxu0 0.0
      %3257 = vmatprep.subr.mxu0 0.0
      %3258 = vmatpush1.msra.mxu0 0.0
      %3259 = vmatprep.subr.mxu0 0.0
      %3260 = vmatpush1.msra.mxu0 0.0
      %3261 = vmatprep.subr.mxu0 0.0
      %3262 = vmatpush1.msra.mxu0 0.0
      %3263 = vmatprep.subr.mxu0 0.0
      %3264 = vmatpush1.msra.mxu0 0.0
      %3265 = vmatprep.subr.mxu0 0.0
      %3266 = vmatpush1.msra.mxu0 0.0
      %3267 = vmatprep.subr.mxu0 0.0
      %3268 = vmatpush1.msra.mxu0 0.0
      %3269 = vmatprep.subr.mxu0 0.0
      %3270 = vmatpush1.msra.mxu0 0.0
      %3271 = vmatprep.subr.mxu0 0.0
      %3272 = vmatpush1.msra.mxu0 0.0
      %3273 = vmatprep.subr.mxu0 0.0
      %3274 = vmatpush1.msra.mxu0 0.0
      %3275 = vmatprep.subr.mxu0 0.0
      %3276 = vmatpush1.msra.mxu0 0.0
      %3277 = vmatprep.subr.mxu0 0.0
      %3278 = vmatpush1.msra.mxu0 0.0
      %3279 = vmatprep.subr.mxu0 0.0
      %3280 = vmatpush1.msra.mxu0 0.0
      %3281 = vmatprep.subr.mxu0 0.0
      %3282 = vmatpush1.msra.mxu0 0.0
      %3283 = vmatprep.subr.mxu0 0.0
      %3284 = vmatpush1.msra.mxu0 0.0
      %3285 = vmatprep.mubr.f32.mxu0 0.0
      %3286 = vmatmul.mubr.f32.gmra.mrb[0].mxu0 %v947
      %v3287 = vpop.f32.mrb[0].mxu0
      %v3288 = vadd.f32 %v943, %v3287
      %v3289 = vpop.f32.mrb[0].mxu0
      %3290 = vmatprep.mubr.f32.mxu0 0.0
      %3291 = vmatmul.mubr.f32.gmra.mrb[0].mxu0 %v950
      %v3292 = vpop.f32.mrb[0].mxu0
      %v3293 = vadd.f32 %v943, %v3292
      %v3294 = vpop.f32.mrb[0].mxu0
      %3295 = vmatprep.mubr.f32.mxu0 0.0
      %3296 = vmatmul.mubr.f32.gmra.mrb[0].mxu0 %v953
      %v3297 = vpop.f32.mrb[0].mxu0
      %v3298 = vadd.f32 %v943, %v3297
      %v3299 = vpop.f32.mrb[0].mxu0
      %3300 = vmatprep.mubr.f32.mxu0 0.0
      %3301 = vmatmul.mubr.f32.gmra.mrb[0].mxu0 %v956
      %v3302 = vpop.f32.mrb[0].mxu0
      %v3303 = vadd.f32 %v943, %v3302
      %v3304 = vpop.f32.mrb[0].mxu0
      %3305 = vmatprep.mubr.f32.mxu0 0.0
      %3306 = vmatmul.mubr.f32.gmra.mrb[0].mxu0 %v959
      %v3307 = vpop.f32.mrb[0].mxu0
      %v3308 = vadd.f32 %v943, %v3307
      %v3309 = vpop.f32.mrb[0].mxu0
      %3310 = vmatprep.mubr.f32.mxu0 0.0
      %3311 = vmatmul.mubr.f32.gmra.mrb[0].mxu0 %v962
      %v3312 = vpop.f32.mrb[0].mxu0
      %v3313 = vadd.f32 %v943, %v3312
      %v3314 = vpop.f32.mrb[0].mxu0
      %3315 = vmatprep.mubr.f32.mxu0 0.0
      %3316 = vmatmul.mubr.f32.gmra.mrb[0].mxu0 %v965
      %v3317 = vpop.f32.mrb[0].mxu0
      %v3318 = vadd.f32 %v943, %v3317
      %v3319 = vpop.f32.mrb[0].mxu0
      %3320 = vmatprep.mubr.f32.mxu0 0.0
      %3321 = vmatmul.mubr.f32.gmra.mrb[0].mxu0 %v968
      %v3322 = vpop.f32.mrb[0].mxu0
      %v3323 = vadd.f32 %v943, %v3322
      %v3324 = vpop.f32.mrb[0].mxu0
      %3325 = vmatprep.mubr.f32.mxu0 0.0
      %3326 = vmatmul.mubr.f32.gmra.mrb[0].mxu0 %v971
      %v3327 = vpop.f32.mrb[0].mxu0
      %v3328 = vadd.f32 %v943, %v3327
      %v3329 = vpop.f32.mrb[0].mxu0
      %3330 = vmatprep.mubr.f32.mxu0 0.0
      %3331 = vmatmul.mubr.f32.gmra.mrb[0].mxu0 %v974
      %v3332 = vpop.f32.mrb[0].mxu0
      %v3333 = vadd.f32 %v943, %v3332
      %v3334 = vpop.f32.mrb[0].mxu0
      %3335 = vmatprep.mubr.f32.mxu0 0.0
      %3336 = vmatmul.mubr.f32.gmra.mrb[0].mxu0 %v977
      %v3337 = vpop.f32.mrb[0].mxu0
      %v3338 = vadd.f32 %v943, %v3337
      %v3339 = vpop.f32.mrb[0].mxu0
      %3340 = vmatprep.mubr.f32.mxu0 0.0
      %3341 = vmatmul.mubr.f32.gmra.mrb[0].mxu0 %v980
      %v3342 = vpop.f32.mrb[0].mxu0
      %v3343 = vadd.f32 %v943, %v3342
      %v3344 = vpop.f32.mrb[0].mxu0
      %3345 = vmatprep.mubr.f32.mxu0 0.0
      %3346 = vmatmul.mubr.f32.gmra.mrb[0].mxu0 %v983
      %v3347 = vpop.f32.mrb[0].mxu0
      %v3348 = vadd.f32 %v943, %v3347
      %v3349 = vpop.f32.mrb[0].mxu0
      %3350 = vmatprep.mubr.f32.mxu0 0.0
      %3351 = vmatmul.mubr.f32.gmra.mrb[0].mxu0 %v986
      %v3352 = vpop.f32.mrb[0].mxu0
      %v3353 = vadd.f32 %v943, %v3352
      %v3354 = vpop.f32.mrb[0].mxu0
      %3355 = vmatprep.mubr.f32.mxu0 0.0
      %3356 = vmatmul.mubr.f32.gmra.mrb[0].mxu0 %v989
      %v3357 = vpop.f32.mrb[0].mxu0
      %v3358 = vadd.f32 %v943, %v3357
      %v3359 = vpop.f32.mrb[0].mxu0
      %3360 = vmatprep.mubr.f32.mxu0 0.0
      %3361 = vmatmul.mubr.f32.gmra.mrb[0].mxu0 %v992
      %v3362 = vpop.f32.mrb[0].mxu0
      %v3363 = vadd.f32 %v943, %v3362
      %v3364 = vpop.f32.mrb[0].mxu0
      %3365 = vmatprep.mubr.f32.mxu0 0.0
      %3366 = vmatmul.mubr.f32.gmra.mrb[0].mxu0 %v995
      %v3367 = vpop.f32.mrb[0].mxu0
      %v3368 = vadd.f32 %v943, %v3367
      %v3369 = vpop.f32.mrb[0].mxu0
      %3370 = vmatprep.mubr.f32.mxu0 0.0
      %3371 = vmatmul.mubr.f32.gmra.mrb[0].mxu0 %v998
      %v3372 = vpop.f32.mrb[0].mxu0
      %v3373 = vadd.f32 %v943, %v3372
      %v3374 = vpop.f32.mrb[0].mxu0
      %3375 = vmatprep.mubr.f32.mxu0 0.0
      %3376 = vmatmul.mubr.f32.gmra.mrb[0].mxu0 %v1001
      %v3377 = vpop.f32.mrb[0].mxu0
      %v3378 = vadd.f32 %v943, %v3377
      %v3379 = vpop.f32.mrb[0].mxu0
      %3380 = vmatprep.mubr.f32.mxu0 0.0
      %3381 = vmatmul.mubr.f32.gmra.mrb[0].mxu0 %v1004
      %v3382 = vpop.f32.mrb[0].mxu0
      %v3383 = vadd.f32 %v943, %v3382
      %v3384 = vpop.f32.mrb[0].mxu0
      %3385 = vmatprep.mubr.f32.mxu0 0.0
      %3386 = vmatmul.mubr.f32.gmra.mrb[0].mxu0 %v1007
      %v3387 = vpop.f32.mrb[0].mxu0
      %v3388 = vadd.f32 %v943, %v3387
      %v3389 = vpop.f32.mrb[0].mxu0
      %3390 = vmatprep.mubr.f32.mxu0 0.0
      %3391 = vmatmul.mubr.f32.gmra.mrb[0].mxu0 %v1010
      %v3392 = vpop.f32.mrb[0].mxu0
      %v3393 = vadd.f32 %v943, %v3392
      %v3394 = vpop.f32.mrb[0].mxu0
      %3395 = vmatprep.mubr.f32.mxu0 0.0
      %3396 = vmatmul.mubr.f32.gmra.mrb[0].mxu0 %v1013
      %v3397 = vpop.f32.mrb[0].mxu0
      %v3398 = vadd.f32 %v943, %v3397
      %v3399 = vpop.f32.mrb[0].mxu0
      %3400 = vmatprep.mubr.f32.mxu0 0.0
      %3401 = vmatmul.mubr.f32.gmra.mrb[0].mxu0 %v1016
      %v3402 = vpop.f32.mrb[0].mxu0
      %v3403 = vadd.f32 %v943, %v3402
      %v3404 = vpop.f32.mrb[0].mxu0
      %3405 = vmatprep.mubr.f32.mxu0 0.0
      %3406 = vmatmul.mubr.f32.gmra.mrb[0].mxu0 %v1019
      %v3407 = vpop.f32.mrb[0].mxu0
      %v3408 = vadd.f32 %v943, %v3407
      %v3409 = vpop.f32.mrb[0].mxu0
      %3410 = vmatprep.mubr.f32.mxu0 0.0
      %3411 = vmatmul.mubr.f32.gmra.mrb[0].mxu0 %v1022
      %v3412 = vpop.f32.mrb[0].mxu0
      %v3413 = vadd.f32 %v943, %v3412
      %v3414 = vpop.f32.mrb[0].mxu0
      %3415 = vmatprep.mubr.f32.mxu0 0.0
      %3416 = vmatmul.mubr.f32.gmra.mrb[0].mxu0 %v1025
      %v3417 = vpop.f32.mrb[0].mxu0
      %v3418 = vadd.f32 %v943, %v3417
      %v3419 = vpop.f32.mrb[0].mxu0
      %3420 = vmatprep.mubr.f32.mxu0 0.0
      %3421 = vmatmul.mubr.f32.gmra.mrb[0].mxu0 %v1028
      %v3422 = vpop.f32.mrb[0].mxu0
      %v3423 = vadd.f32 %v943, %v3422
      %v3424 = vpop.f32.mrb[0].mxu0
      %3425 = vmatprep.mubr.f32.mxu0 0.0
      %3426 = vmatmul.mubr.f32.gmra.mrb[0].mxu0 %v1031
      %v3427 = vpop.f32.mrb[0].mxu0
      %v3428 = vadd.f32 %v943, %v3427
      %v3429 = vpop.f32.mrb[0].mxu0
      %3430 = vmatprep.mubr.f32.mxu0 0.0
      %3431 = vmatmul.mubr.f32.gmra.mrb[0].mxu0 %v1034
      %v3432 = vpop.f32.mrb[0].mxu0
      %v3433 = vadd.f32 %v943, %v3432
      %v3434 = vpop.f32.mrb[0].mxu0
      %3435 = vmatprep.mubr.f32.mxu0 0.0
      %3436 = vmatmul.mubr.f32.gmra.mrb[0].mxu0 %v1037
      %v3437 = vpop.f32.mrb[0].mxu0
      %v3438 = vadd.f32 %v943, %v3437
      %v3439 = vpop.f32.mrb[0].mxu0
      %3440 = vmatprep.mubr.f32.mxu0 0.0
      %3441 = vmatmul.mubr.f32.gmra.mrb[0].mxu0 %v1040
      %v3442 = vpop.f32.mrb[0].mxu0
      %v3443 = vadd.f32 %v943, %v3442
      %v3444 = vpop.f32.mrb[0].mxu0
      %3445 = vmatprep.mubr.f32.mxu0 0.0
      %3446 = vmatmul.mubr.f32.gmra.mrb[0].mxu0 %v1043
      %v3447 = vpop.f32.mrb[0].mxu0
      %v3448 = vadd.f32 %v943, %v3447
      %v3449 = vpop.f32.mrb[0].mxu0
      %3450 = vmatprep.mubr.f32.mxu0 0.0
      %3451 = vmatmul.mubr.f32.gmra.mrb[0].mxu0 %v1046
      %v3452 = vpop.f32.mrb[0].mxu0
      %v3453 = vadd.f32 %v943, %v3452
      %v3454 = vpop.f32.mrb[0].mxu0
      %3455 = vmatprep.mubr.f32.mxu0 0.0
      %3456 = vmatmul.mubr.f32.gmra.mrb[0].mxu0 %v1049
      %v3457 = vpop.f32.mrb[0].mxu0
      %v3458 = vadd.f32 %v943, %v3457
      %v3459 = vpop.f32.mrb[0].mxu0
      %3460 = vmatprep.mubr.f32.mxu0 0.0
      %3461 = vmatmul.mubr.f32.gmra.mrb[0].mxu0 %v1052
      %v3462 = vpop.f32.mrb[0].mxu0
      %v3463 = vadd.f32 %v943, %v3462
      %v3464 = vpop.f32.mrb[0].mxu0
      %3465 = vmatprep.mubr.f32.mxu0 0.0
      %3466 = vmatmul.mubr.f32.gmra.mrb[0].mxu0 %v1055
      %v3467 = vpop.f32.mrb[0].mxu0
      %v3468 = vadd.f32 %v943, %v3467
      %v3469 = vpop.f32.mrb[0].mxu0
      %3470 = vmatprep.mubr.f32.mxu0 0.0
      %3471 = vmatmul.mubr.f32.gmra.mrb[0].mxu0 %v1058
      %v3472 = vpop.f32.mrb[0].mxu0
      %v3473 = vadd.f32 %v943, %v3472
      %v3474 = vpop.f32.mrb[0].mxu0
      %3475 = vmatprep.mubr.f32.mxu0 0.0
      %3476 = vmatmul.mubr.f32.gmra.mrb[0].mxu0 %v1061
      %v3477 = vpop.f32.mrb[0].mxu0
      %v3478 = vadd.f32 %v943, %v3477
      %v3479 = vpop.f32.mrb[0].mxu0
      %3480 = vmatprep.mubr.f32.mxu0 0.0
      %3481 = vmatmul.mubr.f32.gmra.mrb[0].mxu0 %v1064
      %v3482 = vpop.f32.mrb[0].mxu0
      %v3483 = vadd.f32 %v943, %v3482
      %v3484 = vpop.f32.mrb[0].mxu0
      %3485 = vmatprep.mubr.f32.mxu0 0.0
      %3486 = vmatmul.mubr.f32.gmra.mrb[0].mxu0 %v1067
      %v3487 = vpop.f32.mrb[0].mxu0
      %v3488 = vadd.f32 %v943, %v3487
      %v3489 = vpop.f32.mrb[0].mxu0
      %3490 = vmatprep.mubr.f32.mxu0 0.0
      %3491 = vmatmul.mubr.f32.gmra.mrb[0].mxu0 %v1070
      %v3492 = vpop.f32.mrb[0].mxu0
      %v3493 = vadd.f32 %v943, %v3492
      %v3494 = vpop.f32.mrb[0].mxu0
      %3495 = vmatprep.mubr.f32.mxu0 0.0
      %3496 = vmatmul.mubr.f32.gmra.mrb[0].mxu0 %v1073
      %v3497 = vpop.f32.mrb[0].mxu0
      %v3498 = vadd.f32 %v943, %v3497
      %v3499 = vpop.f32.mrb[0].mxu0
      %3500 = vmatprep.mubr.f32.mxu0 0.0
      %3501 = vmatmul.mubr.f32.gmra.mrb[0].mxu0 %v1076
      %v3502 = vpop.f32.mrb[0].mxu0
      %v3503 = vadd.f32 %v943, %v3502
      %v3504 = vpop.f32.mrb[0].mxu0
      %3505 = vmatprep.mubr.f32.mxu0 0.0
      %3506 = vmatmul.mubr.f32.gmra.mrb[0].mxu0 %v1079
      %v3507 = vpop.f32.mrb[0].mxu0
      %v3508 = vadd.f32 %v943, %v3507
      %v3509 = vpop.f32.mrb[0].mxu0
      %3510 = vmatprep.mubr.f32.mxu0 0.0
      %3511 = vmatmul.mubr.f32.gmra.mrb[0].mxu0 %v1082
      %v3512 = vpop.f32.mrb[0].mxu0
      %v3513 = vadd.f32 %v943, %v3512
      %v3514 = vpop.f32.mrb[0].mxu0
      %3515 = vmatprep.mubr.f32.mxu0 0.0
      %3516 = vmatmul.mubr.f32.gmra.mrb[0].mxu0 %v1085
      %v3517 = vpop.f32.mrb[0].mxu0
      %v3518 = vadd.f32 %v943, %v3517
      %v3519 = vpop.f32.mrb[0].mxu0
      %3520 = vmatprep.mubr.f32.mxu0 0.0
      %3521 = vmatmul.mubr.f32.gmra.mrb[0].mxu0 %v1088
      %v3522 = vpop.f32.mrb[0].mxu0
      %v3523 = vadd.f32 %v943, %v3522
      %v3524 = vpop.f32.mrb[0].mxu0
      %3525 = vmatprep.mubr.f32.mxu0 0.0
      %3526 = vmatmul.mubr.f32.gmra.mrb[0].mxu0 %v1091
      %v3527 = vpop.f32.mrb[0].mxu0
      %v3528 = vadd.f32 %v943, %v3527
      %v3529 = vpop.f32.mrb[0].mxu0
      %3530 = vmatprep.mubr.f32.mxu0 0.0
      %3531 = vmatmul.mubr.f32.gmra.mrb[0].mxu0 %v1094
      %v3532 = vpop.f32.mrb[0].mxu0
      %v3533 = vadd.f32 %v943, %v3532
      %v3534 = vpop.f32.mrb[0].mxu0
      %3535 = vmatprep.mubr.f32.mxu0 0.0
      %3536 = vmatmul.mubr.f32.gmra.mrb[0].mxu0 %v1097
      %v3537 = vpop.f32.mrb[0].mxu0
      %v3538 = vadd.f32 %v943, %v3537
      %v3539 = vpop.f32.mrb[0].mxu0
      %3540 = vmatprep.mubr.f32.mxu0 0.0
      %3541 = vmatmul.mubr.f32.gmra.mrb[0].mxu0 %v1100
      %v3542 = vpop.f32.mrb[0].mxu0
      %v3543 = vadd.f32 %v943, %v3542
      %v3544 = vpop.f32.mrb[0].mxu0
      %3545 = vmatprep.mubr.f32.mxu0 0.0
      %3546 = vmatmul.mubr.f32.gmra.mrb[0].mxu0 %v1103
      %v3547 = vpop.f32.mrb[0].mxu0
      %v3548 = vadd.f32 %v943, %v3547
      %v3549 = vpop.f32.mrb[0].mxu0
      %3550 = vmatprep.mubr.f32.mxu0 0.0
      %3551 = vmatmul.mubr.f32.gmra.mrb[0].mxu0 %v1106
      %v3552 = vpop.f32.mrb[0].mxu0
      %v3553 = vadd.f32 %v943, %v3552
      %v3554 = vpop.f32.mrb[0].mxu0
      %3555 = vmatprep.mubr.f32.mxu0 0.0
      %3556 = vmatmul.mubr.f32.gmra.mrb[0].mxu0 %v1109
      %v3557 = vpop.f32.mrb[0].mxu0
      %v3558 = vadd.f32 %v943, %v3557
      %v3559 = vpop.f32.mrb[0].mxu0
      %3560 = vmatprep.mubr.f32.mxu0 0.0
      %3561 = vmatmul.mubr.f32.gmra.mrb[0].mxu0 %v1112
      %v3562 = vpop.f32.mrb[0].mxu0
      %v3563 = vadd.f32 %v943, %v3562
      %v3564 = vpop.f32.mrb[0].mxu0
      %3565 = vmatprep.mubr.f32.mxu0 0.0
      %3566 = vmatmul.mubr.f32.gmra.mrb[0].mxu0 %v1115
      %v3567 = vpop.f32.mrb[0].mxu0
      %v3568 = vadd.f32 %v943, %v3567
      %v3569 = vpop.f32.mrb[0].mxu0
      %3570 = vmatprep.mubr.f32.mxu0 0.0
      %3571 = vmatmul.mubr.f32.gmra.mrb[0].mxu0 %v1118
      %v3572 = vpop.f32.mrb[0].mxu0
      %v3573 = vadd.f32 %v943, %v3572
      %v3574 = vpop.f32.mrb[0].mxu0
      %3575 = vmatprep.mubr.f32.mxu0 0.0
      %3576 = vmatmul.mubr.f32.gmra.mrb[0].mxu0 %v1121
      %v3577 = vpop.f32.mrb[0].mxu0
      %v3578 = vadd.f32 %v943, %v3577
      %v3579 = vpop.f32.mrb[0].mxu0
      %3580 = vmatprep.mubr.f32.mxu0 0.0
      %3581 = vmatmul.mubr.f32.gmra.mrb[0].mxu0 %v1124
      %v3582 = vpop.f32.mrb[0].mxu0
      %v3583 = vadd.f32 %v943, %v3582
      %v3584 = vpop.f32.mrb[0].mxu0
      %3585 = vmatprep.mubr.f32.mxu0 0.0
      %3586 = vmatmul.mubr.f32.gmra.mrb[0].mxu0 %v1127
      %v3587 = vpop.f32.mrb[0].mxu0
      %v3588 = vadd.f32 %v943, %v3587
      %v3589 = vpop.f32.mrb[0].mxu0
      %3590 = vmatprep.mubr.f32.mxu0 0.0
      %3591 = vmatmul.mubr.f32.gmra.mrb[0].mxu0 %v1130
      %v3592 = vpop.f32.mrb[0].mxu0
      %v3593 = vadd.f32 %v943, %v3592
      %v3594 = vpop.f32.mrb[0].mxu0
      %3595 = vmatprep.mubr.f32.mxu0 0.0
      %3596 = vmatmul.mubr.f32.gmra.mrb[0].mxu0 %v1133
      %v3597 = vpop.f32.mrb[0].mxu0
      %v3598 = vadd.f32 %v943, %v3597
      %v3599 = vpop.f32.mrb[0].mxu0
      %3600 = vmatprep.mubr.f32.mxu0 0.0
      %3601 = vmatmul.mubr.f32.gmra.mrb[0].mxu0 %v1136
      %v3602 = vpop.f32.mrb[0].mxu0
      %v3603 = vadd.f32 %v943, %v3602
      %v3604 = vpop.f32.mrb[0].mxu0
      %3605 = vmatprep.mubr.f32.mxu0 0.0
      %3606 = vmatmul.mubr.f32.gmra.mrb[0].mxu0 %v1139
      %v3607 = vpop.f32.mrb[0].mxu0
      %v3608 = vadd.f32 %v943, %v3607
      %v3609 = vpop.f32.mrb[0].mxu0
      %3610 = vmatprep.mubr.f32.mxu0 0.0
      %3611 = vmatmul.mubr.f32.gmra.mrb[0].mxu0 %v1142
      %v3612 = vpop.f32.mrb[0].mxu0
      %v3613 = vadd.f32 %v943, %v3612
      %v3614 = vpop.f32.mrb[0].mxu0
      %3615 = vmatprep.mubr.f32.mxu0 0.0
      %3616 = vmatmul.mubr.f32.gmra.mrb[0].mxu0 %v1145
      %v3617 = vpop.f32.mrb[0].mxu0
      %v3618 = vadd.f32 %v943, %v3617
      %v3619 = vpop.f32.mrb[0].mxu0
      %3620 = vmatprep.mubr.f32.mxu0 0.0
      %3621 = vmatmul.mubr.f32.gmra.mrb[0].mxu0 %v1148
      %v3622 = vpop.f32.mrb[0].mxu0
      %v3623 = vadd.f32 %v943, %v3622
      %v3624 = vpop.f32.mrb[0].mxu0
      %3625 = vmatprep.mubr.f32.mxu0 0.0
      %3626 = vmatmul.mubr.f32.gmra.mrb[0].mxu0 %v1151
      %v3627 = vpop.f32.mrb[0].mxu0
      %v3628 = vadd.f32 %v943, %v3627
      %v3629 = vpop.f32.mrb[0].mxu0
      %3630 = vmatprep.mubr.f32.mxu0 0.0
      %3631 = vmatmul.mubr.f32.gmra.mrb[0].mxu0 %v1154
      %v3632 = vpop.f32.mrb[0].mxu0
      %v3633 = vadd.f32 %v943, %v3632
      %v3634 = vpop.f32.mrb[0].mxu0
      %3635 = vmatprep.mubr.f32.mxu0 0.0
      %3636 = vmatmul.mubr.f32.gmra.mrb[0].mxu0 %v1157
      %v3637 = vpop.f32.mrb[0].mxu0
      %v3638 = vadd.f32 %v943, %v3637
      %v3639 = vpop.f32.mrb[0].mxu0
      %3640 = vmatprep.mubr.f32.mxu0 0.0
      %3641 = vmatmul.mubr.f32.gmra.mrb[0].mxu0 %v1160
      %v3642 = vpop.f32.mrb[0].mxu0
      %v3643 = vadd.f32 %v943, %v3642
      %v3644 = vpop.f32.mrb[0].mxu0
      %3645 = vmatprep.mubr.f32.mxu0 0.0
      %3646 = vmatmul.mubr.f32.gmra.mrb[0].mxu0 %v1163
      %v3647 = vpop.f32.mrb[0].mxu0
      %v3648 = vadd.f32 %v943, %v3647
      %v3649 = vpop.f32.mrb[0].mxu0
      %3650 = vmatprep.mubr.f32.mxu0 0.0
      %3651 = vmatmul.mubr.f32.gmra.mrb[0].mxu0 %v1166
      %v3652 = vpop.f32.mrb[0].mxu0
      %v3653 = vadd.f32 %v943, %v3652
      %v3654 = vpop.f32.mrb[0].mxu0
      %3655 = vmatprep.mubr.f32.mxu0 0.0
      %3656 = vmatmul.mubr.f32.gmra.mrb[0].mxu0 %v1169
      %v3657 = vpop.f32.mrb[0].mxu0
      %v3658 = vadd.f32 %v943, %v3657
      %v3659 = vpop.f32.mrb[0].mxu0
      %3660 = vmatprep.mubr.f32.mxu0 0.0
      %3661 = vmatmul.mubr.f32.gmra.mrb[0].mxu0 %v1172
      %v3662 = vpop.f32.mrb[0].mxu0
      %v3663 = vadd.f32 %v943, %v3662
      %v3664 = vpop.f32.mrb[0].mxu0
      %3665 = vmatprep.mubr.f32.mxu0 0.0
      %3666 = vmatmul.mubr.f32.gmra.mrb[0].mxu0 %v1175
      %v3667 = vpop.f32.mrb[0].mxu0
      %v3668 = vadd.f32 %v943, %v3667
      %v3669 = vpop.f32.mrb[0].mxu0
      %3670 = vmatprep.mubr.f32.mxu0 0.0
      %3671 = vmatmul.mubr.f32.gmra.mrb[0].mxu0 %v1178
      %v3672 = vpop.f32.mrb[0].mxu0
      %v3673 = vadd.f32 %v943, %v3672
      %v3674 = vpop.f32.mrb[0].mxu0
      %3675 = vmatprep.mubr.f32.mxu0 0.0
      %3676 = vmatmul.mubr.f32.gmra.mrb[0].mxu0 %v1181
      %v3677 = vpop.f32.mrb[0].mxu0
      %v3678 = vadd.f32 %v943, %v3677
      %v3679 = vpop.f32.mrb[0].mxu0
      %3680 = vmatprep.mubr.f32.mxu0 0.0
      %3681 = vmatmul.mubr.f32.gmra.mrb[0].mxu0 %v1184
      %v3682 = vpop.f32.mrb[0].mxu0
      %v3683 = vadd.f32 %v943, %v3682
      %v3684 = vpop.f32.mrb[0].mxu0
      %3685 = vmatprep.mubr.f32.mxu0 0.0
      %3686 = vmatmul.mubr.f32.gmra.mrb[0].mxu0 %v1187
      %v3687 = vpop.f32.mrb[0].mxu0
      %v3688 = vadd.f32 %v943, %v3687
      %v3689 = vpop.f32.mrb[0].mxu0
      %3690 = vmatprep.mubr.f32.mxu0 0.0
      %3691 = vmatmul.mubr.f32.gmra.mrb[0].mxu0 %v1190
      %v3692 = vpop.f32.mrb[0].mxu0
      %v3693 = vadd.f32 %v943, %v3692
      %v3694 = vpop.f32.mrb[0].mxu0
      %3695 = vmatprep.mubr.f32.mxu0 0.0
      %3696 = vmatmul.mubr.f32.gmra.mrb[0].mxu0 %v1193
      %v3697 = vpop.f32.mrb[0].mxu0
      %v3698 = vadd.f32 %v943, %v3697
      %v3699 = vpop.f32.mrb[0].mxu0
      %3700 = vmatprep.mubr.f32.mxu0 0.0
      %3701 = vmatmul.mubr.f32.gmra.mrb[0].mxu0 %v1196
      %v3702 = vpop.f32.mrb[0].mxu0
      %v3703 = vadd.f32 %v943, %v3702
      %v3704 = vpop.f32.mrb[0].mxu0
      %3705 = vmatprep.mubr.f32.mxu0 0.0
      %3706 = vmatmul.mubr.f32.gmra.mrb[0].mxu0 %v1199
      %v3707 = vpop.f32.mrb[0].mxu0
      %v3708 = vadd.f32 %v943, %v3707
      %v3709 = vpop.f32.mrb[0].mxu0
      %3710 = vmatprep.mubr.f32.mxu0 0.0
      %3711 = vmatmul.mubr.f32.gmra.mrb[0].mxu0 %v1202
      %v3712 = vpop.f32.mrb[0].mxu0
      %v3713 = vadd.f32 %v943, %v3712
      %v3714 = vpop.f32.mrb[0].mxu0
      %3715 = vmatprep.mubr.f32.mxu0 0.0
      %3716 = vmatmul.mubr.f32.gmra.mrb[0].mxu0 %v1205
      %v3717 = vpop.f32.mrb[0].mxu0
      %v3718 = vadd.f32 %v943, %v3717
      %v3719 = vpop.f32.mrb[0].mxu0
      %3720 = vmatprep.mubr.f32.mxu0 0.0
      %3721 = vmatmul.mubr.f32.gmra.mrb[0].mxu0 %v1208
      %v3722 = vpop.f32.mrb[0].mxu0
      %v3723 = vadd.f32 %v943, %v3722
      %v3724 = vpop.f32.mrb[0].mxu0
      %3725 = vmatprep.mubr.f32.mxu0 0.0
      %3726 = vmatmul.mubr.f32.gmra.mrb[0].mxu0 %v1211
      %v3727 = vpop.f32.mrb[0].mxu0
      %v3728 = vadd.f32 %v943, %v3727
      %v3729 = vpop.f32.mrb[0].mxu0
      %3730 = vmatprep.mubr.f32.mxu0 0.0
      %3731 = vmatmul.mubr.f32.gmra.mrb[0].mxu0 %v1214
      %v3732 = vpop.f32.mrb[0].mxu0
      %v3733 = vadd.f32 %v943, %v3732
      %v3734 = vpop.f32.mrb[0].mxu0
      %3735 = vmatprep.mubr.f32.mxu0 0.0
      %3736 = vmatmul.mubr.f32.gmra.mrb[0].mxu0 %v1217
      %v3737 = vpop.f32.mrb[0].mxu0
      %v3738 = vadd.f32 %v943, %v3737
      %v3739 = vpop.f32.mrb[0].mxu0
      %3740 = vmatprep.mubr.f32.mxu0 0.0
      %3741 = vmatmul.mubr.f32.gmra.mrb[0].mxu0 %v1220
      %v3742 = vpop.f32.mrb[0].mxu0
      %v3743 = vadd.f32 %v943, %v3742
      %v3744 = vpop.f32.mrb[0].mxu0
      %3745 = vmatprep.mubr.f32.mxu0 0.0
      %3746 = vmatmul.mubr.f32.gmra.mrb[0].mxu0 %v1223
      %v3747 = vpop.f32.mrb[0].mxu0
      %v3748 = vadd.f32 %v943, %v3747
      %v3749 = vpop.f32.mrb[0].mxu0
      %3750 = vmatprep.mubr.f32.mxu0 0.0
      %3751 = vmatmul.mubr.f32.gmra.mrb[0].mxu0 %v1226
      %v3752 = vpop.f32.mrb[0].mxu0
      %v3753 = vadd.f32 %v943, %v3752
      %v3754 = vpop.f32.mrb[0].mxu0
      %3755 = vmatprep.mubr.f32.mxu0 0.0
      %3756 = vmatmul.mubr.f32.gmra.mrb[0].mxu0 %v1229
      %v3757 = vpop.f32.mrb[0].mxu0
      %v3758 = vadd.f32 %v943, %v3757
      %v3759 = vpop.f32.mrb[0].mxu0
      %3760 = vmatprep.mubr.f32.mxu0 0.0
      %3761 = vmatmul.mubr.f32.gmra.mrb[0].mxu0 %v1232
      %v3762 = vpop.f32.mrb[0].mxu0
      %v3763 = vadd.f32 %v943, %v3762
      %v3764 = vpop.f32.mrb[0].mxu0
      %3765 = vmatprep.mubr.f32.mxu0 0.0
      %3766 = vmatmul.mubr.f32.gmra.mrb[0].mxu0 %v1235
      %v3767 = vpop.f32.mrb[0].mxu0
      %v3768 = vadd.f32 %v943, %v3767
      %v3769 = vpop.f32.mrb[0].mxu0
      %3770 = vmatprep.mubr.f32.mxu0 0.0
      %3771 = vmatmul.mubr.f32.gmra.mrb[0].mxu0 %v1238
      %v3772 = vpop.f32.mrb[0].mxu0
      %v3773 = vadd.f32 %v943, %v3772
      %v3774 = vpop.f32.mrb[0].mxu0
      %3775 = vmatprep.mubr.f32.mxu0 0.0
      %3776 = vmatmul.mubr.f32.gmra.mrb[0].mxu0 %v1241
      %v3777 = vpop.f32.mrb[0].mxu0
      %v3778 = vadd.f32 %v943, %v3777
      %v3779 = vpop.f32.mrb[0].mxu0
      %3780 = vmatprep.mubr.f32.mxu0 0.0
      %3781 = vmatmul.mubr.f32.gmra.mrb[0].mxu0 %v1244
      %v3782 = vpop.f32.mrb[0].mxu0
      %v3783 = vadd.f32 %v943, %v3782
      %v3784 = vpop.f32.mrb[0].mxu0
      %3785 = vmatprep.mubr.f32.mxu0 0.0
      %3786 = vmatmul.mubr.f32.gmra.mrb[0].mxu0 %v1247
      %v3787 = vpop.f32.mrb[0].mxu0
      %v3788 = vadd.f32 %v943, %v3787
      %v3789 = vpop.f32.mrb[0].mxu0
      %3790 = vmatprep.mubr.f32.mxu0 0.0
      %3791 = vmatmul.mubr.f32.gmra.mrb[0].mxu0 %v1250
      %v3792 = vpop.f32.mrb[0].mxu0
      %v3793 = vadd.f32 %v943, %v3792
      %v3794 = vpop.f32.mrb[0].mxu0
      %3795 = vmatprep.mubr.f32.mxu0 0.0
      %3796 = vmatmul.mubr.f32.gmra.mrb[0].mxu0 %v1253
      %v3797 = vpop.f32.mrb[0].mxu0
      %v3798 = vadd.f32 %v943, %v3797
      %v3799 = vpop.f32.mrb[0].mxu0
      %3800 = vmatprep.mubr.f32.mxu0 0.0
      %3801 = vmatmul.mubr.f32.gmra.mrb[0].mxu0 %v1256
      %v3802 = vpop.f32.mrb[0].mxu0
      %v3803 = vadd.f32 %v943, %v3802
      %v3804 = vpop.f32.mrb[0].mxu0
      %3805 = vmatprep.mubr.f32.mxu0 0.0
      %3806 = vmatmul.mubr.f32.gmra.mrb[0].mxu0 %v1259
      %v3807 = vpop.f32.mrb[0].mxu0
      %v3808 = vadd.f32 %v943, %v3807
      %v3809 = vpop.f32.mrb[0].mxu0
      %3810 = vmatprep.mubr.f32.mxu0 0.0
      %3811 = vmatmul.mubr.f32.gmra.mrb[0].mxu0 %v1262
      %v3812 = vpop.f32.mrb[0].mxu0
      %v3813 = vadd.f32 %v943, %v3812
      %v3814 = vpop.f32.mrb[0].mxu0
      %3815 = vmatprep.mubr.f32.mxu0 0.0
      %3816 = vmatmul.mubr.f32.gmra.mrb[0].mxu0 %v1265
      %v3817 = vpop.f32.mrb[0].mxu0
      %v3818 = vadd.f32 %v943, %v3817
      %v3819 = vpop.f32.mrb[0].mxu0
      %3820 = vmatprep.mubr.f32.mxu0 0.0
      %3821 = vmatmul.mubr.f32.gmra.mrb[0].mxu0 %v1268
      %v3822 = vpop.f32.mrb[0].mxu0
      %v3823 = vadd.f32 %v943, %v3822
      %v3824 = vpop.f32.mrb[0].mxu0
      %3825 = vmatprep.mubr.f32.mxu0 0.0
      %3826 = vmatmul.mubr.f32.gmra.mrb[0].mxu0 %v1271
      %v3827 = vpop.f32.mrb[0].mxu0
      %v3828 = vadd.f32 %v943, %v3827
      %v3829 = vpop.f32.mrb[0].mxu0
      %3830 = vmatprep.mubr.f32.mxu0 0.0
      %3831 = vmatmul.mubr.f32.gmra.mrb[0].mxu0 %v1274
      %v3832 = vpop.f32.mrb[0].mxu0
      %v3833 = vadd.f32 %v943, %v3832
      %v3834 = vpop.f32.mrb[0].mxu0
      %3835 = vmatprep.mubr.f32.mxu0 0.0
      %3836 = vmatmul.mubr.f32.gmra.mrb[0].mxu0 %v1277
      %v3837 = vpop.f32.mrb[0].mxu0
      %v3838 = vadd.f32 %v943, %v3837
      %v3839 = vpop.f32.mrb[0].mxu0
      %3840 = vmatprep.mubr.f32.mxu0 0.0
      %3841 = vmatmul.mubr.f32.gmra.mrb[0].mxu0 %v1280
      %v3842 = vpop.f32.mrb[0].mxu0
      %v3843 = vadd.f32 %v943, %v3842
      %v3844 = vpop.f32.mrb[0].mxu0
      %3845 = vmatprep.mubr.f32.mxu0 0.0
      %3846 = vmatmul.mubr.f32.gmra.mrb[0].mxu0 %v1283
      %v3847 = vpop.f32.mrb[0].mxu0
      %v3848 = vadd.f32 %v943, %v3847
      %v3849 = vpop.f32.mrb[0].mxu0
      %3850 = vmatprep.mubr.f32.mxu0 0.0
      %3851 = vmatmul.mubr.f32.gmra.mrb[0].mxu0 %v1286
      %v3852 = vpop.f32.mrb[0].mxu0
      %v3853 = vadd.f32 %v943, %v3852
      %v3854 = vpop.f32.mrb[0].mxu0
      %3855 = vmatprep.mubr.f32.mxu0 0.0
      %3856 = vmatmul.mubr.f32.gmra.mrb[0].mxu0 %v1289
      %v3857 = vpop.f32.mrb[0].mxu0
      %v3858 = vadd.f32 %v943, %v3857
      %v3859 = vpop.f32.mrb[0].mxu0
      %3860 = vmatprep.mubr.f32.mxu0 0.0
      %3861 = vmatmul.mubr.f32.gmra.mrb[0].mxu0 %v1292
      %v3862 = vpop.f32.mrb[0].mxu0
      %v3863 = vadd.f32 %v943, %v3862
      %v3864 = vpop.f32.mrb[0].mxu0
      %3865 = vmatprep.mubr.f32.mxu0 0.0
      %3866 = vmatmul.mubr.f32.gmra.mrb[0].mxu0 %v1295
      %v3867 = vpop.f32.mrb[0].mxu0
      %v3868 = vadd.f32 %v943, %v3867
      %v3869 = vpop.f32.mrb[0].mxu0
      %3870 = vmatprep.mubr.f32.mxu0 0.0
      %3871 = vmatmul.mubr.f32.gmra.mrb[0].mxu0 %v1298
      %v3872 = vpop.f32.mrb[0].mxu0
      %v3873 = vadd.f32 %v943, %v3872
      %v3874 = vpop.f32.mrb[0].mxu0
      %3875 = vmatprep.mubr.f32.mxu0 0.0
      %3876 = vmatmul.mubr.f32.gmra.mrb[0].mxu0 %v1301
      %v3877 = vpop.f32.mrb[0].mxu0
      %v3878 = vadd.f32 %v943, %v3877
      %v3879 = vpop.f32.mrb[0].mxu0
      %3880 = vmatprep.mubr.f32.mxu0 0.0
      %3881 = vmatmul.mubr.f32.gmra.mrb[0].mxu0 %v1304
      %v3882 = vpop.f32.mrb[0].mxu0
      %v3883 = vadd.f32 %v943, %v3882
      %v3884 = vpop.f32.mrb[0].mxu0
      %3885 = vmatprep.mubr.f32.mxu0 0.0
      %3886 = vmatmul.mubr.f32.gmra.mrb[0].mxu0 %v1307
      %v3887 = vpop.f32.mrb[0].mxu0
      %v3888 = vadd.f32 %v943, %v3887
      %v3889 = vpop.f32.mrb[0].mxu0
      %3890 = vmatprep.mubr.f32.mxu0 0.0
      %3891 = vmatmul.mubr.f32.gmra.mrb[0].mxu0 %v1310
      %v3892 = vpop.f32.mrb[0].mxu0
      %v3893 = vadd.f32 %v943, %v3892
      %v3894 = vpop.f32.mrb[0].mxu0
      %3895 = vmatprep.mubr.f32.mxu0 0.0
      %3896 = vmatmul.mubr.f32.gmra.mrb[0].mxu0 %v1313
      %v3897 = vpop.f32.mrb[0].mxu0
      %v3898 = vadd.f32 %v943, %v3897
      %v3899 = vpop.f32.mrb[0].mxu0
      %3900 = vmatprep.mubr.f32.mxu0 0.0
      %3901 = vmatmul.mubr.f32.gmra.mrb[0].mxu0 %v1316
      %v3902 = vpop.f32.mrb[0].mxu0
      %v3903 = vadd.f32 %v943, %v3902
      %v3904 = vpop.f32.mrb[0].mxu0
      %3905 = vmatprep.mubr.f32.mxu0 0.0
      %3906 = vmatmul.mubr.f32.gmra.mrb[0].mxu0 %v1319
      %v3907 = vpop.f32.mrb[0].mxu0
      %v3908 = vadd.f32 %v943, %v3907
      %v3909 = vpop.f32.mrb[0].mxu0
      %3910 = vmatprep.mubr.f32.mxu0 0.0
      %3911 = vmatmul.mubr.f32.gmra.mrb[0].mxu0 %v1322
      %v3912 = vpop.f32.mrb[0].mxu0
      %v3913 = vadd.f32 %v943, %v3912
      %v3914 = vpop.f32.mrb[0].mxu0
      %3915 = vmatprep.mubr.f32.mxu0 0.0
      %3916 = vmatmul.mubr.f32.gmra.mrb[0].mxu0 %v1325
      %v3917 = vpop.f32.mrb[0].mxu0
      %v3918 = vadd.f32 %v943, %v3917
      %v3919 = vpop.f32.mrb[0].mxu0
      %3920 = vmatprep.mubr.f32.mxu0 0.0
      %3921 = vmatmul.mubr.f32.gmra.mrb[0].mxu0 %v1328
      %v3922 = vpop.f32.mrb[0].mxu0
      %v3923 = vadd.f32 %v943, %v3922
      %v3924 = vpop.f32.mrb[0].mxu0
      %3925 = vmatprep.mubr.f32.mxu0 0.0
      %3926 = vmatmul.mubr.f32.gmra.mrb[0].mxu0 %v1331
      %v3927 = vpop.f32.mrb[0].mxu0
      %v3928 = vadd.f32 %v943, %v3927
      %v3929 = vpop.f32.mrb[0].mxu0
      %3930 = vmatprep.mubr.f32.mxu0 0.0
      %3931 = vmatmul.mubr.f32.gmra.mrb[0].mxu0 %v1334
      %v3932 = vpop.f32.mrb[0].mxu0
      %v3933 = vadd.f32 %v943, %v3932
      %v3934 = vpop.f32.mrb[0].mxu0
      %3935 = vmatprep.mubr.f32.mxu0 0.0
      %3936 = vmatmul.mubr.f32.gmra.mrb[0].mxu0 %v1337
      %v3937 = vpop.f32.mrb[0].mxu0
      %v3938 = vadd.f32 %v943, %v3937
      %v3939 = vpop.f32.mrb[0].mxu0
      %3940 = vmatprep.mubr.f32.mxu0 0.0
      %3941 = vmatmul.mubr.f32.gmra.mrb[0].mxu0 %v1340
      %v3942 = vpop.f32.mrb[0].mxu0
      %v3943 = vadd.f32 %v943, %v3942
      %v3944 = vpop.f32.mrb[0].mxu0
      %3945 = vmatprep.mubr.f32.mxu0 0.0
      %3946 = vmatmul.mubr.f32.gmra.mrb[0].mxu0 %v1343
      %v3947 = vpop.f32.mrb[0].mxu0
      %v3948 = vadd.f32 %v943, %v3947
      %v3949 = vpop.f32.mrb[0].mxu0
      %3950 = vmatprep.mubr.f32.mxu0 0.0
      %3951 = vmatmul.mubr.f32.gmra.mrb[0].mxu0 %v1346
      %v3952 = vpop.f32.mrb[0].mxu0
      %v3953 = vadd.f32 %v943, %v3952
      %v3954 = vpop.f32.mrb[0].mxu0
      %3955 = vmatprep.mubr.f32.mxu0 0.0
      %3956 = vmatmul.mubr.f32.gmra.mrb[0].mxu0 %v1349
      %v3957 = vpop.f32.mrb[0].mxu0
      %v3958 = vadd.f32 %v943, %v3957
      %v3959 = vpop.f32.mrb[0].mxu0
      %3960 = vmatprep.mubr.f32.mxu0 0.0
      %3961 = vmatmul.mubr.f32.gmra.mrb[0].mxu0 %v1352
      %v3962 = vpop.f32.mrb[0].mxu0
      %v3963 = vadd.f32 %v943, %v3962
      %v3964 = vpop.f32.mrb[0].mxu0
      %3965 = vmatprep.mubr.f32.mxu0 0.0
      %3966 = vmatmul.mubr.f32.gmra.mrb[0].mxu0 %v1355
      %v3967 = vpop.f32.mrb[0].mxu0
      %v3968 = vadd.f32 %v943, %v3967
      %v3969 = vpop.f32.mrb[0].mxu0
      %3970 = vmatprep.mubr.f32.mxu0 0.0
      %3971 = vmatmul.mubr.f32.gmra.mrb[0].mxu0 %v1358
      %v3972 = vpop.f32.mrb[0].mxu0
      %v3973 = vadd.f32 %v943, %v3972
      %v3974 = vpop.f32.mrb[0].mxu0
      %3975 = vmatprep.mubr.f32.mxu0 0.0
      %3976 = vmatmul.mubr.f32.gmra.mrb[0].mxu0 %v1361
      %v3977 = vpop.f32.mrb[0].mxu0
      %v3978 = vadd.f32 %v943, %v3977
      %v3979 = vpop.f32.mrb[0].mxu0
      %3980 = vmatprep.mubr.f32.mxu0 0.0
      %3981 = vmatmul.mubr.f32.gmra.mrb[0].mxu0 %v1364
      %v3982 = vpop.f32.mrb[0].mxu0
      %v3983 = vadd.f32 %v943, %v3982
      %v3984 = vpop.f32.mrb[0].mxu0
      %3985 = vmatprep.mubr.f32.mxu0 0.0
      %3986 = vmatmul.mubr.f32.gmra.mrb[0].mxu0 %v1367
      %v3987 = vpop.f32.mrb[0].mxu0
      %v3988 = vadd.f32 %v943, %v3987
      %v3989 = vpop.f32.mrb[0].mxu0
      %3990 = vmatprep.mubr.f32.mxu0 0.0
      %3991 = vmatmul.mubr.f32.gmra.mrb[0].mxu0 %v1370
      %v3992 = vpop.f32.mrb[0].mxu0
      %v3993 = vadd.f32 %v943, %v3992
      %v3994 = vpop.f32.mrb[0].mxu0
      %3995 = vmatprep.mubr.f32.mxu0 0.0
      %3996 = vmatmul.mubr.f32.gmra.mrb[0].mxu0 %v1373
      %v3997 = vpop.f32.mrb[0].mxu0
      %v3998 = vadd.f32 %v943, %v3997
      %v3999 = vpop.f32.mrb[0].mxu0
      %4000 = vmatprep.mubr.f32.mxu0 0.0
      %4001 = vmatmul.mubr.f32.gmra.mrb[0].mxu0 %v1376
      %v4002 = vpop.f32.mrb[0].mxu0
      %v4003 = vadd.f32 %v943, %v4002
      %v4004 = vpop.f32.mrb[0].mxu0
      %4005 = vmatprep.mubr.f32.mxu0 0.0
      %4006 = vmatmul.mubr.f32.gmra.mrb[0].mxu0 %v1379
      %v4007 = vpop.f32.mrb[0].mxu0
      %v4008 = vadd.f32 %v943, %v4007
      %v4009 = vpop.f32.mrb[0].mxu0
      %4010 = vmatprep.mubr.f32.mxu0 0.0
      %4011 = vmatmul.mubr.f32.gmra.mrb[0].mxu0 %v1382
      %v4012 = vpop.f32.mrb[0].mxu0
      %v4013 = vadd.f32 %v943, %v4012
      %v4014 = vpop.f32.mrb[0].mxu0
      %4015 = vmatprep.mubr.f32.mxu0 0.0
      %4016 = vmatmul.mubr.f32.gmra.mrb[0].mxu0 %v1385
      %v4017 = vpop.f32.mrb[0].mxu0
      %v4018 = vadd.f32 %v943, %v4017
      %v4019 = vpop.f32.mrb[0].mxu0
      %4020 = vmatprep.mubr.f32.mxu0 0.0
      %4021 = vmatmul.mubr.f32.gmra.mrb[0].mxu0 %v1388
      %v4022 = vpop.f32.mrb[0].mxu0
      %v4023 = vadd.f32 %v943, %v4022
      %v4024 = vpop.f32.mrb[0].mxu0
      %4025 = vmatprep.mubr.f32.mxu0 0.0
      %4026 = vmatmul.mubr.f32.gmra.mrb[0].mxu0 %v1391
      %v4027 = vpop.f32.mrb[0].mxu0
      %v4028 = vadd.f32 %v943, %v4027
      %v4029 = vpop.f32.mrb[0].mxu0
      %4030 = vmatprep.mubr.f32.mxu0 0.0
      %4031 = vmatmul.mubr.f32.gmra.mrb[0].mxu0 %v1394
      %v4032 = vpop.f32.mrb[0].mxu0
      %v4033 = vadd.f32 %v943, %v4032
      %v4034 = vpop.f32.mrb[0].mxu0
      %4035 = vmatprep.mubr.f32.mxu0 0.0
      %4036 = vmatmul.mubr.f32.gmra.mrb[0].mxu0 %v1397
      %v4037 = vpop.f32.mrb[0].mxu0
      %v4038 = vadd.f32 %v943, %v4037
      %v4039 = vpop.f32.mrb[0].mxu0
      %4040 = vmatprep.mubr.f32.mxu0 0.0
      %4041 = vmatmul.mubr.f32.gmra.mrb[0].mxu0 %v1400
      %v4042 = vpop.f32.mrb[0].mxu0
      %v4043 = vadd.f32 %v943, %v4042
      %v4044 = vpop.f32.mrb[0].mxu0
      %4045 = vmatprep.mubr.f32.mxu0 0.0
      %4046 = vmatmul.mubr.f32.gmra.mrb[0].mxu0 %v1403
      %v4047 = vpop.f32.mrb[0].mxu0
      %v4048 = vadd.f32 %v943, %v4047
      %v4049 = vpop.f32.mrb[0].mxu0
      %4050 = vmatprep.mubr.f32.mxu0 0.0
      %4051 = vmatmul.mubr.f32.gmra.mrb[0].mxu0 %v1406
      %v4052 = vpop.f32.mrb[0].mxu0
      %v4053 = vadd.f32 %v943, %v4052
      %v4054 = vpop.f32.mrb[0].mxu0
      %4055 = vmatprep.mubr.f32.mxu0 0.0
      %4056 = vmatmul.mubr.f32.gmra.mrb[0].mxu0 %v1409
      %v4057 = vpop.f32.mrb[0].mxu0
      %v4058 = vadd.f32 %v943, %v4057
      %v4059 = vpop.f32.mrb[0].mxu0
      %4060 = vmatprep.mubr.f32.mxu0 0.0
      %4061 = vmatmul.mubr.f32.gmra.mrb[0].mxu0 %v1412
      %v4062 = vpop.f32.mrb[0].mxu0
      %v4063 = vadd.f32 %v943, %v4062
      %v4064 = vpop.f32.mrb[0].mxu0
      %4065 = vmatprep.mubr.f32.mxu0 0.0
      %4066 = vmatmul.mubr.f32.gmra.mrb[0].mxu0 %v1415
      %v4067 = vpop.f32.mrb[0].mxu0
      %v4068 = vadd.f32 %v943, %v4067
      %v4069 = vpop.f32.mrb[0].mxu0
      %4070 = vmatprep.mubr.f32.mxu0 0.0
      %4071 = vmatmul.mubr.f32.gmra.mrb[0].mxu0 %v1418
      %v4072 = vpop.f32.mrb[0].mxu0
      %v4073 = vadd.f32 %v943, %v4072
      %v4074 = vpop.f32.mrb[0].mxu0
      %4075 = vmatprep.mubr.f32.mxu0 0.0
      %4076 = vmatmul.mubr.f32.gmra.mrb[0].mxu0 %v1421
      %v4077 = vpop.f32.mrb[0].mxu0
      %v4078 = vadd.f32 %v943, %v4077
      %v4079 = vpop.f32.mrb[0].mxu0
      %4080 = vmatprep.mubr.f32.mxu0 0.0
      %4081 = vmatmul.mubr.f32.gmra.mrb[0].mxu0 %v1424
      %v4082 = vpop.f32.mrb[0].mxu0
      %v4083 = vadd.f32 %v943, %v4082
      %v4084 = vpop.f32.mrb[0].mxu0
      %4085 = vmatprep.mubr.f32.mxu0 0.0
      %4086 = vmatmul.mubr.f32.gmra.mrb[0].mxu0 %v1427
      %v4087 = vpop.f32.mrb[0].mxu0
      %v4088 = vadd.f32 %v943, %v4087
      %v4089 = vpop.f32.mrb[0].mxu0
      %4090 = vmatprep.mubr.f32.mxu0 0.0
      %4091 = vmatmul.mubr.f32.gmra.mrb[0].mxu0 %v1430
      %v4092 = vpop.f32.mrb[0].mxu0
      %v4093 = vadd.f32 %v943, %v4092
      %v4094 = vpop.f32.mrb[0].mxu0
      %4095 = vmatprep.mubr.f32.mxu0 0.0
      %4096 = vmatmul.mubr.f32.gmra.mrb[0].mxu0 %v1433
      %v4097 = vpop.f32.mrb[0].mxu0
      %v4098 = vadd.f32 %v943, %v4097
      %v4099 = vpop.f32.mrb[0].mxu0
      %4100 = vmatprep.mubr.f32.mxu0 0.0
      %4101 = vmatmul.mubr.f32.gmra.mrb[0].mxu0 %v1436
      %v4102 = vpop.f32.mrb[0].mxu0
      %v4103 = vadd.f32 %v943, %v4102
      %v4104 = vpop.f32.mrb[0].mxu0
      %4105 = vmatprep.mubr.f32.mxu0 0.0
      %4106 = vmatmul.mubr.f32.gmra.mrb[0].mxu0 %v1439
      %v4107 = vpop.f32.mrb[0].mxu0
      %v4108 = vadd.f32 %v943, %v4107
      %v4109 = vpop.f32.mrb[0].mxu0
      %4110 = vmatprep.mubr.f32.mxu0 0.0
      %4111 = vmatmul.mubr.f32.gmra.mrb[0].mxu0 %v1442
      %v4112 = vpop.f32.mrb[0].mxu0
      %v4113 = vadd.f32 %v943, %v4112
      %v4114 = vpop.f32.mrb[0].mxu0
      %4115 = vmatprep.mubr.f32.mxu0 0.0
      %4116 = vmatmul.mubr.f32.gmra.mrb[0].mxu0 %v1445
      %v4117 = vpop.f32.mrb[0].mxu0
      %v4118 = vadd.f32 %v943, %v4117
      %v4119 = vpop.f32.mrb[0].mxu0
      %4120 = vmatprep.mubr.f32.mxu0 0.0
      %4121 = vmatmul.mubr.f32.gmra.mrb[0].mxu0 %v1448
      %v4122 = vpop.f32.mrb[0].mxu0
      %v4123 = vadd.f32 %v943, %v4122
      %v4124 = vpop.f32.mrb[0].mxu0
      %4125 = vmatprep.mubr.f32.mxu0 0.0
      %4126 = vmatmul.mubr.f32.gmra.mrb[0].mxu0 %v1451
      %v4127 = vpop.f32.mrb[0].mxu0
      %v4128 = vadd.f32 %v943, %v4127
      %v4129 = vpop.f32.mrb[0].mxu0
      %4130 = vmatprep.mubr.f32.mxu0 0.0
      %4131 = vmatmul.mubr.f32.gmra.mrb[0].mxu0 %v1454
      %v4132 = vpop.f32.mrb[0].mxu0
      %v4133 = vadd.f32 %v943, %v4132
      %v4134 = vpop.f32.mrb[0].mxu0
      %4135 = vmatprep.mubr.f32.mxu0 0.0
      %4136 = vmatmul.mubr.f32.gmra.mrb[0].mxu0 %v1457
      %v4137 = vpop.f32.mrb[0].mxu0
      %v4138 = vadd.f32 %v943, %v4137
      %v4139 = vpop.f32.mrb[0].mxu0
      %4140 = vmatprep.mubr.f32.mxu0 0.0
      %4141 = vmatmul.mubr.f32.gmra.mrb[0].mxu0 %v1460
      %v4142 = vpop.f32.mrb[0].mxu0
      %v4143 = vadd.f32 %v943, %v4142
      %v4144 = vpop.f32.mrb[0].mxu0
      %4145 = vmatprep.mubr.f32.mxu0 0.0
      %4146 = vmatmul.mubr.f32.gmra.mrb[0].mxu0 %v1463
      %v4147 = vpop.f32.mrb[0].mxu0
      %v4148 = vadd.f32 %v943, %v4147
      %v4149 = vpop.f32.mrb[0].mxu0
      %4150 = vmatprep.mubr.f32.mxu0 0.0
      %4151 = vmatmul.mubr.f32.gmra.mrb[0].mxu0 %v1466
      %v4152 = vpop.f32.mrb[0].mxu0
      %v4153 = vadd.f32 %v943, %v4152
      %v4154 = vpop.f32.mrb[0].mxu0
      %4155 = vmatprep.mubr.f32.mxu0 0.0
      %4156 = vmatmul.mubr.f32.gmra.mrb[0].mxu0 %v1469
      %v4157 = vpop.f32.mrb[0].mxu0
      %v4158 = vadd.f32 %v943, %v4157
      %v4159 = vpop.f32.mrb[0].mxu0
      %4160 = vmatprep.mubr.f32.mxu0 0.0
      %4161 = vmatmul.mubr.f32.gmra.mrb[0].mxu0 %v1472
      %v4162 = vpop.f32.mrb[0].mxu0
      %v4163 = vadd.f32 %v943, %v4162
      %v4164 = vpop.f32.mrb[0].mxu0
      %4165 = vmatprep.mubr.f32.mxu0 0.0
      %4166 = vmatmul.mubr.f32.gmra.mrb[0].mxu0 %v1475
      %v4167 = vpop.f32.mrb[0].mxu0
      %v4168 = vadd.f32 %v943, %v4167
      %v4169 = vpop.f32.mrb[0].mxu0
      %4170 = vmatprep.mubr.f32.mxu0 0.0
      %4171 = vmatmul.mubr.f32.gmra.mrb[0].mxu0 %v1478
      %v4172 = vpop.f32.mrb[0].mxu0
      %v4173 = vadd.f32 %v943, %v4172
      %v4174 = vpop.f32.mrb[0].mxu0
      %4175 = vmatprep.mubr.f32.mxu0 0.0
      %4176 = vmatmul.mubr.f32.gmra.mrb[0].mxu0 %v1481
      %v4177 = vpop.f32.mrb[0].mxu0
      %v4178 = vadd.f32 %v943, %v4177
      %v4179 = vpop.f32.mrb[0].mxu0
      %4180 = vmatprep.mubr.f32.mxu0 0.0
      %4181 = vmatmul.mubr.f32.gmra.mrb[0].mxu0 %v1484
      %v4182 = vpop.f32.mrb[0].mxu0
      %v4183 = vadd.f32 %v943, %v4182
      %v4184 = vpop.f32.mrb[0].mxu0
      %4185 = vmatprep.mubr.f32.mxu0 0.0
      %4186 = vmatmul.mubr.f32.gmra.mrb[0].mxu0 %v1487
      %v4187 = vpop.f32.mrb[0].mxu0
      %v4188 = vadd.f32 %v943, %v4187
      %v4189 = vpop.f32.mrb[0].mxu0
      %4190 = vmatprep.mubr.f32.mxu0 0.0
      %4191 = vmatmul.mubr.f32.gmra.mrb[0].mxu0 %v1490
      %v4192 = vpop.f32.mrb[0].mxu0
      %v4193 = vadd.f32 %v943, %v4192
      %v4194 = vpop.f32.mrb[0].mxu0
      %4195 = vmatprep.mubr.f32.mxu0 0.0
      %4196 = vmatmul.mubr.f32.gmra.mrb[0].mxu0 %v1493
      %v4197 = vpop.f32.mrb[0].mxu0
      %v4198 = vadd.f32 %v943, %v4197
      %v4199 = vpop.f32.mrb[0].mxu0
      %4200 = vmatprep.mubr.f32.mxu0 0.0
      %4201 = vmatmul.mubr.f32.gmra.mrb[0].mxu0 %v1496
      %v4202 = vpop.f32.mrb[0].mxu0
      %v4203 = vadd.f32 %v943, %v4202
      %v4204 = vpop.f32.mrb[0].mxu0
      %4205 = vmatprep.mubr.f32.mxu0 0.0
      %4206 = vmatmul.mubr.f32.gmra.mrb[0].mxu0 %v1499
      %v4207 = vpop.f32.mrb[0].mxu0
      %v4208 = vadd.f32 %v943, %v4207
      %v4209 = vpop.f32.mrb[0].mxu0
      %4210 = vmatprep.mubr.f32.mxu0 0.0
      %4211 = vmatmul.mubr.f32.gmra.mrb[0].mxu0 %v1502
      %v4212 = vpop.f32.mrb[0].mxu0
      %v4213 = vadd.f32 %v943, %v4212
      %v4214 = vpop.f32.mrb[0].mxu0
      %4215 = vmatprep.mubr.f32.mxu0 0.0
      %4216 = vmatmul.mubr.f32.gmra.mrb[0].mxu0 %v1505
      %v4217 = vpop.f32.mrb[0].mxu0
      %v4218 = vadd.f32 %v943, %v4217
      %v4219 = vpop.f32.mrb[0].mxu0
      %4220 = vmatprep.mubr.f32.mxu0 0.0
      %4221 = vmatmul.mubr.f32.gmra.mrb[0].mxu0 %v1508
      %v4222 = vpop.f32.mrb[0].mxu0
      %v4223 = vadd.f32 %v943, %v4222
      %v4224 = vpop.f32.mrb[0].mxu0
      %4225 = vmatprep.mubr.f32.mxu0 0.0
      %4226 = vmatmul.mubr.f32.gmra.mrb[0].mxu0 %v1511
      %v4227 = vpop.f32.mrb[0].mxu0
      %v4228 = vadd.f32 %v943, %v4227
      %v4229 = vpop.f32.mrb[0].mxu0
      %4230 = vmatprep.mubr.f32.mxu0 0.0
      %4231 = vmatmul.mubr.f32.gmra.mrb[0].mxu0 %v1514
      %v4232 = vpop.f32.mrb[0].mxu0
      %v4233 = vadd.f32 %v943, %v4232
      %v4234 = vpop.f32.mrb[0].mxu0
      %4235 = vmatprep.mubr.f32.mxu0 0.0
      %4236 = vmatmul.mubr.f32.gmra.mrb[0].mxu0 %v1517
      %v4237 = vpop.f32.mrb[0].mxu0
      %v4238 = vadd.f32 %v943, %v4237
      %v4239 = vpop.f32.mrb[0].mxu0
      %4240 = vmatprep.mubr.f32.mxu0 0.0
      %4241 = vmatmul.mubr.f32.gmra.mrb[0].mxu0 %v1520
      %v4242 = vpop.f32.mrb[0].mxu0
      %v4243 = vadd.f32 %v943, %v4242
      %v4244 = vpop.f32.mrb[0].mxu0
      %4245 = vmatprep.mubr.f32.mxu0 0.0
      %4246 = vmatmul.mubr.f32.gmra.mrb[0].mxu0 %v1523
      %v4247 = vpop.f32.mrb[0].mxu0
      %v4248 = vadd.f32 %v943, %v4247
      %v4249 = vpop.f32.mrb[0].mxu0
      %4250 = vmatprep.mubr.f32.mxu0 0.0
      %4251 = vmatmul.mubr.f32.gmra.mrb[0].mxu0 %v1526
      %v4252 = vpop.f32.mrb[0].mxu0
      %v4253 = vadd.f32 %v943, %v4252
      %v4254 = vpop.f32.mrb[0].mxu0
      %4255 = vmatprep.mubr.f32.mxu0 0.0
      %4256 = vmatmul.mubr.f32.gmra.mrb[0].mxu0 %v1529
      %v4257 = vpop.f32.mrb[0].mxu0
      %v4258 = vadd.f32 %v943, %v4257
      %v4259 = vpop.f32.mrb[0].mxu0
      %4260 = vmatprep.mubr.f32.mxu0 0.0
      %4261 = vmatmul.mubr.f32.gmra.mrb[0].mxu0 %v1532
      %v4262 = vpop.f32.mrb[0].mxu0
      %v4263 = vadd.f32 %v943, %v4262
      %v4264 = vpop.f32.mrb[0].mxu0
      %4265 = vmatprep.mubr.f32.mxu0 0.0
      %4266 = vmatmul.mubr.f32.gmra.mrb[0].mxu0 %v1535
      %v4267 = vpop.f32.mrb[0].mxu0
      %v4268 = vadd.f32 %v943, %v4267
      %v4269 = vpop.f32.mrb[0].mxu0
      %4270 = vmatprep.mubr.f32.mxu0 0.0
      %4271 = vmatmul.mubr.f32.gmra.mrb[0].mxu0 %v1538
      %v4272 = vpop.f32.mrb[0].mxu0
      %v4273 = vadd.f32 %v943, %v4272
      %v4274 = vpop.f32.mrb[0].mxu0
      %4275 = vmatprep.mubr.f32.mxu0 0.0
      %4276 = vmatmul.mubr.f32.gmra.mrb[0].mxu0 %v1541
      %v4277 = vpop.f32.mrb[0].mxu0
      %v4278 = vadd.f32 %v943, %v4277
      %v4279 = vpop.f32.mrb[0].mxu0
      %4280 = vmatprep.mubr.f32.mxu0 0.0
      %4281 = vmatmul.mubr.f32.gmra.mrb[0].mxu0 %v1544
      %v4282 = vpop.f32.mrb[0].mxu0
      %v4283 = vadd.f32 %v943, %v4282
      %v4284 = vpop.f32.mrb[0].mxu0
      %4285 = vmatprep.mubr.f32.mxu0 0.0
      %4286 = vmatmul.mubr.f32.gmra.mrb[0].mxu0 %v1547
      %v4287 = vpop.f32.mrb[0].mxu0
      %v4288 = vadd.f32 %v943, %v4287
      %v4289 = vpop.f32.mrb[0].mxu0
      %4290 = vmatprep.mubr.f32.mxu0 0.0
      %4291 = vmatmul.mubr.f32.gmra.mrb[0].mxu0 %v1550
      %v4292 = vpop.f32.mrb[0].mxu0
      %v4293 = vadd.f32 %v943, %v4292
      %v4294 = vpop.f32.mrb[0].mxu0
      %4295 = vmatprep.mubr.f32.mxu0 0.0
      %4296 = vmatmul.mubr.f32.gmra.mrb[0].mxu0 %v1553
      %v4297 = vpop.f32.mrb[0].mxu0
      %v4298 = vadd.f32 %v943, %v4297
      %v4299 = vpop.f32.mrb[0].mxu0
      %4300 = vmatprep.mubr.f32.mxu0 0.0
      %4301 = vmatmul.mubr.f32.gmra.mrb[0].mxu0 %v1556
      %v4302 = vpop.f32.mrb[0].mxu0
      %v4303 = vadd.f32 %v943, %v4302
      %v4304 = vpop.f32.mrb[0].mxu0
      %4305 = vmatprep.mubr.f32.mxu0 0.0
      %4306 = vmatmul.mubr.f32.gmra.mrb[0].mxu0 %v1559
      %v4307 = vpop.f32.mrb[0].mxu0
      %v4308 = vadd.f32 %v943, %v4307
      %v4309 = vpop.f32.mrb[0].mxu0
      %4310 = vmatprep.mubr.f32.mxu0 0.0
      %4311 = vmatmul.mubr.f32.gmra.mrb[0].mxu0 %v1562
      %v4312 = vpop.f32.mrb[0].mxu0
      %v4313 = vadd.f32 %v943, %v4312
      %v4314 = vpop.f32.mrb[0].mxu0
      %4315 = vmatprep.mubr.f32.mxu0 0.0
      %4316 = vmatmul.mubr.f32.gmra.mrb[0].mxu0 %v1565
      %v4317 = vpop.f32.mrb[0].mxu0
      %v4318 = vadd.f32 %v943, %v4317
      %v4319 = vpop.f32.mrb[0].mxu0
      %4320 = vmatprep.mubr.f32.mxu0 0.0
      %4321 = vmatmul.mubr.f32.gmra.mrb[0].mxu0 %v1568
      %v4322 = vpop.f32.mrb[0].mxu0
      %v4323 = vadd.f32 %v943, %v4322
      %v4324 = vpop.f32.mrb[0].mxu0
      %4325 = vmatprep.mubr.f32.mxu0 0.0
      %4326 = vmatmul.mubr.f32.gmra.mrb[0].mxu0 %v1571
      %v4327 = vpop.f32.mrb[0].mxu0
      %v4328 = vadd.f32 %v943, %v4327
      %v4329 = vpop.f32.mrb[0].mxu0
      %4330 = vmatprep.mubr.f32.mxu0 0.0
      %4331 = vmatmul.mubr.f32.gmra.mrb[0].mxu0 %v1574
      %v4332 = vpop.f32.mrb[0].mxu0
      %v4333 = vadd.f32 %v943, %v4332
      %v4334 = vpop.f32.mrb[0].mxu0
      %4335 = vmatprep.mubr.f32.mxu0 0.0
      %4336 = vmatmul.mubr.f32.gmra.mrb[0].mxu0 %v1577
      %v4337 = vpop.f32.mrb[0].mxu0
      %v4338 = vadd.f32 %v943, %v4337
      %v4339 = vpop.f32.mrb[0].mxu0
      %4340 = vmatprep.mubr.f32.mxu0 0.0
      %4341 = vmatmul.mubr.f32.gmra.mrb[0].mxu0 %v1580
      %v4342 = vpop.f32.mrb[0].mxu0
      %v4343 = vadd.f32 %v943, %v4342
      %v4344 = vpop.f32.mrb[0].mxu0
      %4345 = vmatprep.mubr.f32.mxu0 0.0
      %4346 = vmatmul.mubr.f32.gmra.mrb[0].mxu0 %v1583
      %v4347 = vpop.f32.mrb[0].mxu0
      %v4348 = vadd.f32 %v943, %v4347
      %v4349 = vpop.f32.mrb[0].mxu0
      %4350 = vmatprep.mubr.f32.mxu0 0.0
      %4351 = vmatmul.mubr.f32.gmra.mrb[0].mxu0 %v1586
      %v4352 = vpop.f32.mrb[0].mxu0
      %v4353 = vadd.f32 %v943, %v4352
      %v4354 = vpop.f32.mrb[0].mxu0
      %4355 = vmatprep.mubr.f32.mxu0 0.0
      %4356 = vmatmul.mubr.f32.gmra.mrb[0].mxu0 %v1589
      %v4357 = vpop.f32.mrb[0].mxu0
      %v4358 = vadd.f32 %v943, %v4357
      %v4359 = vpop.f32.mrb[0].mxu0
      %4360 = vmatprep.mubr.f32.mxu0 0.0
      %4361 = vmatmul.mubr.f32.gmra.mrb[0].mxu0 %v1592
      %v4362 = vpop.f32.mrb[0].mxu0
      %v4363 = vadd.f32 %v943, %v4362
      %v4364 = vpop.f32.mrb[0].mxu0
      %4365 = vmatprep.mubr.f32.mxu0 0.0
      %4366 = vmatmul.mubr.f32.gmra.mrb[0].mxu0 %v1595
      %v4367 = vpop.f32.mrb[0].mxu0
      %v4368 = vadd.f32 %v943, %v4367
      %v4369 = vpop.f32.mrb[0].mxu0
      %4370 = vmatprep.mubr.f32.mxu0 0.0
      %4371 = vmatmul.mubr.f32.gmra.mrb[0].mxu0 %v1598
      %v4372 = vpop.f32.mrb[0].mxu0
      %v4373 = vadd.f32 %v943, %v4372
      %v4374 = vpop.f32.mrb[0].mxu0
      %4375 = vmatprep.mubr.f32.mxu0 0.0
      %4376 = vmatmul.mubr.f32.gmra.mrb[0].mxu0 %v1601
      %v4377 = vpop.f32.mrb[0].mxu0
      %v4378 = vadd.f32 %v943, %v4377
      %v4379 = vpop.f32.mrb[0].mxu0
      %4380 = vmatprep.mubr.f32.mxu0 0.0
      %4381 = vmatmul.mubr.f32.gmra.mrb[0].mxu0 %v1604
      %v4382 = vpop.f32.mrb[0].mxu0
      %v4383 = vadd.f32 %v943, %v4382
      %v4384 = vpop.f32.mrb[0].mxu0
      %4385 = vmatprep.mubr.f32.mxu0 0.0
      %4386 = vmatmul.mubr.f32.gmra.mrb[0].mxu0 %v1607
      %v4387 = vpop.f32.mrb[0].mxu0
      %v4388 = vadd.f32 %v943, %v4387
      %v4389 = vpop.f32.mrb[0].mxu0
      %4390 = vmatprep.mubr.f32.mxu0 0.0
      %4391 = vmatmul.mubr.f32.gmra.mrb[0].mxu0 %v1610
      %v4392 = vpop.f32.mrb[0].mxu0
      %v4393 = vadd.f32 %v943, %v4392
      %v4394 = vpop.f32.mrb[0].mxu0
      %4395 = vmatprep.mubr.f32.mxu0 0.0
      %4396 = vmatmul.mubr.f32.gmra.mrb[0].mxu0 %v1613
      %v4397 = vpop.f32.mrb[0].mxu0
      %v4398 = vadd.f32 %v943, %v4397
      %v4399 = vpop.f32.mrb[0].mxu0
      %4400 = vmatprep.mubr.f32.mxu0 0.0
      %4401 = vmatmul.mubr.f32.gmra.mrb[0].mxu0 %v1616
      %v4402 = vpop.f32.mrb[0].mxu0
      %v4403 = vadd.f32 %v943, %v4402
      %v4404 = vpop.f32.mrb[0].mxu0
      %4405 = vmatprep.mubr.f32.mxu0 0.0
      %4406 = vmatmul.mubr.f32.gmra.mrb[0].mxu0 %v1619
      %v4407 = vpop.f32.mrb[0].mxu0
      %v4408 = vadd.f32 %v943, %v4407
      %v4409 = vpop.f32.mrb[0].mxu0
      %4410 = vmatprep.mubr.f32.mxu0 0.0
      %4411 = vmatmul.mubr.f32.gmra.mrb[0].mxu0 %v1622
      %v4412 = vpop.f32.mrb[0].mxu0
      %v4413 = vadd.f32 %v943, %v4412
      %v4414 = vpop.f32.mrb[0].mxu0
      %4415 = vmatprep.mubr.f32.mxu0 0.0
      %4416 = vmatmul.mubr.f32.gmra.mrb[0].mxu0 %v1625
      %v4417 = vpop.f32.mrb[0].mxu0
      %v4418 = vadd.f32 %v943, %v4417
      %v4419 = vpop.f32.mrb[0].mxu0
      %4420 = vmatprep.mubr.f32.mxu0 0.0
      %4421 = vmatmul.mubr.f32.gmra.mrb[0].mxu0 %v1628
      %v4422 = vpop.f32.mrb[0].mxu0
      %v4423 = vadd.f32 %v943, %v4422
      %v4424 = vpop.f32.mrb[0].mxu0
      %4425 = vmatprep.mubr.f32.mxu0 0.0
      %4426 = vmatmul.mubr.f32.gmra.mrb[0].mxu0 %v1631
      %v4427 = vpop.f32.mrb[0].mxu0
      %v4428 = vadd.f32 %v943, %v4427
      %v4429 = vpop.f32.mrb[0].mxu0
      %4430 = vmatprep.mubr.f32.mxu0 0.0
      %4431 = vmatmul.mubr.f32.gmra.mrb[0].mxu0 %v1634
      %v4432 = vpop.f32.mrb[0].mxu0
      %v4433 = vadd.f32 %v943, %v4432
      %v4434 = vpop.f32.mrb[0].mxu0
      %4435 = vmatprep.mubr.f32.mxu0 0.0
      %4436 = vmatmul.mubr.f32.gmra.mrb[0].mxu0 %v1637
      %v4437 = vpop.f32.mrb[0].mxu0
      %v4438 = vadd.f32 %v943, %v4437
      %v4439 = vpop.f32.mrb[0].mxu0
      %4440 = vmatprep.mubr.f32.mxu0 0.0
      %4441 = vmatmul.mubr.f32.gmra.mrb[0].mxu0 %v1640
      %v4442 = vpop.f32.mrb[0].mxu0
      %v4443 = vadd.f32 %v943, %v4442
      %v4444 = vpop.f32.mrb[0].mxu0
      %4445 = vmatprep.mubr.f32.mxu0 0.0
      %4446 = vmatmul.mubr.f32.gmra.mrb[0].mxu0 %v1643
      %v4447 = vpop.f32.mrb[0].mxu0
      %v4448 = vadd.f32 %v943, %v4447
      %v4449 = vpop.f32.mrb[0].mxu0
      %4450 = vmatprep.mubr.f32.mxu0 0.0
      %4451 = vmatmul.mubr.f32.gmra.mrb[0].mxu0 %v1646
      %v4452 = vpop.f32.mrb[0].mxu0
      %v4453 = vadd.f32 %v943, %v4452
      %v4454 = vpop.f32.mrb[0].mxu0
      %4455 = vmatprep.mubr.f32.mxu0 0.0
      %4456 = vmatmul.mubr.f32.gmra.mrb[0].mxu0 %v1649
      %v4457 = vpop.f32.mrb[0].mxu0
      %v4458 = vadd.f32 %v943, %v4457
      %v4459 = vpop.f32.mrb[0].mxu0
      %4460 = vmatprep.mubr.f32.mxu0 0.0
      %4461 = vmatmul.mubr.f32.gmra.mrb[0].mxu0 %v1652
      %v4462 = vpop.f32.mrb[0].mxu0
      %v4463 = vadd.f32 %v943, %v4462
      %v4464 = vpop.f32.mrb[0].mxu0
      %4465 = vmatprep.mubr.f32.mxu0 0.0
      %4466 = vmatmul.mubr.f32.gmra.mrb[0].mxu0 %v1655
      %v4467 = vpop.f32.mrb[0].mxu0
      %v4468 = vadd.f32 %v943, %v4467
      %v4469 = vpop.f32.mrb[0].mxu0
      %4470 = vmatprep.mubr.f32.mxu0 0.0
      %4471 = vmatmul.mubr.f32.gmra.mrb[0].mxu0 %v1658
      %v4472 = vpop.f32.mrb[0].mxu0
      %v4473 = vadd.f32 %v943, %v4472
      %v4474 = vpop.f32.mrb[0].mxu0
      %4475 = vmatprep.mubr.f32.mxu0 0.0
      %4476 = vmatmul.mubr.f32.gmra.mrb[0].mxu0 %v1661
      %v4477 = vpop.f32.mrb[0].mxu0
      %v4478 = vadd.f32 %v943, %v4477
      %v4479 = vpop.f32.mrb[0].mxu0
      %4480 = vmatprep.mubr.f32.mxu0 0.0
      %4481 = vmatmul.mubr.f32.gmra.mrb[0].mxu0 %v1664
      %v4482 = vpop.f32.mrb[0].mxu0
      %v4483 = vadd.f32 %v943, %v4482
      %v4484 = vpop.f32.mrb[0].mxu0
      %4485 = vmatprep.mubr.f32.mxu0 0.0
      %4486 = vmatmul.mubr.f32.gmra.mrb[0].mxu0 %v1667
      %v4487 = vpop.f32.mrb[0].mxu0
      %v4488 = vadd.f32 %v943, %v4487
      %v4489 = vpop.f32.mrb[0].mxu0
      %4490 = vmatprep.mubr.f32.mxu0 0.0
      %4491 = vmatmul.mubr.f32.gmra.mrb[0].mxu0 %v1670
      %v4492 = vpop.f32.mrb[0].mxu0
      %v4493 = vadd.f32 %v943, %v4492
      %v4494 = vpop.f32.mrb[0].mxu0
      %4495 = vmatprep.mubr.f32.mxu0 0.0
      %4496 = vmatmul.mubr.f32.gmra.mrb[0].mxu0 %v1673
      %v4497 = vpop.f32.mrb[0].mxu0
      %v4498 = vadd.f32 %v943, %v4497
      %v4499 = vpop.f32.mrb[0].mxu0
      %4500 = vmatprep.mubr.f32.mxu0 0.0
      %4501 = vmatmul.mubr.f32.gmra.mrb[0].mxu0 %v1676
      %v4502 = vpop.f32.mrb[0].mxu0
      %v4503 = vadd.f32 %v943, %v4502
      %v4504 = vpop.f32.mrb[0].mxu0
      %4505 = vmatprep.mubr.f32.mxu0 0.0
      %4506 = vmatmul.mubr.f32.gmra.mrb[0].mxu0 %v1679
      %v4507 = vpop.f32.mrb[0].mxu0
      %v4508 = vadd.f32 %v943, %v4507
      %v4509 = vpop.f32.mrb[0].mxu0
      %4510 = vmatprep.mubr.f32.mxu0 0.0
      %4511 = vmatmul.mubr.f32.gmra.mrb[0].mxu0 %v1682
      %v4512 = vpop.f32.mrb[0].mxu0
      %v4513 = vadd.f32 %v943, %v4512
      %v4514 = vpop.f32.mrb[0].mxu0
      %4515 = vmatprep.mubr.f32.mxu0 0.0
      %4516 = vmatmul.mubr.f32.gmra.mrb[0].mxu0 %v1685
      %v4517 = vpop.f32.mrb[0].mxu0
      %v4518 = vadd.f32 %v943, %v4517
      %v4519 = vpop.f32.mrb[0].mxu0
      %4520 = vmatprep.mubr.f32.mxu0 0.0
      %4521 = vmatmul.mubr.f32.gmra.mrb[0].mxu0 %v1688
      %v4522 = vpop.f32.mrb[0].mxu0
      %v4523 = vadd.f32 %v943, %v4522
      %v4524 = vpop.f32.mrb[0].mxu0
      %4525 = vmatprep.mubr.f32.mxu0 0.0
      %4526 = vmatmul.mubr.f32.gmra.mrb[0].mxu0 %v1691
      %v4527 = vpop.f32.mrb[0].mxu0
      %v4528 = vadd.f32 %v943, %v4527
      %v4529 = vpop.f32.mrb[0].mxu0
      %4530 = vmatprep.mubr.f32.mxu0 0.0
      %4531 = vmatmul.mubr.f32.gmra.mrb[0].mxu0 %v1694
      %v4532 = vpop.f32.mrb[0].mxu0
      %v4533 = vadd.f32 %v943, %v4532
      %v4534 = vpop.f32.mrb[0].mxu0
      %4535 = vmatprep.mubr.f32.mxu0 0.0
      %4536 = vmatmul.mubr.f32.gmra.mrb[0].mxu0 %v1697
      %v4537 = vpop.f32.mrb[0].mxu0
      %v4538 = vadd.f32 %v943, %v4537
      %v4539 = vpop.f32.mrb[0].mxu0
      %4540 = vmatprep.mubr.f32.mxu0 0.0
      %4541 = vmatmul.mubr.f32.gmra.mrb[0].mxu0 %v1700
      %v4542 = vpop.f32.mrb[0].mxu0
      %v4543 = vadd.f32 %v943, %v4542
      %v4544 = vpop.f32.mrb[0].mxu0
      %4545 = vmatprep.mubr.f32.mxu0 0.0
      %4546 = vmatmul.mubr.f32.gmra.mrb[0].mxu0 %v1703
      %v4547 = vpop.f32.mrb[0].mxu0
      %v4548 = vadd.f32 %v943, %v4547
      %v4549 = vpop.f32.mrb[0].mxu0
      %4550 = vmatprep.mubr.f32.mxu0 0.0
      %4551 = vmatmul.mubr.f32.gmra.mrb[0].mxu0 %v1706
      %v4552 = vpop.f32.mrb[0].mxu0
      %v4553 = vadd.f32 %v943, %v4552
      %v4554 = vpop.f32.mrb[0].mxu0
      %4555 = vmatprep.mubr.f32.mxu0 0.0
      %4556 = vmatmul.mubr.f32.gmra.mrb[0].mxu0 %v1709
      %v4557 = vpop.f32.mrb[0].mxu0
      %v4558 = vadd.f32 %v943, %v4557
      %v4559 = vpop.f32.mrb[0].mxu0
      %4560 = vmatprep.mubr.f32.mxu0 0.0
      %4561 = vmatmul.mubr.f32.gmra.mrb[0].mxu0 %v1712
      %v4562 = vpop.f32.mrb[0].mxu0
      %v4563 = vadd.f32 %v943, %v4562
      %v4564 = vpop.f32.mrb[0].mxu0
      %4565 = vmatprep.mubr.f32.mxu0 0.0
      %4566 = vmatmul.mubr.f32.gmra.mrb[0].mxu0 %v1715
      %v4567 = vpop.f32.mrb[0].mxu0
      %v4568 = vadd.f32 %v943, %v4567
      %v4569 = vpop.f32.mrb[0].mxu0
      %4570 = vmatprep.mubr.f32.mxu0 0.0
      %4571 = vmatmul.mubr.f32.gmra.mrb[0].mxu0 %v1718
      %v4572 = vpop.f32.mrb[0].mxu0
      %v4573 = vadd.f32 %v943, %v4572
      %v4574 = vpop.f32.mrb[0].mxu0
      %4575 = vmatprep.mubr.f32.mxu0 0.0
      %4576 = vmatmul.mubr.f32.gmra.mrb[0].mxu0 %v1721
      %v4577 = vpop.f32.mrb[0].mxu0
      %v4578 = vadd.f32 %v943, %v4577
      %v4579 = vpop.f32.mrb[0].mxu0
      %4580 = vmatprep.mubr.f32.mxu0 0.0
      %4581 = vmatmul.mubr.f32.gmra.mrb[0].mxu0 %v1724
      %v4582 = vpop.f32.mrb[0].mxu0
      %v4583 = vadd.f32 %v943, %v4582
      %v4584 = vpop.f32.mrb[0].mxu0
      %4585 = vmatprep.mubr.f32.mxu0 0.0
      %4586 = vmatmul.mubr.f32.gmra.mrb[0].mxu0 %v1727
      %v4587 = vpop.f32.mrb[0].mxu0
      %v4588 = vadd.f32 %v943, %v4587
      %v4589 = vpop.f32.mrb[0].mxu0
      %4590 = vmatprep.mubr.f32.mxu0 0.0
      %4591 = vmatmul.mubr.f32.gmra.mrb[0].mxu0 %v1730
      %v4592 = vpop.f32.mrb[0].mxu0
      %v4593 = vadd.f32 %v943, %v4592
      %v4594 = vpop.f32.mrb[0].mxu0
      %4595 = vmatprep.mubr.f32.mxu0 0.0
      %4596 = vmatmul.mubr.f32.gmra.mrb[0].mxu0 %v1733
      %v4597 = vpop.f32.mrb[0].mxu0
      %v4598 = vadd.f32 %v943, %v4597
      %v4599 = vpop.f32.mrb[0].mxu0
      %4600 = vmatprep.mubr.f32.mxu0 0.0
      %4601 = vmatmul.mubr.f32.gmra.mrb[0].mxu0 %v1736
      %v4602 = vpop.f32.mrb[0].mxu0
      %v4603 = vadd.f32 %v943, %v4602
      %v4604 = vpop.f32.mrb[0].mxu0
      %4605 = vmatprep.mubr.f32.mxu0 0.0
      %4606 = vmatmul.mubr.f32.gmra.mrb[0].mxu0 %v1739
      %v4607 = vpop.f32.mrb[0].mxu0
      %v4608 = vadd.f32 %v943, %v4607
      %v4609 = vpop.f32.mrb[0].mxu0
      %4610 = vmatprep.mubr.f32.mxu0 0.0
      %4611 = vmatmul.mubr.f32.gmra.mrb[0].mxu0 %v1742
      %v4612 = vpop.f32.mrb[0].mxu0
      %v4613 = vadd.f32 %v943, %v4612
      %v4614 = vpop.f32.mrb[0].mxu0
      %4615 = vmatprep.mubr.f32.mxu0 0.0
      %4616 = vmatmul.mubr.f32.gmra.mrb[0].mxu0 %v1745
      %v4617 = vpop.f32.mrb[0].mxu0
      %v4618 = vadd.f32 %v943, %v4617
      %v4619 = vpop.f32.mrb[0].mxu0
      %4620 = vmatprep.mubr.f32.mxu0 0.0
      %4621 = vmatmul.mubr.f32.gmra.mrb[0].mxu0 %v1748
      %v4622 = vpop.f32.mrb[0].mxu0
      %v4623 = vadd.f32 %v943, %v4622
      %v4624 = vpop.f32.mrb[0].mxu0
      %4625 = vmatprep.mubr.f32.mxu0 0.0
      %4626 = vmatmul.mubr.f32.gmra.mrb[0].mxu0 %v1751
      %v4627 = vpop.f32.mrb[0].mxu0
      %v4628 = vadd.f32 %v943, %v4627
      %v4629 = vpop.f32.mrb[0].mxu0
      %4630 = vmatprep.mubr.f32.mxu0 0.0
      %4631 = vmatmul.mubr.f32.gmra.mrb[0].mxu0 %v1754
      %v4632 = vpop.f32.mrb[0].mxu0
      %v4633 = vadd.f32 %v943, %v4632
      %v4634 = vpop.f32.mrb[0].mxu0
      %4635 = vmatprep.mubr.f32.mxu0 0.0
      %4636 = vmatmul.mubr.f32.gmra.mrb[0].mxu0 %v1757
      %v4637 = vpop.f32.mrb[0].mxu0
      %v4638 = vadd.f32 %v943, %v4637
      %v4639 = vpop.f32.mrb[0].mxu0
      %4640 = vmatprep.mubr.f32.mxu0 0.0
      %4641 = vmatmul.mubr.f32.gmra.mrb[0].mxu0 %v1760
      %v4642 = vpop.f32.mrb[0].mxu0
      %v4643 = vadd.f32 %v943, %v4642
      %v4644 = vpop.f32.mrb[0].mxu0
      %4645 = vmatprep.mubr.f32.mxu0 0.0
      %4646 = vmatmul.mubr.f32.gmra.mrb[0].mxu0 %v1763
      %v4647 = vpop.f32.mrb[0].mxu0
      %v4648 = vadd.f32 %v943, %v4647
      %v4649 = vpop.f32.mrb[0].mxu0
      %4650 = vmatprep.mubr.f32.mxu0 0.0
      %4651 = vmatmul.mubr.f32.gmra.mrb[0].mxu0 %v1766
      %v4652 = vpop.f32.mrb[0].mxu0
      %v4653 = vadd.f32 %v943, %v4652
      %v4654 = vpop.f32.mrb[0].mxu0
      %4655 = vmatprep.mubr.f32.mxu0 0.0
      %4656 = vmatmul.mubr.f32.gmra.mrb[0].mxu0 %v1769
      %v4657 = vpop.f32.mrb[0].mxu0
      %v4658 = vadd.f32 %v943, %v4657
      %v4659 = vpop.f32.mrb[0].mxu0
      %4660 = vmatprep.mubr.f32.mxu0 0.0
      %4661 = vmatmul.mubr.f32.gmra.mrb[0].mxu0 %v1772
      %v4662 = vpop.f32.mrb[0].mxu0
      %v4663 = vadd.f32 %v943, %v4662
      %v4664 = vpop.f32.mrb[0].mxu0
      %4665 = vmatprep.mubr.f32.mxu0 0.0
      %4666 = vmatmul.mubr.f32.gmra.mrb[0].mxu0 %v1775
      %v4667 = vpop.f32.mrb[0].mxu0
      %v4668 = vadd.f32 %v943, %v4667
      %v4669 = vpop.f32.mrb[0].mxu0
      %4670 = vmatprep.mubr.f32.mxu0 0.0
      %4671 = vmatmul.mubr.f32.gmra.mrb[0].mxu0 %v1778
      %v4672 = vpop.f32.mrb[0].mxu0
      %v4673 = vadd.f32 %v943, %v4672
      %v4674 = vpop.f32.mrb[0].mxu0
      %4675 = vmatprep.mubr.f32.mxu0 0.0
      %4676 = vmatmul.mubr.f32.gmra.mrb[0].mxu0 %v1781
      %v4677 = vpop.f32.mrb[0].mxu0
      %v4678 = vadd.f32 %v943, %v4677
      %v4679 = vpop.f32.mrb[0].mxu0
      %4680 = vmatprep.mubr.f32.mxu0 0.0
      %4681 = vmatmul.mubr.f32.gmra.mrb[0].mxu0 %v1784
      %v4682 = vpop.f32.mrb[0].mxu0
      %v4683 = vadd.f32 %v943, %v4682
      %v4684 = vpop.f32.mrb[0].mxu0
      %4685 = vmatprep.mubr.f32.mxu0 0.0
      %4686 = vmatmul.mubr.f32.gmra.mrb[0].mxu0 %v1787
      %v4687 = vpop.f32.mrb[0].mxu0
      %v4688 = vadd.f32 %v943, %v4687
      %v4689 = vpop.f32.mrb[0].mxu0
      %4690 = vmatprep.mubr.f32.mxu0 0.0
      %4691 = vmatmul.mubr.f32.gmra.mrb[0].mxu0 %v1790
      %v4692 = vpop.f32.mrb[0].mxu0
      %v4693 = vadd.f32 %v943, %v4692
      %v4694 = vpop.f32.mrb[0].mxu0
      %4695 = vmatprep.mubr.f32.mxu0 0.0
      %4696 = vmatmul.mubr.f32.gmra.mrb[0].mxu0 %v1793
      %v4697 = vpop.f32.mrb[0].mxu0
      %v4698 = vadd.f32 %v943, %v4697
      %v4699 = vpop.f32.mrb[0].mxu0
      %4700 = vmatprep.mubr.f32.mxu0 0.0
      %4701 = vmatmul.mubr.f32.gmra.mrb[0].mxu0 %v1796
      %v4702 = vpop.f32.mrb[0].mxu0
      %v4703 = vadd.f32 %v943, %v4702
      %v4704 = vpop.f32.mrb[0].mxu0
      %4705 = vmatprep.mubr.f32.mxu0 0.0
      %4706 = vmatmul.mubr.f32.gmra.mrb[0].mxu0 %v1799
      %v4707 = vpop.f32.mrb[0].mxu0
      %v4708 = vadd.f32 %v943, %v4707
      %v4709 = vpop.f32.mrb[0].mxu0
      %4710 = vmatprep.mubr.f32.mxu0 0.0
      %4711 = vmatmul.mubr.f32.gmra.mrb[0].mxu0 %v1802
      %v4712 = vpop.f32.mrb[0].mxu0
      %v4713 = vadd.f32 %v943, %v4712
      %v4714 = vpop.f32.mrb[0].mxu0
      %4715 = vmatprep.mubr.f32.mxu0 0.0
      %4716 = vmatmul.mubr.f32.gmra.mrb[0].mxu0 %v1805
      %v4717 = vpop.f32.mrb[0].mxu0
      %v4718 = vadd.f32 %v943, %v4717
      %v4719 = vpop.f32.mrb[0].mxu0
      %4720 = vmatprep.mubr.f32.mxu0 0.0
      %4721 = vmatmul.mubr.f32.gmra.mrb[0].mxu0 %v1808
      %v4722 = vpop.f32.mrb[0].mxu0
      %v4723 = vadd.f32 %v943, %v4722
      %v4724 = vpop.f32.mrb[0].mxu0
      %4725 = vmatprep.mubr.f32.mxu0 0.0
      %4726 = vmatmul.mubr.f32.gmra.mrb[0].mxu0 %v1811
      %v4727 = vpop.f32.mrb[0].mxu0
      %v4728 = vadd.f32 %v943, %v4727
      %v4729 = vpop.f32.mrb[0].mxu0
      %4730 = vmatprep.mubr.f32.mxu0 0.0
      %4731 = vmatmul.mubr.f32.gmra.mrb[0].mxu0 %v1814
      %v4732 = vpop.f32.mrb[0].mxu0
      %v4733 = vadd.f32 %v943, %v4732
      %v4734 = vpop.f32.mrb[0].mxu0
      %4735 = vmatprep.mubr.f32.mxu0 0.0
      %4736 = vmatmul.mubr.f32.gmra.mrb[0].mxu0 %v1817
      %v4737 = vpop.f32.mrb[0].mxu0
      %v4738 = vadd.f32 %v943, %v4737
      %v4739 = vpop.f32.mrb[0].mxu0
      %4740 = vmatprep.mubr.f32.mxu0 0.0
      %4741 = vmatmul.mubr.f32.gmra.mrb[0].mxu0 %v1820
      %v4742 = vpop.f32.mrb[0].mxu0
      %v4743 = vadd.f32 %v943, %v4742
      %v4744 = vpop.f32.mrb[0].mxu0
      %4745 = vmatprep.mubr.f32.mxu0 0.0
      %4746 = vmatmul.mubr.f32.gmra.mrb[0].mxu0 %v1823
      %v4747 = vpop.f32.mrb[0].mxu0
      %v4748 = vadd.f32 %v943, %v4747
      %v4749 = vpop.f32.mrb[0].mxu0
      %4750 = vmatprep.mubr.f32.mxu0 0.0
      %4751 = vmatmul.mubr.f32.gmra.mrb[0].mxu0 %v1826
      %v4752 = vpop.f32.mrb[0].mxu0
      %v4753 = vadd.f32 %v943, %v4752
      %v4754 = vpop.f32.mrb[0].mxu0
      %4755 = vmatprep.mubr.f32.mxu0 0.0
      %4756 = vmatmul.mubr.f32.gmra.mrb[0].mxu0 %v1829
      %v4757 = vpop.f32.mrb[0].mxu0
      %v4758 = vadd.f32 %v943, %v4757
      %v4759 = vpop.f32.mrb[0].mxu0
      %4760 = vmatprep.mubr.f32.mxu0 0.0
      %4761 = vmatmul.mubr.f32.gmra.mrb[0].mxu0 %v1832
      %v4762 = vpop.f32.mrb[0].mxu0
      %v4763 = vadd.f32 %v943, %v4762
      %v4764 = vpop.f32.mrb[0].mxu0
      %4765 = vmatprep.mubr.f32.mxu0 0.0
      %4766 = vmatmul.mubr.f32.gmra.mrb[0].mxu0 %v1835
      %v4767 = vpop.f32.mrb[0].mxu0
      %v4768 = vadd.f32 %v943, %v4767
      %v4769 = vpop.f32.mrb[0].mxu0
      %4770 = vmatprep.mubr.f32.mxu0 0.0
      %4771 = vmatmul.mubr.f32.gmra.mrb[0].mxu0 %v1838
      %v4772 = vpop.f32.mrb[0].mxu0
      %v4773 = vadd.f32 %v943, %v4772
      %v4774 = vpop.f32.mrb[0].mxu0
      %4775 = vmatprep.mubr.f32.mxu0 0.0
      %4776 = vmatmul.mubr.f32.gmra.mrb[0].mxu0 %v1841
      %v4777 = vpop.f32.mrb[0].mxu0
      %v4778 = vadd.f32 %v943, %v4777
      %v4779 = vpop.f32.mrb[0].mxu0
      %4780 = vmatprep.mubr.f32.mxu0 0.0
      %4781 = vmatmul.mubr.f32.gmra.mrb[0].mxu0 %v1844
      %v4782 = vpop.f32.mrb[0].mxu0
      %v4783 = vadd.f32 %v943, %v4782
      %v4784 = vpop.f32.mrb[0].mxu0
      %4785 = vmatprep.mubr.f32.mxu0 0.0
      %4786 = vmatmul.mubr.f32.gmra.mrb[0].mxu0 %v1847
      %v4787 = vpop.f32.mrb[0].mxu0
      %v4788 = vadd.f32 %v943, %v4787
      %v4789 = vpop.f32.mrb[0].mxu0
      %4790 = vmatprep.mubr.f32.mxu0 0.0
      %4791 = vmatmul.mubr.f32.gmra.mrb[0].mxu0 %v1850
      %v4792 = vpop.f32.mrb[0].mxu0
      %v4793 = vadd.f32 %v943, %v4792
      %v4794 = vpop.f32.mrb[0].mxu0
      %4795 = vmatprep.mubr.f32.mxu0 0.0
      %4796 = vmatmul.mubr.f32.gmra.mrb[0].mxu0 %v1853
      %v4797 = vpop.f32.mrb[0].mxu0
      %v4798 = vadd.f32 %v943, %v4797
      %v4799 = vpop.f32.mrb[0].mxu0
      %4800 = vmatprep.mubr.f32.mxu0 0.0
      %4801 = vmatmul.mubr.f32.gmra.mrb[0].mxu0 %v1856
      %v4802 = vpop.f32.mrb[0].mxu0
      %v4803 = vadd.f32 %v943, %v4802
      %v4804 = vpop.f32.mrb[0].mxu0
      %4805 = vmatprep.mubr.f32.mxu0 0.0
      %4806 = vmatmul.mubr.f32.gmra.mrb[0].mxu0 %v1859
      %v4807 = vpop.f32.mrb[0].mxu0
      %v4808 = vadd.f32 %v943, %v4807
      %v4809 = vpop.f32.mrb[0].mxu0
      %4810 = vmatprep.mubr.f32.mxu0 0.0
      %4811 = vmatmul.mubr.f32.gmra.mrb[0].mxu0 %v1862
      %v4812 = vpop.f32.mrb[0].mxu0
      %v4813 = vadd.f32 %v943, %v4812
      %v4814 = vpop.f32.mrb[0].mxu0
      %4815 = vmatprep.mubr.f32.mxu0 0.0
      %4816 = vmatmul.mubr.f32.gmra.mrb[0].mxu0 %v1865
      %v4817 = vpop.f32.mrb[0].mxu0
      %v4818 = vadd.f32 %v943, %v4817
      %v4819 = vpop.f32.mrb[0].mxu0
      %4820 = vmatprep.mubr.f32.mxu0 0.0
      %4821 = vmatmul.mubr.f32.gmra.mrb[0].mxu0 %v1868
      %v4822 = vpop.f32.mrb[0].mxu0
      %v4823 = vadd.f32 %v943, %v4822
      %v4824 = vpop.f32.mrb[0].mxu0
      %4825 = vmatprep.mubr.f32.mxu0 0.0
      %4826 = vmatmul.mubr.f32.gmra.mrb[0].mxu0 %v1871
      %v4827 = vpop.f32.mrb[0].mxu0
      %v4828 = vadd.f32 %v943, %v4827
      %v4829 = vpop.f32.mrb[0].mxu0
      %4830 = vmatprep.mubr.f32.mxu0 0.0
      %4831 = vmatmul.mubr.f32.gmra.mrb[0].mxu0 %v1874
      %v4832 = vpop.f32.mrb[0].mxu0
      %v4833 = vadd.f32 %v943, %v4832
      %v4834 = vpop.f32.mrb[0].mxu0
      %4835 = vmatprep.mubr.f32.mxu0 0.0
      %4836 = vmatmul.mubr.f32.gmra.mrb[0].mxu0 %v1877
      %v4837 = vpop.f32.mrb[0].mxu0
      %v4838 = vadd.f32 %v943, %v4837
      %v4839 = vpop.f32.mrb[0].mxu0
      %4840 = vmatprep.mubr.f32.mxu0 0.0
      %4841 = vmatmul.mubr.f32.gmra.mrb[0].mxu0 %v1880
      %v4842 = vpop.f32.mrb[0].mxu0
      %v4843 = vadd.f32 %v943, %v4842
      %v4844 = vpop.f32.mrb[0].mxu0
      %4845 = vmatprep.mubr.f32.mxu0 0.0
      %4846 = vmatmul.mubr.f32.gmra.mrb[0].mxu0 %v1883
      %v4847 = vpop.f32.mrb[0].mxu0
      %v4848 = vadd.f32 %v943, %v4847
      %v4849 = vpop.f32.mrb[0].mxu0
      %4850 = vmatprep.mubr.f32.mxu0 0.0
      %4851 = vmatmul.mubr.f32.gmra.mrb[0].mxu0 %v1886
      %v4852 = vpop.f32.mrb[0].mxu0
      %v4853 = vadd.f32 %v943, %v4852
      %v4854 = vpop.f32.mrb[0].mxu0
      %4855 = vmatprep.mubr.f32.mxu0 0.0
      %4856 = vmatmul.mubr.f32.gmra.mrb[0].mxu0 %v1889
      %v4857 = vpop.f32.mrb[0].mxu0
      %v4858 = vadd.f32 %v943, %v4857
      %v4859 = vpop.f32.mrb[0].mxu0
      %4860 = vmatprep.mubr.f32.mxu0 0.0
      %4861 = vmatmul.mubr.f32.gmra.mrb[0].mxu0 %v1892
      %v4862 = vpop.f32.mrb[0].mxu0
      %v4863 = vadd.f32 %v943, %v4862
      %v4864 = vpop.f32.mrb[0].mxu0
      %4865 = vmatprep.mubr.f32.mxu0 0.0
      %4866 = vmatmul.mubr.f32.gmra.mrb[0].mxu0 %v1895
      %v4867 = vpop.f32.mrb[0].mxu0
      %v4868 = vadd.f32 %v943, %v4867
      %v4869 = vpop.f32.mrb[0].mxu0
      %4870 = vmatprep.mubr.f32.mxu0 0.0
      %4871 = vmatmul.mubr.f32.gmra.mrb[0].mxu0 %v1898
      %v4872 = vpop.f32.mrb[0].mxu0
      %v4873 = vadd.f32 %v943, %v4872
      %v4874 = vpop.f32.mrb[0].mxu0
      %4875 = vmatprep.mubr.f32.mxu0 0.0
      %4876 = vmatmul.mubr.f32.gmra.mrb[0].mxu0 %v1901
      %v4877 = vpop.f32.mrb[0].mxu0
      %v4878 = vadd.f32 %v943, %v4877
      %v4879 = vpop.f32.mrb[0].mxu0
      %4880 = vmatprep.mubr.f32.mxu0 0.0
      %4881 = vmatmul.mubr.f32.gmra.mrb[0].mxu0 %v1904
      %v4882 = vpop.f32.mrb[0].mxu0
      %v4883 = vadd.f32 %v943, %v4882
      %v4884 = vpop.f32.mrb[0].mxu0
      %4885 = vmatprep.mubr.f32.mxu0 0.0
      %4886 = vmatmul.mubr.f32.gmra.mrb[0].mxu0 %v1907
      %v4887 = vpop.f32.mrb[0].mxu0
      %v4888 = vadd.f32 %v943, %v4887
      %v4889 = vpop.f32.mrb[0].mxu0
      %4890 = vmatprep.mubr.f32.mxu0 0.0
      %4891 = vmatmul.mubr.f32.gmra.mrb[0].mxu0 %v1910
      %v4892 = vpop.f32.mrb[0].mxu0
      %v4893 = vadd.f32 %v943, %v4892
      %v4894 = vpop.f32.mrb[0].mxu0
      %4895 = vmatprep.mubr.f32.mxu0 0.0
      %4896 = vmatmul.mubr.f32.gmra.mrb[0].mxu0 %v1913
      %v4897 = vpop.f32.mrb[0].mxu0
      %v4898 = vadd.f32 %v943, %v4897
      %v4899 = vpop.f32.mrb[0].mxu0
      %4900 = vmatprep.mubr.f32.mxu0 0.0
      %4901 = vmatmul.mubr.f32.gmra.mrb[0].mxu0 %v1916
      %v4902 = vpop.f32.mrb[0].mxu0
      %v4903 = vadd.f32 %v943, %v4902
      %v4904 = vpop.f32.mrb[0].mxu0
      %4905 = vmatprep.mubr.f32.mxu0 0.0
      %4906 = vmatmul.mubr.f32.gmra.mrb[0].mxu0 %v1919
      %v4907 = vpop.f32.mrb[0].mxu0
      %v4908 = vadd.f32 %v943, %v4907
      %v4909 = vpop.f32.mrb[0].mxu0
      %4910 = vmatprep.mubr.f32.mxu0 0.0
      %4911 = vmatmul.mubr.f32.gmra.mrb[0].mxu0 %v1922
      %v4912 = vpop.f32.mrb[0].mxu0
      %v4913 = vadd.f32 %v943, %v4912
      %v4914 = vpop.f32.mrb[0].mxu0
      %4915 = vmatprep.mubr.f32.mxu0 0.0
      %4916 = vmatmul.mubr.f32.gmra.mrb[0].mxu0 %v1925
      %v4917 = vpop.f32.mrb[0].mxu0
      %v4918 = vadd.f32 %v943, %v4917
      %v4919 = vpop.f32.mrb[0].mxu0
      %4920 = vmatprep.mubr.f32.mxu0 0.0
      %4921 = vmatmul.mubr.f32.gmra.mrb[0].mxu0 %v1928
      %v4922 = vpop.f32.mrb[0].mxu0
      %v4923 = vadd.f32 %v943, %v4922
      %v4924 = vpop.f32.mrb[0].mxu0
      %4925 = vmatprep.mubr.f32.mxu0 0.0
      %4926 = vmatmul.mubr.f32.gmra.mrb[0].mxu0 %v1931
      %v4927 = vpop.f32.mrb[0].mxu0
      %v4928 = vadd.f32 %v943, %v4927
      %v4929 = vpop.f32.mrb[0].mxu0
      %4930 = vmatprep.mubr.f32.mxu0 0.0
      %4931 = vmatmul.mubr.f32.gmra.mrb[0].mxu0 %v1934
      %v4932 = vpop.f32.mrb[0].mxu0
      %v4933 = vadd.f32 %v943, %v4932
      %v4934 = vpop.f32.mrb[0].mxu0
      %4935 = vmatprep.mubr.f32.mxu0 0.0
      %4936 = vmatmul.mubr.f32.gmra.mrb[0].mxu0 %v1937
      %v4937 = vpop.f32.mrb[0].mxu0
      %v4938 = vadd.f32 %v943, %v4937
      %v4939 = vpop.f32.mrb[0].mxu0
      %4940 = vmatprep.mubr.f32.mxu0 0.0
      %4941 = vmatmul.mubr.f32.gmra.mrb[0].mxu0 %v1940
      %v4942 = vpop.f32.mrb[0].mxu0
      %v4943 = vadd.f32 %v943, %v4942
      %v4944 = vpop.f32.mrb[0].mxu0
      %4945 = vmatprep.mubr.f32.mxu0 0.0
      %4946 = vmatmul.mubr.f32.gmra.mrb[0].mxu0 %v1943
      %v4947 = vpop.f32.mrb[0].mxu0
      %v4948 = vadd.f32 %v943, %v4947
      %v4949 = vpop.f32.mrb[0].mxu0
      %4950 = vmatprep.mubr.f32.mxu0 0.0
      %4951 = vmatmul.mubr.f32.gmra.mrb[0].mxu0 %v1946
      %v4952 = vpop.f32.mrb[0].mxu0
      %v4953 = vadd.f32 %v943, %v4952
      %v4954 = vpop.f32.mrb[0].mxu0
      %4955 = vmatprep.mubr.f32.mxu0 0.0
      %4956 = vmatmul.mubr.f32.gmra.mrb[0].mxu0 %v1949
      %v4957 = vpop.f32.mrb[0].mxu0
      %v4958 = vadd.f32 %v943, %v4957
      %v4959 = vpop.f32.mrb[0].mxu0
      %4960 = vmatprep.mubr.f32.mxu0 0.0
      %4961 = vmatmul.mubr.f32.gmra.mrb[0].mxu0 %v1952
      %v4962 = vpop.f32.mrb[0].mxu0
      %v4963 = vadd.f32 %v943, %v4962
      %v4964 = vpop.f32.mrb[0].mxu0
      %4965 = vmatprep.mubr.f32.mxu0 0.0
      %4966 = vmatmul.mubr.f32.gmra.mrb[0].mxu0 %v1955
      %v4967 = vpop.f32.mrb[0].mxu0
      %v4968 = vadd.f32 %v943, %v4967
      %v4969 = vpop.f32.mrb[0].mxu0
      %4970 = vmatprep.mubr.f32.mxu0 0.0
      %4971 = vmatmul.mubr.f32.gmra.mrb[0].mxu0 %v1958
      %v4972 = vpop.f32.mrb[0].mxu0
      %v4973 = vadd.f32 %v943, %v4972
      %v4974 = vpop.f32.mrb[0].mxu0
      %4975 = vmatprep.mubr.f32.mxu0 0.0
      %4976 = vmatmul.mubr.f32.gmra.mrb[0].mxu0 %v1961
      %v4977 = vpop.f32.mrb[0].mxu0
      %v4978 = vadd.f32 %v943, %v4977
      %v4979 = vpop.f32.mrb[0].mxu0
      %4980 = vmatprep.mubr.f32.mxu0 0.0
      %4981 = vmatmul.mubr.f32.gmra.mrb[0].mxu0 %v1964
      %v4982 = vpop.f32.mrb[0].mxu0
      %v4983 = vadd.f32 %v943, %v4982
      %v4984 = vpop.f32.mrb[0].mxu0
      %4985 = vmatprep.mubr.f32.mxu0 0.0
      %4986 = vmatmul.mubr.f32.gmra.mrb[0].mxu0 %v1967
      %v4987 = vpop.f32.mrb[0].mxu0
      %v4988 = vadd.f32 %v943, %v4987
      %v4989 = vpop.f32.mrb[0].mxu0
      %4990 = vmatprep.mubr.f32.mxu0 0.0
      %4991 = vmatmul.mubr.f32.gmra.mrb[0].mxu0 %v1970
      %v4992 = vpop.f32.mrb[0].mxu0
      %v4993 = vadd.f32 %v943, %v4992
      %v4994 = vpop.f32.mrb[0].mxu0
      %4995 = vmatprep.mubr.f32.mxu0 0.0
      %4996 = vmatmul.mubr.f32.gmra.mrb[0].mxu0 %v1973
      %v4997 = vpop.f32.mrb[0].mxu0
      %v4998 = vadd.f32 %v943, %v4997
      %v4999 = vpop.f32.mrb[0].mxu0
      %5000 = vmatprep.mubr.f32.mxu0 0.0
      %5001 = vmatmul.mubr.f32.gmra.mrb[0].mxu0 %v1976
      %v5002 = vpop.f32.mrb[0].mxu0
      %v5003 = vadd.f32 %v943, %v5002
      %v5004 = vpop.f32.mrb[0].mxu0
      %5005 = vmatprep.mubr.f32.mxu0 0.0
      %5006 = vmatmul.mubr.f32.gmra.mrb[0].mxu0 %v1979
      %v5007 = vpop.f32.mrb[0].mxu0
      %v5008 = vadd.f32 %v943, %v5007
      %v5009 = vpop.f32.mrb[0].mxu0
      %5010 = vmatprep.mubr.f32.mxu0 0.0
      %5011 = vmatmul.mubr.f32.gmra.mrb[0].mxu0 %v1982
      %v5012 = vpop.f32.mrb[0].mxu0
      %v5013 = vadd.f32 %v943, %v5012
      %v5014 = vpop.f32.mrb[0].mxu0
      %5015 = vmatprep.mubr.f32.mxu0 0.0
      %5016 = vmatmul.mubr.f32.gmra.mrb[0].mxu0 %v1985
      %v5017 = vpop.f32.mrb[0].mxu0
      %v5018 = vadd.f32 %v943, %v5017
      %v5019 = vpop.f32.mrb[0].mxu0
      %5020 = vmatprep.mubr.f32.mxu0 0.0
      %5021 = vmatmul.mubr.f32.gmra.mrb[0].mxu0 %v1988
      %v5022 = vpop.f32.mrb[0].mxu0
      %v5023 = vadd.f32 %v943, %v5022
      %v5024 = vpop.f32.mrb[0].mxu0
      %5025 = vmatprep.mubr.f32.mxu0 0.0
      %5026 = vmatmul.mubr.f32.gmra.mrb[0].mxu0 %v1991
      %v5027 = vpop.f32.mrb[0].mxu0
      %v5028 = vadd.f32 %v943, %v5027
      %v5029 = vpop.f32.mrb[0].mxu0
      %5030 = vmatprep.mubr.f32.mxu0 0.0
      %5031 = vmatmul.mubr.f32.gmra.mrb[0].mxu0 %v1994
      %v5032 = vpop.f32.mrb[0].mxu0
      %v5033 = vadd.f32 %v943, %v5032
      %v5034 = vpop.f32.mrb[0].mxu0
      %5035 = vmatprep.mubr.f32.mxu0 0.0
      %5036 = vmatmul.mubr.f32.gmra.mrb[0].mxu0 %v1997
      %v5037 = vpop.f32.mrb[0].mxu0
      %v5038 = vadd.f32 %v943, %v5037
      %v5039 = vpop.f32.mrb[0].mxu0
      %5040 = vmatprep.mubr.f32.mxu0 0.0
      %5041 = vmatmul.mubr.f32.gmra.mrb[0].mxu0 %v2000
      %v5042 = vpop.f32.mrb[0].mxu0
      %v5043 = vadd.f32 %v943, %v5042
      %v5044 = vpop.f32.mrb[0].mxu0
      %5045 = vmatprep.mubr.f32.mxu0 0.0
      %5046 = vmatmul.mubr.f32.gmra.mrb[0].mxu0 %v2003
      %v5047 = vpop.f32.mrb[0].mxu0
      %v5048 = vadd.f32 %v943, %v5047
      %v5049 = vpop.f32.mrb[0].mxu0
      %5050 = vmatprep.mubr.f32.mxu0 0.0
      %5051 = vmatmul.mubr.f32.gmra.mrb[0].mxu0 %v2006
      %v5052 = vpop.f32.mrb[0].mxu0
      %v5053 = vadd.f32 %v943, %v5052
      %v5054 = vpop.f32.mrb[0].mxu0
      %5055 = vmatprep.mubr.f32.mxu0 0.0
      %5056 = vmatmul.mubr.f32.gmra.mrb[0].mxu0 %v2009
      %v5057 = vpop.f32.mrb[0].mxu0
      %v5058 = vadd.f32 %v943, %v5057
      %v5059 = vpop.f32.mrb[0].mxu0
      %5060 = vmatprep.mubr.f32.mxu0 0.0
      %5061 = vmatmul.mubr.f32.gmra.mrb[0].mxu0 %v2012
      %v5062 = vpop.f32.mrb[0].mxu0
      %v5063 = vadd.f32 %v943, %v5062
      %v5064 = vpop.f32.mrb[0].mxu0
      %5065 = vmatprep.mubr.f32.mxu0 0.0
      %5066 = vmatmul.mubr.f32.gmra.mrb[0].mxu0 %v2015
      %v5067 = vpop.f32.mrb[0].mxu0
      %v5068 = vadd.f32 %v943, %v5067
      %v5069 = vpop.f32.mrb[0].mxu0
      %5070 = vmatprep.mubr.f32.mxu0 0.0
      %5071 = vmatmul.mubr.f32.gmra.mrb[0].mxu0 %v2018
      %v5072 = vpop.f32.mrb[0].mxu0
      %v5073 = vadd.f32 %v943, %v5072
      %v5074 = vpop.f32.mrb[0].mxu0
      %5075 = vmatprep.mubr.f32.mxu0 0.0
      %5076 = vmatmul.mubr.f32.gmra.mrb[0].mxu0 %v2021
      %v5077 = vpop.f32.mrb[0].mxu0
      %v5078 = vadd.f32 %v943, %v5077
      %v5079 = vpop.f32.mrb[0].mxu0
      %5080 = vmatprep.mubr.f32.mxu0 0.0
      %5081 = vmatmul.mubr.f32.gmra.mrb[0].mxu0 %v2024
      %v5082 = vpop.f32.mrb[0].mxu0
      %v5083 = vadd.f32 %v943, %v5082
      %v5084 = vpop.f32.mrb[0].mxu0
      %5085 = vmatprep.mubr.f32.mxu0 0.0
      %5086 = vmatmul.mubr.f32.gmra.mrb[0].mxu0 %v2027
      %v5087 = vpop.f32.mrb[0].mxu0
      %v5088 = vadd.f32 %v943, %v5087
      %v5089 = vpop.f32.mrb[0].mxu0
      %5090 = vmatprep.mubr.f32.mxu0 0.0
      %5091 = vmatmul.mubr.f32.gmra.mrb[0].mxu0 %v2030
      %v5092 = vpop.f32.mrb[0].mxu0
      %v5093 = vadd.f32 %v943, %v5092
      %v5094 = vpop.f32.mrb[0].mxu0
      %5095 = vmatprep.mubr.f32.mxu0 0.0
      %5096 = vmatmul.mubr.f32.gmra.mrb[0].mxu0 %v2033
      %v5097 = vpop.f32.mrb[0].mxu0
      %v5098 = vadd.f32 %v943, %v5097
      %v5099 = vpop.f32.mrb[0].mxu0
      %5100 = vmatprep.mubr.f32.mxu0 0.0
      %5101 = vmatmul.mubr.f32.gmra.mrb[0].mxu0 %v2036
      %v5102 = vpop.f32.mrb[0].mxu0
      %v5103 = vadd.f32 %v943, %v5102
      %v5104 = vpop.f32.mrb[0].mxu0
      %5105 = vmatprep.mubr.f32.mxu0 0.0
      %5106 = vmatmul.mubr.f32.gmra.mrb[0].mxu0 %v2039
      %v5107 = vpop.f32.mrb[0].mxu0
      %v5108 = vadd.f32 %v943, %v5107
      %v5109 = vpop.f32.mrb[0].mxu0
      %5110 = vmatprep.mubr.f32.mxu0 0.0
      %5111 = vmatmul.mubr.f32.gmra.mrb[0].mxu0 %v2042
      %v5112 = vpop.f32.mrb[0].mxu0
      %v5113 = vadd.f32 %v943, %v5112
      %v5114 = vpop.f32.mrb[0].mxu0
      %5115 = vmatprep.mubr.f32.mxu0 0.0
      %5116 = vmatmul.mubr.f32.gmra.mrb[0].mxu0 %v2045
      %v5117 = vpop.f32.mrb[0].mxu0
      %v5118 = vadd.f32 %v943, %v5117
      %v5119 = vpop.f32.mrb[0].mxu0
      %5120 = vmatprep.mubr.f32.mxu0 0.0
      %5121 = vmatmul.mubr.f32.gmra.mrb[0].mxu0 %v2048
      %v5122 = vpop.f32.mrb[0].mxu0
      %v5123 = vadd.f32 %v943, %v5122
      %v5124 = vpop.f32.mrb[0].mxu0
      %5125 = vmatprep.mubr.f32.mxu0 0.0
      %5126 = vmatmul.mubr.f32.gmra.mrb[0].mxu0 %v2051
      %v5127 = vpop.f32.mrb[0].mxu0
      %v5128 = vadd.f32 %v943, %v5127
      %v5129 = vpop.f32.mrb[0].mxu0
      %5130 = vmatprep.mubr.f32.mxu0 0.0
      %5131 = vmatmul.mubr.f32.gmra.mrb[0].mxu0 %v2054
      %v5132 = vpop.f32.mrb[0].mxu0
      %v5133 = vadd.f32 %v943, %v5132
      %v5134 = vpop.f32.mrb[0].mxu0
      %5135 = vmatprep.mubr.f32.mxu0 0.0
      %5136 = vmatmul.mubr.f32.gmra.mrb[0].mxu0 %v2057
      %v5137 = vpop.f32.mrb[0].mxu0
      %v5138 = vadd.f32 %v943, %v5137
      %v5139 = vpop.f32.mrb[0].mxu0
      %5140 = vmatprep.mubr.f32.mxu0 0.0
      %5141 = vmatmul.mubr.f32.gmra.mrb[0].mxu0 %v2060
      %v5142 = vpop.f32.mrb[0].mxu0
      %v5143 = vadd.f32 %v943, %v5142
      %v5144 = vpop.f32.mrb[0].mxu0
      %5145 = vmatprep.mubr.f32.mxu0 0.0
      %5146 = vmatmul.mubr.f32.gmra.mrb[0].mxu0 %v2063
      %v5147 = vpop.f32.mrb[0].mxu0
      %v5148 = vadd.f32 %v943, %v5147
      %v5149 = vpop.f32.mrb[0].mxu0
      %5150 = vmatprep.mubr.f32.mxu0 0.0
      %5151 = vmatmul.mubr.f32.gmra.mrb[0].mxu0 %v2066
      %v5152 = vpop.f32.mrb[0].mxu0
      %v5153 = vadd.f32 %v943, %v5152
      %v5154 = vpop.f32.mrb[0].mxu0
      %5155 = vmatprep.mubr.f32.mxu0 0.0
      %5156 = vmatmul.mubr.f32.gmra.mrb[0].mxu0 %v2069
      %v5157 = vpop.f32.mrb[0].mxu0
      %v5158 = vadd.f32 %v943, %v5157
      %v5159 = vpop.f32.mrb[0].mxu0
      %5160 = vmatprep.mubr.f32.mxu0 0.0
      %5161 = vmatmul.mubr.f32.gmra.mrb[0].mxu0 %v2072
      %v5162 = vpop.f32.mrb[0].mxu0
      %v5163 = vadd.f32 %v943, %v5162
      %v5164 = vpop.f32.mrb[0].mxu0
      %5165 = vmatprep.mubr.f32.mxu0 0.0
      %5166 = vmatmul.mubr.f32.gmra.mrb[0].mxu0 %v2075
      %v5167 = vpop.f32.mrb[0].mxu0
      %v5168 = vadd.f32 %v943, %v5167
      %v5169 = vpop.f32.mrb[0].mxu0
      %5170 = vmatprep.mubr.f32.mxu0 0.0
      %5171 = vmatmul.mubr.f32.gmra.mrb[0].mxu0 %v2078
      %v5172 = vpop.f32.mrb[0].mxu0
      %v5173 = vadd.f32 %v943, %v5172
      %v5174 = vpop.f32.mrb[0].mxu0
      %5175 = vmatprep.mubr.f32.mxu0 0.0
      %5176 = vmatmul.mubr.f32.gmra.mrb[0].mxu0 %v2081
      %v5177 = vpop.f32.mrb[0].mxu0
      %v5178 = vadd.f32 %v943, %v5177
      %v5179 = vpop.f32.mrb[0].mxu0
      %5180 = vmatprep.mubr.f32.mxu0 0.0
      %5181 = vmatmul.mubr.f32.gmra.mrb[0].mxu0 %v2084
      %v5182 = vpop.f32.mrb[0].mxu0
      %v5183 = vadd.f32 %v943, %v5182
      %v5184 = vpop.f32.mrb[0].mxu0
      %5185 = vmatprep.mubr.f32.mxu0 0.0
      %5186 = vmatmul.mubr.f32.gmra.mrb[0].mxu0 %v2087
      %v5187 = vpop.f32.mrb[0].mxu0
      %v5188 = vadd.f32 %v943, %v5187
      %v5189 = vpop.f32.mrb[0].mxu0
      %5190 = vmatprep.mubr.f32.mxu0 0.0
      %5191 = vmatmul.mubr.f32.gmra.mrb[0].mxu0 %v2090
      %v5192 = vpop.f32.mrb[0].mxu0
      %v5193 = vadd.f32 %v943, %v5192
      %v5194 = vpop.f32.mrb[0].mxu0
      %5195 = vmatprep.mubr.f32.mxu0 0.0
      %5196 = vmatmul.mubr.f32.gmra.mrb[0].mxu0 %v2093
      %v5197 = vpop.f32.mrb[0].mxu0
      %v5198 = vadd.f32 %v943, %v5197
      %v5199 = vpop.f32.mrb[0].mxu0
      %5200 = vmatprep.mubr.f32.mxu0 0.0
      %5201 = vmatmul.mubr.f32.gmra.mrb[0].mxu0 %v2096
      %v5202 = vpop.f32.mrb[0].mxu0
      %v5203 = vadd.f32 %v943, %v5202
      %v5204 = vpop.f32.mrb[0].mxu0
      %5205 = vmatprep.mubr.f32.mxu0 0.0
      %5206 = vmatmul.mubr.f32.gmra.mrb[0].mxu0 %v2099
      %v5207 = vpop.f32.mrb[0].mxu0
      %v5208 = vadd.f32 %v943, %v5207
      %v5209 = vpop.f32.mrb[0].mxu0
      %5210 = vmatprep.mubr.f32.mxu0 0.0
      %5211 = vmatmul.mubr.f32.gmra.mrb[0].mxu0 %v2102
      %v5212 = vpop.f32.mrb[0].mxu0
      %v5213 = vadd.f32 %v943, %v5212
      %v5214 = vpop.f32.mrb[0].mxu0
      %5215 = vmatprep.mubr.f32.mxu0 0.0
      %5216 = vmatmul.mubr.f32.gmra.mrb[0].mxu0 %v2105
      %v5217 = vpop.f32.mrb[0].mxu0
      %v5218 = vadd.f32 %v943, %v5217
      %v5219 = vpop.f32.mrb[0].mxu0
      %5220 = vmatprep.mubr.f32.mxu0 0.0
      %5221 = vmatmul.mubr.f32.gmra.mrb[0].mxu0 %v2108
      %v5222 = vpop.f32.mrb[0].mxu0
      %v5223 = vadd.f32 %v943, %v5222
      %v5224 = vpop.f32.mrb[0].mxu0
      %5225 = vmatprep.mubr.f32.mxu0 0.0
      %5226 = vmatmul.mubr.f32.gmra.mrb[0].mxu0 %v2111
      %v5227 = vpop.f32.mrb[0].mxu0
      %v5228 = vadd.f32 %v943, %v5227
      %v5229 = vpop.f32.mrb[0].mxu0
      %5230 = vmatprep.mubr.f32.mxu0 0.0
      %5231 = vmatmul.mubr.f32.gmra.mrb[0].mxu0 %v2114
      %v5232 = vpop.f32.mrb[0].mxu0
      %v5233 = vadd.f32 %v943, %v5232
      %v5234 = vpop.f32.mrb[0].mxu0
      %5235 = vmatprep.mubr.f32.mxu0 0.0
      %5236 = vmatmul.mubr.f32.gmra.mrb[0].mxu0 %v2117
      %v5237 = vpop.f32.mrb[0].mxu0
      %v5238 = vadd.f32 %v943, %v5237
      %v5239 = vpop.f32.mrb[0].mxu0
      %5240 = vmatprep.mubr.f32.mxu0 0.0
      %5241 = vmatmul.mubr.f32.gmra.mrb[0].mxu0 %v2120
      %v5242 = vpop.f32.mrb[0].mxu0
      %v5243 = vadd.f32 %v943, %v5242
      %v5244 = vpop.f32.mrb[0].mxu0
      %5245 = vmatprep.mubr.f32.mxu0 0.0
      %5246 = vmatmul.mubr.f32.gmra.mrb[0].mxu0 %v2123
      %v5247 = vpop.f32.mrb[0].mxu0
      %v5248 = vadd.f32 %v943, %v5247
      %v5249 = vpop.f32.mrb[0].mxu0
      %5250 = vmatprep.mubr.f32.mxu0 0.0
      %5251 = vmatmul.mubr.f32.gmra.mrb[0].mxu0 %v2126
      %v5252 = vpop.f32.mrb[0].mxu0
      %v5253 = vadd.f32 %v943, %v5252
      %v5254 = vpop.f32.mrb[0].mxu0
      %5255 = vmatprep.mubr.f32.mxu0 0.0
      %5256 = vmatmul.mubr.f32.gmra.mrb[0].mxu0 %v2129
      %v5257 = vpop.f32.mrb[0].mxu0
      %v5258 = vadd.f32 %v943, %v5257
      %v5259 = vpop.f32.mrb[0].mxu0
      %5260 = vmatprep.mubr.f32.mxu0 0.0
      %5261 = vmatmul.mubr.f32.gmra.mrb[0].mxu0 %v2132
      %v5262 = vpop.f32.mrb[0].mxu0
      %v5263 = vadd.f32 %v943, %v5262
      %v5264 = vpop.f32.mrb[0].mxu0
      %5265 = vmatprep.mubr.f32.mxu0 0.0
      %5266 = vmatmul.mubr.f32.gmra.mrb[0].mxu0 %v2135
      %v5267 = vpop.f32.mrb[0].mxu0
      %v5268 = vadd.f32 %v943, %v5267
      %v5269 = vpop.f32.mrb[0].mxu0
      %5270 = vmatprep.mubr.f32.mxu0 0.0
      %5271 = vmatmul.mubr.f32.gmra.mrb[0].mxu0 %v2138
      %v5272 = vpop.f32.mrb[0].mxu0
      %v5273 = vadd.f32 %v943, %v5272
      %v5274 = vpop.f32.mrb[0].mxu0
      %5275 = vmatprep.mubr.f32.mxu0 0.0
      %5276 = vmatmul.mubr.f32.gmra.mrb[0].mxu0 %v2141
      %v5277 = vpop.f32.mrb[0].mxu0
      %v5278 = vadd.f32 %v943, %v5277
      %v5279 = vpop.f32.mrb[0].mxu0
      %5280 = vmatprep.mubr.f32.mxu0 0.0
      %5281 = vmatmul.mubr.f32.gmra.mrb[0].mxu0 %v2144
      %v5282 = vpop.f32.mrb[0].mxu0
      %v5283 = vadd.f32 %v943, %v5282
      %v5284 = vpop.f32.mrb[0].mxu0
      %5285 = vmatprep.mubr.f32.mxu0 0.0
      %5286 = vmatmul.mubr.f32.gmra.mrb[0].mxu0 %v2147
      %v5287 = vpop.f32.mrb[0].mxu0
      %v5288 = vadd.f32 %v943, %v5287
      %v5289 = vpop.f32.mrb[0].mxu0
      %5290 = vmatprep.mubr.f32.mxu0 0.0
      %5291 = vmatmul.mubr.f32.gmra.mrb[0].mxu0 %v2150
      %v5292 = vpop.f32.mrb[0].mxu0
      %v5293 = vadd.f32 %v943, %v5292
      %v5294 = vpop.f32.mrb[0].mxu0
      %5295 = vmatprep.mubr.f32.mxu0 0.0
      %5296 = vmatmul.mubr.f32.gmra.mrb[0].mxu0 %v2153
      %v5297 = vpop.f32.mrb[0].mxu0
      %v5298 = vadd.f32 %v943, %v5297
      %v5299 = vpop.f32.mrb[0].mxu0
      %5300 = vmatprep.mubr.f32.mxu0 0.0
      %5301 = vmatmul.mubr.f32.gmra.mrb[0].mxu0 %v2156
      %v5302 = vpop.f32.mrb[0].mxu0
      %v5303 = vadd.f32 %v943, %v5302
      %v5304 = vpop.f32.mrb[0].mxu0
      %5305 = vmatprep.mubr.f32.mxu0 0.0
      %5306 = vmatmul.mubr.f32.gmra.mrb[0].mxu0 %v2159
      %v5307 = vpop.f32.mrb[0].mxu0
      %v5308 = vadd.f32 %v943, %v5307
      %v5309 = vpop.f32.mrb[0].mxu0
      %5310 = vmatprep.mubr.f32.mxu0 0.0
      %5311 = vmatmul.mubr.f32.gmra.mrb[0].mxu0 %v2162
      %v5312 = vpop.f32.mrb[0].mxu0
      %v5313 = vadd.f32 %v943, %v5312
      %v5314 = vpop.f32.mrb[0].mxu0
      %5315 = vmatprep.mubr.f32.mxu0 0.0
      %5316 = vmatmul.mubr.f32.gmra.mrb[0].mxu0 %v2165
      %v5317 = vpop.f32.mrb[0].mxu0
      %v5318 = vadd.f32 %v943, %v5317
      %v5319 = vpop.f32.mrb[0].mxu0
      %5320 = vmatprep.mubr.f32.mxu0 0.0
      %5321 = vmatmul.mubr.f32.gmra.mrb[0].mxu0 %v2168
      %v5322 = vpop.f32.mrb[0].mxu0
      %v5323 = vadd.f32 %v943, %v5322
      %v5324 = vpop.f32.mrb[0].mxu0
      %5325 = vmatprep.mubr.f32.mxu0 0.0
      %5326 = vmatmul.mubr.f32.gmra.mrb[0].mxu0 %v2171
      %v5327 = vpop.f32.mrb[0].mxu0
      %v5328 = vadd.f32 %v943, %v5327
      %v5329 = vpop.f32.mrb[0].mxu0
      %5330 = vmatprep.mubr.f32.mxu0 0.0
      %5331 = vmatmul.mubr.f32.gmra.mrb[0].mxu0 %v2174
      %v5332 = vpop.f32.mrb[0].mxu0
      %v5333 = vadd.f32 %v943, %v5332
      %v5334 = vpop.f32.mrb[0].mxu0
      %5335 = vmatprep.mubr.f32.mxu0 0.0
      %5336 = vmatmul.mubr.f32.gmra.mrb[0].mxu0 %v2177
      %v5337 = vpop.f32.mrb[0].mxu0
      %v5338 = vadd.f32 %v943, %v5337
      %v5339 = vpop.f32.mrb[0].mxu0
      %5340 = vmatprep.mubr.f32.mxu0 0.0
      %5341 = vmatmul.mubr.f32.gmra.mrb[0].mxu0 %v2180
      %v5342 = vpop.f32.mrb[0].mxu0
      %v5343 = vadd.f32 %v943, %v5342
      %v5344 = vpop.f32.mrb[0].mxu0
      %5345 = vmatprep.mubr.f32.mxu0 0.0
      %5346 = vmatmul.mubr.f32.gmra.mrb[0].mxu0 %v2183
      %v5347 = vpop.f32.mrb[0].mxu0
      %v5348 = vadd.f32 %v943, %v5347
      %v5349 = vpop.f32.mrb[0].mxu0
      %5350 = vmatprep.mubr.f32.mxu0 0.0
      %5351 = vmatmul.mubr.f32.gmra.mrb[0].mxu0 %v2186
      %v5352 = vpop.f32.mrb[0].mxu0
      %v5353 = vadd.f32 %v943, %v5352
      %v5354 = vpop.f32.mrb[0].mxu0
      %5355 = vmatprep.mubr.f32.mxu0 0.0
      %5356 = vmatmul.mubr.f32.gmra.mrb[0].mxu0 %v2189
      %v5357 = vpop.f32.mrb[0].mxu0
      %v5358 = vadd.f32 %v943, %v5357
      %v5359 = vpop.f32.mrb[0].mxu0
      %5360 = vmatprep.mubr.f32.mxu0 0.0
      %5361 = vmatmul.mubr.f32.gmra.mrb[0].mxu0 %v2192
      %v5362 = vpop.f32.mrb[0].mxu0
      %v5363 = vadd.f32 %v943, %v5362
      %v5364 = vpop.f32.mrb[0].mxu0
      %5365 = vmatprep.mubr.f32.mxu0 0.0
      %5366 = vmatmul.mubr.f32.gmra.mrb[0].mxu0 %v2195
      %v5367 = vpop.f32.mrb[0].mxu0
      %v5368 = vadd.f32 %v943, %v5367
      %v5369 = vpop.f32.mrb[0].mxu0
      %5370 = vmatprep.mubr.f32.mxu0 0.0
      %5371 = vmatmul.mubr.f32.gmra.mrb[0].mxu0 %v2198
      %v5372 = vpop.f32.mrb[0].mxu0
      %v5373 = vadd.f32 %v943, %v5372
      %v5374 = vpop.f32.mrb[0].mxu0
      %5375 = vmatprep.mubr.f32.mxu0 0.0
      %5376 = vmatmul.mubr.f32.gmra.mrb[0].mxu0 %v2201
      %v5377 = vpop.f32.mrb[0].mxu0
      %v5378 = vadd.f32 %v943, %v5377
      %v5379 = vpop.f32.mrb[0].mxu0
      %5380 = vmatprep.mubr.f32.mxu0 0.0
      %5381 = vmatmul.mubr.f32.gmra.mrb[0].mxu0 %v2204
      %v5382 = vpop.f32.mrb[0].mxu0
      %v5383 = vadd.f32 %v943, %v5382
      %v5384 = vpop.f32.mrb[0].mxu0
      %5385 = vmatprep.mubr.f32.mxu0 0.0
      %5386 = vmatmul.mubr.f32.gmra.mrb[0].mxu0 %v2207
      %v5387 = vpop.f32.mrb[0].mxu0
      %v5388 = vadd.f32 %v943, %v5387
      %v5389 = vpop.f32.mrb[0].mxu0
      %5390 = vmatprep.mubr.f32.mxu0 0.0
      %5391 = vmatmul.mubr.f32.gmra.mrb[0].mxu0 %v2210
      %v5392 = vpop.f32.mrb[0].mxu0
      %v5393 = vadd.f32 %v943, %v5392
      %v5394 = vpop.f32.mrb[0].mxu0
      %5395 = vmatprep.mubr.f32.mxu0 0.0
      %5396 = vmatmul.mubr.f32.gmra.mrb[0].mxu0 %v2213
      %v5397 = vpop.f32.mrb[0].mxu0
      %v5398 = vadd.f32 %v943, %v5397
      %v5399 = vpop.f32.mrb[0].mxu0
      %5400 = vmatprep.mubr.f32.mxu0 0.0
      %5401 = vmatmul.mubr.f32.gmra.mrb[0].mxu0 %v2216
      %v5402 = vpop.f32.mrb[0].mxu0
      %v5403 = vadd.f32 %v943, %v5402
      %v5404 = vpop.f32.mrb[0].mxu0
      %5405 = vmatprep.mubr.f32.mxu0 0.0
      %5406 = vmatmul.mubr.f32.gmra.mrb[0].mxu0 %v2219
      %v5407 = vpop.f32.mrb[0].mxu0
      %v5408 = vadd.f32 %v943, %v5407
      %v5409 = vpop.f32.mrb[0].mxu0
      %5410 = vmatprep.mubr.f32.mxu0 0.0
      %5411 = vmatmul.mubr.f32.gmra.mrb[0].mxu0 %v2222
      %v5412 = vpop.f32.mrb[0].mxu0
      %v5413 = vadd.f32 %v943, %v5412
      %v5414 = vpop.f32.mrb[0].mxu0
      %5415 = vmatprep.mubr.f32.mxu0 0.0
      %5416 = vmatmul.mubr.f32.gmra.mrb[0].mxu0 %v2225
      %v5417 = vpop.f32.mrb[0].mxu0
      %v5418 = vadd.f32 %v943, %v5417
      %v5419 = vpop.f32.mrb[0].mxu0
      %5420 = vmatprep.mubr.f32.mxu0 0.0
      %5421 = vmatmul.mubr.f32.gmra.mrb[0].mxu0 %v2228
      %v5422 = vpop.f32.mrb[0].mxu0
      %v5423 = vadd.f32 %v943, %v5422
      %v5424 = vpop.f32.mrb[0].mxu0
      %5425 = vmatprep.mubr.f32.mxu0 0.0
      %5426 = vmatmul.mubr.f32.gmra.mrb[0].mxu0 %v2231
      %v5427 = vpop.f32.mrb[0].mxu0
      %v5428 = vadd.f32 %v943, %v5427
      %v5429 = vpop.f32.mrb[0].mxu0
      %5430 = vmatprep.mubr.f32.mxu0 0.0
      %5431 = vmatmul.mubr.f32.gmra.mrb[0].mxu0 %v2234
      %v5432 = vpop.f32.mrb[0].mxu0
      %v5433 = vadd.f32 %v943, %v5432
      %v5434 = vpop.f32.mrb[0].mxu0
      %5435 = vmatprep.mubr.f32.mxu0 0.0
      %5436 = vmatmul.mubr.f32.gmra.mrb[0].mxu0 %v2237
      %v5437 = vpop.f32.mrb[0].mxu0
      %v5438 = vadd.f32 %v943, %v5437
      %v5439 = vpop.f32.mrb[0].mxu0
      %5440 = vmatprep.mubr.f32.mxu0 0.0
      %5441 = vmatmul.mubr.f32.gmra.mrb[0].mxu0 %v2240
      %v5442 = vpop.f32.mrb[0].mxu0
      %v5443 = vadd.f32 %v943, %v5442
      %v5444 = vpop.f32.mrb[0].mxu0
      %5445 = vmatprep.mubr.f32.mxu0 0.0
      %5446 = vmatmul.mubr.f32.gmra.mrb[0].mxu0 %v2243
      %v5447 = vpop.f32.mrb[0].mxu0
      %v5448 = vadd.f32 %v943, %v5447
      %v5449 = vpop.f32.mrb[0].mxu0
      %5450 = vmatprep.mubr.f32.mxu0 0.0
      %5451 = vmatmul.mubr.f32.gmra.mrb[0].mxu0 %v2246
      %v5452 = vpop.f32.mrb[0].mxu0
      %v5453 = vadd.f32 %v943, %v5452
      %v5454 = vpop.f32.mrb[0].mxu0
      %5455 = vmatprep.mubr.f32.mxu0 0.0
      %5456 = vmatmul.mubr.f32.gmra.mrb[0].mxu0 %v2249
      %v5457 = vpop.f32.mrb[0].mxu0
      %v5458 = vadd.f32 %v943, %v5457
      %v5459 = vpop.f32.mrb[0].mxu0
      %5460 = vmatprep.mubr.f32.mxu0 0.0
      %5461 = vmatmul.mubr.f32.gmra.mrb[0].mxu0 %v2252
      %v5462 = vpop.f32.mrb[0].mxu0
      %v5463 = vadd.f32 %v943, %v5462
      %v5464 = vpop.f32.mrb[0].mxu0
      %5465 = vmatprep.mubr.f32.mxu0 0.0
      %5466 = vmatmul.mubr.f32.gmra.mrb[0].mxu0 %v2255
      %v5467 = vpop.f32.mrb[0].mxu0
      %v5468 = vadd.f32 %v943, %v5467
      %v5469 = vpop.f32.mrb[0].mxu0
      %5470 = vmatprep.mubr.f32.mxu0 0.0
      %5471 = vmatmul.mubr.f32.gmra.mrb[0].mxu0 %v2258
      %v5472 = vpop.f32.mrb[0].mxu0
      %v5473 = vadd.f32 %v943, %v5472
      %v5474 = vpop.f32.mrb[0].mxu0
      %5475 = vmatprep.mubr.f32.mxu0 0.0
      %5476 = vmatmul.mubr.f32.gmra.mrb[0].mxu0 %v2261
      %v5477 = vpop.f32.mrb[0].mxu0
      %v5478 = vadd.f32 %v943, %v5477
      %v5479 = vpop.f32.mrb[0].mxu0
      %5480 = vmatprep.mubr.f32.mxu0 0.0
      %5481 = vmatmul.mubr.f32.gmra.mrb[0].mxu0 %v2264
      %v5482 = vpop.f32.mrb[0].mxu0
      %v5483 = vadd.f32 %v943, %v5482
      %v5484 = vpop.f32.mrb[0].mxu0
      %5485 = vmatprep.mubr.f32.mxu0 0.0
      %5486 = vmatmul.mubr.f32.gmra.mrb[0].mxu0 %v2267
      %v5487 = vpop.f32.mrb[0].mxu0
      %v5488 = vadd.f32 %v943, %v5487
      %v5489 = vpop.f32.mrb[0].mxu0
      %5490 = vmatprep.mubr.f32.mxu0 0.0
      %5491 = vmatmul.mubr.f32.gmra.mrb[0].mxu0 %v2270
      %v5492 = vpop.f32.mrb[0].mxu0
      %v5493 = vadd.f32 %v943, %v5492
      %v5494 = vpop.f32.mrb[0].mxu0
      %5495 = vmatprep.mubr.f32.mxu0 0.0
      %5496 = vmatmul.mubr.f32.gmra.mrb[0].mxu0 %v2273
      %v5497 = vpop.f32.mrb[0].mxu0
      %v5498 = vadd.f32 %v943, %v5497
      %v5499 = vpop.f32.mrb[0].mxu0
      %5500 = vmatprep.mubr.f32.mxu0 0.0
      %5501 = vmatmul.mubr.f32.gmra.mrb[0].mxu0 %v2276
      %v5502 = vpop.f32.mrb[0].mxu0
      %v5503 = vadd.f32 %v943, %v5502
      %v5504 = vpop.f32.mrb[0].mxu0
      %5505 = vmatprep.mubr.f32.mxu0 0.0
      %5506 = vmatmul.mubr.f32.gmra.mrb[0].mxu0 %v2279
      %v5507 = vpop.f32.mrb[0].mxu0
      %v5508 = vadd.f32 %v943, %v5507
      %v5509 = vpop.f32.mrb[0].mxu0
      %5510 = vmatprep.mubr.f32.mxu0 0.0
      %5511 = vmatmul.mubr.f32.gmra.mrb[0].mxu0 %v2282
      %v5512 = vpop.f32.mrb[0].mxu0
      %v5513 = vadd.f32 %v943, %v5512
      %v5514 = vpop.f32.mrb[0].mxu0
      %5515 = vmatprep.mubr.f32.mxu0 0.0
      %5516 = vmatmul.mubr.f32.gmra.mrb[0].mxu0 %v2285
      %v5517 = vpop.f32.mrb[0].mxu0
      %v5518 = vadd.f32 %v943, %v5517
      %v5519 = vpop.f32.mrb[0].mxu0
      %5520 = vmatprep.mubr.f32.mxu0 0.0
      %5521 = vmatmul.mubr.f32.gmra.mrb[0].mxu0 %v2288
      %v5522 = vpop.f32.mrb[0].mxu0
      %v5523 = vadd.f32 %v943, %v5522
      %v5524 = vpop.f32.mrb[0].mxu0
      %5525 = vmatprep.mubr.f32.mxu0 0.0
      %5526 = vmatmul.mubr.f32.gmra.mrb[0].mxu0 %v2291
      %v5527 = vpop.f32.mrb[0].mxu0
      %v5528 = vadd.f32 %v943, %v5527
      %v5529 = vpop.f32.mrb[0].mxu0
      %5530 = vmatprep.mubr.f32.mxu0 0.0
      %5531 = vmatmul.mubr.f32.gmra.mrb[0].mxu0 %v2294
      %v5532 = vpop.f32.mrb[0].mxu0
      %v5533 = vadd.f32 %v943, %v5532
      %v5534 = vpop.f32.mrb[0].mxu0
      %5535 = vmatprep.mubr.f32.mxu0 0.0
      %5536 = vmatmul.mubr.f32.gmra.mrb[0].mxu0 %v2297
      %v5537 = vpop.f32.mrb[0].mxu0
      %v5538 = vadd.f32 %v943, %v5537
      %v5539 = vpop.f32.mrb[0].mxu0
      %5540 = vmatprep.mubr.f32.mxu0 0.0
      %5541 = vmatmul.mubr.f32.gmra.mrb[0].mxu0 %v2300
      %v5542 = vpop.f32.mrb[0].mxu0
      %v5543 = vadd.f32 %v943, %v5542
      %v5544 = vpop.f32.mrb[0].mxu0
      %5545 = vmatprep.mubr.f32.mxu0 0.0
      %5546 = vmatmul.mubr.f32.gmra.mrb[0].mxu0 %v2303
      %v5547 = vpop.f32.mrb[0].mxu0
      %v5548 = vadd.f32 %v943, %v5547
      %v5549 = vpop.f32.mrb[0].mxu0
      %5550 = vmatprep.mubr.f32.mxu0 0.0
      %5551 = vmatmul.mubr.f32.gmra.mrb[0].mxu0 %v2306
      %v5552 = vpop.f32.mrb[0].mxu0
      %v5553 = vadd.f32 %v943, %v5552
      %v5554 = vpop.f32.mrb[0].mxu0
      %5555 = vmatprep.mubr.f32.mxu0 0.0
      %5556 = vmatmul.mubr.f32.gmra.mrb[0].mxu0 %v2309
      %v5557 = vpop.f32.mrb[0].mxu0
      %v5558 = vadd.f32 %v943, %v5557
      %v5559 = vpop.f32.mrb[0].mxu0
      %5560 = vmatprep.mubr.f32.mxu0 0.0
      %5561 = vmatmul.mubr.f32.gmra.mrb[0].mxu0 %v2312
      %v5562 = vpop.f32.mrb[0].mxu0
      %v5563 = vadd.f32 %v943, %v5562
      %v5564 = vpop.f32.mrb[0].mxu0
      %5565 = vmatprep.mubr.f32.mxu0 0.0
      %5566 = vmatmul.mubr.f32.gmra.mrb[0].mxu0 %v2315
      %v5567 = vpop.f32.mrb[0].mxu0
      %v5568 = vadd.f32 %v943, %v5567
      %v5569 = vpop.f32.mrb[0].mxu0
      %5570 = vmatprep.mubr.f32.mxu0 0.0
      %5571 = vmatmul.mubr.f32.gmra.mrb[0].mxu0 %v2318
      %v5572 = vpop.f32.mrb[0].mxu0
      %v5573 = vadd.f32 %v943, %v5572
      %v5574 = vpop.f32.mrb[0].mxu0
      %5575 = vmatprep.mubr.f32.mxu0 0.0
      %5576 = vmatmul.mubr.f32.gmra.mrb[0].mxu0 %v2321
      %v5577 = vpop.f32.mrb[0].mxu0
      %v5578 = vadd.f32 %v943, %v5577
      %v5579 = vpop.f32.mrb[0].mxu0
      %5580 = vmatprep.mubr.f32.mxu0 0.0
      %5581 = vmatmul.mubr.f32.gmra.mrb[0].mxu0 %v2324
      %v5582 = vpop.f32.mrb[0].mxu0
      %v5583 = vadd.f32 %v943, %v5582
      %v5584 = vpop.f32.mrb[0].mxu0
      %5585 = vmatprep.mubr.f32.mxu0 0.0
      %5586 = vmatmul.mubr.f32.gmra.mrb[0].mxu0 %v2327
      %v5587 = vpop.f32.mrb[0].mxu0
      %v5588 = vadd.f32 %v943, %v5587
      %v5589 = vpop.f32.mrb[0].mxu0
      %5590 = vmatprep.mubr.f32.mxu0 0.0
      %5591 = vmatmul.mubr.f32.gmra.mrb[0].mxu0 %v2330
      %v5592 = vpop.f32.mrb[0].mxu0
      %v5593 = vadd.f32 %v943, %v5592
      %v5594 = vpop.f32.mrb[0].mxu0
      %5595 = vmatprep.mubr.f32.mxu0 0.0
      %5596 = vmatmul.mubr.f32.gmra.mrb[0].mxu0 %v2333
      %v5597 = vpop.f32.mrb[0].mxu0
      %v5598 = vadd.f32 %v943, %v5597
      %v5599 = vpop.f32.mrb[0].mxu0
      %5600 = vmatprep.mubr.f32.mxu0 0.0
      %5601 = vmatmul.mubr.f32.gmra.mrb[0].mxu0 %v2336
      %v5602 = vpop.f32.mrb[0].mxu0
      %v5603 = vadd.f32 %v943, %v5602
      %v5604 = vpop.f32.mrb[0].mxu0
      %5605 = vmatprep.mubr.f32.mxu0 0.0
      %5606 = vmatmul.mubr.f32.gmra.mrb[0].mxu0 %v2339
      %v5607 = vpop.f32.mrb[0].mxu0
      %v5608 = vadd.f32 %v943, %v5607
      %v5609 = vpop.f32.mrb[0].mxu0
      %5610 = vmatprep.mubr.f32.mxu0 0.0
      %5611 = vmatmul.mubr.f32.gmra.mrb[0].mxu0 %v2342
      %v5612 = vpop.f32.mrb[0].mxu0
      %v5613 = vadd.f32 %v943, %v5612
      %v5614 = vpop.f32.mrb[0].mxu0
      %5615 = vmatprep.mubr.f32.mxu0 0.0
      %5616 = vmatmul.mubr.f32.gmra.mrb[0].mxu0 %v2345
      %v5617 = vpop.f32.mrb[0].mxu0
      %v5618 = vadd.f32 %v943, %v5617
      %v5619 = vpop.f32.mrb[0].mxu0
      %5620 = vmatprep.mubr.f32.mxu0 0.0
      %5621 = vmatmul.mubr.f32.gmra.mrb[0].mxu0 %v2348
      %v5622 = vpop.f32.mrb[0].mxu0
      %v5623 = vadd.f32 %v943, %v5622
      %v5624 = vpop.f32.mrb[0].mxu0
      %5625 = vmatprep.mubr.f32.mxu0 0.0
      %5626 = vmatmul.mubr.f32.gmra.mrb[0].mxu0 %v2351
      %v5627 = vpop.f32.mrb[0].mxu0
      %v5628 = vadd.f32 %v943, %v5627
      %v5629 = vpop.f32.mrb[0].mxu0
      %5630 = vmatprep.mubr.f32.mxu0 0.0
      %5631 = vmatmul.mubr.f32.gmra.mrb[0].mxu0 %v2354
      %v5632 = vpop.f32.mrb[0].mxu0
      %v5633 = vadd.f32 %v943, %v5632
      %v5634 = vpop.f32.mrb[0].mxu0
      %5635 = vmatprep.mubr.f32.mxu0 0.0
      %5636 = vmatmul.mubr.f32.gmra.mrb[0].mxu0 %v2357
      %v5637 = vpop.f32.mrb[0].mxu0
      %v5638 = vadd.f32 %v943, %v5637
      %v5639 = vpop.f32.mrb[0].mxu0
      %5640 = vmatprep.mubr.f32.mxu0 0.0
      %5641 = vmatmul.mubr.f32.gmra.mrb[0].mxu0 %v2360
      %v5642 = vpop.f32.mrb[0].mxu0
      %v5643 = vadd.f32 %v943, %v5642
      %v5644 = vpop.f32.mrb[0].mxu0
      %5645 = vmatprep.mubr.f32.mxu0 0.0
      %5646 = vmatmul.mubr.f32.gmra.mrb[0].mxu0 %v2363
      %v5647 = vpop.f32.mrb[0].mxu0
      %v5648 = vadd.f32 %v943, %v5647
      %v5649 = vpop.f32.mrb[0].mxu0
      %5650 = vmatprep.mubr.f32.mxu0 0.0
      %5651 = vmatmul.mubr.f32.gmra.mrb[0].mxu0 %v2366
      %v5652 = vpop.f32.mrb[0].mxu0
      %v5653 = vadd.f32 %v943, %v5652
      %v5654 = vpop.f32.mrb[0].mxu0
      %5655 = vmatprep.mubr.f32.mxu0 0.0
      %5656 = vmatmul.mubr.f32.gmra.mrb[0].mxu0 %v2369
      %v5657 = vpop.f32.mrb[0].mxu0
      %v5658 = vadd.f32 %v943, %v5657
      %v5659 = vpop.f32.mrb[0].mxu0
      %5660 = vmatprep.mubr.f32.mxu0 0.0
      %5661 = vmatmul.mubr.f32.gmra.mrb[0].mxu0 %v2372
      %v5662 = vpop.f32.mrb[0].mxu0
      %v5663 = vadd.f32 %v943, %v5662
      %v5664 = vpop.f32.mrb[0].mxu0
      %5665 = vmatprep.mubr.f32.mxu0 0.0
      %5666 = vmatmul.mubr.f32.gmra.mrb[0].mxu0 %v2375
      %v5667 = vpop.f32.mrb[0].mxu0
      %v5668 = vadd.f32 %v943, %v5667
      %v5669 = vpop.f32.mrb[0].mxu0
      %5670 = vmatprep.mubr.f32.mxu0 0.0
      %5671 = vmatmul.mubr.f32.gmra.mrb[0].mxu0 %v2378
      %v5672 = vpop.f32.mrb[0].mxu0
      %v5673 = vadd.f32 %v943, %v5672
      %v5674 = vpop.f32.mrb[0].mxu0
      %5675 = vmatprep.mubr.f32.mxu0 0.0
      %5676 = vmatmul.mubr.f32.gmra.mrb[0].mxu0 %v2381
      %v5677 = vpop.f32.mrb[0].mxu0
      %v5678 = vadd.f32 %v943, %v5677
      %v5679 = vpop.f32.mrb[0].mxu0
      %5680 = vmatprep.mubr.f32.mxu0 0.0
      %5681 = vmatmul.mubr.f32.gmra.mrb[0].mxu0 %v2384
      %v5682 = vpop.f32.mrb[0].mxu0
      %v5683 = vadd.f32 %v943, %v5682
      %v5684 = vpop.f32.mrb[0].mxu0
      %5685 = vmatprep.mubr.f32.mxu0 0.0
      %5686 = vmatmul.mubr.f32.gmra.mrb[0].mxu0 %v2387
      %v5687 = vpop.f32.mrb[0].mxu0
      %v5688 = vadd.f32 %v943, %v5687
      %v5689 = vpop.f32.mrb[0].mxu0
      %5690 = vmatprep.mubr.f32.mxu0 0.0
      %5691 = vmatmul.mubr.f32.gmra.mrb[0].mxu0 %v2390
      %v5692 = vpop.f32.mrb[0].mxu0
      %v5693 = vadd.f32 %v943, %v5692
      %v5694 = vpop.f32.mrb[0].mxu0
      %5695 = vmatprep.mubr.f32.mxu0 0.0
      %5696 = vmatmul.mubr.f32.gmra.mrb[0].mxu0 %v2393
      %v5697 = vpop.f32.mrb[0].mxu0
      %v5698 = vadd.f32 %v943, %v5697
      %v5699 = vpop.f32.mrb[0].mxu0
      %5700 = vmatprep.mubr.f32.mxu0 0.0
      %5701 = vmatmul.mubr.f32.gmra.mrb[0].mxu0 %v2396
      %v5702 = vpop.f32.mrb[0].mxu0
      %v5703 = vadd.f32 %v943, %v5702
      %v5704 = vpop.f32.mrb[0].mxu0
      %5705 = vmatprep.mubr.f32.mxu0 0.0
      %5706 = vmatmul.mubr.f32.gmra.mrb[0].mxu0 %v2399
      %v5707 = vpop.f32.mrb[0].mxu0
      %v5708 = vadd.f32 %v943, %v5707
      %v5709 = vpop.f32.mrb[0].mxu0
      %5710 = vmatprep.mubr.f32.mxu0 0.0
      %5711 = vmatmul.mubr.f32.gmra.mrb[0].mxu0 %v2402
      %v5712 = vpop.f32.mrb[0].mxu0
      %v5713 = vadd.f32 %v943, %v5712
      %v5714 = vpop.f32.mrb[0].mxu0
      %5715 = vmatprep.mubr.f32.mxu0 0.0
      %5716 = vmatmul.mubr.f32.gmra.mrb[0].mxu0 %v2405
      %v5717 = vpop.f32.mrb[0].mxu0
      %v5718 = vadd.f32 %v943, %v5717
      %v5719 = vpop.f32.mrb[0].mxu0
      %5720 = vmatprep.mubr.f32.mxu0 0.0
      %5721 = vmatmul.mubr.f32.gmra.mrb[0].mxu0 %v2408
      %v5722 = vpop.f32.mrb[0].mxu0
      %v5723 = vadd.f32 %v943, %v5722
      %v5724 = vpop.f32.mrb[0].mxu0
      %5725 = vmatprep.mubr.f32.mxu0 0.0
      %5726 = vmatmul.mubr.f32.gmra.mrb[0].mxu0 %v2411
      %v5727 = vpop.f32.mrb[0].mxu0
      %v5728 = vadd.f32 %v943, %v5727
      %v5729 = vpop.f32.mrb[0].mxu0
      %5730 = vmatprep.mubr.f32.mxu0 0.0
      %5731 = vmatmul.mubr.f32.gmra.mrb[0].mxu0 %v2414
      %v5732 = vpop.f32.mrb[0].mxu0
      %v5733 = vadd.f32 %v943, %v5732
      %v5734 = vpop.f32.mrb[0].mxu0
      %5735 = vmatprep.mubr.f32.mxu0 0.0
      %5736 = vmatmul.mubr.f32.gmra.mrb[0].mxu0 %v2417
      %v5737 = vpop.f32.mrb[0].mxu0
      %v5738 = vadd.f32 %v943, %v5737
      %v5739 = vpop.f32.mrb[0].mxu0
      %5740 = vmatprep.mubr.f32.mxu0 0.0
      %5741 = vmatmul.mubr.f32.gmra.mrb[0].mxu0 %v2420
      %v5742 = vpop.f32.mrb[0].mxu0
      %v5743 = vadd.f32 %v943, %v5742
      %v5744 = vpop.f32.mrb[0].mxu0
      %5745 = vmatprep.mubr.f32.mxu0 0.0
      %5746 = vmatmul.mubr.f32.gmra.mrb[0].mxu0 %v2423
      %v5747 = vpop.f32.mrb[0].mxu0
      %v5748 = vadd.f32 %v943, %v5747
      %v5749 = vpop.f32.mrb[0].mxu0
      %5750 = vmatprep.mubr.f32.mxu0 0.0
      %5751 = vmatmul.mubr.f32.gmra.mrb[0].mxu0 %v2426
      %v5752 = vpop.f32.mrb[0].mxu0
      %v5753 = vadd.f32 %v943, %v5752
      %v5754 = vpop.f32.mrb[0].mxu0
      %5755 = vmatprep.mubr.f32.mxu0 0.0
      %5756 = vmatmul.mubr.f32.gmra.mrb[0].mxu0 %v2429
      %v5757 = vpop.f32.mrb[0].mxu0
      %v5758 = vadd.f32 %v943, %v5757
      %v5759 = vpop.f32.mrb[0].mxu0
      %5760 = vmatprep.mubr.f32.mxu0 0.0
      %5761 = vmatmul.mubr.f32.gmra.mrb[0].mxu0 %v2432
      %v5762 = vpop.f32.mrb[0].mxu0
      %v5763 = vadd.f32 %v943, %v5762
      %v5764 = vpop.f32.mrb[0].mxu0
      %5765 = vmatprep.mubr.f32.mxu0 0.0
      %5766 = vmatmul.mubr.f32.gmra.mrb[0].mxu0 %v2435
      %v5767 = vpop.f32.mrb[0].mxu0
      %v5768 = vadd.f32 %v943, %v5767
      %v5769 = vpop.f32.mrb[0].mxu0
      %5770 = vmatprep.mubr.f32.mxu0 0.0
      %5771 = vmatmul.mubr.f32.gmra.mrb[0].mxu0 %v2438
      %v5772 = vpop.f32.mrb[0].mxu0
      %v5773 = vadd.f32 %v943, %v5772
      %v5774 = vpop.f32.mrb[0].mxu0
      %5775 = vmatprep.mubr.f32.mxu0 0.0
      %5776 = vmatmul.mubr.f32.gmra.mrb[0].mxu0 %v2441
      %v5777 = vpop.f32.mrb[0].mxu0
      %v5778 = vadd.f32 %v943, %v5777
      %v5779 = vpop.f32.mrb[0].mxu0
      %5780 = vmatprep.mubr.f32.mxu0 0.0
      %5781 = vmatmul.mubr.f32.gmra.mrb[0].mxu0 %v2444
      %v5782 = vpop.f32.mrb[0].mxu0
      %v5783 = vadd.f32 %v943, %v5782
      %v5784 = vpop.f32.mrb[0].mxu0
      %5785 = vmatprep.mubr.f32.mxu0 0.0
      %5786 = vmatmul.mubr.f32.gmra.mrb[0].mxu0 %v2447
      %v5787 = vpop.f32.mrb[0].mxu0
      %v5788 = vadd.f32 %v943, %v5787
      %v5789 = vpop.f32.mrb[0].mxu0
      %5790 = vmatprep.mubr.f32.mxu0 0.0
      %5791 = vmatmul.mubr.f32.gmra.mrb[0].mxu0 %v2450
      %v5792 = vpop.f32.mrb[0].mxu0
      %v5793 = vadd.f32 %v943, %v5792
      %v5794 = vpop.f32.mrb[0].mxu0
      %5795 = vmatprep.mubr.f32.mxu0 0.0
      %5796 = vmatmul.mubr.f32.gmra.mrb[0].mxu0 %v2453
      %v5797 = vpop.f32.mrb[0].mxu0
      %v5798 = vadd.f32 %v943, %v5797
      %v5799 = vpop.f32.mrb[0].mxu0
      %5800 = vmatprep.mubr.f32.mxu0 0.0
      %5801 = vmatmul.mubr.f32.gmra.mrb[0].mxu0 %v2456
      %v5802 = vpop.f32.mrb[0].mxu0
      %v5803 = vadd.f32 %v943, %v5802
      %v5804 = vpop.f32.mrb[0].mxu0
      %5805 = vmatprep.mubr.f32.mxu0 0.0
      %5806 = vmatmul.mubr.f32.gmra.mrb[0].mxu0 %v2459
      %v5807 = vpop.f32.mrb[0].mxu0
      %v5808 = vadd.f32 %v943, %v5807
      %v5809 = vpop.f32.mrb[0].mxu0
      %5810 = vmatprep.mubr.f32.mxu0 0.0
      %5811 = vmatmul.mubr.f32.gmra.mrb[0].mxu0 %v2462
      %v5812 = vpop.f32.mrb[0].mxu0
      %v5813 = vadd.f32 %v943, %v5812
      %v5814 = vpop.f32.mrb[0].mxu0
      %5815 = vmatprep.mubr.f32.mxu0 0.0
      %5816 = vmatmul.mubr.f32.gmra.mrb[0].mxu0 %v2465
      %v5817 = vpop.f32.mrb[0].mxu0
      %v5818 = vadd.f32 %v943, %v5817
      %v5819 = vpop.f32.mrb[0].mxu0
      %5820 = vmatprep.mubr.f32.mxu0 0.0
      %5821 = vmatmul.mubr.f32.gmra.mrb[0].mxu0 %v2468
      %v5822 = vpop.f32.mrb[0].mxu0
      %v5823 = vadd.f32 %v943, %v5822
      %v5824 = vpop.f32.mrb[0].mxu0
      %5825 = vmatprep.mubr.f32.mxu0 0.0
      %5826 = vmatmul.mubr.f32.gmra.mrb[0].mxu0 %v2471
      %v5827 = vpop.f32.mrb[0].mxu0
      %v5828 = vadd.f32 %v943, %v5827
      %v5829 = vpop.f32.mrb[0].mxu0
      %5830 = vmatprep.mubr.f32.mxu0 0.0
      %5831 = vmatmul.mubr.f32.gmra.mrb[0].mxu0 %v2474
      %v5832 = vpop.f32.mrb[0].mxu0
      %v5833 = vadd.f32 %v943, %v5832
      %v5834 = vpop.f32.mrb[0].mxu0
      %5835 = vmatprep.mubr.f32.mxu0 0.0
      %5836 = vmatmul.mubr.f32.gmra.mrb[0].mxu0 %v2477
      %v5837 = vpop.f32.mrb[0].mxu0
      %v5838 = vadd.f32 %v943, %v5837
      %v5839 = vpop.f32.mrb[0].mxu0
      %5840 = vmatprep.mubr.f32.mxu0 0.0
      %5841 = vmatmul.mubr.f32.gmra.mrb[0].mxu0 %v2480
      %v5842 = vpop.f32.mrb[0].mxu0
      %v5843 = vadd.f32 %v943, %v5842
      %v5844 = vpop.f32.mrb[0].mxu0
      %5845 = vmatprep.mubr.f32.mxu0 0.0
      %5846 = vmatmul.mubr.f32.gmra.mrb[0].mxu0 %v2483
      %v5847 = vpop.f32.mrb[0].mxu0
      %v5848 = vadd.f32 %v943, %v5847
      %v5849 = vpop.f32.mrb[0].mxu0
      %5850 = vmatprep.mubr.f32.mxu0 0.0
      %5851 = vmatmul.mubr.f32.gmra.mrb[0].mxu0 %v2486
      %v5852 = vpop.f32.mrb[0].mxu0
      %v5853 = vadd.f32 %v943, %v5852
      %v5854 = vpop.f32.mrb[0].mxu0
      %5855 = vmatprep.mubr.f32.mxu0 0.0
      %5856 = vmatmul.mubr.f32.gmra.mrb[0].mxu0 %v2489
      %v5857 = vpop.f32.mrb[0].mxu0
      %v5858 = vadd.f32 %v943, %v5857
      %v5859 = vpop.f32.mrb[0].mxu0
      %5860 = vmatprep.mubr.f32.mxu0 0.0
      %5861 = vmatmul.mubr.f32.gmra.mrb[0].mxu0 %v2492
      %v5862 = vpop.f32.mrb[0].mxu0
      %v5863 = vadd.f32 %v943, %v5862
      %v5864 = vpop.f32.mrb[0].mxu0
      %5865 = vmatprep.mubr.f32.mxu0 0.0
      %5866 = vmatmul.mubr.f32.gmra.mrb[0].mxu0 %v2495
      %v5867 = vpop.f32.mrb[0].mxu0
      %v5868 = vadd.f32 %v943, %v5867
      %v5869 = vpop.f32.mrb[0].mxu0
      %5870 = vmatprep.mubr.f32.mxu0 0.0
      %5871 = vmatmul.mubr.f32.gmra.mrb[0].mxu0 %v2498
      %v5872 = vpop.f32.mrb[0].mxu0
      %v5873 = vadd.f32 %v943, %v5872
      %v5874 = vpop.f32.mrb[0].mxu0
      %5875 = vmatprep.mubr.f32.mxu0 0.0
      %5876 = vmatmul.mubr.f32.gmra.mrb[0].mxu0 %v2501
      %v5877 = vpop.f32.mrb[0].mxu0
      %v5878 = vadd.f32 %v943, %v5877
      %v5879 = vpop.f32.mrb[0].mxu0
      %5880 = vmatprep.mubr.f32.mxu0 0.0
      %5881 = vmatmul.mubr.f32.gmra.mrb[0].mxu0 %v2504
      %v5882 = vpop.f32.mrb[0].mxu0
      %v5883 = vadd.f32 %v943, %v5882
      %v5884 = vpop.f32.mrb[0].mxu0
      %5885 = vmatprep.mubr.f32.mxu0 0.0
      %5886 = vmatmul.mubr.f32.gmra.mrb[0].mxu0 %v2507
      %v5887 = vpop.f32.mrb[0].mxu0
      %v5888 = vadd.f32 %v943, %v5887
      %v5889 = vpop.f32.mrb[0].mxu0
      %5890 = vmatprep.mubr.f32.mxu0 0.0
      %5891 = vmatmul.mubr.f32.gmra.mrb[0].mxu0 %v2510
      %v5892 = vpop.f32.mrb[0].mxu0
      %v5893 = vadd.f32 %v943, %v5892
      %v5894 = vpop.f32.mrb[0].mxu0
      %5895 = vmatprep.mubr.f32.mxu0 0.0
      %5896 = vmatmul.mubr.f32.gmra.mrb[0].mxu0 %v2513
      %v5897 = vpop.f32.mrb[0].mxu0
      %v5898 = vadd.f32 %v943, %v5897
      %v5899 = vpop.f32.mrb[0].mxu0
      %5900 = vmatprep.mubr.f32.mxu0 0.0
      %5901 = vmatmul.mubr.f32.gmra.mrb[0].mxu0 %v2516
      %v5902 = vpop.f32.mrb[0].mxu0
      %v5903 = vadd.f32 %v943, %v5902
      %v5904 = vpop.f32.mrb[0].mxu0
      %5905 = vmatprep.mubr.f32.mxu0 0.0
      %5906 = vmatmul.mubr.f32.gmra.mrb[0].mxu0 %v2519
      %v5907 = vpop.f32.mrb[0].mxu0
      %v5908 = vadd.f32 %v943, %v5907
      %v5909 = vpop.f32.mrb[0].mxu0
      %5910 = vmatprep.mubr.f32.mxu0 0.0
      %5911 = vmatmul.mubr.f32.gmra.mrb[0].mxu0 %v2522
      %v5912 = vpop.f32.mrb[0].mxu0
      %v5913 = vadd.f32 %v943, %v5912
      %v5914 = vpop.f32.mrb[0].mxu0
      %5915 = vmatprep.mubr.f32.mxu0 0.0
      %5916 = vmatmul.mubr.f32.gmra.mrb[0].mxu0 %v2525
      %v5917 = vpop.f32.mrb[0].mxu0
      %v5918 = vadd.f32 %v943, %v5917
      %v5919 = vpop.f32.mrb[0].mxu0
      %5920 = vmatprep.mubr.f32.mxu0 0.0
      %5921 = vmatmul.mubr.f32.gmra.mrb[0].mxu0 %v2528
      %v5922 = vpop.f32.mrb[0].mxu0
      %v5923 = vadd.f32 %v943, %v5922
      %v5924 = vpop.f32.mrb[0].mxu0
      %5925 = vmatprep.mubr.f32.mxu0 0.0
      %5926 = vmatmul.mubr.f32.gmra.mrb[0].mxu0 %v2531
      %v5927 = vpop.f32.mrb[0].mxu0
      %v5928 = vadd.f32 %v943, %v5927
      %v5929 = vpop.f32.mrb[0].mxu0
      %5930 = vmatprep.mubr.f32.mxu0 0.0
      %5931 = vmatmul.mubr.f32.gmra.mrb[0].mxu0 %v2534
      %v5932 = vpop.f32.mrb[0].mxu0
      %v5933 = vadd.f32 %v943, %v5932
      %v5934 = vpop.f32.mrb[0].mxu0
      %5935 = vmatprep.mubr.f32.mxu0 0.0
      %5936 = vmatmul.mubr.f32.gmra.mrb[0].mxu0 %v2537
      %v5937 = vpop.f32.mrb[0].mxu0
      %v5938 = vadd.f32 %v943, %v5937
      %v5939 = vpop.f32.mrb[0].mxu0
      %5940 = vmatprep.mubr.f32.mxu0 0.0
      %5941 = vmatmul.mubr.f32.gmra.mrb[0].mxu0 %v2540
      %v5942 = vpop.f32.mrb[0].mxu0
      %v5943 = vadd.f32 %v943, %v5942
      %v5944 = vpop.f32.mrb[0].mxu0
      %5945 = vmatprep.mubr.f32.mxu0 0.0
      %5946 = vmatmul.mubr.f32.gmra.mrb[0].mxu0 %v2543
      %v5947 = vpop.f32.mrb[0].mxu0
      %v5948 = vadd.f32 %v943, %v5947
      %v5949 = vpop.f32.mrb[0].mxu0
      %5950 = vmatprep.mubr.f32.mxu0 0.0
      %5951 = vmatmul.mubr.f32.gmra.mrb[0].mxu0 %v2546
      %v5952 = vpop.f32.mrb[0].mxu0
      %v5953 = vadd.f32 %v943, %v5952
      %v5954 = vpop.f32.mrb[0].mxu0
      %5955 = vmatprep.mubr.f32.mxu0 0.0
      %5956 = vmatmul.mubr.f32.gmra.mrb[0].mxu0 %v2549
      %v5957 = vpop.f32.mrb[0].mxu0
      %v5958 = vadd.f32 %v943, %v5957
      %v5959 = vpop.f32.mrb[0].mxu0
      %5960 = vmatprep.mubr.f32.mxu0 0.0
      %5961 = vmatmul.mubr.f32.gmra.mrb[0].mxu0 %v2552
      %v5962 = vpop.f32.mrb[0].mxu0
      %v5963 = vadd.f32 %v943, %v5962
      %v5964 = vpop.f32.mrb[0].mxu0
      %5965 = vmatprep.mubr.f32.mxu0 0.0
      %5966 = vmatmul.mubr.f32.gmra.mrb[0].mxu0 %v2555
      %v5967 = vpop.f32.mrb[0].mxu0
      %v5968 = vadd.f32 %v943, %v5967
      %v5969 = vpop.f32.mrb[0].mxu0
      %5970 = vmatprep.mubr.f32.mxu0 0.0
      %5971 = vmatmul.mubr.f32.gmra.mrb[0].mxu0 %v2558
      %v5972 = vpop.f32.mrb[0].mxu0
      %v5973 = vadd.f32 %v943, %v5972
      %v5974 = vpop.f32.mrb[0].mxu0
      %5975 = vmatprep.mubr.f32.mxu0 0.0
      %5976 = vmatmul.mubr.f32.gmra.mrb[0].mxu0 %v2561
      %v5977 = vpop.f32.mrb[0].mxu0
      %v5978 = vadd.f32 %v943, %v5977
      %v5979 = vpop.f32.mrb[0].mxu0
      %5980 = vmatprep.mubr.f32.mxu0 0.0
      %5981 = vmatmul.mubr.f32.gmra.mrb[0].mxu0 %v2564
      %v5982 = vpop.f32.mrb[0].mxu0
      %v5983 = vadd.f32 %v943, %v5982
      %v5984 = vpop.f32.mrb[0].mxu0
      %5985 = vmatprep.mubr.f32.mxu0 0.0
      %5986 = vmatmul.mubr.f32.gmra.mrb[0].mxu0 %v2567
      %v5987 = vpop.f32.mrb[0].mxu0
      %v5988 = vadd.f32 %v943, %v5987
      %v5989 = vpop.f32.mrb[0].mxu0
      %5990 = vmatprep.mubr.f32.mxu0 0.0
      %5991 = vmatmul.mubr.f32.gmra.mrb[0].mxu0 %v2570
      %v5992 = vpop.f32.mrb[0].mxu0
      %v5993 = vadd.f32 %v943, %v5992
      %v5994 = vpop.f32.mrb[0].mxu0
      %5995 = vmatprep.mubr.f32.mxu0 0.0
      %5996 = vmatmul.mubr.f32.gmra.mrb[0].mxu0 %v2573
      %v5997 = vpop.f32.mrb[0].mxu0
      %v5998 = vadd.f32 %v943, %v5997
      %v5999 = vpop.f32.mrb[0].mxu0
      %6000 = vmatprep.mubr.f32.mxu0 0.0
      %6001 = vmatmul.mubr.f32.gmra.mrb[0].mxu0 %v2576
      %v6002 = vpop.f32.mrb[0].mxu0
      %v6003 = vadd.f32 %v943, %v6002
      %v6004 = vpop.f32.mrb[0].mxu0
      %6005 = vmatprep.mubr.f32.mxu0 0.0
      %6006 = vmatmul.mubr.f32.gmra.mrb[0].mxu0 %v2579
      %v6007 = vpop.f32.mrb[0].mxu0
      %v6008 = vadd.f32 %v943, %v6007
      %v6009 = vpop.f32.mrb[0].mxu0
      %6010 = vmatprep.mubr.f32.mxu0 0.0
      %6011 = vmatmul.mubr.f32.gmra.mrb[0].mxu0 %v2582
      %v6012 = vpop.f32.mrb[0].mxu0
      %v6013 = vadd.f32 %v943, %v6012
      %v6014 = vpop.f32.mrb[0].mxu0
      %6015 = vmatprep.mubr.f32.mxu0 0.0
      %6016 = vmatmul.mubr.f32.gmra.mrb[0].mxu0 %v2585
      %v6017 = vpop.f32.mrb[0].mxu0
      %v6018 = vadd.f32 %v943, %v6017
      %v6019 = vpop.f32.mrb[0].mxu0
      %6020 = vmatprep.mubr.f32.mxu0 0.0
      %6021 = vmatmul.mubr.f32.gmra.mrb[0].mxu0 %v2588
      %v6022 = vpop.f32.mrb[0].mxu0
      %v6023 = vadd.f32 %v943, %v6022
      %v6024 = vpop.f32.mrb[0].mxu0
      %6025 = vmatprep.mubr.f32.mxu0 0.0
      %6026 = vmatmul.mubr.f32.gmra.mrb[0].mxu0 %v2591
      %v6027 = vpop.f32.mrb[0].mxu0
      %v6028 = vadd.f32 %v943, %v6027
      %v6029 = vpop.f32.mrb[0].mxu0
      %6030 = vmatprep.mubr.f32.mxu0 0.0
      %6031 = vmatmul.mubr.f32.gmra.mrb[0].mxu0 %v2594
      %v6032 = vpop.f32.mrb[0].mxu0
      %v6033 = vadd.f32 %v943, %v6032
      %v6034 = vpop.f32.mrb[0].mxu0
      %6035 = vmatprep.mubr.f32.mxu0 0.0
      %6036 = vmatmul.mubr.f32.gmra.mrb[0].mxu0 %v2597
      %v6037 = vpop.f32.mrb[0].mxu0
      %v6038 = vadd.f32 %v943, %v6037
      %v6039 = vpop.f32.mrb[0].mxu0
      %6040 = vmatprep.mubr.f32.mxu0 0.0
      %6041 = vmatmul.mubr.f32.gmra.mrb[0].mxu0 %v2600
      %v6042 = vpop.f32.mrb[0].mxu0
      %v6043 = vadd.f32 %v943, %v6042
      %v6044 = vpop.f32.mrb[0].mxu0
      %6045 = vmatprep.mubr.f32.mxu0 0.0
      %6046 = vmatmul.mubr.f32.gmra.mrb[0].mxu0 %v2603
      %v6047 = vpop.f32.mrb[0].mxu0
      %v6048 = vadd.f32 %v943, %v6047
      %v6049 = vpop.f32.mrb[0].mxu0
      %6050 = vmatprep.mubr.f32.mxu0 0.0
      %6051 = vmatmul.mubr.f32.gmra.mrb[0].mxu0 %v2606
      %v6052 = vpop.f32.mrb[0].mxu0
      %v6053 = vadd.f32 %v943, %v6052
      %v6054 = vpop.f32.mrb[0].mxu0
      %6055 = vmatprep.mubr.f32.mxu0 0.0
      %6056 = vmatmul.mubr.f32.gmra.mrb[0].mxu0 %v2609
      %v6057 = vpop.f32.mrb[0].mxu0
      %v6058 = vadd.f32 %v943, %v6057
      %v6059 = vpop.f32.mrb[0].mxu0
      %6060 = vmatprep.mubr.f32.mxu0 0.0
      %6061 = vmatmul.mubr.f32.gmra.mrb[0].mxu0 %v2612
      %v6062 = vpop.f32.mrb[0].mxu0
      %v6063 = vadd.f32 %v943, %v6062
      %v6064 = vpop.f32.mrb[0].mxu0
      %6065 = vmatprep.mubr.f32.mxu0 0.0
      %6066 = vmatmul.mubr.f32.gmra.mrb[0].mxu0 %v2615
      %v6067 = vpop.f32.mrb[0].mxu0
      %v6068 = vadd.f32 %v943, %v6067
      %v6069 = vpop.f32.mrb[0].mxu0
      %6070 = vmatprep.mubr.f32.mxu0 0.0
      %6071 = vmatmul.mubr.f32.gmra.mrb[0].mxu0 %v2618
      %v6072 = vpop.f32.mrb[0].mxu0
      %v6073 = vadd.f32 %v943, %v6072
      %v6074 = vpop.f32.mrb[0].mxu0
      %6075 = vmatprep.mubr.f32.mxu0 0.0
      %6076 = vmatmul.mubr.f32.gmra.mrb[0].mxu0 %v2621
      %v6077 = vpop.f32.mrb[0].mxu0
      %v6078 = vadd.f32 %v943, %v6077
      %v6079 = vpop.f32.mrb[0].mxu0
      %6080 = vmatprep.mubr.f32.mxu0 0.0
      %6081 = vmatmul.mubr.f32.gmra.mrb[0].mxu0 %v2624
      %v6082 = vpop.f32.mrb[0].mxu0
      %v6083 = vadd.f32 %v943, %v6082
      %v6084 = vpop.f32.mrb[0].mxu0
      %6085 = vmatprep.mubr.f32.mxu0 0.0
      %6086 = vmatmul.mubr.f32.gmra.mrb[0].mxu0 %v2627
      %v6087 = vpop.f32.mrb[0].mxu0
      %v6088 = vadd.f32 %v943, %v6087
      %v6089 = vpop.f32.mrb[0].mxu0
      %6090 = vmatprep.mubr.f32.mxu0 0.0
      %6091 = vmatmul.mubr.f32.gmra.mrb[0].mxu0 %v2630
      %v6092 = vpop.f32.mrb[0].mxu0
      %v6093 = vadd.f32 %v943, %v6092
      %v6094 = vpop.f32.mrb[0].mxu0
      %6095 = vmatprep.mubr.f32.mxu0 0.0
      %6096 = vmatmul.mubr.f32.gmra.mrb[0].mxu0 %v2633
      %v6097 = vpop.f32.mrb[0].mxu0
      %v6098 = vadd.f32 %v943, %v6097
      %v6099 = vpop.f32.mrb[0].mxu0
      %6100 = vmatprep.mubr.f32.mxu0 0.0
      %6101 = vmatmul.mubr.f32.gmra.mrb[0].mxu0 %v2636
      %v6102 = vpop.f32.mrb[0].mxu0
      %v6103 = vadd.f32 %v943, %v6102
      %v6104 = vpop.f32.mrb[0].mxu0
      %6105 = vmatprep.mubr.f32.mxu0 0.0
      %6106 = vmatmul.mubr.f32.gmra.mrb[0].mxu0 %v2639
      %v6107 = vpop.f32.mrb[0].mxu0
      %v6108 = vadd.f32 %v943, %v6107
      %v6109 = vpop.f32.mrb[0].mxu0
      %6110 = vmatprep.mubr.f32.mxu0 0.0
      %6111 = vmatmul.mubr.f32.gmra.mrb[0].mxu0 %v2642
      %v6112 = vpop.f32.mrb[0].mxu0
      %v6113 = vadd.f32 %v943, %v6112
      %v6114 = vpop.f32.mrb[0].mxu0
      %6115 = vmatprep.mubr.f32.mxu0 0.0
      %6116 = vmatmul.mubr.f32.gmra.mrb[0].mxu0 %v2645
      %v6117 = vpop.f32.mrb[0].mxu0
      %v6118 = vadd.f32 %v943, %v6117
      %v6119 = vpop.f32.mrb[0].mxu0
      %6120 = vmatprep.mubr.f32.mxu0 0.0
      %6121 = vmatmul.mubr.f32.gmra.mrb[0].mxu0 %v2648
      %v6122 = vpop.f32.mrb[0].mxu0
      %v6123 = vadd.f32 %v943, %v6122
      %v6124 = vpop.f32.mrb[0].mxu0
      %6125 = vmatprep.mubr.f32.mxu0 0.0
      %6126 = vmatmul.mubr.f32.gmra.mrb[0].mxu0 %v2651
      %v6127 = vpop.f32.mrb[0].mxu0
      %v6128 = vadd.f32 %v943, %v6127
      %v6129 = vpop.f32.mrb[0].mxu0
      %6130 = vmatprep.mubr.f32.mxu0 0.0
      %6131 = vmatmul.mubr.f32.gmra.mrb[0].mxu0 %v2654
      %v6132 = vpop.f32.mrb[0].mxu0
      %v6133 = vadd.f32 %v943, %v6132
      %v6134 = vpop.f32.mrb[0].mxu0
      %6135 = vmatprep.mubr.f32.mxu0 0.0
      %6136 = vmatmul.mubr.f32.gmra.mrb[0].mxu0 %v2657
      %v6137 = vpop.f32.mrb[0].mxu0
      %v6138 = vadd.f32 %v943, %v6137
      %v6139 = vpop.f32.mrb[0].mxu0
      %6140 = vmatprep.mubr.f32.mxu0 0.0
      %6141 = vmatmul.mubr.f32.gmra.mrb[0].mxu0 %v2660
      %v6142 = vpop.f32.mrb[0].mxu0
      %v6143 = vadd.f32 %v943, %v6142
      %v6144 = vpop.f32.mrb[0].mxu0
      %6145 = vmatprep.mubr.f32.mxu0 0.0
      %6146 = vmatmul.mubr.f32.gmra.mrb[0].mxu0 %v2663
      %v6147 = vpop.f32.mrb[0].mxu0
      %v6148 = vadd.f32 %v943, %v6147
      %v6149 = vpop.f32.mrb[0].mxu0
      %6150 = vmatprep.mubr.f32.mxu0 0.0
      %6151 = vmatmul.mubr.f32.gmra.mrb[0].mxu0 %v2666
      %v6152 = vpop.f32.mrb[0].mxu0
      %v6153 = vadd.f32 %v943, %v6152
      %v6154 = vpop.f32.mrb[0].mxu0
      %6155 = vmatprep.mubr.f32.mxu0 0.0
      %6156 = vmatmul.mubr.f32.gmra.mrb[0].mxu0 %v2669
      %v6157 = vpop.f32.mrb[0].mxu0
      %v6158 = vadd.f32 %v943, %v6157
      %v6159 = vpop.f32.mrb[0].mxu0
      %6160 = vmatprep.mubr.f32.mxu0 0.0
      %6161 = vmatmul.mubr.f32.gmra.mrb[0].mxu0 %v2672
      %v6162 = vpop.f32.mrb[0].mxu0
      %v6163 = vadd.f32 %v943, %v6162
      %v6164 = vpop.f32.mrb[0].mxu0
      %6165 = vmatprep.mubr.f32.mxu0 0.0
      %6166 = vmatmul.mubr.f32.gmra.mrb[0].mxu0 %v2675
      %v6167 = vpop.f32.mrb[0].mxu0
      %v6168 = vadd.f32 %v943, %v6167
      %v6169 = vpop.f32.mrb[0].mxu0
      %6170 = vmatprep.mubr.f32.mxu0 0.0
      %6171 = vmatmul.mubr.f32.gmra.mrb[0].mxu0 %v2678
      %v6172 = vpop.f32.mrb[0].mxu0
      %v6173 = vadd.f32 %v943, %v6172
      %v6174 = vpop.f32.mrb[0].mxu0
      %6175 = vmatprep.mubr.f32.mxu0 0.0
      %6176 = vmatmul.mubr.f32.gmra.mrb[0].mxu0 %v2681
      %v6177 = vpop.f32.mrb[0].mxu0
      %v6178 = vadd.f32 %v943, %v6177
      %v6179 = vpop.f32.mrb[0].mxu0
      %6180 = vmatprep.mubr.f32.mxu0 0.0
      %6181 = vmatmul.mubr.f32.gmra.mrb[0].mxu0 %v2684
      %v6182 = vpop.f32.mrb[0].mxu0
      %v6183 = vadd.f32 %v943, %v6182
      %v6184 = vpop.f32.mrb[0].mxu0
      %6185 = vmatprep.mubr.f32.mxu0 0.0
      %6186 = vmatmul.mubr.f32.gmra.mrb[0].mxu0 %v2687
      %v6187 = vpop.f32.mrb[0].mxu0
      %v6188 = vadd.f32 %v943, %v6187
      %v6189 = vpop.f32.mrb[0].mxu0
      %6190 = vmatprep.mubr.f32.mxu0 0.0
      %6191 = vmatmul.mubr.f32.gmra.mrb[0].mxu0 %v2690
      %v6192 = vpop.f32.mrb[0].mxu0
      %v6193 = vadd.f32 %v943, %v6192
      %v6194 = vpop.f32.mrb[0].mxu0
      %6195 = vmatprep.mubr.f32.mxu0 0.0
      %6196 = vmatmul.mubr.f32.gmra.mrb[0].mxu0 %v2693
      %v6197 = vpop.f32.mrb[0].mxu0
      %v6198 = vadd.f32 %v943, %v6197
      %v6199 = vpop.f32.mrb[0].mxu0
      %6200 = vmatprep.mubr.f32.mxu0 0.0
      %6201 = vmatmul.mubr.f32.gmra.mrb[0].mxu0 %v2696
      %v6202 = vpop.f32.mrb[0].mxu0
      %v6203 = vadd.f32 %v943, %v6202
      %v6204 = vpop.f32.mrb[0].mxu0
      %6205 = vmatprep.mubr.f32.mxu0 0.0
      %6206 = vmatmul.mubr.f32.gmra.mrb[0].mxu0 %v2699
      %v6207 = vpop.f32.mrb[0].mxu0
      %v6208 = vadd.f32 %v943, %v6207
      %v6209 = vpop.f32.mrb[0].mxu0
      %6210 = vmatprep.mubr.f32.mxu0 0.0
      %6211 = vmatmul.mubr.f32.gmra.mrb[0].mxu0 %v2702
      %v6212 = vpop.f32.mrb[0].mxu0
      %v6213 = vadd.f32 %v943, %v6212
      %v6214 = vpop.f32.mrb[0].mxu0
      %6215 = vmatprep.mubr.f32.mxu0 0.0
      %6216 = vmatmul.mubr.f32.gmra.mrb[0].mxu0 %v2705
      %v6217 = vpop.f32.mrb[0].mxu0
      %v6218 = vadd.f32 %v943, %v6217
      %v6219 = vpop.f32.mrb[0].mxu0
      %6220 = vmatprep.mubr.f32.mxu0 0.0
      %6221 = vmatmul.mubr.f32.gmra.mrb[0].mxu0 %v2708
      %v6222 = vpop.f32.mrb[0].mxu0
      %v6223 = vadd.f32 %v943, %v6222
      %v6224 = vpop.f32.mrb[0].mxu0
      %6225 = vmatprep.mubr.f32.mxu0 0.0
      %6226 = vmatmul.mubr.f32.gmra.mrb[0].mxu0 %v2711
      %v6227 = vpop.f32.mrb[0].mxu0
      %v6228 = vadd.f32 %v943, %v6227
      %v6229 = vpop.f32.mrb[0].mxu0
      %6230 = vmatprep.mubr.f32.mxu0 0.0
      %6231 = vmatmul.mubr.f32.gmra.mrb[0].mxu0 %v2714
      %v6232 = vpop.f32.mrb[0].mxu0
      %v6233 = vadd.f32 %v943, %v6232
      %v6234 = vpop.f32.mrb[0].mxu0
      %6235 = vmatprep.mubr.f32.mxu0 0.0
      %6236 = vmatmul.mubr.f32.gmra.mrb[0].mxu0 %v2717
      %v6237 = vpop.f32.mrb[0].mxu0
      %v6238 = vadd.f32 %v943, %v6237
      %v6239 = vpop.f32.mrb[0].mxu0
      %6240 = vmatprep.mubr.f32.mxu0 0.0
      %6241 = vmatmul.mubr.f32.gmra.mrb[0].mxu0 %v2720
      %v6242 = vpop.f32.mrb[0].mxu0
      %v6243 = vadd.f32 %v943, %v6242
      %v6244 = vpop.f32.mrb[0].mxu0
      %6245 = vmatprep.mubr.f32.mxu0 0.0
      %6246 = vmatmul.mubr.f32.gmra.mrb[0].mxu0 %v2723
      %v6247 = vpop.f32.mrb[0].mxu0
      %v6248 = vadd.f32 %v943, %v6247
      %v6249 = vpop.f32.mrb[0].mxu0
      %6250 = vmatprep.mubr.f32.mxu0 0.0
      %6251 = vmatmul.mubr.f32.gmra.mrb[0].mxu0 %v2726
      %v6252 = vpop.f32.mrb[0].mxu0
      %v6253 = vadd.f32 %v943, %v6252
      %v6254 = vpop.f32.mrb[0].mxu0
      %6255 = vmatprep.mubr.f32.mxu0 0.0
      %6256 = vmatmul.mubr.f32.gmra.mrb[0].mxu0 %v2729
      %v6257 = vpop.f32.mrb[0].mxu0
      %v6258 = vadd.f32 %v943, %v6257
      %v6259 = vpop.f32.mrb[0].mxu0
      %6260 = vmatprep.mubr.f32.mxu0 0.0
      %6261 = vmatmul.mubr.f32.gmra.mrb[0].mxu0 %v2732
      %v6262 = vpop.f32.mrb[0].mxu0
      %v6263 = vadd.f32 %v943, %v6262
      %v6264 = vpop.f32.mrb[0].mxu0
      %6265 = vmatprep.mubr.f32.mxu0 0.0
      %6266 = vmatmul.mubr.f32.gmra.mrb[0].mxu0 %v2735
      %v6267 = vpop.f32.mrb[0].mxu0
      %v6268 = vadd.f32 %v943, %v6267
      %v6269 = vpop.f32.mrb[0].mxu0
      %6270 = vmatprep.mubr.f32.mxu0 0.0
      %6271 = vmatmul.mubr.f32.gmra.mrb[0].mxu0 %v2738
      %v6272 = vpop.f32.mrb[0].mxu0
      %v6273 = vadd.f32 %v943, %v6272
      %v6274 = vpop.f32.mrb[0].mxu0
      %6275 = vmatprep.mubr.f32.mxu0 0.0
      %6276 = vmatmul.mubr.f32.gmra.mrb[0].mxu0 %v2741
      %v6277 = vpop.f32.mrb[0].mxu0
      %v6278 = vadd.f32 %v943, %v6277
      %v6279 = vpop.f32.mrb[0].mxu0
      %6280 = vmatprep.mubr.f32.mxu0 0.0
      %6281 = vmatmul.mubr.f32.gmra.mrb[0].mxu0 %v2744
      %v6282 = vpop.f32.mrb[0].mxu0
      %v6283 = vadd.f32 %v943, %v6282
      %v6284 = vpop.f32.mrb[0].mxu0
      %6285 = vmatprep.mubr.f32.mxu0 0.0
      %6286 = vmatmul.mubr.f32.gmra.mrb[0].mxu0 %v2747
      %v6287 = vpop.f32.mrb[0].mxu0
      %v6288 = vadd.f32 %v943, %v6287
      %v6289 = vpop.f32.mrb[0].mxu0
      %6290 = vmatprep.mubr.f32.mxu0 0.0
      %6291 = vmatmul.mubr.f32.gmra.mrb[0].mxu0 %v2750
      %v6292 = vpop.f32.mrb[0].mxu0
      %v6293 = vadd.f32 %v943, %v6292
      %v6294 = vpop.f32.mrb[0].mxu0
      %6295 = vmatprep.mubr.f32.mxu0 0.0
      %6296 = vmatmul.mubr.f32.gmra.mrb[0].mxu0 %v2753
      %v6297 = vpop.f32.mrb[0].mxu0
      %v6298 = vadd.f32 %v943, %v6297
      %v6299 = vpop.f32.mrb[0].mxu0
      %6300 = vmatprep.mubr.f32.mxu0 0.0
      %6301 = vmatmul.mubr.f32.gmra.mrb[0].mxu0 %v2756
      %v6302 = vpop.f32.mrb[0].mxu0
      %v6303 = vadd.f32 %v943, %v6302
      %v6304 = vpop.f32.mrb[0].mxu0
      %6305 = vmatprep.mubr.f32.mxu0 0.0
      %6306 = vmatmul.mubr.f32.gmra.mrb[0].mxu0 %v2759
      %v6307 = vpop.f32.mrb[0].mxu0
      %v6308 = vadd.f32 %v943, %v6307
      %v6309 = vpop.f32.mrb[0].mxu0
      %6310 = vmatprep.mubr.f32.mxu0 0.0
      %6311 = vmatmul.mubr.f32.gmra.mrb[0].mxu0 %v2762
      %v6312 = vpop.f32.mrb[0].mxu0
      %v6313 = vadd.f32 %v943, %v6312
      %v6314 = vpop.f32.mrb[0].mxu0
      %6315 = vmatprep.mubr.f32.mxu0 0.0
      %6316 = vmatmul.mubr.f32.gmra.mrb[0].mxu0 %v2765
      %v6317 = vpop.f32.mrb[0].mxu0
      %v6318 = vadd.f32 %v943, %v6317
      %v6319 = vpop.f32.mrb[0].mxu0
      %6320 = vmatprep.mubr.f32.mxu0 0.0
      %6321 = vmatmul.mubr.f32.gmra.mrb[0].mxu0 %v2768
      %v6322 = vpop.f32.mrb[0].mxu0
      %v6323 = vadd.f32 %v943, %v6322
      %v6324 = vpop.f32.mrb[0].mxu0
      %6325 = vmatprep.mubr.f32.mxu0 0.0
      %6326 = vmatmul.mubr.f32.gmra.mrb[0].mxu0 %v2771
      %v6327 = vpop.f32.mrb[0].mxu0
      %v6328 = vadd.f32 %v943, %v6327
      %v6329 = vpop.f32.mrb[0].mxu0
      %6330 = vmatprep.mubr.f32.mxu0 0.0
      %6331 = vmatmul.mubr.f32.gmra.mrb[0].mxu0 %v2774
      %v6332 = vpop.f32.mrb[0].mxu0
      %v6333 = vadd.f32 %v943, %v6332
      %v6334 = vpop.f32.mrb[0].mxu0
      %6335 = vmatprep.mubr.f32.mxu0 0.0
      %6336 = vmatmul.mubr.f32.gmra.mrb[0].mxu0 %v2777
      %v6337 = vpop.f32.mrb[0].mxu0
      %v6338 = vadd.f32 %v943, %v6337
      %v6339 = vpop.f32.mrb[0].mxu0
      %6340 = vmatprep.mubr.f32.mxu0 0.0
      %6341 = vmatmul.mubr.f32.gmra.mrb[0].mxu0 %v2780
      %v6342 = vpop.f32.mrb[0].mxu0
      %v6343 = vadd.f32 %v943, %v6342
      %v6344 = vpop.f32.mrb[0].mxu0
      %6345 = vmatprep.mubr.f32.mxu0 0.0
      %6346 = vmatmul.mubr.f32.gmra.mrb[0].mxu0 %v2783
      %v6347 = vpop.f32.mrb[0].mxu0
      %v6348 = vadd.f32 %v943, %v6347
      %v6349 = vpop.f32.mrb[0].mxu0
      %6350 = vmatprep.mubr.f32.mxu0 0.0
      %6351 = vmatmul.mubr.f32.gmra.mrb[0].mxu0 %v2786
      %v6352 = vpop.f32.mrb[0].mxu0
      %v6353 = vadd.f32 %v943, %v6352
      %v6354 = vpop.f32.mrb[0].mxu0
      %6355 = vmatprep.mubr.f32.mxu0 0.0
      %6356 = vmatmul.mubr.f32.gmra.mrb[0].mxu0 %v2789
      %v6357 = vpop.f32.mrb[0].mxu0
      %v6358 = vadd.f32 %v943, %v6357
      %v6359 = vpop.f32.mrb[0].mxu0
      %6360 = vmatprep.mubr.f32.mxu0 0.0
      %6361 = vmatmul.mubr.f32.gmra.mrb[0].mxu0 %v2792
      %v6362 = vpop.f32.mrb[0].mxu0
      %v6363 = vadd.f32 %v943, %v6362
      %v6364 = vpop.f32.mrb[0].mxu0
      %6365 = vmatprep.mubr.f32.mxu0 0.0
      %6366 = vmatmul.mubr.f32.gmra.mrb[0].mxu0 %v2795
      %v6367 = vpop.f32.mrb[0].mxu0
      %v6368 = vadd.f32 %v943, %v6367
      %v6369 = vpop.f32.mrb[0].mxu0
      %6370 = vmatprep.mubr.f32.mxu0 0.0
      %6371 = vmatmul.mubr.f32.gmra.mrb[0].mxu0 %v2798
      %v6372 = vpop.f32.mrb[0].mxu0
      %v6373 = vadd.f32 %v943, %v6372
      %v6374 = vpop.f32.mrb[0].mxu0
      %6375 = vmatprep.mubr.f32.mxu0 0.0
      %6376 = vmatmul.mubr.f32.gmra.mrb[0].mxu0 %v2801
      %v6377 = vpop.f32.mrb[0].mxu0
      %v6378 = vadd.f32 %v943, %v6377
      %v6379 = vpop.f32.mrb[0].mxu0
      %6380 = vmatprep.mubr.f32.mxu0 0.0
      %6381 = vmatmul.mubr.f32.gmra.mrb[0].mxu0 %v2804
      %v6382 = vpop.f32.mrb[0].mxu0
      %v6383 = vadd.f32 %v943, %v6382
      %v6384 = vpop.f32.mrb[0].mxu0
      %6385 = vmatprep.mubr.f32.mxu0 0.0
      %6386 = vmatmul.mubr.f32.gmra.mrb[0].mxu0 %v2807
      %v6387 = vpop.f32.mrb[0].mxu0
      %v6388 = vadd.f32 %v943, %v6387
      %v6389 = vpop.f32.mrb[0].mxu0
      %6390 = vmatprep.mubr.f32.mxu0 0.0
      %6391 = vmatmul.mubr.f32.gmra.mrb[0].mxu0 %v2810
      %v6392 = vpop.f32.mrb[0].mxu0
      %v6393 = vadd.f32 %v943, %v6392
      %v6394 = vpop.f32.mrb[0].mxu0
      %6395 = vmatprep.mubr.f32.mxu0 0.0
      %6396 = vmatmul.mubr.f32.gmra.mrb[0].mxu0 %v2813
      %v6397 = vpop.f32.mrb[0].mxu0
      %v6398 = vadd.f32 %v943, %v6397
      %v6399 = vpop.f32.mrb[0].mxu0
      %6400 = vmatprep.mubr.f32.mxu0 0.0
      %6401 = vmatmul.mubr.f32.gmra.mrb[0].mxu0 %v2816
      %v6402 = vpop.f32.mrb[0].mxu0
      %v6403 = vadd.f32 %v943, %v6402
      %v6404 = vpop.f32.mrb[0].mxu0
      %6405 = vmatprep.mubr.f32.mxu0 0.0
      %6406 = vmatmul.mubr.f32.gmra.mrb[0].mxu0 %v2819
      %v6407 = vpop.f32.mrb[0].mxu0
      %v6408 = vadd.f32 %v943, %v6407
      %v6409 = vpop.f32.mrb[0].mxu0
      %6410 = vmatprep.mubr.f32.mxu0 0.0
      %6411 = vmatmul.mubr.f32.gmra.mrb[0].mxu0 %v2822
      %v6412 = vpop.f32.mrb[0].mxu0
      %v6413 = vadd.f32 %v943, %v6412
      %v6414 = vpop.f32.mrb[0].mxu0
      %6415 = vmatprep.mubr.f32.mxu0 0.0
      %6416 = vmatmul.mubr.f32.gmra.mrb[0].mxu0 %v2825
      %v6417 = vpop.f32.mrb[0].mxu0
      %v6418 = vadd.f32 %v943, %v6417
      %v6419 = vpop.f32.mrb[0].mxu0
      %6420 = vmatprep.mubr.f32.mxu0 0.0
      %6421 = vmatmul.mubr.f32.gmra.mrb[0].mxu0 %v2828
      %v6422 = vpop.f32.mrb[0].mxu0
      %v6423 = vadd.f32 %v943, %v6422
      %v6424 = vpop.f32.mrb[0].mxu0
      %6425 = vmatprep.mubr.f32.mxu0 0.0
      %6426 = vmatmul.mubr.f32.gmra.mrb[0].mxu0 %v2831
      %v6427 = vpop.f32.mrb[0].mxu0
      %v6428 = vadd.f32 %v943, %v6427
      %v6429 = vpop.f32.mrb[0].mxu0
      %6430 = vmatprep.mubr.f32.mxu0 0.0
      %6431 = vmatmul.mubr.f32.gmra.mrb[0].mxu0 %v2834
      %v6432 = vpop.f32.mrb[0].mxu0
      %v6433 = vadd.f32 %v943, %v6432
      %v6434 = vpop.f32.mrb[0].mxu0
      %6435 = vmatprep.mubr.f32.mxu0 0.0
      %6436 = vmatmul.mubr.f32.gmra.mrb[0].mxu0 %v2837
      %v6437 = vpop.f32.mrb[0].mxu0
      %v6438 = vadd.f32 %v943, %v6437
      %v6439 = vpop.f32.mrb[0].mxu0
      %6440 = vmatprep.mubr.f32.mxu0 0.0
      %6441 = vmatmul.mubr.f32.gmra.mrb[0].mxu0 %v2840
      %v6442 = vpop.f32.mrb[0].mxu0
      %v6443 = vadd.f32 %v943, %v6442
      %v6444 = vpop.f32.mrb[0].mxu0
      %6445 = vmatprep.mubr.f32.mxu0 0.0
      %6446 = vmatmul.mubr.f32.gmra.mrb[0].mxu0 %v2843
      %v6447 = vpop.f32.mrb[0].mxu0
      %v6448 = vadd.f32 %v943, %v6447
      %v6449 = vpop.f32.mrb[0].mxu0
      %6450 = vmatprep.mubr.f32.mxu0 0.0
      %6451 = vmatmul.mubr.f32.gmra.mrb[0].mxu0 %v2846
      %v6452 = vpop.f32.mrb[0].mxu0
      %v6453 = vadd.f32 %v943, %v6452
      %v6454 = vpop.f32.mrb[0].mxu0
      %6455 = vmatprep.mubr.f32.mxu0 0.0
      %6456 = vmatmul.mubr.f32.gmra.mrb[0].mxu0 %v2849
      %v6457 = vpop.f32.mrb[0].mxu0
      %v6458 = vadd.f32 %v943, %v6457
      %v6459 = vpop.f32.mrb[0].mxu0
      %6460 = vmatprep.mubr.f32.mxu0 0.0
      %6461 = vmatmul.mubr.f32.gmra.mrb[0].mxu0 %v2852
      %v6462 = vpop.f32.mrb[0].mxu0
      %v6463 = vadd.f32 %v943, %v6462
      %v6464 = vpop.f32.mrb[0].mxu0
      %6465 = vmatprep.mubr.f32.mxu0 0.0
      %6466 = vmatmul.mubr.f32.gmra.mrb[0].mxu0 %v2855
      %v6467 = vpop.f32.mrb[0].mxu0
      %v6468 = vadd.f32 %v943, %v6467
      %v6469 = vpop.f32.mrb[0].mxu0
      %6470 = vmatprep.mubr.f32.mxu0 0.0
      %6471 = vmatmul.mubr.f32.gmra.mrb[0].mxu0 %v2858
      %v6472 = vpop.f32.mrb[0].mxu0
      %v6473 = vadd.f32 %v943, %v6472
      %v6474 = vpop.f32.mrb[0].mxu0
      %6475 = vmatprep.mubr.f32.mxu0 0.0
      %6476 = vmatmul.mubr.f32.gmra.mrb[0].mxu0 %v2861
      %v6477 = vpop.f32.mrb[0].mxu0
      %v6478 = vadd.f32 %v943, %v6477
      %v6479 = vpop.f32.mrb[0].mxu0
      %6480 = vmatprep.mubr.f32.mxu0 0.0
      %6481 = vmatmul.mubr.f32.gmra.mrb[0].mxu0 %v2864
      %v6482 = vpop.f32.mrb[0].mxu0
      %v6483 = vadd.f32 %v943, %v6482
      %v6484 = vpop.f32.mrb[0].mxu0
      %6485 = vmatprep.mubr.f32.mxu0 0.0
      %6486 = vmatmul.mubr.f32.gmra.mrb[0].mxu0 %v2867
      %v6487 = vpop.f32.mrb[0].mxu0
      %v6488 = vadd.f32 %v943, %v6487
      %v6489 = vpop.f32.mrb[0].mxu0
      %6490 = vmatprep.mubr.f32.mxu0 0.0
      %6491 = vmatmul.mubr.f32.gmra.mrb[0].mxu0 %v2870
      %v6492 = vpop.f32.mrb[0].mxu0
      %v6493 = vadd.f32 %v943, %v6492
      %v6494 = vpop.f32.mrb[0].mxu0
      %6495 = vmatprep.mubr.f32.mxu0 0.0
      %6496 = vmatmul.mubr.f32.gmra.mrb[0].mxu0 %v2873
      %v6497 = vpop.f32.mrb[0].mxu0
      %v6498 = vadd.f32 %v943, %v6497
      %v6499 = vpop.f32.mrb[0].mxu0
      %6500 = vmatprep.mubr.f32.mxu0 0.0
      %6501 = vmatmul.mubr.f32.gmra.mrb[0].mxu0 %v2876
      %v6502 = vpop.f32.mrb[0].mxu0
      %v6503 = vadd.f32 %v943, %v6502
      %v6504 = vpop.f32.mrb[0].mxu0
      %6505 = vmatprep.mubr.f32.mxu0 0.0
      %6506 = vmatmul.mubr.f32.gmra.mrb[0].mxu0 %v2879
      %v6507 = vpop.f32.mrb[0].mxu0
      %v6508 = vadd.f32 %v943, %v6507
      %v6509 = vpop.f32.mrb[0].mxu0
      %6510 = vmatprep.mubr.f32.mxu0 0.0
      %6511 = vmatmul.mubr.f32.gmra.mrb[0].mxu0 %v2882
      %v6512 = vpop.f32.mrb[0].mxu0
      %v6513 = vadd.f32 %v943, %v6512
      %v6514 = vpop.f32.mrb[0].mxu0
      %6515 = vmatprep.mubr.f32.mxu0 0.0
      %6516 = vmatmul.mubr.f32.gmra.mrb[0].mxu0 %v2885
      %v6517 = vpop.f32.mrb[0].mxu0
      %v6518 = vadd.f32 %v943, %v6517
      %v6519 = vpop.f32.mrb[0].mxu0
      %6520 = vmatprep.mubr.f32.mxu0 0.0
      %6521 = vmatmul.mubr.f32.gmra.mrb[0].mxu0 %v2888
      %v6522 = vpop.f32.mrb[0].mxu0
      %v6523 = vadd.f32 %v943, %v6522
      %v6524 = vpop.f32.mrb[0].mxu0
      %6525 = vmatprep.mubr.f32.mxu0 0.0
      %6526 = vmatmul.mubr.f32.gmra.mrb[0].mxu0 %v2891
      %v6527 = vpop.f32.mrb[0].mxu0
      %v6528 = vadd.f32 %v943, %v6527
      %v6529 = vpop.f32.mrb[0].mxu0
      %6530 = vmatprep.mubr.f32.mxu0 0.0
      %6531 = vmatmul.mubr.f32.gmra.mrb[0].mxu0 %v2894
      %v6532 = vpop.f32.mrb[0].mxu0
      %v6533 = vadd.f32 %v943, %v6532
      %v6534 = vpop.f32.mrb[0].mxu0
      %6535 = vmatprep.mubr.f32.mxu0 0.0
      %6536 = vmatmul.mubr.f32.gmra.mrb[0].mxu0 %v2897
      %v6537 = vpop.f32.mrb[0].mxu0
      %v6538 = vadd.f32 %v943, %v6537
      %v6539 = vpop.f32.mrb[0].mxu0
      %6540 = vmatprep.mubr.f32.mxu0 0.0
      %6541 = vmatmul.mubr.f32.gmra.mrb[0].mxu0 %v2900
      %v6542 = vpop.f32.mrb[0].mxu0
      %v6543 = vadd.f32 %v943, %v6542
      %v6544 = vpop.f32.mrb[0].mxu0
      %6545 = vmatprep.mubr.f32.mxu0 0.0
      %6546 = vmatmul.mubr.f32.gmra.mrb[0].mxu0 %v2903
      %v6547 = vpop.f32.mrb[0].mxu0
      %v6548 = vadd.f32 %v943, %v6547
      %v6549 = vpop.f32.mrb[0].mxu0
      %6550 = vmatprep.mubr.f32.mxu0 0.0
      %6551 = vmatmul.mubr.f32.gmra.mrb[0].mxu0 %v2906
      %v6552 = vpop.f32.mrb[0].mxu0
      %v6553 = vadd.f32 %v943, %v6552
      %v6554 = vpop.f32.mrb[0].mxu0
      %6555 = vmatprep.mubr.f32.mxu0 0.0
      %6556 = vmatmul.mubr.f32.gmra.mrb[0].mxu0 %v2909
      %v6557 = vpop.f32.mrb[0].mxu0
      %v6558 = vadd.f32 %v943, %v6557
      %v6559 = vpop.f32.mrb[0].mxu0
      %6560 = vmatprep.mubr.f32.mxu0 0.0
      %6561 = vmatmul.mubr.f32.gmra.mrb[0].mxu0 %v2912
      %v6562 = vpop.f32.mrb[0].mxu0
      %v6563 = vadd.f32 %v943, %v6562
      %v6564 = vpop.f32.mrb[0].mxu0
      %6565 = vmatprep.mubr.f32.mxu0 0.0
      %6566 = vmatmul.mubr.f32.gmra.mrb[0].mxu0 %v2915
      %v6567 = vpop.f32.mrb[0].mxu0
      %v6568 = vadd.f32 %v943, %v6567
      %v6569 = vpop.f32.mrb[0].mxu0
      %6570 = vmatprep.mubr.f32.mxu0 0.0
      %6571 = vmatmul.mubr.f32.gmra.mrb[0].mxu0 %v2918
      %v6572 = vpop.f32.mrb[0].mxu0
      %v6573 = vadd.f32 %v943, %v6572
      %v6574 = vpop.f32.mrb[0].mxu0
      %6575 = vmatprep.mubr.f32.mxu0 0.0
      %6576 = vmatmul.mubr.f32.gmra.mrb[0].mxu0 %v2921
      %v6577 = vpop.f32.mrb[0].mxu0
      %v6578 = vadd.f32 %v943, %v6577
      %v6579 = vpop.f32.mrb[0].mxu0
      %6580 = vmatprep.mubr.f32.mxu0 0.0
      %6581 = vmatmul.mubr.f32.gmra.mrb[0].mxu0 %v2924
      %v6582 = vpop.f32.mrb[0].mxu0
      %v6583 = vadd.f32 %v943, %v6582
      %v6584 = vpop.f32.mrb[0].mxu0
      %6585 = vmatprep.mubr.f32.mxu0 0.0
      %6586 = vmatmul.mubr.f32.gmra.mrb[0].mxu0 %v2927
      %v6587 = vpop.f32.mrb[0].mxu0
      %v6588 = vadd.f32 %v943, %v6587
      %v6589 = vpop.f32.mrb[0].mxu0
      %6590 = vmatprep.mubr.f32.mxu0 0.0
      %6591 = vmatmul.mubr.f32.gmra.mrb[0].mxu0 %v2930
      %v6592 = vpop.f32.mrb[0].mxu0
      %v6593 = vadd.f32 %v943, %v6592
      %v6594 = vpop.f32.mrb[0].mxu0
      %6595 = vmatprep.mubr.f32.mxu0 0.0
      %6596 = vmatmul.mubr.f32.gmra.mrb[0].mxu0 %v2933
      %v6597 = vpop.f32.mrb[0].mxu0
      %v6598 = vadd.f32 %v943, %v6597
      %v6599 = vpop.f32.mrb[0].mxu0
      %6600 = vmatprep.mubr.f32.mxu0 0.0
      %6601 = vmatmul.mubr.f32.gmra.mrb[0].mxu0 %v2936
      %v6602 = vpop.f32.mrb[0].mxu0
      %v6603 = vadd.f32 %v943, %v6602
      %v6604 = vpop.f32.mrb[0].mxu0
      %6605 = vmatprep.mubr.f32.mxu0 0.0
      %6606 = vmatmul.mubr.f32.gmra.mrb[0].mxu0 %v2939
      %v6607 = vpop.f32.mrb[0].mxu0
      %v6608 = vadd.f32 %v943, %v6607
      %v6609 = vpop.f32.mrb[0].mxu0
      %6610 = vmatprep.mubr.f32.mxu0 0.0
      %6611 = vmatmul.mubr.f32.gmra.mrb[0].mxu0 %v2942
      %v6612 = vpop.f32.mrb[0].mxu0
      %v6613 = vadd.f32 %v943, %v6612
      %v6614 = vpop.f32.mrb[0].mxu0
      %6615 = vmatprep.mubr.f32.mxu0 0.0
      %6616 = vmatmul.mubr.f32.gmra.mrb[0].mxu0 %v2945
      %v6617 = vpop.f32.mrb[0].mxu0
      %v6618 = vadd.f32 %v943, %v6617
      %v6619 = vpop.f32.mrb[0].mxu0
      %6620 = vmatprep.mubr.f32.mxu0 0.0
      %6621 = vmatmul.mubr.f32.gmra.mrb[0].mxu0 %v2948
      %v6622 = vpop.f32.mrb[0].mxu0
      %v6623 = vadd.f32 %v943, %v6622
      %v6624 = vpop.f32.mrb[0].mxu0
      %6625 = vmatprep.mubr.f32.mxu0 0.0
      %6626 = vmatmul.mubr.f32.gmra.mrb[0].mxu0 %v2951
      %v6627 = vpop.f32.mrb[0].mxu0
      %v6628 = vadd.f32 %v943, %v6627
      %v6629 = vpop.f32.mrb[0].mxu0
      %6630 = vmatprep.mubr.f32.mxu0 0.0
      %6631 = vmatmul.mubr.f32.gmra.mrb[0].mxu0 %v2954
      %v6632 = vpop.f32.mrb[0].mxu0
      %v6633 = vadd.f32 %v943, %v6632
      %v6634 = vpop.f32.mrb[0].mxu0
      %6635 = vmatprep.mubr.f32.mxu0 0.0
      %6636 = vmatmul.mubr.f32.gmra.mrb[0].mxu0 %v2957
      %v6637 = vpop.f32.mrb[0].mxu0
      %v6638 = vadd.f32 %v943, %v6637
      %v6639 = vpop.f32.mrb[0].mxu0
      %6640 = vmatprep.mubr.f32.mxu0 0.0
      %6641 = vmatmul.mubr.f32.gmra.mrb[0].mxu0 %v2960
      %v6642 = vpop.f32.mrb[0].mxu0
      %v6643 = vadd.f32 %v943, %v6642
      %v6644 = vpop.f32.mrb[0].mxu0
      %6645 = vmatprep.mubr.f32.mxu0 0.0
      %6646 = vmatmul.mubr.f32.gmra.mrb[0].mxu0 %v2963
      %v6647 = vpop.f32.mrb[0].mxu0
      %v6648 = vadd.f32 %v943, %v6647
      %v6649 = vpop.f32.mrb[0].mxu0
      %6650 = vmatprep.mubr.f32.mxu0 0.0
      %6651 = vmatmul.mubr.f32.gmra.mrb[0].mxu0 %v2966
      %v6652 = vpop.f32.mrb[0].mxu0
      %v6653 = vadd.f32 %v943, %v6652
      %v6654 = vpop.f32.mrb[0].mxu0
      %6655 = vmatprep.mubr.f32.mxu0 0.0
      %6656 = vmatmul.mubr.f32.gmra.mrb[0].mxu0 %v2969
      %v6657 = vpop.f32.mrb[0].mxu0
      %v6658 = vadd.f32 %v943, %v6657
      %v6659 = vpop.f32.mrb[0].mxu0
      %6660 = vmatprep.mubr.f32.mxu0 0.0
      %6661 = vmatmul.mubr.f32.gmra.mrb[0].mxu0 %v2972
      %v6662 = vpop.f32.mrb[0].mxu0
      %v6663 = vadd.f32 %v943, %v6662
      %v6664 = vpop.f32.mrb[0].mxu0
      %6665 = vmatprep.mubr.f32.mxu0 0.0
      %6666 = vmatmul.mubr.f32.gmra.mrb[0].mxu0 %v2975
      %v6667 = vpop.f32.mrb[0].mxu0
      %v6668 = vadd.f32 %v943, %v6667
      %v6669 = vpop.f32.mrb[0].mxu0
      %6670 = vmatprep.mubr.f32.mxu0 0.0
      %6671 = vmatmul.mubr.f32.gmra.mrb[0].mxu0 %v2978
      %v6672 = vpop.f32.mrb[0].mxu0
      %v6673 = vadd.f32 %v943, %v6672
      %v6674 = vpop.f32.mrb[0].mxu0
      %6675 = vmatprep.mubr.f32.mxu0 0.0
      %6676 = vmatmul.mubr.f32.gmra.mrb[0].mxu0 %v2981
      %v6677 = vpop.f32.mrb[0].mxu0
      %v6678 = vadd.f32 %v943, %v6677
      %v6679 = vpop.f32.mrb[0].mxu0
      %6680 = vmatprep.mubr.f32.mxu0 0.0
      %6681 = vmatmul.mubr.f32.gmra.mrb[0].mxu0 %v2984
      %v6682 = vpop.f32.mrb[0].mxu0
      %v6683 = vadd.f32 %v943, %v6682
      %v6684 = vpop.f32.mrb[0].mxu0
      %6685 = vmatprep.mubr.f32.mxu0 0.0
      %6686 = vmatmul.mubr.f32.gmra.mrb[0].mxu0 %v2987
      %v6687 = vpop.f32.mrb[0].mxu0
      %v6688 = vadd.f32 %v943, %v6687
      %v6689 = vpop.f32.mrb[0].mxu0
      %6690 = vmatprep.mubr.f32.mxu0 0.0
      %6691 = vmatmul.mubr.f32.gmra.mrb[0].mxu0 %v2990
      %v6692 = vpop.f32.mrb[0].mxu0
      %v6693 = vadd.f32 %v943, %v6692
      %v6694 = vpop.f32.mrb[0].mxu0
      %6695 = vmatprep.mubr.f32.mxu0 0.0
      %6696 = vmatmul.mubr.f32.gmra.mrb[0].mxu0 %v2993
      %v6697 = vpop.f32.mrb[0].mxu0
      %v6698 = vadd.f32 %v943, %v6697
      %v6699 = vpop.f32.mrb[0].mxu0
      %6700 = vmatprep.mubr.f32.mxu0 0.0
      %6701 = vmatmul.mubr.f32.gmra.mrb[0].mxu0 %v2996
      %v6702 = vpop.f32.mrb[0].mxu0
      %v6703 = vadd.f32 %v943, %v6702
      %v6704 = vpop.f32.mrb[0].mxu0
      %6705 = vmatprep.mubr.f32.mxu0 0.0
      %6706 = vmatmul.mubr.f32.gmra.mrb[0].mxu0 %v2999
      %v6707 = vpop.f32.mrb[0].mxu0
      %v6708 = vadd.f32 %v943, %v6707
      %v6709 = vpop.f32.mrb[0].mxu0
      %6710 = vmatprep.mubr.f32.mxu0 0.0
      %6711 = vmatmul.mubr.f32.gmra.mrb[0].mxu0 %v3002
      %v6712 = vpop.f32.mrb[0].mxu0
      %v6713 = vadd.f32 %v943, %v6712
      %v6714 = vpop.f32.mrb[0].mxu0
      %6715 = vmatprep.mubr.f32.mxu0 0.0
      %6716 = vmatmul.mubr.f32.gmra.mrb[0].mxu0 %v3005
      %v6717 = vpop.f32.mrb[0].mxu0
      %v6718 = vadd.f32 %v943, %v6717
      %v6719 = vpop.f32.mrb[0].mxu0
      %6720 = vmatprep.mubr.f32.mxu0 0.0
      %6721 = vmatmul.mubr.f32.gmra.mrb[0].mxu0 %v3008
      %v6722 = vpop.f32.mrb[0].mxu0
      %v6723 = vadd.f32 %v943, %v6722
      %v6724 = vpop.f32.mrb[0].mxu0
      %6725 = vmatprep.mubr.f32.mxu0 0.0
      %6726 = vmatmul.mubr.f32.gmra.mrb[0].mxu0 %v3011
      %v6727 = vpop.f32.mrb[0].mxu0
      %v6728 = vadd.f32 %v943, %v6727
      %v6729 = vpop.f32.mrb[0].mxu0
      %6730 = vmatprep.mubr.f32.mxu0 0.0
      %6731 = vmatmul.mubr.f32.gmra.mrb[0].mxu0 %v3014
      %v6732 = vpop.f32.mrb[0].mxu0
      %v6733 = vadd.f32 %v943, %v6732
      %v6734 = vpop.f32.mrb[0].mxu0
      %6735 = vmatprep.mubr.f32.mxu0 0.0
      %6736 = vmatmul.mubr.f32.gmra.mrb[0].mxu0 %v3017
      %v6737 = vpop.f32.mrb[0].mxu0
      %v6738 = vadd.f32 %v943, %v6737
      %v6739 = vpop.f32.mrb[0].mxu0
      %6740 = vmatprep.mubr.f32.mxu0 0.0
      %6741 = vmatmul.mubr.f32.gmra.mrb[0].mxu0 %v3020
      %v6742 = vpop.f32.mrb[0].mxu0
      %v6743 = vadd.f32 %v943, %v6742
      %v6744 = vpop.f32.mrb[0].mxu0
      %6745 = vmatprep.mubr.f32.mxu0 0.0
      %6746 = vmatmul.mubr.f32.gmra.mrb[0].mxu0 %v3023
      %v6747 = vpop.f32.mrb[0].mxu0
      %v6748 = vadd.f32 %v943, %v6747
      %v6749 = vpop.f32.mrb[0].mxu0
      %6750 = vmatprep.mubr.f32.mxu0 0.0
      %6751 = vmatmul.mubr.f32.gmra.mrb[0].mxu0 %v3026
      %v6752 = vpop.f32.mrb[0].mxu0
      %v6753 = vadd.f32 %v943, %v6752
      %v6754 = vpop.f32.mrb[0].mxu0
      %6755 = vmatprep.mubr.f32.mxu0 0.0
      %6756 = vmatmul.mubr.f32.gmra.mrb[0].mxu0 %v3029
      %v6757 = vpop.f32.mrb[0].mxu0
      %v6758 = vadd.f32 %v943, %v6757
      %v6759 = vpop.f32.mrb[0].mxu0
      %6760 = vmatprep.mubr.f32.mxu0 0.0
      %6761 = vmatmul.mubr.f32.gmra.mrb[0].mxu0 %v3032
      %v6762 = vpop.f32.mrb[0].mxu0
      %v6763 = vadd.f32 %v943, %v6762
      %v6764 = vpop.f32.mrb[0].mxu0
      %6765 = vmatprep.mubr.f32.mxu0 0.0
      %6766 = vmatmul.mubr.f32.gmra.mrb[0].mxu0 %v3035
      %v6767 = vpop.f32.mrb[0].mxu0
      %v6768 = vadd.f32 %v943, %v6767
      %v6769 = vpop.f32.mrb[0].mxu0
      %6770 = vmatprep.mubr.f32.mxu0 0.0
      %6771 = vmatmul.mubr.f32.gmra.mrb[0].mxu0 %v3038
      %v6772 = vpop.f32.mrb[0].mxu0
      %v6773 = vadd.f32 %v943, %v6772
      %v6774 = vpop.f32.mrb[0].mxu0
      %6775 = vmatprep.mubr.f32.mxu0 0.0
      %6776 = vmatmul.mubr.f32.gmra.mrb[0].mxu0 %v3041
      %v6777 = vpop.f32.mrb[0].mxu0
      %v6778 = vadd.f32 %v943, %v6777
      %v6779 = vpop.f32.mrb[0].mxu0
      %6780 = vmatprep.mubr.f32.mxu0 0.0
      %6781 = vmatmul.mubr.f32.gmra.mrb[0].mxu0 %v3044
      %v6782 = vpop.f32.mrb[0].mxu0
      %v6783 = vadd.f32 %v943, %v6782
      %v6784 = vpop.f32.mrb[0].mxu0
      %6785 = vmatprep.mubr.f32.mxu0 0.0
      %6786 = vmatmul.mubr.f32.gmra.mrb[0].mxu0 %v3047
      %v6787 = vpop.f32.mrb[0].mxu0
      %v6788 = vadd.f32 %v943, %v6787
      %v6789 = vpop.f32.mrb[0].mxu0
      %6790 = vmatprep.mubr.f32.mxu0 0.0
      %6791 = vmatmul.mubr.f32.gmra.mrb[0].mxu0 %v3050
      %v6792 = vpop.f32.mrb[0].mxu0
      %v6793 = vadd.f32 %v943, %v6792
      %v6794 = vpop.f32.mrb[0].mxu0
      %6795 = vmatprep.mubr.f32.mxu0 0.0
      %6796 = vmatmul.mubr.f32.gmra.mrb[0].mxu0 %v3053
      %v6797 = vpop.f32.mrb[0].mxu0
      %v6798 = vadd.f32 %v943, %v6797
      %v6799 = vpop.f32.mrb[0].mxu0
      %6800 = vmatprep.mubr.f32.mxu0 0.0
      %6801 = vmatmul.mubr.f32.gmra.mrb[0].mxu0 %v3056
      %v6802 = vpop.f32.mrb[0].mxu0
      %v6803 = vadd.f32 %v943, %v6802
      %v6804 = vpop.f32.mrb[0].mxu0
      %6805 = vmatprep.mubr.f32.mxu0 0.0
      %6806 = vmatmul.mubr.f32.gmra.mrb[0].mxu0 %v3059
      %v6807 = vpop.f32.mrb[0].mxu0
      %v6808 = vadd.f32 %v943, %v6807
      %v6809 = vpop.f32.mrb[0].mxu0
      %6810 = vmatprep.mubr.f32.mxu0 0.0
      %6811 = vmatmul.mubr.f32.gmra.mrb[0].mxu0 %v3062
      %v6812 = vpop.f32.mrb[0].mxu0
      %v6813 = vadd.f32 %v943, %v6812
      %v6814 = vpop.f32.mrb[0].mxu0
      %6815 = vmatprep.mubr.f32.mxu0 0.0
      %6816 = vmatmul.mubr.f32.gmra.mrb[0].mxu0 %v3065
      %v6817 = vpop.f32.mrb[0].mxu0
      %v6818 = vadd.f32 %v943, %v6817
      %v6819 = vpop.f32.mrb[0].mxu0
      %6820 = vmatprep.mubr.f32.mxu0 0.0
      %6821 = vmatmul.mubr.f32.gmra.mrb[0].mxu0 %v3068
      %v6822 = vpop.f32.mrb[0].mxu0
      %v6823 = vadd.f32 %v943, %v6822
      %v6824 = vpop.f32.mrb[0].mxu0
      %6825 = vmatprep.mubr.f32.mxu0 0.0
      %6826 = vmatmul.mubr.f32.gmra.mrb[0].mxu0 %v3071
      %v6827 = vpop.f32.mrb[0].mxu0
      %v6828 = vadd.f32 %v943, %v6827
      %v6829 = vpop.f32.mrb[0].mxu0
      %6830 = vmatprep.mubr.f32.mxu0 0.0
      %6831 = vmatmul.mubr.f32.gmra.mrb[0].mxu0 %v3074
      %v6832 = vpop.f32.mrb[0].mxu0
      %v6833 = vadd.f32 %v943, %v6832
      %v6834 = vpop.f32.mrb[0].mxu0
      %6835 = vmatprep.mubr.f32.mxu0 0.0
      %6836 = vmatmul.mubr.f32.gmra.mrb[0].mxu0 %v3077
      %v6837 = vpop.f32.mrb[0].mxu0
      %v6838 = vadd.f32 %v943, %v6837
      %v6839 = vpop.f32.mrb[0].mxu0
      %6840 = vmatprep.mubr.f32.mxu0 0.0
      %6841 = vmatmul.mubr.f32.gmra.mrb[0].mxu0 %v3080
      %v6842 = vpop.f32.mrb[0].mxu0
      %v6843 = vadd.f32 %v943, %v6842
      %v6844 = vpop.f32.mrb[0].mxu0
      %6845 = vmatprep.mubr.f32.mxu0 0.0
      %6846 = vmatmul.mubr.f32.gmra.mrb[0].mxu0 %v3083
      %v6847 = vpop.f32.mrb[0].mxu0
      %v6848 = vadd.f32 %v943, %v6847
      %v6849 = vpop.f32.mrb[0].mxu0
      %6850 = vmatprep.mubr.f32.mxu0 0.0
      %6851 = vmatmul.mubr.f32.gmra.mrb[0].mxu0 %v3086
      %v6852 = vpop.f32.mrb[0].mxu0
      %v6853 = vadd.f32 %v943, %v6852
      %v6854 = vpop.f32.mrb[0].mxu0
      %6855 = vmatprep.mubr.f32.mxu0 0.0
      %6856 = vmatmul.mubr.f32.gmra.mrb[0].mxu0 %v3089
      %v6857 = vpop.f32.mrb[0].mxu0
      %v6858 = vadd.f32 %v943, %v6857
      %v6859 = vpop.f32.mrb[0].mxu0
      %6860 = vmatprep.mubr.f32.mxu0 0.0
      %6861 = vmatmul.mubr.f32.gmra.mrb[0].mxu0 %v3092
      %v6862 = vpop.f32.mrb[0].mxu0
      %v6863 = vadd.f32 %v943, %v6862
      %v6864 = vpop.f32.mrb[0].mxu0
      %6865 = vmatprep.mubr.f32.mxu0 0.0
      %6866 = vmatmul.mubr.f32.gmra.mrb[0].mxu0 %v3095
      %v6867 = vpop.f32.mrb[0].mxu0
      %v6868 = vadd.f32 %v943, %v6867
      %v6869 = vpop.f32.mrb[0].mxu0
      %6870 = vmatprep.mubr.f32.mxu0 0.0
      %6871 = vmatmul.mubr.f32.gmra.mrb[0].mxu0 %v3098
      %v6872 = vpop.f32.mrb[0].mxu0
      %v6873 = vadd.f32 %v943, %v6872
      %v6874 = vpop.f32.mrb[0].mxu0
      %6875 = vmatprep.mubr.f32.mxu0 0.0
      %6876 = vmatmul.mubr.f32.gmra.mrb[0].mxu0 %v3101
      %v6877 = vpop.f32.mrb[0].mxu0
      %v6878 = vadd.f32 %v943, %v6877
      %v6879 = vpop.f32.mrb[0].mxu0
      %6880 = vmatprep.mubr.f32.mxu0 0.0
      %6881 = vmatmul.mubr.f32.gmra.mrb[0].mxu0 %v3104
      %v6882 = vpop.f32.mrb[0].mxu0
      %v6883 = vadd.f32 %v943, %v6882
      %v6884 = vpop.f32.mrb[0].mxu0
      %6885 = vmatprep.mubr.f32.mxu0 0.0
      %6886 = vmatmul.mubr.f32.gmra.mrb[0].mxu0 %v3107
      %v6887 = vpop.f32.mrb[0].mxu0
      %v6888 = vadd.f32 %v943, %v6887
      %v6889 = vpop.f32.mrb[0].mxu0
      %6890 = vmatprep.mubr.f32.mxu0 0.0
      %6891 = vmatmul.mubr.f32.gmra.mrb[0].mxu0 %v3110
      %v6892 = vpop.f32.mrb[0].mxu0
      %v6893 = vadd.f32 %v943, %v6892
      %v6894 = vpop.f32.mrb[0].mxu0
      %6895 = vmatprep.mubr.f32.mxu0 0.0
      %6896 = vmatmul.mubr.f32.gmra.mrb[0].mxu0 %v3113
      %v6897 = vpop.f32.mrb[0].mxu0
      %v6898 = vadd.f32 %v943, %v6897
      %v6899 = vpop.f32.mrb[0].mxu0
      %6900 = vmatprep.mubr.f32.mxu0 0.0
      %6901 = vmatmul.mubr.f32.gmra.mrb[0].mxu0 %v3116
      %v6902 = vpop.f32.mrb[0].mxu0
      %v6903 = vadd.f32 %v943, %v6902
      %v6904 = vpop.f32.mrb[0].mxu0
      %6905 = vmatprep.mubr.f32.mxu0 0.0
      %6906 = vmatmul.mubr.f32.gmra.mrb[0].mxu0 %v3119
      %v6907 = vpop.f32.mrb[0].mxu0
      %v6908 = vadd.f32 %v943, %v6907
      %v6909 = vpop.f32.mrb[0].mxu0
      %6910 = vmatprep.mubr.f32.mxu0 0.0
      %6911 = vmatmul.mubr.f32.gmra.mrb[0].mxu0 %v3122
      %v6912 = vpop.f32.mrb[0].mxu0
      %v6913 = vadd.f32 %v943, %v6912
      %v6914 = vpop.f32.mrb[0].mxu0
      %6915 = vmatprep.mubr.f32.mxu0 0.0
      %6916 = vmatmul.mubr.f32.gmra.mrb[0].mxu0 %v3125
      %v6917 = vpop.f32.mrb[0].mxu0
      %v6918 = vadd.f32 %v943, %v6917
      %v6919 = vpop.f32.mrb[0].mxu0
      %6920 = vmatprep.mubr.f32.mxu0 0.0
      %6921 = vmatmul.mubr.f32.gmra.mrb[0].mxu0 %v3128
      %v6922 = vpop.f32.mrb[0].mxu0
      %v6923 = vadd.f32 %v943, %v6922
      %v6924 = vpop.f32.mrb[0].mxu0
      %6925 = vmatprep.mubr.f32.mxu0 0.0
      %6926 = vmatmul.mubr.f32.gmra.mrb[0].mxu0 %v3131
      %v6927 = vpop.f32.mrb[0].mxu0
      %v6928 = vadd.f32 %v943, %v6927
      %v6929 = vpop.f32.mrb[0].mxu0
      %6930 = vmatprep.mubr.f32.mxu0 0.0
      %6931 = vmatmul.mubr.f32.gmra.mrb[0].mxu0 %v3134
      %v6932 = vpop.f32.mrb[0].mxu0
      %v6933 = vadd.f32 %v943, %v6932
      %v6934 = vpop.f32.mrb[0].mxu0
      %6935 = vmatprep.mubr.f32.mxu0 0.0
      %6936 = vmatmul.mubr.f32.gmra.mrb[0].mxu0 %v3137
      %v6937 = vpop.f32.mrb[0].mxu0
      %v6938 = vadd.f32 %v943, %v6937
      %v6939 = vpop.f32.mrb[0].mxu0
      %6940 = vmatprep.mubr.f32.mxu0 0.0
      %6941 = vmatmul.mubr.f32.gmra.mrb[0].mxu0 %v3140
      %v6942 = vpop.f32.mrb[0].mxu0
      %v6943 = vadd.f32 %v943, %v6942
      %v6944 = vpop.f32.mrb[0].mxu0
      %6945 = vmatprep.mubr.f32.mxu0 0.0
      %6946 = vmatmul.mubr.f32.gmra.mrb[0].mxu0 %v3143
      %v6947 = vpop.f32.mrb[0].mxu0
      %v6948 = vadd.f32 %v943, %v6947
      %v6949 = vpop.f32.mrb[0].mxu0
      %6950 = vmatprep.mubr.f32.mxu0 0.0
      %6951 = vmatmul.mubr.f32.gmra.mrb[0].mxu0 %v3146
      %v6952 = vpop.f32.mrb[0].mxu0
      %v6953 = vadd.f32 %v943, %v6952
      %v6954 = vpop.f32.mrb[0].mxu0
      %6955 = vmatprep.mubr.f32.mxu0 0.0
      %6956 = vmatmul.mubr.f32.gmra.mrb[0].mxu0 %v3149
      %v6957 = vpop.f32.mrb[0].mxu0
      %v6958 = vadd.f32 %v943, %v6957
      %v6959 = vpop.f32.mrb[0].mxu0
      %6960 = vmatprep.mubr.f32.mxu0 0.0
      %6961 = vmatmul.mubr.f32.gmra.mrb[0].mxu0 %v3152
      %v6962 = vpop.f32.mrb[0].mxu0
      %v6963 = vadd.f32 %v943, %v6962
      %v6964 = vpop.f32.mrb[0].mxu0
      %6965 = vmatprep.mubr.f32.mxu0 0.0
      %6966 = vmatmul.mubr.f32.gmra.mrb[0].mxu0 %v3155
      %v6967 = vpop.f32.mrb[0].mxu0
      %v6968 = vadd.f32 %v943, %v6967
      %v6969 = vpop.f32.mrb[0].mxu0
      %6970 = vmatprep.mubr.f32.mxu0 0.0
      %6971 = vmatmul.mubr.f32.gmra.mrb[0].mxu0 %v3158
      %v6972 = vpop.f32.mrb[0].mxu0
      %v6973 = vadd.f32 %v943, %v6972
      %v6974 = vpop.f32.mrb[0].mxu0
      %6975 = vmatprep.mubr.f32.mxu0 0.0
      %6976 = vmatmul.mubr.f32.gmra.mrb[0].mxu0 %v3161
      %v6977 = vpop.f32.mrb[0].mxu0
      %v6978 = vadd.f32 %v943, %v6977
      %v6979 = vpop.f32.mrb[0].mxu0
      %6980 = vmatprep.mubr.f32.mxu0 0.0
      %6981 = vmatmul.mubr.f32.gmra.mrb[0].mxu0 %v3164
      %v6982 = vpop.f32.mrb[0].mxu0
      %v6983 = vadd.f32 %v943, %v6982
      %v6984 = vpop.f32.mrb[0].mxu0
      %6985 = vmatprep.mubr.f32.mxu0 0.0
      %6986 = vmatmul.mubr.f32.gmra.mrb[0].mxu0 %v3167
      %v6987 = vpop.f32.mrb[0].mxu0
      %v6988 = vadd.f32 %v943, %v6987
      %v6989 = vpop.f32.mrb[0].mxu0
      %6990 = vmatprep.mubr.f32.mxu0 0.0
      %6991 = vmatmul.mubr.f32.gmra.mrb[0].mxu0 %v3170
      %v6992 = vpop.f32.mrb[0].mxu0
      %v6993 = vadd.f32 %v943, %v6992
      %v6994 = vpop.f32.mrb[0].mxu0
      %6995 = vmatprep.mubr.f32.mxu0 0.0
      %6996 = vmatmul.mubr.f32.gmra.mrb[0].mxu0 %v3173
      %v6997 = vpop.f32.mrb[0].mxu0
      %v6998 = vadd.f32 %v943, %v6997
      %v6999 = vpop.f32.mrb[0].mxu0
      %7000 = vmatprep.mubr.f32.mxu0 0.0
      %7001 = vmatmul.mubr.f32.gmra.mrb[0].mxu0 %v3176
      %v7002 = vpop.f32.mrb[0].mxu0
      %v7003 = vadd.f32 %v943, %v7002
      %v7004 = vpop.f32.mrb[0].mxu0
      %7005 = vmatprep.mubr.f32.mxu0 0.0
      %7006 = vmatmul.mubr.f32.gmra.mrb[0].mxu0 %v3179
      %v7007 = vpop.f32.mrb[0].mxu0
      %v7008 = vadd.f32 %v943, %v7007
      %v7009 = vpop.f32.mrb[0].mxu0
      %7010 = vmatprep.mubr.f32.mxu0 0.0
      %7011 = vmatmul.mubr.f32.gmra.mrb[0].mxu0 %v3182
      %v7012 = vpop.f32.mrb[0].mxu0
      %v7013 = vadd.f32 %v943, %v7012
      %v7014 = vpop.f32.mrb[0].mxu0
      %7015 = vmatprep.mubr.f32.mxu0 0.0
      %7016 = vmatmul.mubr.f32.gmra.mrb[0].mxu0 %v3185
      %v7017 = vpop.f32.mrb[0].mxu0
      %v7018 = vadd.f32 %v943, %v7017
      %v7019 = vpop.f32.mrb[0].mxu0
      %7020 = vmatprep.mubr.f32.mxu0 0.0
      %7021 = vmatmul.mubr.f32.gmra.mrb[0].mxu0 %v3188
      %v7022 = vpop.f32.mrb[0].mxu0
      %v7023 = vadd.f32 %v943, %v7022
      %v7024 = vpop.f32.mrb[0].mxu0
      %7025 = vmatprep.mubr.f32.mxu0 0.0
      %7026 = vmatmul.mubr.f32.gmra.mrb[0].mxu0 %v3191
      %v7027 = vpop.f32.mrb[0].mxu0
      %v7028 = vadd.f32 %v943, %v7027
      %v7029 = vpop.f32.mrb[0].mxu0
      %7030 = vmatprep.mubr.f32.mxu0 0.0
      %7031 = vmatmul.mubr.f32.gmra.mrb[0].mxu0 %v3194
      %v7032 = vpop.f32.mrb[0].mxu0
      %v7033 = vadd.f32 %v943, %v7032
      %v7034 = vpop.f32.mrb[0].mxu0
      %7035 = vmatprep.mubr.f32.mxu0 0.0
      %7036 = vmatmul.mubr.f32.gmra.mrb[0].mxu0 %v3197
      %v7037 = vpop.f32.mrb[0].mxu0
      %v7038 = vadd.f32 %v943, %v7037
      %v7039 = vpop.f32.mrb[0].mxu0
      %7040 = vmatprep.mubr.f32.mxu0 0.0
      %7041 = vmatmul.mubr.f32.gmra.mrb[0].mxu0 %v3200
      %v7042 = vpop.f32.mrb[0].mxu0
      %v7043 = vadd.f32 %v943, %v7042
      %v7044 = vpop.f32.mrb[0].mxu0
      %7045 = vmatprep.mubr.f32.mxu0 0.0
      %7046 = vmatmul.mubr.f32.gmra.mrb[0].mxu0 %v3203
      %v7047 = vpop.f32.mrb[0].mxu0
      %v7048 = vadd.f32 %v943, %v7047
      %v7049 = vpop.f32.mrb[0].mxu0
      %7050 = vmatprep.mubr.f32.mxu0 0.0
      %7051 = vmatmul.mubr.f32.gmra.mrb[0].mxu0 %v3206
      %v7052 = vpop.f32.mrb[0].mxu0
      %v7053 = vadd.f32 %v943, %v7052
      %v7054 = vpop.f32.mrb[0].mxu0
      %7055 = vmatprep.mubr.f32.mxu0 0.0
      %7056 = vmatmul.mubr.f32.gmra.mrb[0].mxu0 %v3209
      %v7057 = vpop.f32.mrb[0].mxu0
      %v7058 = vadd.f32 %v943, %v7057
      %v7059 = vpop.f32.mrb[0].mxu0
      %7060 = vmatprep.mubr.f32.mxu0 0.0
      %7061 = vmatmul.mubr.f32.gmra.mrb[0].mxu0 %v3212
      %v7062 = vpop.f32.mrb[0].mxu0
      %v7063 = vadd.f32 %v943, %v7062
      %v7064 = vpop.f32.mrb[0].mxu0
      %7065 = vmatprep.mubr.f32.mxu0 0.0
      %7066 = vmatmul.mubr.f32.gmra.mrb[0].mxu0 %v3215
      %v7067 = vpop.f32.mrb[0].mxu0
      %v7068 = vadd.f32 %v943, %v7067
      %v7069 = vpop.f32.mrb[0].mxu0
      %7070 = vdwg.mxu0
      %v7071 = vmax.f32 %v3288, 0.0
      %v7072 = vmax.f32 %v3293, 0.0
      %v7073 = vmax.f32 %v3298, 0.0
      %v7074 = vmax.f32 %v3303, 0.0
      %v7075 = vmax.f32 %v3308, 0.0
      %v7076 = vmax.f32 %v3313, 0.0
      %v7077 = vmax.f32 %v3318, 0.0
      %v7078 = vmax.f32 %v3323, 0.0
      %v7079 = vmax.f32 %v3328, 0.0
      %v7080 = vmax.f32 %v3333, 0.0
      %v7081 = vmax.f32 %v3338, 0.0
      %v7082 = vmax.f32 %v3343, 0.0
      %v7083 = vmax.f32 %v3348, 0.0
      %v7084 = vmax.f32 %v3353, 0.0
      %v7085 = vmax.f32 %v3358, 0.0
      %v7086 = vmax.f32 %v3363, 0.0
      %v7087 = vmax.f32 %v3368, 0.0
      %v7088 = vmax.f32 %v3373, 0.0
      %v7089 = vmax.f32 %v3378, 0.0
      %v7090 = vmax.f32 %v3383, 0.0
      %v7091 = vmax.f32 %v3388, 0.0
      %v7092 = vmax.f32 %v3393, 0.0
      %v7093 = vmax.f32 %v3398, 0.0
      %v7094 = vmax.f32 %v3403, 0.0
      %v7095 = vmax.f32 %v3408, 0.0
      %v7096 = vmax.f32 %v3413, 0.0
      %v7097 = vmax.f32 %v3418, 0.0
      %v7098 = vmax.f32 %v3423, 0.0
      %v7099 = vmax.f32 %v3428, 0.0
      %v7100 = vmax.f32 %v3433, 0.0
      %v7101 = vmax.f32 %v3438, 0.0
      %v7102 = vmax.f32 %v3443, 0.0
      %v7103 = vmax.f32 %v3448, 0.0
      %v7104 = vmax.f32 %v3453, 0.0
      %v7105 = vmax.f32 %v3458, 0.0
      %v7106 = vmax.f32 %v3463, 0.0
      %v7107 = vmax.f32 %v3468, 0.0
      %v7108 = vmax.f32 %v3473, 0.0
      %v7109 = vmax.f32 %v3478, 0.0
      %v7110 = vmax.f32 %v3483, 0.0
      %v7111 = vmax.f32 %v3488, 0.0
      %v7112 = vmax.f32 %v3493, 0.0
      %v7113 = vmax.f32 %v3498, 0.0
      %v7114 = vmax.f32 %v3503, 0.0
      %v7115 = vmax.f32 %v3508, 0.0
      %v7116 = vmax.f32 %v3513, 0.0
      %v7117 = vmax.f32 %v3518, 0.0
      %v7118 = vmax.f32 %v3523, 0.0
      %v7119 = vmax.f32 %v3528, 0.0
      %v7120 = vmax.f32 %v3533, 0.0
      %v7121 = vmax.f32 %v3538, 0.0
      %v7122 = vmax.f32 %v3543, 0.0
      %v7123 = vmax.f32 %v3548, 0.0
      %v7124 = vmax.f32 %v3553, 0.0
      %v7125 = vmax.f32 %v3558, 0.0
      %v7126 = vmax.f32 %v3563, 0.0
      %v7127 = vmax.f32 %v3568, 0.0
      %v7128 = vmax.f32 %v3573, 0.0
      %v7129 = vmax.f32 %v3578, 0.0
      %v7130 = vmax.f32 %v3583, 0.0
      %v7131 = vmax.f32 %v3588, 0.0
      %v7132 = vmax.f32 %v3593, 0.0
      %v7133 = vmax.f32 %v3598, 0.0
      %v7134 = vmax.f32 %v3603, 0.0
      %v7135 = vmax.f32 %v3608, 0.0
      %v7136 = vmax.f32 %v3613, 0.0
      %v7137 = vmax.f32 %v3618, 0.0
      %v7138 = vmax.f32 %v3623, 0.0
      %v7139 = vmax.f32 %v3628, 0.0
      %v7140 = vmax.f32 %v3633, 0.0
      %v7141 = vmax.f32 %v3638, 0.0
      %v7142 = vmax.f32 %v3643, 0.0
      %v7143 = vmax.f32 %v3648, 0.0
      %v7144 = vmax.f32 %v3653, 0.0
      %v7145 = vmax.f32 %v3658, 0.0
      %v7146 = vmax.f32 %v3663, 0.0
      %v7147 = vmax.f32 %v3668, 0.0
      %v7148 = vmax.f32 %v3673, 0.0
      %v7149 = vmax.f32 %v3678, 0.0
      %v7150 = vmax.f32 %v3683, 0.0
      %v7151 = vmax.f32 %v3688, 0.0
      %v7152 = vmax.f32 %v3693, 0.0
      %v7153 = vmax.f32 %v3698, 0.0
      %v7154 = vmax.f32 %v3703, 0.0
      %v7155 = vmax.f32 %v3708, 0.0
      %v7156 = vmax.f32 %v3713, 0.0
      %v7157 = vmax.f32 %v3718, 0.0
      %v7158 = vmax.f32 %v3723, 0.0
      %v7159 = vmax.f32 %v3728, 0.0
      %v7160 = vmax.f32 %v3733, 0.0
      %v7161 = vmax.f32 %v3738, 0.0
      %v7162 = vmax.f32 %v3743, 0.0
      %v7163 = vmax.f32 %v3748, 0.0
      %v7164 = vmax.f32 %v3753, 0.0
      %v7165 = vmax.f32 %v3758, 0.0
      %v7166 = vmax.f32 %v3763, 0.0
      %v7167 = vmax.f32 %v3768, 0.0
      %v7168 = vmax.f32 %v3773, 0.0
      %v7169 = vmax.f32 %v3778, 0.0
      %v7170 = vmax.f32 %v3783, 0.0
      %v7171 = vmax.f32 %v3788, 0.0
      %v7172 = vmax.f32 %v3793, 0.0
      %v7173 = vmax.f32 %v3798, 0.0
      %v7174 = vmax.f32 %v3803, 0.0
      %v7175 = vmax.f32 %v3808, 0.0
      %v7176 = vmax.f32 %v3813, 0.0
      %v7177 = vmax.f32 %v3818, 0.0
      %v7178 = vmax.f32 %v3823, 0.0
      %v7179 = vmax.f32 %v3828, 0.0
      %v7180 = vmax.f32 %v3833, 0.0
      %v7181 = vmax.f32 %v3838, 0.0
      %v7182 = vmax.f32 %v3843, 0.0
      %v7183 = vmax.f32 %v3848, 0.0
      %v7184 = vmax.f32 %v3853, 0.0
      %v7185 = vmax.f32 %v3858, 0.0
      %v7186 = vmax.f32 %v3863, 0.0
      %v7187 = vmax.f32 %v3868, 0.0
      %v7188 = vmax.f32 %v3873, 0.0
      %v7189 = vmax.f32 %v3878, 0.0
      %v7190 = vmax.f32 %v3883, 0.0
      %v7191 = vmax.f32 %v3888, 0.0
      %v7192 = vmax.f32 %v3893, 0.0
      %v7193 = vmax.f32 %v3898, 0.0
      %v7194 = vmax.f32 %v3903, 0.0
      %v7195 = vmax.f32 %v3908, 0.0
      %v7196 = vmax.f32 %v3913, 0.0
      %v7197 = vmax.f32 %v3918, 0.0
      %v7198 = vmax.f32 %v3923, 0.0
      %v7199 = vmax.f32 %v3928, 0.0
      %v7200 = vmax.f32 %v3933, 0.0
      %v7201 = vmax.f32 %v3938, 0.0
      %v7202 = vmax.f32 %v3943, 0.0
      %v7203 = vmax.f32 %v3948, 0.0
      %v7204 = vmax.f32 %v3953, 0.0
      %v7205 = vmax.f32 %v3958, 0.0
      %v7206 = vmax.f32 %v3963, 0.0
      %v7207 = vmax.f32 %v3968, 0.0
      %v7208 = vmax.f32 %v3973, 0.0
      %v7209 = vmax.f32 %v3978, 0.0
      %v7210 = vmax.f32 %v3983, 0.0
      %v7211 = vmax.f32 %v3988, 0.0
      %v7212 = vmax.f32 %v3993, 0.0
      %v7213 = vmax.f32 %v3998, 0.0
      %v7214 = vmax.f32 %v4003, 0.0
      %v7215 = vmax.f32 %v4008, 0.0
      %v7216 = vmax.f32 %v4013, 0.0
      %v7217 = vmax.f32 %v4018, 0.0
      %v7218 = vmax.f32 %v4023, 0.0
      %v7219 = vmax.f32 %v4028, 0.0
      %v7220 = vmax.f32 %v4033, 0.0
      %v7221 = vmax.f32 %v4038, 0.0
      %v7222 = vmax.f32 %v4043, 0.0
      %v7223 = vmax.f32 %v4048, 0.0
      %v7224 = vmax.f32 %v4053, 0.0
      %v7225 = vmax.f32 %v4058, 0.0
      %v7226 = vmax.f32 %v4063, 0.0
      %v7227 = vmax.f32 %v4068, 0.0
      %v7228 = vmax.f32 %v4073, 0.0
      %v7229 = vmax.f32 %v4078, 0.0
      %v7230 = vmax.f32 %v4083, 0.0
      %v7231 = vmax.f32 %v4088, 0.0
      %v7232 = vmax.f32 %v4093, 0.0
      %v7233 = vmax.f32 %v4098, 0.0
      %v7234 = vmax.f32 %v4103, 0.0
      %v7235 = vmax.f32 %v4108, 0.0
      %v7236 = vmax.f32 %v4113, 0.0
      %v7237 = vmax.f32 %v4118, 0.0
      %v7238 = vmax.f32 %v4123, 0.0
      %v7239 = vmax.f32 %v4128, 0.0
      %v7240 = vmax.f32 %v4133, 0.0
      %v7241 = vmax.f32 %v4138, 0.0
      %v7242 = vmax.f32 %v4143, 0.0
      %v7243 = vmax.f32 %v4148, 0.0
      %v7244 = vmax.f32 %v4153, 0.0
      %v7245 = vmax.f32 %v4158, 0.0
      %v7246 = vmax.f32 %v4163, 0.0
      %v7247 = vmax.f32 %v4168, 0.0
      %v7248 = vmax.f32 %v4173, 0.0
      %v7249 = vmax.f32 %v4178, 0.0
      %v7250 = vmax.f32 %v4183, 0.0
      %v7251 = vmax.f32 %v4188, 0.0
      %v7252 = vmax.f32 %v4193, 0.0
      %v7253 = vmax.f32 %v4198, 0.0
      %v7254 = vmax.f32 %v4203, 0.0
      %v7255 = vmax.f32 %v4208, 0.0
      %v7256 = vmax.f32 %v4213, 0.0
      %v7257 = vmax.f32 %v4218, 0.0
      %v7258 = vmax.f32 %v4223, 0.0
      %v7259 = vmax.f32 %v4228, 0.0
      %v7260 = vmax.f32 %v4233, 0.0
      %v7261 = vmax.f32 %v4238, 0.0
      %v7262 = vmax.f32 %v4243, 0.0
      %v7263 = vmax.f32 %v4248, 0.0
      %v7264 = vmax.f32 %v4253, 0.0
      %v7265 = vmax.f32 %v4258, 0.0
      %v7266 = vmax.f32 %v4263, 0.0
      %v7267 = vmax.f32 %v4268, 0.0
      %v7268 = vmax.f32 %v4273, 0.0
      %v7269 = vmax.f32 %v4278, 0.0
      %v7270 = vmax.f32 %v4283, 0.0
      %v7271 = vmax.f32 %v4288, 0.0
      %v7272 = vmax.f32 %v4293, 0.0
      %v7273 = vmax.f32 %v4298, 0.0
      %v7274 = vmax.f32 %v4303, 0.0
      %v7275 = vmax.f32 %v4308, 0.0
      %v7276 = vmax.f32 %v4313, 0.0
      %v7277 = vmax.f32 %v4318, 0.0
      %v7278 = vmax.f32 %v4323, 0.0
      %v7279 = vmax.f32 %v4328, 0.0
      %v7280 = vmax.f32 %v4333, 0.0
      %v7281 = vmax.f32 %v4338, 0.0
      %v7282 = vmax.f32 %v4343, 0.0
      %v7283 = vmax.f32 %v4348, 0.0
      %v7284 = vmax.f32 %v4353, 0.0
      %v7285 = vmax.f32 %v4358, 0.0
      %v7286 = vmax.f32 %v4363, 0.0
      %v7287 = vmax.f32 %v4368, 0.0
      %v7288 = vmax.f32 %v4373, 0.0
      %v7289 = vmax.f32 %v4378, 0.0
      %v7290 = vmax.f32 %v4383, 0.0
      %v7291 = vmax.f32 %v4388, 0.0
      %v7292 = vmax.f32 %v4393, 0.0
      %v7293 = vmax.f32 %v4398, 0.0
      %v7294 = vmax.f32 %v4403, 0.0
      %v7295 = vmax.f32 %v4408, 0.0
      %v7296 = vmax.f32 %v4413, 0.0
      %v7297 = vmax.f32 %v4418, 0.0
      %v7298 = vmax.f32 %v4423, 0.0
      %v7299 = vmax.f32 %v4428, 0.0
      %v7300 = vmax.f32 %v4433, 0.0
      %v7301 = vmax.f32 %v4438, 0.0
      %v7302 = vmax.f32 %v4443, 0.0
      %v7303 = vmax.f32 %v4448, 0.0
      %v7304 = vmax.f32 %v4453, 0.0
      %v7305 = vmax.f32 %v4458, 0.0
      %v7306 = vmax.f32 %v4463, 0.0
      %v7307 = vmax.f32 %v4468, 0.0
      %v7308 = vmax.f32 %v4473, 0.0
      %v7309 = vmax.f32 %v4478, 0.0
      %v7310 = vmax.f32 %v4483, 0.0
      %v7311 = vmax.f32 %v4488, 0.0
      %v7312 = vmax.f32 %v4493, 0.0
      %v7313 = vmax.f32 %v4498, 0.0
      %v7314 = vmax.f32 %v4503, 0.0
      %v7315 = vmax.f32 %v4508, 0.0
      %v7316 = vmax.f32 %v4513, 0.0
      %v7317 = vmax.f32 %v4518, 0.0
      %v7318 = vmax.f32 %v4523, 0.0
      %v7319 = vmax.f32 %v4528, 0.0
      %v7320 = vmax.f32 %v4533, 0.0
      %v7321 = vmax.f32 %v4538, 0.0
      %v7322 = vmax.f32 %v4543, 0.0
      %v7323 = vmax.f32 %v4548, 0.0
      %v7324 = vmax.f32 %v4553, 0.0
      %v7325 = vmax.f32 %v4558, 0.0
      %v7326 = vmax.f32 %v4563, 0.0
      %v7327 = vmax.f32 %v4568, 0.0
      %v7328 = vmax.f32 %v4573, 0.0
      %v7329 = vmax.f32 %v4578, 0.0
      %v7330 = vmax.f32 %v4583, 0.0
      %v7331 = vmax.f32 %v4588, 0.0
      %v7332 = vmax.f32 %v4593, 0.0
      %v7333 = vmax.f32 %v4598, 0.0
      %v7334 = vmax.f32 %v4603, 0.0
      %v7335 = vmax.f32 %v4608, 0.0
      %v7336 = vmax.f32 %v4613, 0.0
      %v7337 = vmax.f32 %v4618, 0.0
      %v7338 = vmax.f32 %v4623, 0.0
      %v7339 = vmax.f32 %v4628, 0.0
      %v7340 = vmax.f32 %v4633, 0.0
      %v7341 = vmax.f32 %v4638, 0.0
      %v7342 = vmax.f32 %v4643, 0.0
      %v7343 = vmax.f32 %v4648, 0.0
      %v7344 = vmax.f32 %v4653, 0.0
      %v7345 = vmax.f32 %v4658, 0.0
      %v7346 = vmax.f32 %v4663, 0.0
      %v7347 = vmax.f32 %v4668, 0.0
      %v7348 = vmax.f32 %v4673, 0.0
      %v7349 = vmax.f32 %v4678, 0.0
      %v7350 = vmax.f32 %v4683, 0.0
      %v7351 = vmax.f32 %v4688, 0.0
      %v7352 = vmax.f32 %v4693, 0.0
      %v7353 = vmax.f32 %v4698, 0.0
      %v7354 = vmax.f32 %v4703, 0.0
      %v7355 = vmax.f32 %v4708, 0.0
      %v7356 = vmax.f32 %v4713, 0.0
      %v7357 = vmax.f32 %v4718, 0.0
      %v7358 = vmax.f32 %v4723, 0.0
      %v7359 = vmax.f32 %v4728, 0.0
      %v7360 = vmax.f32 %v4733, 0.0
      %v7361 = vmax.f32 %v4738, 0.0
      %v7362 = vmax.f32 %v4743, 0.0
      %v7363 = vmax.f32 %v4748, 0.0
      %v7364 = vmax.f32 %v4753, 0.0
      %v7365 = vmax.f32 %v4758, 0.0
      %v7366 = vmax.f32 %v4763, 0.0
      %v7367 = vmax.f32 %v4768, 0.0
      %v7368 = vmax.f32 %v4773, 0.0
      %v7369 = vmax.f32 %v4778, 0.0
      %v7370 = vmax.f32 %v4783, 0.0
      %v7371 = vmax.f32 %v4788, 0.0
      %v7372 = vmax.f32 %v4793, 0.0
      %v7373 = vmax.f32 %v4798, 0.0
      %v7374 = vmax.f32 %v4803, 0.0
      %v7375 = vmax.f32 %v4808, 0.0
      %v7376 = vmax.f32 %v4813, 0.0
      %v7377 = vmax.f32 %v4818, 0.0
      %v7378 = vmax.f32 %v4823, 0.0
      %v7379 = vmax.f32 %v4828, 0.0
      %v7380 = vmax.f32 %v4833, 0.0
      %v7381 = vmax.f32 %v4838, 0.0
      %v7382 = vmax.f32 %v4843, 0.0
      %v7383 = vmax.f32 %v4848, 0.0
      %v7384 = vmax.f32 %v4853, 0.0
      %v7385 = vmax.f32 %v4858, 0.0
      %v7386 = vmax.f32 %v4863, 0.0
      %v7387 = vmax.f32 %v4868, 0.0
      %v7388 = vmax.f32 %v4873, 0.0
      %v7389 = vmax.f32 %v4878, 0.0
      %v7390 = vmax.f32 %v4883, 0.0
      %v7391 = vmax.f32 %v4888, 0.0
      %v7392 = vmax.f32 %v4893, 0.0
      %v7393 = vmax.f32 %v4898, 0.0
      %v7394 = vmax.f32 %v4903, 0.0
      %v7395 = vmax.f32 %v4908, 0.0
      %v7396 = vmax.f32 %v4913, 0.0
      %v7397 = vmax.f32 %v4918, 0.0
      %v7398 = vmax.f32 %v4923, 0.0
      %v7399 = vmax.f32 %v4928, 0.0
      %v7400 = vmax.f32 %v4933, 0.0
      %v7401 = vmax.f32 %v4938, 0.0
      %v7402 = vmax.f32 %v4943, 0.0
      %v7403 = vmax.f32 %v4948, 0.0
      %v7404 = vmax.f32 %v4953, 0.0
      %v7405 = vmax.f32 %v4958, 0.0
      %v7406 = vmax.f32 %v4963, 0.0
      %v7407 = vmax.f32 %v4968, 0.0
      %v7408 = vmax.f32 %v4973, 0.0
      %v7409 = vmax.f32 %v4978, 0.0
      %v7410 = vmax.f32 %v4983, 0.0
      %v7411 = vmax.f32 %v4988, 0.0
      %v7412 = vmax.f32 %v4993, 0.0
      %v7413 = vmax.f32 %v4998, 0.0
      %v7414 = vmax.f32 %v5003, 0.0
      %v7415 = vmax.f32 %v5008, 0.0
      %v7416 = vmax.f32 %v5013, 0.0
      %v7417 = vmax.f32 %v5018, 0.0
      %v7418 = vmax.f32 %v5023, 0.0
      %v7419 = vmax.f32 %v5028, 0.0
      %v7420 = vmax.f32 %v5033, 0.0
      %v7421 = vmax.f32 %v5038, 0.0
      %v7422 = vmax.f32 %v5043, 0.0
      %v7423 = vmax.f32 %v5048, 0.0
      %v7424 = vmax.f32 %v5053, 0.0
      %v7425 = vmax.f32 %v5058, 0.0
      %v7426 = vmax.f32 %v5063, 0.0
      %v7427 = vmax.f32 %v5068, 0.0
      %v7428 = vmax.f32 %v5073, 0.0
      %v7429 = vmax.f32 %v5078, 0.0
      %v7430 = vmax.f32 %v5083, 0.0
      %v7431 = vmax.f32 %v5088, 0.0
      %v7432 = vmax.f32 %v5093, 0.0
      %v7433 = vmax.f32 %v5098, 0.0
      %v7434 = vmax.f32 %v5103, 0.0
      %v7435 = vmax.f32 %v5108, 0.0
      %v7436 = vmax.f32 %v5113, 0.0
      %v7437 = vmax.f32 %v5118, 0.0
      %v7438 = vmax.f32 %v5123, 0.0
      %v7439 = vmax.f32 %v5128, 0.0
      %v7440 = vmax.f32 %v5133, 0.0
      %v7441 = vmax.f32 %v5138, 0.0
      %v7442 = vmax.f32 %v5143, 0.0
      %v7443 = vmax.f32 %v5148, 0.0
      %v7444 = vmax.f32 %v5153, 0.0
      %v7445 = vmax.f32 %v5158, 0.0
      %v7446 = vmax.f32 %v5163, 0.0
      %v7447 = vmax.f32 %v5168, 0.0
      %v7448 = vmax.f32 %v5173, 0.0
      %v7449 = vmax.f32 %v5178, 0.0
      %v7450 = vmax.f32 %v5183, 0.0
      %v7451 = vmax.f32 %v5188, 0.0
      %v7452 = vmax.f32 %v5193, 0.0
      %v7453 = vmax.f32 %v5198, 0.0
      %v7454 = vmax.f32 %v5203, 0.0
      %v7455 = vmax.f32 %v5208, 0.0
      %v7456 = vmax.f32 %v5213, 0.0
      %v7457 = vmax.f32 %v5218, 0.0
      %v7458 = vmax.f32 %v5223, 0.0
      %v7459 = vmax.f32 %v5228, 0.0
      %v7460 = vmax.f32 %v5233, 0.0
      %v7461 = vmax.f32 %v5238, 0.0
      %v7462 = vmax.f32 %v5243, 0.0
      %v7463 = vmax.f32 %v5248, 0.0
      %v7464 = vmax.f32 %v5253, 0.0
      %v7465 = vmax.f32 %v5258, 0.0
      %v7466 = vmax.f32 %v5263, 0.0
      %v7467 = vmax.f32 %v5268, 0.0
      %v7468 = vmax.f32 %v5273, 0.0
      %v7469 = vmax.f32 %v5278, 0.0
      %v7470 = vmax.f32 %v5283, 0.0
      %v7471 = vmax.f32 %v5288, 0.0
      %v7472 = vmax.f32 %v5293, 0.0
      %v7473 = vmax.f32 %v5298, 0.0
      %v7474 = vmax.f32 %v5303, 0.0
      %v7475 = vmax.f32 %v5308, 0.0
      %v7476 = vmax.f32 %v5313, 0.0
      %v7477 = vmax.f32 %v5318, 0.0
      %v7478 = vmax.f32 %v5323, 0.0
      %v7479 = vmax.f32 %v5328, 0.0
      %v7480 = vmax.f32 %v5333, 0.0
      %v7481 = vmax.f32 %v5338, 0.0
      %v7482 = vmax.f32 %v5343, 0.0
      %v7483 = vmax.f32 %v5348, 0.0
      %v7484 = vmax.f32 %v5353, 0.0
      %v7485 = vmax.f32 %v5358, 0.0
      %v7486 = vmax.f32 %v5363, 0.0
      %v7487 = vmax.f32 %v5368, 0.0
      %v7488 = vmax.f32 %v5373, 0.0
      %v7489 = vmax.f32 %v5378, 0.0
      %v7490 = vmax.f32 %v5383, 0.0
      %v7491 = vmax.f32 %v5388, 0.0
      %v7492 = vmax.f32 %v5393, 0.0
      %v7493 = vmax.f32 %v5398, 0.0
      %v7494 = vmax.f32 %v5403, 0.0
      %v7495 = vmax.f32 %v5408, 0.0
      %v7496 = vmax.f32 %v5413, 0.0
      %v7497 = vmax.f32 %v5418, 0.0
      %v7498 = vmax.f32 %v5423, 0.0
      %v7499 = vmax.f32 %v5428, 0.0
      %v7500 = vmax.f32 %v5433, 0.0
      %v7501 = vmax.f32 %v5438, 0.0
      %v7502 = vmax.f32 %v5443, 0.0
      %v7503 = vmax.f32 %v5448, 0.0
      %v7504 = vmax.f32 %v5453, 0.0
      %v7505 = vmax.f32 %v5458, 0.0
      %v7506 = vmax.f32 %v5463, 0.0
      %v7507 = vmax.f32 %v5468, 0.0
      %v7508 = vmax.f32 %v5473, 0.0
      %v7509 = vmax.f32 %v5478, 0.0
      %v7510 = vmax.f32 %v5483, 0.0
      %v7511 = vmax.f32 %v5488, 0.0
      %v7512 = vmax.f32 %v5493, 0.0
      %v7513 = vmax.f32 %v5498, 0.0
      %v7514 = vmax.f32 %v5503, 0.0
      %v7515 = vmax.f32 %v5508, 0.0
      %v7516 = vmax.f32 %v5513, 0.0
      %v7517 = vmax.f32 %v5518, 0.0
      %v7518 = vmax.f32 %v5523, 0.0
      %v7519 = vmax.f32 %v5528, 0.0
      %v7520 = vmax.f32 %v5533, 0.0
      %v7521 = vmax.f32 %v5538, 0.0
      %v7522 = vmax.f32 %v5543, 0.0
      %v7523 = vmax.f32 %v5548, 0.0
      %v7524 = vmax.f32 %v5553, 0.0
      %v7525 = vmax.f32 %v5558, 0.0
      %v7526 = vmax.f32 %v5563, 0.0
      %v7527 = vmax.f32 %v5568, 0.0
      %v7528 = vmax.f32 %v5573, 0.0
      %v7529 = vmax.f32 %v5578, 0.0
      %v7530 = vmax.f32 %v5583, 0.0
      %v7531 = vmax.f32 %v5588, 0.0
      %v7532 = vmax.f32 %v5593, 0.0
      %v7533 = vmax.f32 %v5598, 0.0
      %v7534 = vmax.f32 %v5603, 0.0
      %v7535 = vmax.f32 %v5608, 0.0
      %v7536 = vmax.f32 %v5613, 0.0
      %v7537 = vmax.f32 %v5618, 0.0
      %v7538 = vmax.f32 %v5623, 0.0
      %v7539 = vmax.f32 %v5628, 0.0
      %v7540 = vmax.f32 %v5633, 0.0
      %v7541 = vmax.f32 %v5638, 0.0
      %v7542 = vmax.f32 %v5643, 0.0
      %v7543 = vmax.f32 %v5648, 0.0
      %v7544 = vmax.f32 %v5653, 0.0
      %v7545 = vmax.f32 %v5658, 0.0
      %v7546 = vmax.f32 %v5663, 0.0
      %v7547 = vmax.f32 %v5668, 0.0
      %v7548 = vmax.f32 %v5673, 0.0
      %v7549 = vmax.f32 %v5678, 0.0
      %v7550 = vmax.f32 %v5683, 0.0
      %v7551 = vmax.f32 %v5688, 0.0
      %v7552 = vmax.f32 %v5693, 0.0
      %v7553 = vmax.f32 %v5698, 0.0
      %v7554 = vmax.f32 %v5703, 0.0
      %v7555 = vmax.f32 %v5708, 0.0
      %v7556 = vmax.f32 %v5713, 0.0
      %v7557 = vmax.f32 %v5718, 0.0
      %v7558 = vmax.f32 %v5723, 0.0
      %v7559 = vmax.f32 %v5728, 0.0
      %v7560 = vmax.f32 %v5733, 0.0
      %v7561 = vmax.f32 %v5738, 0.0
      %v7562 = vmax.f32 %v5743, 0.0
      %v7563 = vmax.f32 %v5748, 0.0
      %v7564 = vmax.f32 %v5753, 0.0
      %v7565 = vmax.f32 %v5758, 0.0
      %v7566 = vmax.f32 %v5763, 0.0
      %v7567 = vmax.f32 %v5768, 0.0
      %v7568 = vmax.f32 %v5773, 0.0
      %v7569 = vmax.f32 %v5778, 0.0
      %v7570 = vmax.f32 %v5783, 0.0
      %v7571 = vmax.f32 %v5788, 0.0
      %v7572 = vmax.f32 %v5793, 0.0
      %v7573 = vmax.f32 %v5798, 0.0
      %v7574 = vmax.f32 %v5803, 0.0
      %v7575 = vmax.f32 %v5808, 0.0
      %v7576 = vmax.f32 %v5813, 0.0
      %v7577 = vmax.f32 %v5818, 0.0
      %v7578 = vmax.f32 %v5823, 0.0
      %v7579 = vmax.f32 %v5828, 0.0
      %v7580 = vmax.f32 %v5833, 0.0
      %v7581 = vmax.f32 %v5838, 0.0
      %v7582 = vmax.f32 %v5843, 0.0
      %v7583 = vmax.f32 %v5848, 0.0
      %v7584 = vmax.f32 %v5853, 0.0
      %v7585 = vmax.f32 %v5858, 0.0
      %v7586 = vmax.f32 %v5863, 0.0
      %v7587 = vmax.f32 %v5868, 0.0
      %v7588 = vmax.f32 %v5873, 0.0
      %v7589 = vmax.f32 %v5878, 0.0
      %v7590 = vmax.f32 %v5883, 0.0
      %v7591 = vmax.f32 %v5888, 0.0
      %v7592 = vmax.f32 %v5893, 0.0
      %v7593 = vmax.f32 %v5898, 0.0
      %v7594 = vmax.f32 %v5903, 0.0
      %v7595 = vmax.f32 %v5908, 0.0
      %v7596 = vmax.f32 %v5913, 0.0
      %v7597 = vmax.f32 %v5918, 0.0
      %v7598 = vmax.f32 %v5923, 0.0
      %v7599 = vmax.f32 %v5928, 0.0
      %v7600 = vmax.f32 %v5933, 0.0
      %v7601 = vmax.f32 %v5938, 0.0
      %v7602 = vmax.f32 %v5943, 0.0
      %v7603 = vmax.f32 %v5948, 0.0
      %v7604 = vmax.f32 %v5953, 0.0
      %v7605 = vmax.f32 %v5958, 0.0
      %v7606 = vmax.f32 %v5963, 0.0
      %v7607 = vmax.f32 %v5968, 0.0
      %v7608 = vmax.f32 %v5973, 0.0
      %v7609 = vmax.f32 %v5978, 0.0
      %v7610 = vmax.f32 %v5983, 0.0
      %v7611 = vmax.f32 %v5988, 0.0
      %v7612 = vmax.f32 %v5993, 0.0
      %v7613 = vmax.f32 %v5998, 0.0
      %v7614 = vmax.f32 %v6003, 0.0
      %v7615 = vmax.f32 %v6008, 0.0
      %v7616 = vmax.f32 %v6013, 0.0
      %v7617 = vmax.f32 %v6018, 0.0
      %v7618 = vmax.f32 %v6023, 0.0
      %v7619 = vmax.f32 %v6028, 0.0
      %v7620 = vmax.f32 %v6033, 0.0
      %v7621 = vmax.f32 %v6038, 0.0
      %v7622 = vmax.f32 %v6043, 0.0
      %v7623 = vmax.f32 %v6048, 0.0
      %v7624 = vmax.f32 %v6053, 0.0
      %v7625 = vmax.f32 %v6058, 0.0
      %v7626 = vmax.f32 %v6063, 0.0
      %v7627 = vmax.f32 %v6068, 0.0
      %v7628 = vmax.f32 %v6073, 0.0
      %v7629 = vmax.f32 %v6078, 0.0
      %v7630 = vmax.f32 %v6083, 0.0
      %v7631 = vmax.f32 %v6088, 0.0
      %v7632 = vmax.f32 %v6093, 0.0
      %v7633 = vmax.f32 %v6098, 0.0
      %v7634 = vmax.f32 %v6103, 0.0
      %v7635 = vmax.f32 %v6108, 0.0
      %v7636 = vmax.f32 %v6113, 0.0
      %v7637 = vmax.f32 %v6118, 0.0
      %v7638 = vmax.f32 %v6123, 0.0
      %v7639 = vmax.f32 %v6128, 0.0
      %v7640 = vmax.f32 %v6133, 0.0
      %v7641 = vmax.f32 %v6138, 0.0
      %v7642 = vmax.f32 %v6143, 0.0
      %v7643 = vmax.f32 %v6148, 0.0
      %v7644 = vmax.f32 %v6153, 0.0
      %v7645 = vmax.f32 %v6158, 0.0
      %v7646 = vmax.f32 %v6163, 0.0
      %v7647 = vmax.f32 %v6168, 0.0
      %v7648 = vmax.f32 %v6173, 0.0
      %v7649 = vmax.f32 %v6178, 0.0
      %v7650 = vmax.f32 %v6183, 0.0
      %v7651 = vmax.f32 %v6188, 0.0
      %v7652 = vmax.f32 %v6193, 0.0
      %v7653 = vmax.f32 %v6198, 0.0
      %v7654 = vmax.f32 %v6203, 0.0
      %v7655 = vmax.f32 %v6208, 0.0
      %v7656 = vmax.f32 %v6213, 0.0
      %v7657 = vmax.f32 %v6218, 0.0
      %v7658 = vmax.f32 %v6223, 0.0
      %v7659 = vmax.f32 %v6228, 0.0
      %v7660 = vmax.f32 %v6233, 0.0
      %v7661 = vmax.f32 %v6238, 0.0
      %v7662 = vmax.f32 %v6243, 0.0
      %v7663 = vmax.f32 %v6248, 0.0
      %v7664 = vmax.f32 %v6253, 0.0
      %v7665 = vmax.f32 %v6258, 0.0
      %v7666 = vmax.f32 %v6263, 0.0
      %v7667 = vmax.f32 %v6268, 0.0
      %v7668 = vmax.f32 %v6273, 0.0
      %v7669 = vmax.f32 %v6278, 0.0
      %v7670 = vmax.f32 %v6283, 0.0
      %v7671 = vmax.f32 %v6288, 0.0
      %v7672 = vmax.f32 %v6293, 0.0
      %v7673 = vmax.f32 %v6298, 0.0
      %v7674 = vmax.f32 %v6303, 0.0
      %v7675 = vmax.f32 %v6308, 0.0
      %v7676 = vmax.f32 %v6313, 0.0
      %v7677 = vmax.f32 %v6318, 0.0
      %v7678 = vmax.f32 %v6323, 0.0
      %v7679 = vmax.f32 %v6328, 0.0
      %v7680 = vmax.f32 %v6333, 0.0
      %v7681 = vmax.f32 %v6338, 0.0
      %v7682 = vmax.f32 %v6343, 0.0
      %v7683 = vmax.f32 %v6348, 0.0
      %v7684 = vmax.f32 %v6353, 0.0
      %v7685 = vmax.f32 %v6358, 0.0
      %v7686 = vmax.f32 %v6363, 0.0
      %v7687 = vmax.f32 %v6368, 0.0
      %v7688 = vmax.f32 %v6373, 0.0
      %v7689 = vmax.f32 %v6378, 0.0
      %v7690 = vmax.f32 %v6383, 0.0
      %v7691 = vmax.f32 %v6388, 0.0
      %v7692 = vmax.f32 %v6393, 0.0
      %v7693 = vmax.f32 %v6398, 0.0
      %v7694 = vmax.f32 %v6403, 0.0
      %v7695 = vmax.f32 %v6408, 0.0
      %v7696 = vmax.f32 %v6413, 0.0
      %v7697 = vmax.f32 %v6418, 0.0
      %v7698 = vmax.f32 %v6423, 0.0
      %v7699 = vmax.f32 %v6428, 0.0
      %v7700 = vmax.f32 %v6433, 0.0
      %v7701 = vmax.f32 %v6438, 0.0
      %v7702 = vmax.f32 %v6443, 0.0
      %v7703 = vmax.f32 %v6448, 0.0
      %v7704 = vmax.f32 %v6453, 0.0
      %v7705 = vmax.f32 %v6458, 0.0
      %v7706 = vmax.f32 %v6463, 0.0
      %v7707 = vmax.f32 %v6468, 0.0
      %v7708 = vmax.f32 %v6473, 0.0
      %v7709 = vmax.f32 %v6478, 0.0
      %v7710 = vmax.f32 %v6483, 0.0
      %v7711 = vmax.f32 %v6488, 0.0
      %v7712 = vmax.f32 %v6493, 0.0
      %v7713 = vmax.f32 %v6498, 0.0
      %v7714 = vmax.f32 %v6503, 0.0
      %v7715 = vmax.f32 %v6508, 0.0
      %v7716 = vmax.f32 %v6513, 0.0
      %v7717 = vmax.f32 %v6518, 0.0
      %v7718 = vmax.f32 %v6523, 0.0
      %v7719 = vmax.f32 %v6528, 0.0
      %v7720 = vmax.f32 %v6533, 0.0
      %v7721 = vmax.f32 %v6538, 0.0
      %v7722 = vmax.f32 %v6543, 0.0
      %v7723 = vmax.f32 %v6548, 0.0
      %v7724 = vmax.f32 %v6553, 0.0
      %v7725 = vmax.f32 %v6558, 0.0
      %v7726 = vmax.f32 %v6563, 0.0
      %v7727 = vmax.f32 %v6568, 0.0
      %v7728 = vmax.f32 %v6573, 0.0
      %v7729 = vmax.f32 %v6578, 0.0
      %v7730 = vmax.f32 %v6583, 0.0
      %v7731 = vmax.f32 %v6588, 0.0
      %v7732 = vmax.f32 %v6593, 0.0
      %v7733 = vmax.f32 %v6598, 0.0
      %v7734 = vmax.f32 %v6603, 0.0
      %v7735 = vmax.f32 %v6608, 0.0
      %v7736 = vmax.f32 %v6613, 0.0
      %v7737 = vmax.f32 %v6618, 0.0
      %v7738 = vmax.f32 %v6623, 0.0
      %v7739 = vmax.f32 %v6628, 0.0
      %v7740 = vmax.f32 %v6633, 0.0
      %v7741 = vmax.f32 %v6638, 0.0
      %v7742 = vmax.f32 %v6643, 0.0
      %v7743 = vmax.f32 %v6648, 0.0
      %v7744 = vmax.f32 %v6653, 0.0
      %v7745 = vmax.f32 %v6658, 0.0
      %v7746 = vmax.f32 %v6663, 0.0
      %v7747 = vmax.f32 %v6668, 0.0
      %v7748 = vmax.f32 %v6673, 0.0
      %v7749 = vmax.f32 %v6678, 0.0
      %v7750 = vmax.f32 %v6683, 0.0
      %v7751 = vmax.f32 %v6688, 0.0
      %v7752 = vmax.f32 %v6693, 0.0
      %v7753 = vmax.f32 %v6698, 0.0
      %v7754 = vmax.f32 %v6703, 0.0
      %v7755 = vmax.f32 %v6708, 0.0
      %v7756 = vmax.f32 %v6713, 0.0
      %v7757 = vmax.f32 %v6718, 0.0
      %v7758 = vmax.f32 %v6723, 0.0
      %v7759 = vmax.f32 %v6728, 0.0
      %v7760 = vmax.f32 %v6733, 0.0
      %v7761 = vmax.f32 %v6738, 0.0
      %v7762 = vmax.f32 %v6743, 0.0
      %v7763 = vmax.f32 %v6748, 0.0
      %v7764 = vmax.f32 %v6753, 0.0
      %v7765 = vmax.f32 %v6758, 0.0
      %v7766 = vmax.f32 %v6763, 0.0
      %v7767 = vmax.f32 %v6768, 0.0
      %v7768 = vmax.f32 %v6773, 0.0
      %v7769 = vmax.f32 %v6778, 0.0
      %v7770 = vmax.f32 %v6783, 0.0
      %v7771 = vmax.f32 %v6788, 0.0
      %v7772 = vmax.f32 %v6793, 0.0
      %v7773 = vmax.f32 %v6798, 0.0
      %v7774 = vmax.f32 %v6803, 0.0
      %v7775 = vmax.f32 %v6808, 0.0
      %v7776 = vmax.f32 %v6813, 0.0
      %v7777 = vmax.f32 %v6818, 0.0
      %v7778 = vmax.f32 %v6823, 0.0
      %v7779 = vmax.f32 %v6828, 0.0
      %v7780 = vmax.f32 %v6833, 0.0
      %v7781 = vmax.f32 %v6838, 0.0
      %v7782 = vmax.f32 %v6843, 0.0
      %v7783 = vmax.f32 %v6848, 0.0
      %v7784 = vmax.f32 %v6853, 0.0
      %v7785 = vmax.f32 %v6858, 0.0
      %v7786 = vmax.f32 %v6863, 0.0
      %v7787 = vmax.f32 %v6868, 0.0
      %v7788 = vmax.f32 %v6873, 0.0
      %v7789 = vmax.f32 %v6878, 0.0
      %v7790 = vmax.f32 %v6883, 0.0
      %v7791 = vmax.f32 %v6888, 0.0
      %v7792 = vmax.f32 %v6893, 0.0
      %v7793 = vmax.f32 %v6898, 0.0
      %v7794 = vmax.f32 %v6903, 0.0
      %v7795 = vmax.f32 %v6908, 0.0
      %v7796 = vmax.f32 %v6913, 0.0
      %v7797 = vmax.f32 %v6918, 0.0
      %v7798 = vmax.f32 %v6923, 0.0
      %v7799 = vmax.f32 %v6928, 0.0
      %v7800 = vmax.f32 %v6933, 0.0
      %v7801 = vmax.f32 %v6938, 0.0
      %v7802 = vmax.f32 %v6943, 0.0
      %v7803 = vmax.f32 %v6948, 0.0
      %v7804 = vmax.f32 %v6953, 0.0
      %v7805 = vmax.f32 %v6958, 0.0
      %v7806 = vmax.f32 %v6963, 0.0
      %v7807 = vmax.f32 %v6968, 0.0
      %v7808 = vmax.f32 %v6973, 0.0
      %v7809 = vmax.f32 %v6978, 0.0
      %v7810 = vmax.f32 %v6983, 0.0
      %v7811 = vmax.f32 %v6988, 0.0
      %v7812 = vmax.f32 %v6993, 0.0
      %v7813 = vmax.f32 %v6998, 0.0
      %v7814 = vmax.f32 %v7003, 0.0
      %v7815 = vmax.f32 %v7008, 0.0
      %v7816 = vmax.f32 %v7013, 0.0
      %v7817 = vmax.f32 %v7018, 0.0
      %v7818 = vmax.f32 %v7023, 0.0
      %v7819 = vmax.f32 %v7028, 0.0
      %v7820 = vmax.f32 %v7033, 0.0
      %v7821 = vmax.f32 %v7038, 0.0
      %v7822 = vmax.f32 %v7043, 0.0
      %v7823 = vmax.f32 %v7048, 0.0
      %v7824 = vmax.f32 %v7053, 0.0
      %v7825 = vmax.f32 %v7058, 0.0
      %v7826 = vmax.f32 %v7063, 0.0
      %v7827 = vmax.f32 %v7068, 0.0
      %vm7828 = vcmask 523264
      %7829 = vst.msk [vmem:[%s170] sm:$0xff] %vm7828, %v7071
      %7830 = vst.msk [vmem:[%s170 + $0x8] sm:$0xff] %vm7828, %v7072
      %7831 = vst.msk [vmem:[%s170 + $0x10] sm:$0xff] %vm7828, %v7073
      %7832 = vst.msk [vmem:[%s170 + $0x18] sm:$0xff] %vm7828, %v7074
      %7833 = vst.msk [vmem:[%s170 + $0x20] sm:$0xff] %vm7828, %v7075
      %7834 = vst.msk [vmem:[%s170 + $0x28] sm:$0xff] %vm7828, %v7076
      %7835 = vst.msk [vmem:[%s170 + $0x30] sm:$0xff] %vm7828, %v7077
      %7836 = vst.msk [vmem:[%s170 + $0x38] sm:$0xff] %vm7828, %v7078
      %7837 = vst.msk [vmem:[%s170 + $0x40] sm:$0xff] %vm7828, %v7079
      %7838 = vst.msk [vmem:[%s170 + $0x48] sm:$0xff] %vm7828, %v7080
      %7839 = vst.msk [vmem:[%s170 + $0x50] sm:$0xff] %vm7828, %v7081
      %7840 = vst.msk [vmem:[%s170 + $0x58] sm:$0xff] %vm7828, %v7082
      %7841 = vst.msk [vmem:[%s170 + $0x60] sm:$0xff] %vm7828, %v7083
      %7842 = vst.msk [vmem:[%s170 + $0x68] sm:$0xff] %vm7828, %v7084
      %7843 = vst.msk [vmem:[%s170 + $0x70] sm:$0xff] %vm7828, %v7085
      %7844 = vst.msk [vmem:[%s170 + $0x78] sm:$0xff] %vm7828, %v7086
      %7845 = vst.msk [vmem:[%s170 + $0x80] sm:$0xff] %vm7828, %v7087
      %7846 = vst.msk [vmem:[%s170 + $0x88] sm:$0xff] %vm7828, %v7088
      %7847 = vst.msk [vmem:[%s170 + $0x90] sm:$0xff] %vm7828, %v7089
      %7848 = vst.msk [vmem:[%s170 + $0x98] sm:$0xff] %vm7828, %v7090
      %7849 = vst.msk [vmem:[%s170 + $0xa0] sm:$0xff] %vm7828, %v7091
      %7850 = vst.msk [vmem:[%s170 + $0xa8] sm:$0xff] %vm7828, %v7092
      %7851 = vst.msk [vmem:[%s170 + $0xb0] sm:$0xff] %vm7828, %v7093
      %7852 = vst.msk [vmem:[%s170 + $0xb8] sm:$0xff] %vm7828, %v7094
      %7853 = vst.msk [vmem:[%s170 + $0xc0] sm:$0xff] %vm7828, %v7095
      %7854 = vst.msk [vmem:[%s170 + $0xc8] sm:$0xff] %vm7828, %v7096
      %7855 = vst.msk [vmem:[%s170 + $0xd0] sm:$0xff] %vm7828, %v7097
      %7856 = vst.msk [vmem:[%s170 + $0xd8] sm:$0xff] %vm7828, %v7098
      %7857 = vst.msk [vmem:[%s170 + $0xe0] sm:$0xff] %vm7828, %v7099
      %7858 = vst.msk [vmem:[%s170 + $0xe8] sm:$0xff] %vm7828, %v7100
      %7859 = vst.msk [vmem:[%s170 + $0xf0] sm:$0xff] %vm7828, %v7101
      %7860 = vst.msk [vmem:[%s170 + $0xf8] sm:$0xff] %vm7828, %v7102
      %7861 = vst.msk [vmem:[%s170 + $0x100] sm:$0xff] %vm7828, %v7103
      %7862 = vst.msk [vmem:[%s170 + $0x108] sm:$0xff] %vm7828, %v7104
      %7863 = vst.msk [vmem:[%s170 + $0x110] sm:$0xff] %vm7828, %v7105
      %7864 = vst.msk [vmem:[%s170 + $0x118] sm:$0xff] %vm7828, %v7106
      %7865 = vst.msk [vmem:[%s170 + $0x120] sm:$0xff] %vm7828, %v7107
      %7866 = vst.msk [vmem:[%s170 + $0x128] sm:$0xff] %vm7828, %v7108
      %7867 = vst.msk [vmem:[%s170 + $0x130] sm:$0xff] %vm7828, %v7109
      %7868 = vst.msk [vmem:[%s170 + $0x138] sm:$0xff] %vm7828, %v7110
      %7869 = vst.msk [vmem:[%s170 + $0x140] sm:$0xff] %vm7828, %v7111
      %7870 = vst.msk [vmem:[%s170 + $0x148] sm:$0xff] %vm7828, %v7112
      %7871 = vst.msk [vmem:[%s170 + $0x150] sm:$0xff] %vm7828, %v7113
      %7872 = vst.msk [vmem:[%s170 + $0x158] sm:$0xff] %vm7828, %v7114
      %7873 = vst.msk [vmem:[%s170 + $0x160] sm:$0xff] %vm7828, %v7115
      %7874 = vst.msk [vmem:[%s170 + $0x168] sm:$0xff] %vm7828, %v7116
      %7875 = vst.msk [vmem:[%s170 + $0x170] sm:$0xff] %vm7828, %v7117
      %7876 = vst.msk [vmem:[%s170 + $0x178] sm:$0xff] %vm7828, %v7118
      %7877 = vst.msk [vmem:[%s170 + $0x180] sm:$0xff] %vm7828, %v7119
      %7878 = vst.msk [vmem:[%s170 + $0x188] sm:$0xff] %vm7828, %v7120
      %7879 = vst.msk [vmem:[%s170 + $0x190] sm:$0xff] %vm7828, %v7121
      %7880 = vst.msk [vmem:[%s170 + $0x198] sm:$0xff] %vm7828, %v7122
      %7881 = vst.msk [vmem:[%s170 + $0x1a0] sm:$0xff] %vm7828, %v7123
      %7882 = vst.msk [vmem:[%s170 + $0x1a8] sm:$0xff] %vm7828, %v7124
      %7883 = vst.msk [vmem:[%s170 + $0x1b0] sm:$0xff] %vm7828, %v7125
      %7884 = vst.msk [vmem:[%s170 + $0x1b8] sm:$0xff] %vm7828, %v7126
      %7885 = vst.msk [vmem:[%s170 + $0x1c0] sm:$0xff] %vm7828, %v7127
      %7886 = vst.msk [vmem:[%s170 + $0x1c8] sm:$0xff] %vm7828, %v7128
      %7887 = vst.msk [vmem:[%s170 + $0x1d0] sm:$0xff] %vm7828, %v7129
      %7888 = vst.msk [vmem:[%s170 + $0x1d8] sm:$0xff] %vm7828, %v7130
      %7889 = vst.msk [vmem:[%s170 + $0x1e0] sm:$0xff] %vm7828, %v7131
      %7890 = vst.msk [vmem:[%s170 + $0x1e8] sm:$0xff] %vm7828, %v7132
      %7891 = vst.msk [vmem:[%s170 + $0x1f0] sm:$0xff] %vm7828, %v7133
      %7892 = vst.msk [vmem:[%s170 + $0x1f8] sm:$0xff] %vm7828, %v7134
      %7893 = vst.msk [vmem:[%s170 + $0x200] sm:$0xff] %vm7828, %v7135
      %7894 = vst.msk [vmem:[%s170 + $0x208] sm:$0xff] %vm7828, %v7136
      %7895 = vst.msk [vmem:[%s170 + $0x210] sm:$0xff] %vm7828, %v7137
      %7896 = vst.msk [vmem:[%s170 + $0x218] sm:$0xff] %vm7828, %v7138
      %7897 = vst.msk [vmem:[%s170 + $0x220] sm:$0xff] %vm7828, %v7139
      %7898 = vst.msk [vmem:[%s170 + $0x228] sm:$0xff] %vm7828, %v7140
      %7899 = vst.msk [vmem:[%s170 + $0x230] sm:$0xff] %vm7828, %v7141
      %7900 = vst.msk [vmem:[%s170 + $0x238] sm:$0xff] %vm7828, %v7142
      %7901 = vst.msk [vmem:[%s170 + $0x240] sm:$0xff] %vm7828, %v7143
      %7902 = vst.msk [vmem:[%s170 + $0x248] sm:$0xff] %vm7828, %v7144
      %7903 = vst.msk [vmem:[%s170 + $0x250] sm:$0xff] %vm7828, %v7145
      %7904 = vst.msk [vmem:[%s170 + $0x258] sm:$0xff] %vm7828, %v7146
      %7905 = vst.msk [vmem:[%s170 + $0x260] sm:$0xff] %vm7828, %v7147
      %7906 = vst.msk [vmem:[%s170 + $0x268] sm:$0xff] %vm7828, %v7148
      %7907 = vst.msk [vmem:[%s170 + $0x270] sm:$0xff] %vm7828, %v7149
      %7908 = vst.msk [vmem:[%s170 + $0x278] sm:$0xff] %vm7828, %v7150
      %7909 = vst.msk [vmem:[%s170 + $0x280] sm:$0xff] %vm7828, %v7151
      %7910 = vst.msk [vmem:[%s170 + $0x288] sm:$0xff] %vm7828, %v7152
      %7911 = vst.msk [vmem:[%s170 + $0x290] sm:$0xff] %vm7828, %v7153
      %7912 = vst.msk [vmem:[%s170 + $0x298] sm:$0xff] %vm7828, %v7154
      %7913 = vst.msk [vmem:[%s170 + $0x2a0] sm:$0xff] %vm7828, %v7155
      %7914 = vst.msk [vmem:[%s170 + $0x2a8] sm:$0xff] %vm7828, %v7156
      %7915 = vst.msk [vmem:[%s170 + $0x2b0] sm:$0xff] %vm7828, %v7157
      %7916 = vst.msk [vmem:[%s170 + $0x2b8] sm:$0xff] %vm7828, %v7158
      %7917 = vst.msk [vmem:[%s170 + $0x2c0] sm:$0xff] %vm7828, %v7159
      %7918 = vst.msk [vmem:[%s170 + $0x2c8] sm:$0xff] %vm7828, %v7160
      %7919 = vst.msk [vmem:[%s170 + $0x2d0] sm:$0xff] %vm7828, %v7161
      %7920 = vst.msk [vmem:[%s170 + $0x2d8] sm:$0xff] %vm7828, %v7162
      %7921 = vst.msk [vmem:[%s170 + $0x2e0] sm:$0xff] %vm7828, %v7163
      %7922 = vst.msk [vmem:[%s170 + $0x2e8] sm:$0xff] %vm7828, %v7164
      %7923 = vst.msk [vmem:[%s170 + $0x2f0] sm:$0xff] %vm7828, %v7165
      %7924 = vst.msk [vmem:[%s170 + $0x2f8] sm:$0xff] %vm7828, %v7166
      %7925 = vst.msk [vmem:[%s170 + $0x300] sm:$0xff] %vm7828, %v7167
      %7926 = vst.msk [vmem:[%s170 + $0x308] sm:$0xff] %vm7828, %v7168
      %7927 = vst.msk [vmem:[%s170 + $0x310] sm:$0xff] %vm7828, %v7169
      %7928 = vst.msk [vmem:[%s170 + $0x318] sm:$0xff] %vm7828, %v7170
      %7929 = vst.msk [vmem:[%s170 + $0x320] sm:$0xff] %vm7828, %v7171
      %7930 = vst.msk [vmem:[%s170 + $0x328] sm:$0xff] %vm7828, %v7172
      %7931 = vst.msk [vmem:[%s170 + $0x330] sm:$0xff] %vm7828, %v7173
      %7932 = vst.msk [vmem:[%s170 + $0x338] sm:$0xff] %vm7828, %v7174
      %7933 = vst.msk [vmem:[%s170 + $0x340] sm:$0xff] %vm7828, %v7175
      %7934 = vst.msk [vmem:[%s170 + $0x348] sm:$0xff] %vm7828, %v7176
      %7935 = vst.msk [vmem:[%s170 + $0x350] sm:$0xff] %vm7828, %v7177
      %7936 = vst.msk [vmem:[%s170 + $0x358] sm:$0xff] %vm7828, %v7178
      %7937 = vst.msk [vmem:[%s170 + $0x360] sm:$0xff] %vm7828, %v7179
      %7938 = vst.msk [vmem:[%s170 + $0x368] sm:$0xff] %vm7828, %v7180
      %7939 = vst.msk [vmem:[%s170 + $0x370] sm:$0xff] %vm7828, %v7181
      %7940 = vst.msk [vmem:[%s170 + $0x378] sm:$0xff] %vm7828, %v7182
      %7941 = vst.msk [vmem:[%s170 + $0x380] sm:$0xff] %vm7828, %v7183
      %7942 = vst.msk [vmem:[%s170 + $0x388] sm:$0xff] %vm7828, %v7184
      %7943 = vst.msk [vmem:[%s170 + $0x390] sm:$0xff] %vm7828, %v7185
      %7944 = vst.msk [vmem:[%s170 + $0x398] sm:$0xff] %vm7828, %v7186
      %7945 = vst.msk [vmem:[%s170 + $0x3a0] sm:$0xff] %vm7828, %v7187
      %7946 = vst.msk [vmem:[%s170 + $0x3a8] sm:$0xff] %vm7828, %v7188
      %7947 = vst.msk [vmem:[%s170 + $0x3b0] sm:$0xff] %vm7828, %v7189
      %7948 = vst.msk [vmem:[%s170 + $0x3b8] sm:$0xff] %vm7828, %v7190
      %7949 = vst.msk [vmem:[%s170 + $0x3c0] sm:$0xff] %vm7828, %v7191
      %7950 = vst.msk [vmem:[%s170 + $0x3c8] sm:$0xff] %vm7828, %v7192
      %7951 = vst.msk [vmem:[%s170 + $0x3d0] sm:$0xff] %vm7828, %v7193
      %7952 = vst.msk [vmem:[%s170 + $0x3d8] sm:$0xff] %vm7828, %v7194
      %7953 = vst.msk [vmem:[%s170 + $0x3e0] sm:$0xff] %vm7828, %v7195
      %7954 = vst.msk [vmem:[%s170 + $0x3e8] sm:$0xff] %vm7828, %v7196
      %7955 = vst.msk [vmem:[%s170 + $0x3f0] sm:$0xff] %vm7828, %v7197
      %7956 = vst.msk [vmem:[%s170 + $0x3f8] sm:$0xff] %vm7828, %v7198
      %7957 = vst.msk [vmem:[%s170 + $0x400] sm:$0xff] %vm7828, %v7199
      %7958 = vst.msk [vmem:[%s170 + $0x408] sm:$0xff] %vm7828, %v7200
      %7959 = vst.msk [vmem:[%s170 + $0x410] sm:$0xff] %vm7828, %v7201
      %7960 = vst.msk [vmem:[%s170 + $0x418] sm:$0xff] %vm7828, %v7202
      %7961 = vst.msk [vmem:[%s170 + $0x420] sm:$0xff] %vm7828, %v7203
      %7962 = vst.msk [vmem:[%s170 + $0x428] sm:$0xff] %vm7828, %v7204
      %7963 = vst.msk [vmem:[%s170 + $0x430] sm:$0xff] %vm7828, %v7205
      %7964 = vst.msk [vmem:[%s170 + $0x438] sm:$0xff] %vm7828, %v7206
      %7965 = vst.msk [vmem:[%s170 + $0x440] sm:$0xff] %vm7828, %v7207
      %7966 = vst.msk [vmem:[%s170 + $0x448] sm:$0xff] %vm7828, %v7208
      %7967 = vst.msk [vmem:[%s170 + $0x450] sm:$0xff] %vm7828, %v7209
      %7968 = vst.msk [vmem:[%s170 + $0x458] sm:$0xff] %vm7828, %v7210
      %7969 = vst.msk [vmem:[%s170 + $0x460] sm:$0xff] %vm7828, %v7211
      %7970 = vst.msk [vmem:[%s170 + $0x468] sm:$0xff] %vm7828, %v7212
      %7971 = vst.msk [vmem:[%s170 + $0x470] sm:$0xff] %vm7828, %v7213
      %7972 = vst.msk [vmem:[%s170 + $0x478] sm:$0xff] %vm7828, %v7214
      %7973 = vst.msk [vmem:[%s170 + $0x480] sm:$0xff] %vm7828, %v7215
      %7974 = vst.msk [vmem:[%s170 + $0x488] sm:$0xff] %vm7828, %v7216
      %7975 = vst.msk [vmem:[%s170 + $0x490] sm:$0xff] %vm7828, %v7217
      %7976 = vst.msk [vmem:[%s170 + $0x498] sm:$0xff] %vm7828, %v7218
      %7977 = vst.msk [vmem:[%s170 + $0x4a0] sm:$0xff] %vm7828, %v7219
      %7978 = vst.msk [vmem:[%s170 + $0x4a8] sm:$0xff] %vm7828, %v7220
      %7979 = vst.msk [vmem:[%s170 + $0x4b0] sm:$0xff] %vm7828, %v7221
      %7980 = vst.msk [vmem:[%s170 + $0x4b8] sm:$0xff] %vm7828, %v7222
      %7981 = vst.msk [vmem:[%s170 + $0x4c0] sm:$0xff] %vm7828, %v7223
      %7982 = vst.msk [vmem:[%s170 + $0x4c8] sm:$0xff] %vm7828, %v7224
      %7983 = vst.msk [vmem:[%s170 + $0x4d0] sm:$0xff] %vm7828, %v7225
      %7984 = vst.msk [vmem:[%s170 + $0x4d8] sm:$0xff] %vm7828, %v7226
      %7985 = vst.msk [vmem:[%s170 + $0x4e0] sm:$0xff] %vm7828, %v7227
      %7986 = vst.msk [vmem:[%s170 + $0x4e8] sm:$0xff] %vm7828, %v7228
      %7987 = vst.msk [vmem:[%s170 + $0x4f0] sm:$0xff] %vm7828, %v7229
      %7988 = vst.msk [vmem:[%s170 + $0x4f8] sm:$0xff] %vm7828, %v7230
      %7989 = vst.msk [vmem:[%s170 + $0x500] sm:$0xff] %vm7828, %v7231
      %7990 = vst.msk [vmem:[%s170 + $0x508] sm:$0xff] %vm7828, %v7232
      %7991 = vst.msk [vmem:[%s170 + $0x510] sm:$0xff] %vm7828, %v7233
      %7992 = vst.msk [vmem:[%s170 + $0x518] sm:$0xff] %vm7828, %v7234
      %7993 = vst.msk [vmem:[%s170 + $0x520] sm:$0xff] %vm7828, %v7235
      %7994 = vst.msk [vmem:[%s170 + $0x528] sm:$0xff] %vm7828, %v7236
      %7995 = vst.msk [vmem:[%s170 + $0x530] sm:$0xff] %vm7828, %v7237
      %7996 = vst.msk [vmem:[%s170 + $0x538] sm:$0xff] %vm7828, %v7238
      %7997 = vst.msk [vmem:[%s170 + $0x540] sm:$0xff] %vm7828, %v7239
      %7998 = vst.msk [vmem:[%s170 + $0x548] sm:$0xff] %vm7828, %v7240
      %7999 = vst.msk [vmem:[%s170 + $0x550] sm:$0xff] %vm7828, %v7241
      %8000 = vst.msk [vmem:[%s170 + $0x558] sm:$0xff] %vm7828, %v7242
      %8001 = vst.msk [vmem:[%s170 + $0x560] sm:$0xff] %vm7828, %v7243
      %8002 = vst.msk [vmem:[%s170 + $0x568] sm:$0xff] %vm7828, %v7244
      %8003 = vst.msk [vmem:[%s170 + $0x570] sm:$0xff] %vm7828, %v7245
      %8004 = vst.msk [vmem:[%s170 + $0x578] sm:$0xff] %vm7828, %v7246
      %8005 = vst.msk [vmem:[%s170 + $0x580] sm:$0xff] %vm7828, %v7247
      %8006 = vst.msk [vmem:[%s170 + $0x588] sm:$0xff] %vm7828, %v7248
      %8007 = vst.msk [vmem:[%s170 + $0x590] sm:$0xff] %vm7828, %v7249
      %8008 = vst.msk [vmem:[%s170 + $0x598] sm:$0xff] %vm7828, %v7250
      %8009 = vst.msk [vmem:[%s170 + $0x5a0] sm:$0xff] %vm7828, %v7251
      %8010 = vst.msk [vmem:[%s170 + $0x5a8] sm:$0xff] %vm7828, %v7252
      %8011 = vst.msk [vmem:[%s170 + $0x5b0] sm:$0xff] %vm7828, %v7253
      %8012 = vst.msk [vmem:[%s170 + $0x5b8] sm:$0xff] %vm7828, %v7254
      %8013 = vst.msk [vmem:[%s170 + $0x5c0] sm:$0xff] %vm7828, %v7255
      %8014 = vst.msk [vmem:[%s170 + $0x5c8] sm:$0xff] %vm7828, %v7256
      %8015 = vst.msk [vmem:[%s170 + $0x5d0] sm:$0xff] %vm7828, %v7257
      %8016 = vst.msk [vmem:[%s170 + $0x5d8] sm:$0xff] %vm7828, %v7258
      %8017 = vst.msk [vmem:[%s170 + $0x5e0] sm:$0xff] %vm7828, %v7259
      %8018 = vst.msk [vmem:[%s170 + $0x5e8] sm:$0xff] %vm7828, %v7260
      %8019 = vst.msk [vmem:[%s170 + $0x5f0] sm:$0xff] %vm7828, %v7261
      %8020 = vst.msk [vmem:[%s170 + $0x5f8] sm:$0xff] %vm7828, %v7262
      %8021 = vst.msk [vmem:[%s170 + $0x600] sm:$0xff] %vm7828, %v7263
      %8022 = vst.msk [vmem:[%s170 + $0x608] sm:$0xff] %vm7828, %v7264
      %8023 = vst.msk [vmem:[%s170 + $0x610] sm:$0xff] %vm7828, %v7265
      %8024 = vst.msk [vmem:[%s170 + $0x618] sm:$0xff] %vm7828, %v7266
      %8025 = vst.msk [vmem:[%s170 + $0x620] sm:$0xff] %vm7828, %v7267
      %8026 = vst.msk [vmem:[%s170 + $0x628] sm:$0xff] %vm7828, %v7268
      %8027 = vst.msk [vmem:[%s170 + $0x630] sm:$0xff] %vm7828, %v7269
      %8028 = vst.msk [vmem:[%s170 + $0x638] sm:$0xff] %vm7828, %v7270
      %8029 = vst.msk [vmem:[%s170 + $0x640] sm:$0xff] %vm7828, %v7271
      %8030 = vst.msk [vmem:[%s170 + $0x648] sm:$0xff] %vm7828, %v7272
      %8031 = vst.msk [vmem:[%s170 + $0x650] sm:$0xff] %vm7828, %v7273
      %8032 = vst.msk [vmem:[%s170 + $0x658] sm:$0xff] %vm7828, %v7274
      %8033 = vst.msk [vmem:[%s170 + $0x660] sm:$0xff] %vm7828, %v7275
      %8034 = vst.msk [vmem:[%s170 + $0x668] sm:$0xff] %vm7828, %v7276
      %8035 = vst.msk [vmem:[%s170 + $0x670] sm:$0xff] %vm7828, %v7277
      %8036 = vst.msk [vmem:[%s170 + $0x678] sm:$0xff] %vm7828, %v7278
      %8037 = vst.msk [vmem:[%s170 + $0x680] sm:$0xff] %vm7828, %v7279
      %8038 = vst.msk [vmem:[%s170 + $0x688] sm:$0xff] %vm7828, %v7280
      %8039 = vst.msk [vmem:[%s170 + $0x690] sm:$0xff] %vm7828, %v7281
      %8040 = vst.msk [vmem:[%s170 + $0x698] sm:$0xff] %vm7828, %v7282
      %8041 = vst.msk [vmem:[%s170 + $0x6a0] sm:$0xff] %vm7828, %v7283
      %8042 = vst.msk [vmem:[%s170 + $0x6a8] sm:$0xff] %vm7828, %v7284
      %8043 = vst.msk [vmem:[%s170 + $0x6b0] sm:$0xff] %vm7828, %v7285
      %8044 = vst.msk [vmem:[%s170 + $0x6b8] sm:$0xff] %vm7828, %v7286
      %8045 = vst.msk [vmem:[%s170 + $0x6c0] sm:$0xff] %vm7828, %v7287
      %8046 = vst.msk [vmem:[%s170 + $0x6c8] sm:$0xff] %vm7828, %v7288
      %8047 = vst.msk [vmem:[%s170 + $0x6d0] sm:$0xff] %vm7828, %v7289
      %8048 = vst.msk [vmem:[%s170 + $0x6d8] sm:$0xff] %vm7828, %v7290
      %8049 = vst.msk [vmem:[%s170 + $0x6e0] sm:$0xff] %vm7828, %v7291
      %8050 = vst.msk [vmem:[%s170 + $0x6e8] sm:$0xff] %vm7828, %v7292
      %8051 = vst.msk [vmem:[%s170 + $0x6f0] sm:$0xff] %vm7828, %v7293
      %8052 = vst.msk [vmem:[%s170 + $0x6f8] sm:$0xff] %vm7828, %v7294
      %8053 = vst.msk [vmem:[%s170 + $0x700] sm:$0xff] %vm7828, %v7295
      %8054 = vst.msk [vmem:[%s170 + $0x708] sm:$0xff] %vm7828, %v7296
      %8055 = vst.msk [vmem:[%s170 + $0x710] sm:$0xff] %vm7828, %v7297
      %8056 = vst.msk [vmem:[%s170 + $0x718] sm:$0xff] %vm7828, %v7298
      %8057 = vst.msk [vmem:[%s170 + $0x720] sm:$0xff] %vm7828, %v7299
      %8058 = vst.msk [vmem:[%s170 + $0x728] sm:$0xff] %vm7828, %v7300
      %8059 = vst.msk [vmem:[%s170 + $0x730] sm:$0xff] %vm7828, %v7301
      %8060 = vst.msk [vmem:[%s170 + $0x738] sm:$0xff] %vm7828, %v7302
      %8061 = vst.msk [vmem:[%s170 + $0x740] sm:$0xff] %vm7828, %v7303
      %8062 = vst.msk [vmem:[%s170 + $0x748] sm:$0xff] %vm7828, %v7304
      %8063 = vst.msk [vmem:[%s170 + $0x750] sm:$0xff] %vm7828, %v7305
      %8064 = vst.msk [vmem:[%s170 + $0x758] sm:$0xff] %vm7828, %v7306
      %8065 = vst.msk [vmem:[%s170 + $0x760] sm:$0xff] %vm7828, %v7307
      %8066 = vst.msk [vmem:[%s170 + $0x768] sm:$0xff] %vm7828, %v7308
      %8067 = vst.msk [vmem:[%s170 + $0x770] sm:$0xff] %vm7828, %v7309
      %8068 = vst.msk [vmem:[%s170 + $0x778] sm:$0xff] %vm7828, %v7310
      %8069 = vst.msk [vmem:[%s170 + $0x780] sm:$0xff] %vm7828, %v7311
      %8070 = vst.msk [vmem:[%s170 + $0x788] sm:$0xff] %vm7828, %v7312
      %8071 = vst.msk [vmem:[%s170 + $0x790] sm:$0xff] %vm7828, %v7313
      %8072 = vst.msk [vmem:[%s170 + $0x798] sm:$0xff] %vm7828, %v7314
      %8073 = vst.msk [vmem:[%s170 + $0x7a0] sm:$0xff] %vm7828, %v7315
      %8074 = vst.msk [vmem:[%s170 + $0x7a8] sm:$0xff] %vm7828, %v7316
      %8075 = vst.msk [vmem:[%s170 + $0x7b0] sm:$0xff] %vm7828, %v7317
      %8076 = vst.msk [vmem:[%s170 + $0x7b8] sm:$0xff] %vm7828, %v7318
      %8077 = vst.msk [vmem:[%s170 + $0x7c0] sm:$0xff] %vm7828, %v7319
      %8078 = vst.msk [vmem:[%s170 + $0x7c8] sm:$0xff] %vm7828, %v7320
      %8079 = vst.msk [vmem:[%s170 + $0x7d0] sm:$0xff] %vm7828, %v7321
      %8080 = vst.msk [vmem:[%s170 + $0x7d8] sm:$0xff] %vm7828, %v7322
      %8081 = vst.msk [vmem:[%s170 + $0x7e0] sm:$0xff] %vm7828, %v7323
      %8082 = vst.msk [vmem:[%s170 + $0x7e8] sm:$0xff] %vm7828, %v7324
      %8083 = vst.msk [vmem:[%s170 + $0x7f0] sm:$0xff] %vm7828, %v7325
      %8084 = vst.msk [vmem:[%s170 + $0x7f8] sm:$0xff] %vm7828, %v7326
      %8085 = vst.msk [vmem:[%s170 + $0x800] sm:$0xff] %vm7828, %v7327
      %8086 = vst.msk [vmem:[%s170 + $0x808] sm:$0xff] %vm7828, %v7328
      %8087 = vst.msk [vmem:[%s170 + $0x810] sm:$0xff] %vm7828, %v7329
      %8088 = vst.msk [vmem:[%s170 + $0x818] sm:$0xff] %vm7828, %v7330
      %8089 = vst.msk [vmem:[%s170 + $0x820] sm:$0xff] %vm7828, %v7331
      %8090 = vst.msk [vmem:[%s170 + $0x828] sm:$0xff] %vm7828, %v7332
      %8091 = vst.msk [vmem:[%s170 + $0x830] sm:$0xff] %vm7828, %v7333
      %8092 = vst.msk [vmem:[%s170 + $0x838] sm:$0xff] %vm7828, %v7334
      %8093 = vst.msk [vmem:[%s170 + $0x840] sm:$0xff] %vm7828, %v7335
      %8094 = vst.msk [vmem:[%s170 + $0x848] sm:$0xff] %vm7828, %v7336
      %8095 = vst.msk [vmem:[%s170 + $0x850] sm:$0xff] %vm7828, %v7337
      %8096 = vst.msk [vmem:[%s170 + $0x858] sm:$0xff] %vm7828, %v7338
      %8097 = vst.msk [vmem:[%s170 + $0x860] sm:$0xff] %vm7828, %v7339
      %8098 = vst.msk [vmem:[%s170 + $0x868] sm:$0xff] %vm7828, %v7340
      %8099 = vst.msk [vmem:[%s170 + $0x870] sm:$0xff] %vm7828, %v7341
      %8100 = vst.msk [vmem:[%s170 + $0x878] sm:$0xff] %vm7828, %v7342
      %8101 = vst.msk [vmem:[%s170 + $0x880] sm:$0xff] %vm7828, %v7343
      %8102 = vst.msk [vmem:[%s170 + $0x888] sm:$0xff] %vm7828, %v7344
      %8103 = vst.msk [vmem:[%s170 + $0x890] sm:$0xff] %vm7828, %v7345
      %8104 = vst.msk [vmem:[%s170 + $0x898] sm:$0xff] %vm7828, %v7346
      %8105 = vst.msk [vmem:[%s170 + $0x8a0] sm:$0xff] %vm7828, %v7347
      %8106 = vst.msk [vmem:[%s170 + $0x8a8] sm:$0xff] %vm7828, %v7348
      %8107 = vst.msk [vmem:[%s170 + $0x8b0] sm:$0xff] %vm7828, %v7349
      %8108 = vst.msk [vmem:[%s170 + $0x8b8] sm:$0xff] %vm7828, %v7350
      %8109 = vst.msk [vmem:[%s170 + $0x8c0] sm:$0xff] %vm7828, %v7351
      %8110 = vst.msk [vmem:[%s170 + $0x8c8] sm:$0xff] %vm7828, %v7352
      %8111 = vst.msk [vmem:[%s170 + $0x8d0] sm:$0xff] %vm7828, %v7353
      %8112 = vst.msk [vmem:[%s170 + $0x8d8] sm:$0xff] %vm7828, %v7354
      %8113 = vst.msk [vmem:[%s170 + $0x8e0] sm:$0xff] %vm7828, %v7355
      %8114 = vst.msk [vmem:[%s170 + $0x8e8] sm:$0xff] %vm7828, %v7356
      %8115 = vst.msk [vmem:[%s170 + $0x8f0] sm:$0xff] %vm7828, %v7357
      %8116 = vst.msk [vmem:[%s170 + $0x8f8] sm:$0xff] %vm7828, %v7358
      %8117 = vst.msk [vmem:[%s170 + $0x900] sm:$0xff] %vm7828, %v7359
      %8118 = vst.msk [vmem:[%s170 + $0x908] sm:$0xff] %vm7828, %v7360
      %8119 = vst.msk [vmem:[%s170 + $0x910] sm:$0xff] %vm7828, %v7361
      %8120 = vst.msk [vmem:[%s170 + $0x918] sm:$0xff] %vm7828, %v7362
      %8121 = vst.msk [vmem:[%s170 + $0x920] sm:$0xff] %vm7828, %v7363
      %8122 = vst.msk [vmem:[%s170 + $0x928] sm:$0xff] %vm7828, %v7364
      %8123 = vst.msk [vmem:[%s170 + $0x930] sm:$0xff] %vm7828, %v7365
      %8124 = vst.msk [vmem:[%s170 + $0x938] sm:$0xff] %vm7828, %v7366
      %8125 = vst.msk [vmem:[%s170 + $0x940] sm:$0xff] %vm7828, %v7367
      %8126 = vst.msk [vmem:[%s170 + $0x948] sm:$0xff] %vm7828, %v7368
      %8127 = vst.msk [vmem:[%s170 + $0x950] sm:$0xff] %vm7828, %v7369
      %8128 = vst.msk [vmem:[%s170 + $0x958] sm:$0xff] %vm7828, %v7370
      %8129 = vst.msk [vmem:[%s170 + $0x960] sm:$0xff] %vm7828, %v7371
      %8130 = vst.msk [vmem:[%s170 + $0x968] sm:$0xff] %vm7828, %v7372
      %8131 = vst.msk [vmem:[%s170 + $0x970] sm:$0xff] %vm7828, %v7373
      %8132 = vst.msk [vmem:[%s170 + $0x978] sm:$0xff] %vm7828, %v7374
      %8133 = vst.msk [vmem:[%s170 + $0x980] sm:$0xff] %vm7828, %v7375
      %8134 = vst.msk [vmem:[%s170 + $0x988] sm:$0xff] %vm7828, %v7376
      %8135 = vst.msk [vmem:[%s170 + $0x990] sm:$0xff] %vm7828, %v7377
      %8136 = vst.msk [vmem:[%s170 + $0x998] sm:$0xff] %vm7828, %v7378
      %8137 = vst.msk [vmem:[%s170 + $0x9a0] sm:$0xff] %vm7828, %v7379
      %8138 = vst.msk [vmem:[%s170 + $0x9a8] sm:$0xff] %vm7828, %v7380
      %8139 = vst.msk [vmem:[%s170 + $0x9b0] sm:$0xff] %vm7828, %v7381
      %8140 = vst.msk [vmem:[%s170 + $0x9b8] sm:$0xff] %vm7828, %v7382
      %8141 = vst.msk [vmem:[%s170 + $0x9c0] sm:$0xff] %vm7828, %v7383
      %8142 = vst.msk [vmem:[%s170 + $0x9c8] sm:$0xff] %vm7828, %v7384
      %8143 = vst.msk [vmem:[%s170 + $0x9d0] sm:$0xff] %vm7828, %v7385
      %8144 = vst.msk [vmem:[%s170 + $0x9d8] sm:$0xff] %vm7828, %v7386
      %8145 = vst.msk [vmem:[%s170 + $0x9e0] sm:$0xff] %vm7828, %v7387
      %8146 = vst.msk [vmem:[%s170 + $0x9e8] sm:$0xff] %vm7828, %v7388
      %8147 = vst.msk [vmem:[%s170 + $0x9f0] sm:$0xff] %vm7828, %v7389
      %8148 = vst.msk [vmem:[%s170 + $0x9f8] sm:$0xff] %vm7828, %v7390
      %8149 = vst.msk [vmem:[%s170 + $0xa00] sm:$0xff] %vm7828, %v7391
      %8150 = vst.msk [vmem:[%s170 + $0xa08] sm:$0xff] %vm7828, %v7392
      %8151 = vst.msk [vmem:[%s170 + $0xa10] sm:$0xff] %vm7828, %v7393
      %8152 = vst.msk [vmem:[%s170 + $0xa18] sm:$0xff] %vm7828, %v7394
      %8153 = vst.msk [vmem:[%s170 + $0xa20] sm:$0xff] %vm7828, %v7395
      %8154 = vst.msk [vmem:[%s170 + $0xa28] sm:$0xff] %vm7828, %v7396
      %8155 = vst.msk [vmem:[%s170 + $0xa30] sm:$0xff] %vm7828, %v7397
      %8156 = vst.msk [vmem:[%s170 + $0xa38] sm:$0xff] %vm7828, %v7398
      %8157 = vst.msk [vmem:[%s170 + $0xa40] sm:$0xff] %vm7828, %v7399
      %8158 = vst.msk [vmem:[%s170 + $0xa48] sm:$0xff] %vm7828, %v7400
      %8159 = vst.msk [vmem:[%s170 + $0xa50] sm:$0xff] %vm7828, %v7401
      %8160 = vst.msk [vmem:[%s170 + $0xa58] sm:$0xff] %vm7828, %v7402
      %8161 = vst.msk [vmem:[%s170 + $0xa60] sm:$0xff] %vm7828, %v7403
      %8162 = vst.msk [vmem:[%s170 + $0xa68] sm:$0xff] %vm7828, %v7404
      %8163 = vst.msk [vmem:[%s170 + $0xa70] sm:$0xff] %vm7828, %v7405
      %8164 = vst.msk [vmem:[%s170 + $0xa78] sm:$0xff] %vm7828, %v7406
      %8165 = vst.msk [vmem:[%s170 + $0xa80] sm:$0xff] %vm7828, %v7407
      %8166 = vst.msk [vmem:[%s170 + $0xa88] sm:$0xff] %vm7828, %v7408
      %8167 = vst.msk [vmem:[%s170 + $0xa90] sm:$0xff] %vm7828, %v7409
      %8168 = vst.msk [vmem:[%s170 + $0xa98] sm:$0xff] %vm7828, %v7410
      %8169 = vst.msk [vmem:[%s170 + $0xaa0] sm:$0xff] %vm7828, %v7411
      %8170 = vst.msk [vmem:[%s170 + $0xaa8] sm:$0xff] %vm7828, %v7412
      %8171 = vst.msk [vmem:[%s170 + $0xab0] sm:$0xff] %vm7828, %v7413
      %8172 = vst.msk [vmem:[%s170 + $0xab8] sm:$0xff] %vm7828, %v7414
      %8173 = vst.msk [vmem:[%s170 + $0xac0] sm:$0xff] %vm7828, %v7415
      %8174 = vst.msk [vmem:[%s170 + $0xac8] sm:$0xff] %vm7828, %v7416
      %8175 = vst.msk [vmem:[%s170 + $0xad0] sm:$0xff] %vm7828, %v7417
      %8176 = vst.msk [vmem:[%s170 + $0xad8] sm:$0xff] %vm7828, %v7418
      %8177 = vst.msk [vmem:[%s170 + $0xae0] sm:$0xff] %vm7828, %v7419
      %8178 = vst.msk [vmem:[%s170 + $0xae8] sm:$0xff] %vm7828, %v7420
      %8179 = vst.msk [vmem:[%s170 + $0xaf0] sm:$0xff] %vm7828, %v7421
      %8180 = vst.msk [vmem:[%s170 + $0xaf8] sm:$0xff] %vm7828, %v7422
      %8181 = vst.msk [vmem:[%s170 + $0xb00] sm:$0xff] %vm7828, %v7423
      %8182 = vst.msk [vmem:[%s170 + $0xb08] sm:$0xff] %vm7828, %v7424
      %8183 = vst.msk [vmem:[%s170 + $0xb10] sm:$0xff] %vm7828, %v7425
      %8184 = vst.msk [vmem:[%s170 + $0xb18] sm:$0xff] %vm7828, %v7426
      %8185 = vst.msk [vmem:[%s170 + $0xb20] sm:$0xff] %vm7828, %v7427
      %8186 = vst.msk [vmem:[%s170 + $0xb28] sm:$0xff] %vm7828, %v7428
      %8187 = vst.msk [vmem:[%s170 + $0xb30] sm:$0xff] %vm7828, %v7429
      %8188 = vst.msk [vmem:[%s170 + $0xb38] sm:$0xff] %vm7828, %v7430
      %8189 = vst.msk [vmem:[%s170 + $0xb40] sm:$0xff] %vm7828, %v7431
      %8190 = vst.msk [vmem:[%s170 + $0xb48] sm:$0xff] %vm7828, %v7432
      %8191 = vst.msk [vmem:[%s170 + $0xb50] sm:$0xff] %vm7828, %v7433
      %8192 = vst.msk [vmem:[%s170 + $0xb58] sm:$0xff] %vm7828, %v7434
      %8193 = vst.msk [vmem:[%s170 + $0xb60] sm:$0xff] %vm7828, %v7435
      %8194 = vst.msk [vmem:[%s170 + $0xb68] sm:$0xff] %vm7828, %v7436
      %8195 = vst.msk [vmem:[%s170 + $0xb70] sm:$0xff] %vm7828, %v7437
      %8196 = vst.msk [vmem:[%s170 + $0xb78] sm:$0xff] %vm7828, %v7438
      %8197 = vst.msk [vmem:[%s170 + $0xb80] sm:$0xff] %vm7828, %v7439
      %8198 = vst.msk [vmem:[%s170 + $0xb88] sm:$0xff] %vm7828, %v7440
      %8199 = vst.msk [vmem:[%s170 + $0xb90] sm:$0xff] %vm7828, %v7441
      %8200 = vst.msk [vmem:[%s170 + $0xb98] sm:$0xff] %vm7828, %v7442
      %8201 = vst.msk [vmem:[%s170 + $0xba0] sm:$0xff] %vm7828, %v7443
      %8202 = vst.msk [vmem:[%s170 + $0xba8] sm:$0xff] %vm7828, %v7444
      %8203 = vst.msk [vmem:[%s170 + $0xbb0] sm:$0xff] %vm7828, %v7445
      %8204 = vst.msk [vmem:[%s170 + $0xbb8] sm:$0xff] %vm7828, %v7446
      %8205 = vst.msk [vmem:[%s170 + $0xbc0] sm:$0xff] %vm7828, %v7447
      %8206 = vst.msk [vmem:[%s170 + $0xbc8] sm:$0xff] %vm7828, %v7448
      %8207 = vst.msk [vmem:[%s170 + $0xbd0] sm:$0xff] %vm7828, %v7449
      %8208 = vst.msk [vmem:[%s170 + $0xbd8] sm:$0xff] %vm7828, %v7450
      %8209 = vst.msk [vmem:[%s170 + $0xbe0] sm:$0xff] %vm7828, %v7451
      %8210 = vst.msk [vmem:[%s170 + $0xbe8] sm:$0xff] %vm7828, %v7452
      %8211 = vst.msk [vmem:[%s170 + $0xbf0] sm:$0xff] %vm7828, %v7453
      %8212 = vst.msk [vmem:[%s170 + $0xbf8] sm:$0xff] %vm7828, %v7454
      %8213 = vst.msk [vmem:[%s170 + $0xc00] sm:$0xff] %vm7828, %v7455
      %8214 = vst.msk [vmem:[%s170 + $0xc08] sm:$0xff] %vm7828, %v7456
      %8215 = vst.msk [vmem:[%s170 + $0xc10] sm:$0xff] %vm7828, %v7457
      %8216 = vst.msk [vmem:[%s170 + $0xc18] sm:$0xff] %vm7828, %v7458
      %8217 = vst.msk [vmem:[%s170 + $0xc20] sm:$0xff] %vm7828, %v7459
      %8218 = vst.msk [vmem:[%s170 + $0xc28] sm:$0xff] %vm7828, %v7460
      %8219 = vst.msk [vmem:[%s170 + $0xc30] sm:$0xff] %vm7828, %v7461
      %8220 = vst.msk [vmem:[%s170 + $0xc38] sm:$0xff] %vm7828, %v7462
      %8221 = vst.msk [vmem:[%s170 + $0xc40] sm:$0xff] %vm7828, %v7463
      %8222 = vst.msk [vmem:[%s170 + $0xc48] sm:$0xff] %vm7828, %v7464
      %8223 = vst.msk [vmem:[%s170 + $0xc50] sm:$0xff] %vm7828, %v7465
      %8224 = vst.msk [vmem:[%s170 + $0xc58] sm:$0xff] %vm7828, %v7466
      %8225 = vst.msk [vmem:[%s170 + $0xc60] sm:$0xff] %vm7828, %v7467
      %8226 = vst.msk [vmem:[%s170 + $0xc68] sm:$0xff] %vm7828, %v7468
      %8227 = vst.msk [vmem:[%s170 + $0xc70] sm:$0xff] %vm7828, %v7469
      %8228 = vst.msk [vmem:[%s170 + $0xc78] sm:$0xff] %vm7828, %v7470
      %8229 = vst.msk [vmem:[%s170 + $0xc80] sm:$0xff] %vm7828, %v7471
      %8230 = vst.msk [vmem:[%s170 + $0xc88] sm:$0xff] %vm7828, %v7472
      %8231 = vst.msk [vmem:[%s170 + $0xc90] sm:$0xff] %vm7828, %v7473
      %8232 = vst.msk [vmem:[%s170 + $0xc98] sm:$0xff] %vm7828, %v7474
      %8233 = vst.msk [vmem:[%s170 + $0xca0] sm:$0xff] %vm7828, %v7475
      %8234 = vst.msk [vmem:[%s170 + $0xca8] sm:$0xff] %vm7828, %v7476
      %8235 = vst.msk [vmem:[%s170 + $0xcb0] sm:$0xff] %vm7828, %v7477
      %8236 = vst.msk [vmem:[%s170 + $0xcb8] sm:$0xff] %vm7828, %v7478
      %8237 = vst.msk [vmem:[%s170 + $0xcc0] sm:$0xff] %vm7828, %v7479
      %8238 = vst.msk [vmem:[%s170 + $0xcc8] sm:$0xff] %vm7828, %v7480
      %8239 = vst.msk [vmem:[%s170 + $0xcd0] sm:$0xff] %vm7828, %v7481
      %8240 = vst.msk [vmem:[%s170 + $0xcd8] sm:$0xff] %vm7828, %v7482
      %8241 = vst.msk [vmem:[%s170 + $0xce0] sm:$0xff] %vm7828, %v7483
      %8242 = vst.msk [vmem:[%s170 + $0xce8] sm:$0xff] %vm7828, %v7484
      %8243 = vst.msk [vmem:[%s170 + $0xcf0] sm:$0xff] %vm7828, %v7485
      %8244 = vst.msk [vmem:[%s170 + $0xcf8] sm:$0xff] %vm7828, %v7486
      %8245 = vst.msk [vmem:[%s170 + $0xd00] sm:$0xff] %vm7828, %v7487
      %8246 = vst.msk [vmem:[%s170 + $0xd08] sm:$0xff] %vm7828, %v7488
      %8247 = vst.msk [vmem:[%s170 + $0xd10] sm:$0xff] %vm7828, %v7489
      %8248 = vst.msk [vmem:[%s170 + $0xd18] sm:$0xff] %vm7828, %v7490
      %8249 = vst.msk [vmem:[%s170 + $0xd20] sm:$0xff] %vm7828, %v7491
      %8250 = vst.msk [vmem:[%s170 + $0xd28] sm:$0xff] %vm7828, %v7492
      %8251 = vst.msk [vmem:[%s170 + $0xd30] sm:$0xff] %vm7828, %v7493
      %8252 = vst.msk [vmem:[%s170 + $0xd38] sm:$0xff] %vm7828, %v7494
      %8253 = vst.msk [vmem:[%s170 + $0xd40] sm:$0xff] %vm7828, %v7495
      %8254 = vst.msk [vmem:[%s170 + $0xd48] sm:$0xff] %vm7828, %v7496
      %8255 = vst.msk [vmem:[%s170 + $0xd50] sm:$0xff] %vm7828, %v7497
      %8256 = vst.msk [vmem:[%s170 + $0xd58] sm:$0xff] %vm7828, %v7498
      %8257 = vst.msk [vmem:[%s170 + $0xd60] sm:$0xff] %vm7828, %v7499
      %8258 = vst.msk [vmem:[%s170 + $0xd68] sm:$0xff] %vm7828, %v7500
      %8259 = vst.msk [vmem:[%s170 + $0xd70] sm:$0xff] %vm7828, %v7501
      %8260 = vst.msk [vmem:[%s170 + $0xd78] sm:$0xff] %vm7828, %v7502
      %8261 = vst.msk [vmem:[%s170 + $0xd80] sm:$0xff] %vm7828, %v7503
      %8262 = vst.msk [vmem:[%s170 + $0xd88] sm:$0xff] %vm7828, %v7504
      %8263 = vst.msk [vmem:[%s170 + $0xd90] sm:$0xff] %vm7828, %v7505
      %8264 = vst.msk [vmem:[%s170 + $0xd98] sm:$0xff] %vm7828, %v7506
      %8265 = vst.msk [vmem:[%s170 + $0xda0] sm:$0xff] %vm7828, %v7507
      %8266 = vst.msk [vmem:[%s170 + $0xda8] sm:$0xff] %vm7828, %v7508
      %8267 = vst.msk [vmem:[%s170 + $0xdb0] sm:$0xff] %vm7828, %v7509
      %8268 = vst.msk [vmem:[%s170 + $0xdb8] sm:$0xff] %vm7828, %v7510
      %8269 = vst.msk [vmem:[%s170 + $0xdc0] sm:$0xff] %vm7828, %v7511
      %8270 = vst.msk [vmem:[%s170 + $0xdc8] sm:$0xff] %vm7828, %v7512
      %8271 = vst.msk [vmem:[%s170 + $0xdd0] sm:$0xff] %vm7828, %v7513
      %8272 = vst.msk [vmem:[%s170 + $0xdd8] sm:$0xff] %vm7828, %v7514
      %8273 = vst.msk [vmem:[%s170 + $0xde0] sm:$0xff] %vm7828, %v7515
      %8274 = vst.msk [vmem:[%s170 + $0xde8] sm:$0xff] %vm7828, %v7516
      %8275 = vst.msk [vmem:[%s170 + $0xdf0] sm:$0xff] %vm7828, %v7517
      %8276 = vst.msk [vmem:[%s170 + $0xdf8] sm:$0xff] %vm7828, %v7518
      %8277 = vst.msk [vmem:[%s170 + $0xe00] sm:$0xff] %vm7828, %v7519
      %8278 = vst.msk [vmem:[%s170 + $0xe08] sm:$0xff] %vm7828, %v7520
      %8279 = vst.msk [vmem:[%s170 + $0xe10] sm:$0xff] %vm7828, %v7521
      %8280 = vst.msk [vmem:[%s170 + $0xe18] sm:$0xff] %vm7828, %v7522
      %8281 = vst.msk [vmem:[%s170 + $0xe20] sm:$0xff] %vm7828, %v7523
      %8282 = vst.msk [vmem:[%s170 + $0xe28] sm:$0xff] %vm7828, %v7524
      %8283 = vst.msk [vmem:[%s170 + $0xe30] sm:$0xff] %vm7828, %v7525
      %8284 = vst.msk [vmem:[%s170 + $0xe38] sm:$0xff] %vm7828, %v7526
      %8285 = vst.msk [vmem:[%s170 + $0xe40] sm:$0xff] %vm7828, %v7527
      %8286 = vst.msk [vmem:[%s170 + $0xe48] sm:$0xff] %vm7828, %v7528
      %8287 = vst.msk [vmem:[%s170 + $0xe50] sm:$0xff] %vm7828, %v7529
      %8288 = vst.msk [vmem:[%s170 + $0xe58] sm:$0xff] %vm7828, %v7530
      %8289 = vst.msk [vmem:[%s170 + $0xe60] sm:$0xff] %vm7828, %v7531
      %8290 = vst.msk [vmem:[%s170 + $0xe68] sm:$0xff] %vm7828, %v7532
      %8291 = vst.msk [vmem:[%s170 + $0xe70] sm:$0xff] %vm7828, %v7533
      %8292 = vst.msk [vmem:[%s170 + $0xe78] sm:$0xff] %vm7828, %v7534
      %8293 = vst.msk [vmem:[%s170 + $0xe80] sm:$0xff] %vm7828, %v7535
      %8294 = vst.msk [vmem:[%s170 + $0xe88] sm:$0xff] %vm7828, %v7536
      %8295 = vst.msk [vmem:[%s170 + $0xe90] sm:$0xff] %vm7828, %v7537
      %8296 = vst.msk [vmem:[%s170 + $0xe98] sm:$0xff] %vm7828, %v7538
      %8297 = vst.msk [vmem:[%s170 + $0xea0] sm:$0xff] %vm7828, %v7539
      %8298 = vst.msk [vmem:[%s170 + $0xea8] sm:$0xff] %vm7828, %v7540
      %8299 = vst.msk [vmem:[%s170 + $0xeb0] sm:$0xff] %vm7828, %v7541
      %8300 = vst.msk [vmem:[%s170 + $0xeb8] sm:$0xff] %vm7828, %v7542
      %8301 = vst.msk [vmem:[%s170 + $0xec0] sm:$0xff] %vm7828, %v7543
      %8302 = vst.msk [vmem:[%s170 + $0xec8] sm:$0xff] %vm7828, %v7544
      %8303 = vst.msk [vmem:[%s170 + $0xed0] sm:$0xff] %vm7828, %v7545
      %8304 = vst.msk [vmem:[%s170 + $0xed8] sm:$0xff] %vm7828, %v7546
      %8305 = vst.msk [vmem:[%s170 + $0xee0] sm:$0xff] %vm7828, %v7547
      %8306 = vst.msk [vmem:[%s170 + $0xee8] sm:$0xff] %vm7828, %v7548
      %8307 = vst.msk [vmem:[%s170 + $0xef0] sm:$0xff] %vm7828, %v7549
      %8308 = vst.msk [vmem:[%s170 + $0xef8] sm:$0xff] %vm7828, %v7550
      %8309 = vst.msk [vmem:[%s170 + $0xf00] sm:$0xff] %vm7828, %v7551
      %8310 = vst.msk [vmem:[%s170 + $0xf08] sm:$0xff] %vm7828, %v7552
      %8311 = vst.msk [vmem:[%s170 + $0xf10] sm:$0xff] %vm7828, %v7553
      %8312 = vst.msk [vmem:[%s170 + $0xf18] sm:$0xff] %vm7828, %v7554
      %8313 = vst.msk [vmem:[%s170 + $0xf20] sm:$0xff] %vm7828, %v7555
      %8314 = vst.msk [vmem:[%s170 + $0xf28] sm:$0xff] %vm7828, %v7556
      %8315 = vst.msk [vmem:[%s170 + $0xf30] sm:$0xff] %vm7828, %v7557
      %8316 = vst.msk [vmem:[%s170 + $0xf38] sm:$0xff] %vm7828, %v7558
      %8317 = vst.msk [vmem:[%s170 + $0xf40] sm:$0xff] %vm7828, %v7559
      %8318 = vst.msk [vmem:[%s170 + $0xf48] sm:$0xff] %vm7828, %v7560
      %8319 = vst.msk [vmem:[%s170 + $0xf50] sm:$0xff] %vm7828, %v7561
      %8320 = vst.msk [vmem:[%s170 + $0xf58] sm:$0xff] %vm7828, %v7562
      %8321 = vst.msk [vmem:[%s170 + $0xf60] sm:$0xff] %vm7828, %v7563
      %8322 = vst.msk [vmem:[%s170 + $0xf68] sm:$0xff] %vm7828, %v7564
      %8323 = vst.msk [vmem:[%s170 + $0xf70] sm:$0xff] %vm7828, %v7565
      %8324 = vst.msk [vmem:[%s170 + $0xf78] sm:$0xff] %vm7828, %v7566
      %8325 = vst.msk [vmem:[%s170 + $0xf80] sm:$0xff] %vm7828, %v7567
      %8326 = vst.msk [vmem:[%s170 + $0xf88] sm:$0xff] %vm7828, %v7568
      %8327 = vst.msk [vmem:[%s170 + $0xf90] sm:$0xff] %vm7828, %v7569
      %8328 = vst.msk [vmem:[%s170 + $0xf98] sm:$0xff] %vm7828, %v7570
      %8329 = vst.msk [vmem:[%s170 + $0xfa0] sm:$0xff] %vm7828, %v7571
      %8330 = vst.msk [vmem:[%s170 + $0xfa8] sm:$0xff] %vm7828, %v7572
      %8331 = vst.msk [vmem:[%s170 + $0xfb0] sm:$0xff] %vm7828, %v7573
      %8332 = vst.msk [vmem:[%s170 + $0xfb8] sm:$0xff] %vm7828, %v7574
      %8333 = vst.msk [vmem:[%s170 + $0xfc0] sm:$0xff] %vm7828, %v7575
      %8334 = vst.msk [vmem:[%s170 + $0xfc8] sm:$0xff] %vm7828, %v7576
      %8335 = vst.msk [vmem:[%s170 + $0xfd0] sm:$0xff] %vm7828, %v7577
      %8336 = vst.msk [vmem:[%s170 + $0xfd8] sm:$0xff] %vm7828, %v7578
      %8337 = vst.msk [vmem:[%s170 + $0xfe0] sm:$0xff] %vm7828, %v7579
      %8338 = vst.msk [vmem:[%s170 + $0xfe8] sm:$0xff] %vm7828, %v7580
      %8339 = vst.msk [vmem:[%s170 + $0xff0] sm:$0xff] %vm7828, %v7581
      %8340 = vst.msk [vmem:[%s170 + $0xff8] sm:$0xff] %vm7828, %v7582
      %8341 = vst.msk [vmem:[%s170 + $0x1000] sm:$0xff] %vm7828, %v7583
      %8342 = vst.msk [vmem:[%s170 + $0x1008] sm:$0xff] %vm7828, %v7584
      %8343 = vst.msk [vmem:[%s170 + $0x1010] sm:$0xff] %vm7828, %v7585
      %8344 = vst.msk [vmem:[%s170 + $0x1018] sm:$0xff] %vm7828, %v7586
      %8345 = vst.msk [vmem:[%s170 + $0x1020] sm:$0xff] %vm7828, %v7587
      %8346 = vst.msk [vmem:[%s170 + $0x1028] sm:$0xff] %vm7828, %v7588
      %8347 = vst.msk [vmem:[%s170 + $0x1030] sm:$0xff] %vm7828, %v7589
      %8348 = vst.msk [vmem:[%s170 + $0x1038] sm:$0xff] %vm7828, %v7590
      %8349 = vst.msk [vmem:[%s170 + $0x1040] sm:$0xff] %vm7828, %v7591
      %8350 = vst.msk [vmem:[%s170 + $0x1048] sm:$0xff] %vm7828, %v7592
      %8351 = vst.msk [vmem:[%s170 + $0x1050] sm:$0xff] %vm7828, %v7593
      %8352 = vst.msk [vmem:[%s170 + $0x1058] sm:$0xff] %vm7828, %v7594
      %8353 = vst.msk [vmem:[%s170 + $0x1060] sm:$0xff] %vm7828, %v7595
      %8354 = vst.msk [vmem:[%s170 + $0x1068] sm:$0xff] %vm7828, %v7596
      %8355 = vst.msk [vmem:[%s170 + $0x1070] sm:$0xff] %vm7828, %v7597
      %8356 = vst.msk [vmem:[%s170 + $0x1078] sm:$0xff] %vm7828, %v7598
      %8357 = vst.msk [vmem:[%s170 + $0x1080] sm:$0xff] %vm7828, %v7599
      %8358 = vst.msk [vmem:[%s170 + $0x1088] sm:$0xff] %vm7828, %v7600
      %8359 = vst.msk [vmem:[%s170 + $0x1090] sm:$0xff] %vm7828, %v7601
      %8360 = vst.msk [vmem:[%s170 + $0x1098] sm:$0xff] %vm7828, %v7602
      %8361 = vst.msk [vmem:[%s170 + $0x10a0] sm:$0xff] %vm7828, %v7603
      %8362 = vst.msk [vmem:[%s170 + $0x10a8] sm:$0xff] %vm7828, %v7604
      %8363 = vst.msk [vmem:[%s170 + $0x10b0] sm:$0xff] %vm7828, %v7605
      %8364 = vst.msk [vmem:[%s170 + $0x10b8] sm:$0xff] %vm7828, %v7606
      %8365 = vst.msk [vmem:[%s170 + $0x10c0] sm:$0xff] %vm7828, %v7607
      %8366 = vst.msk [vmem:[%s170 + $0x10c8] sm:$0xff] %vm7828, %v7608
      %8367 = vst.msk [vmem:[%s170 + $0x10d0] sm:$0xff] %vm7828, %v7609
      %8368 = vst.msk [vmem:[%s170 + $0x10d8] sm:$0xff] %vm7828, %v7610
      %8369 = vst.msk [vmem:[%s170 + $0x10e0] sm:$0xff] %vm7828, %v7611
      %8370 = vst.msk [vmem:[%s170 + $0x10e8] sm:$0xff] %vm7828, %v7612
      %8371 = vst.msk [vmem:[%s170 + $0x10f0] sm:$0xff] %vm7828, %v7613
      %8372 = vst.msk [vmem:[%s170 + $0x10f8] sm:$0xff] %vm7828, %v7614
      %8373 = vst.msk [vmem:[%s170 + $0x1100] sm:$0xff] %vm7828, %v7615
      %8374 = vst.msk [vmem:[%s170 + $0x1108] sm:$0xff] %vm7828, %v7616
      %8375 = vst.msk [vmem:[%s170 + $0x1110] sm:$0xff] %vm7828, %v7617
      %8376 = vst.msk [vmem:[%s170 + $0x1118] sm:$0xff] %vm7828, %v7618
      %8377 = vst.msk [vmem:[%s170 + $0x1120] sm:$0xff] %vm7828, %v7619
      %8378 = vst.msk [vmem:[%s170 + $0x1128] sm:$0xff] %vm7828, %v7620
      %8379 = vst.msk [vmem:[%s170 + $0x1130] sm:$0xff] %vm7828, %v7621
      %8380 = vst.msk [vmem:[%s170 + $0x1138] sm:$0xff] %vm7828, %v7622
      %8381 = vst.msk [vmem:[%s170 + $0x1140] sm:$0xff] %vm7828, %v7623
      %8382 = vst.msk [vmem:[%s170 + $0x1148] sm:$0xff] %vm7828, %v7624
      %8383 = vst.msk [vmem:[%s170 + $0x1150] sm:$0xff] %vm7828, %v7625
      %8384 = vst.msk [vmem:[%s170 + $0x1158] sm:$0xff] %vm7828, %v7626
      %8385 = vst.msk [vmem:[%s170 + $0x1160] sm:$0xff] %vm7828, %v7627
      %8386 = vst.msk [vmem:[%s170 + $0x1168] sm:$0xff] %vm7828, %v7628
      %8387 = vst.msk [vmem:[%s170 + $0x1170] sm:$0xff] %vm7828, %v7629
      %8388 = vst.msk [vmem:[%s170 + $0x1178] sm:$0xff] %vm7828, %v7630
      %8389 = vst.msk [vmem:[%s170 + $0x1180] sm:$0xff] %vm7828, %v7631
      %8390 = vst.msk [vmem:[%s170 + $0x1188] sm:$0xff] %vm7828, %v7632
      %8391 = vst.msk [vmem:[%s170 + $0x1190] sm:$0xff] %vm7828, %v7633
      %8392 = vst.msk [vmem:[%s170 + $0x1198] sm:$0xff] %vm7828, %v7634
      %8393 = vst.msk [vmem:[%s170 + $0x11a0] sm:$0xff] %vm7828, %v7635
      %8394 = vst.msk [vmem:[%s170 + $0x11a8] sm:$0xff] %vm7828, %v7636
      %8395 = vst.msk [vmem:[%s170 + $0x11b0] sm:$0xff] %vm7828, %v7637
      %8396 = vst.msk [vmem:[%s170 + $0x11b8] sm:$0xff] %vm7828, %v7638
      %8397 = vst.msk [vmem:[%s170 + $0x11c0] sm:$0xff] %vm7828, %v7639
      %8398 = vst.msk [vmem:[%s170 + $0x11c8] sm:$0xff] %vm7828, %v7640
      %8399 = vst.msk [vmem:[%s170 + $0x11d0] sm:$0xff] %vm7828, %v7641
      %8400 = vst.msk [vmem:[%s170 + $0x11d8] sm:$0xff] %vm7828, %v7642
      %8401 = vst.msk [vmem:[%s170 + $0x11e0] sm:$0xff] %vm7828, %v7643
      %8402 = vst.msk [vmem:[%s170 + $0x11e8] sm:$0xff] %vm7828, %v7644
      %8403 = vst.msk [vmem:[%s170 + $0x11f0] sm:$0xff] %vm7828, %v7645
      %8404 = vst.msk [vmem:[%s170 + $0x11f8] sm:$0xff] %vm7828, %v7646
      %8405 = vst.msk [vmem:[%s170 + $0x1200] sm:$0xff] %vm7828, %v7647
      %8406 = vst.msk [vmem:[%s170 + $0x1208] sm:$0xff] %vm7828, %v7648
      %8407 = vst.msk [vmem:[%s170 + $0x1210] sm:$0xff] %vm7828, %v7649
      %8408 = vst.msk [vmem:[%s170 + $0x1218] sm:$0xff] %vm7828, %v7650
      %8409 = vst.msk [vmem:[%s170 + $0x1220] sm:$0xff] %vm7828, %v7651
      %8410 = vst.msk [vmem:[%s170 + $0x1228] sm:$0xff] %vm7828, %v7652
      %8411 = vst.msk [vmem:[%s170 + $0x1230] sm:$0xff] %vm7828, %v7653
      %8412 = vst.msk [vmem:[%s170 + $0x1238] sm:$0xff] %vm7828, %v7654
      %8413 = vst.msk [vmem:[%s170 + $0x1240] sm:$0xff] %vm7828, %v7655
      %8414 = vst.msk [vmem:[%s170 + $0x1248] sm:$0xff] %vm7828, %v7656
      %8415 = vst.msk [vmem:[%s170 + $0x1250] sm:$0xff] %vm7828, %v7657
      %8416 = vst.msk [vmem:[%s170 + $0x1258] sm:$0xff] %vm7828, %v7658
      %8417 = vst.msk [vmem:[%s170 + $0x1260] sm:$0xff] %vm7828, %v7659
      %8418 = vst.msk [vmem:[%s170 + $0x1268] sm:$0xff] %vm7828, %v7660
      %8419 = vst.msk [vmem:[%s170 + $0x1270] sm:$0xff] %vm7828, %v7661
      %8420 = vst.msk [vmem:[%s170 + $0x1278] sm:$0xff] %vm7828, %v7662
      %8421 = vst.msk [vmem:[%s170 + $0x1280] sm:$0xff] %vm7828, %v7663
      %8422 = vst.msk [vmem:[%s170 + $0x1288] sm:$0xff] %vm7828, %v7664
      %8423 = vst.msk [vmem:[%s170 + $0x1290] sm:$0xff] %vm7828, %v7665
      %8424 = vst.msk [vmem:[%s170 + $0x1298] sm:$0xff] %vm7828, %v7666
      %8425 = vst.msk [vmem:[%s170 + $0x12a0] sm:$0xff] %vm7828, %v7667
      %8426 = vst.msk [vmem:[%s170 + $0x12a8] sm:$0xff] %vm7828, %v7668
      %8427 = vst.msk [vmem:[%s170 + $0x12b0] sm:$0xff] %vm7828, %v7669
      %8428 = vst.msk [vmem:[%s170 + $0x12b8] sm:$0xff] %vm7828, %v7670
      %8429 = vst.msk [vmem:[%s170 + $0x12c0] sm:$0xff] %vm7828, %v7671
      %8430 = vst.msk [vmem:[%s170 + $0x12c8] sm:$0xff] %vm7828, %v7672
      %8431 = vst.msk [vmem:[%s170 + $0x12d0] sm:$0xff] %vm7828, %v7673
      %8432 = vst.msk [vmem:[%s170 + $0x12d8] sm:$0xff] %vm7828, %v7674
      %8433 = vst.msk [vmem:[%s170 + $0x12e0] sm:$0xff] %vm7828, %v7675
      %8434 = vst.msk [vmem:[%s170 + $0x12e8] sm:$0xff] %vm7828, %v7676
      %8435 = vst.msk [vmem:[%s170 + $0x12f0] sm:$0xff] %vm7828, %v7677
      %8436 = vst.msk [vmem:[%s170 + $0x12f8] sm:$0xff] %vm7828, %v7678
      %8437 = vst.msk [vmem:[%s170 + $0x1300] sm:$0xff] %vm7828, %v7679
      %8438 = vst.msk [vmem:[%s170 + $0x1308] sm:$0xff] %vm7828, %v7680
      %8439 = vst.msk [vmem:[%s170 + $0x1310] sm:$0xff] %vm7828, %v7681
      %8440 = vst.msk [vmem:[%s170 + $0x1318] sm:$0xff] %vm7828, %v7682
      %8441 = vst.msk [vmem:[%s170 + $0x1320] sm:$0xff] %vm7828, %v7683
      %8442 = vst.msk [vmem:[%s170 + $0x1328] sm:$0xff] %vm7828, %v7684
      %8443 = vst.msk [vmem:[%s170 + $0x1330] sm:$0xff] %vm7828, %v7685
      %8444 = vst.msk [vmem:[%s170 + $0x1338] sm:$0xff] %vm7828, %v7686
      %8445 = vst.msk [vmem:[%s170 + $0x1340] sm:$0xff] %vm7828, %v7687
      %8446 = vst.msk [vmem:[%s170 + $0x1348] sm:$0xff] %vm7828, %v7688
      %8447 = vst.msk [vmem:[%s170 + $0x1350] sm:$0xff] %vm7828, %v7689
      %8448 = vst.msk [vmem:[%s170 + $0x1358] sm:$0xff] %vm7828, %v7690
      %8449 = vst.msk [vmem:[%s170 + $0x1360] sm:$0xff] %vm7828, %v7691
      %8450 = vst.msk [vmem:[%s170 + $0x1368] sm:$0xff] %vm7828, %v7692
      %8451 = vst.msk [vmem:[%s170 + $0x1370] sm:$0xff] %vm7828, %v7693
      %8452 = vst.msk [vmem:[%s170 + $0x1378] sm:$0xff] %vm7828, %v7694
      %8453 = vst.msk [vmem:[%s170 + $0x1380] sm:$0xff] %vm7828, %v7695
      %8454 = vst.msk [vmem:[%s170 + $0x1388] sm:$0xff] %vm7828, %v7696
      %8455 = vst.msk [vmem:[%s170 + $0x1390] sm:$0xff] %vm7828, %v7697
      %8456 = vst.msk [vmem:[%s170 + $0x1398] sm:$0xff] %vm7828, %v7698
      %8457 = vst.msk [vmem:[%s170 + $0x13a0] sm:$0xff] %vm7828, %v7699
      %8458 = vst.msk [vmem:[%s170 + $0x13a8] sm:$0xff] %vm7828, %v7700
      %8459 = vst.msk [vmem:[%s170 + $0x13b0] sm:$0xff] %vm7828, %v7701
      %8460 = vst.msk [vmem:[%s170 + $0x13b8] sm:$0xff] %vm7828, %v7702
      %8461 = vst.msk [vmem:[%s170 + $0x13c0] sm:$0xff] %vm7828, %v7703
      %8462 = vst.msk [vmem:[%s170 + $0x13c8] sm:$0xff] %vm7828, %v7704
      %8463 = vst.msk [vmem:[%s170 + $0x13d0] sm:$0xff] %vm7828, %v7705
      %8464 = vst.msk [vmem:[%s170 + $0x13d8] sm:$0xff] %vm7828, %v7706
      %8465 = vst.msk [vmem:[%s170 + $0x13e0] sm:$0xff] %vm7828, %v7707
      %8466 = vst.msk [vmem:[%s170 + $0x13e8] sm:$0xff] %vm7828, %v7708
      %8467 = vst.msk [vmem:[%s170 + $0x13f0] sm:$0xff] %vm7828, %v7709
      %8468 = vst.msk [vmem:[%s170 + $0x13f8] sm:$0xff] %vm7828, %v7710
      %8469 = vst.msk [vmem:[%s170 + $0x1400] sm:$0xff] %vm7828, %v7711
      %8470 = vst.msk [vmem:[%s170 + $0x1408] sm:$0xff] %vm7828, %v7712
      %8471 = vst.msk [vmem:[%s170 + $0x1410] sm:$0xff] %vm7828, %v7713
      %8472 = vst.msk [vmem:[%s170 + $0x1418] sm:$0xff] %vm7828, %v7714
      %8473 = vst.msk [vmem:[%s170 + $0x1420] sm:$0xff] %vm7828, %v7715
      %8474 = vst.msk [vmem:[%s170 + $0x1428] sm:$0xff] %vm7828, %v7716
      %8475 = vst.msk [vmem:[%s170 + $0x1430] sm:$0xff] %vm7828, %v7717
      %8476 = vst.msk [vmem:[%s170 + $0x1438] sm:$0xff] %vm7828, %v7718
      %8477 = vst.msk [vmem:[%s170 + $0x1440] sm:$0xff] %vm7828, %v7719
      %8478 = vst.msk [vmem:[%s170 + $0x1448] sm:$0xff] %vm7828, %v7720
      %8479 = vst.msk [vmem:[%s170 + $0x1450] sm:$0xff] %vm7828, %v7721
      %8480 = vst.msk [vmem:[%s170 + $0x1458] sm:$0xff] %vm7828, %v7722
      %8481 = vst.msk [vmem:[%s170 + $0x1460] sm:$0xff] %vm7828, %v7723
      %8482 = vst.msk [vmem:[%s170 + $0x1468] sm:$0xff] %vm7828, %v7724
      %8483 = vst.msk [vmem:[%s170 + $0x1470] sm:$0xff] %vm7828, %v7725
      %8484 = vst.msk [vmem:[%s170 + $0x1478] sm:$0xff] %vm7828, %v7726
      %8485 = vst.msk [vmem:[%s170 + $0x1480] sm:$0xff] %vm7828, %v7727
      %8486 = vst.msk [vmem:[%s170 + $0x1488] sm:$0xff] %vm7828, %v7728
      %8487 = vst.msk [vmem:[%s170 + $0x1490] sm:$0xff] %vm7828, %v7729
      %8488 = vst.msk [vmem:[%s170 + $0x1498] sm:$0xff] %vm7828, %v7730
      %8489 = vst.msk [vmem:[%s170 + $0x14a0] sm:$0xff] %vm7828, %v7731
      %8490 = vst.msk [vmem:[%s170 + $0x14a8] sm:$0xff] %vm7828, %v7732
      %8491 = vst.msk [vmem:[%s170 + $0x14b0] sm:$0xff] %vm7828, %v7733
      %8492 = vst.msk [vmem:[%s170 + $0x14b8] sm:$0xff] %vm7828, %v7734
      %8493 = vst.msk [vmem:[%s170 + $0x14c0] sm:$0xff] %vm7828, %v7735
      %8494 = vst.msk [vmem:[%s170 + $0x14c8] sm:$0xff] %vm7828, %v7736
      %8495 = vst.msk [vmem:[%s170 + $0x14d0] sm:$0xff] %vm7828, %v7737
      %8496 = vst.msk [vmem:[%s170 + $0x14d8] sm:$0xff] %vm7828, %v7738
      %8497 = vst.msk [vmem:[%s170 + $0x14e0] sm:$0xff] %vm7828, %v7739
      %8498 = vst.msk [vmem:[%s170 + $0x14e8] sm:$0xff] %vm7828, %v7740
      %8499 = vst.msk [vmem:[%s170 + $0x14f0] sm:$0xff] %vm7828, %v7741
      %8500 = vst.msk [vmem:[%s170 + $0x14f8] sm:$0xff] %vm7828, %v7742
      %8501 = vst.msk [vmem:[%s170 + $0x1500] sm:$0xff] %vm7828, %v7743
      %8502 = vst.msk [vmem:[%s170 + $0x1508] sm:$0xff] %vm7828, %v7744
      %8503 = vst.msk [vmem:[%s170 + $0x1510] sm:$0xff] %vm7828, %v7745
      %8504 = vst.msk [vmem:[%s170 + $0x1518] sm:$0xff] %vm7828, %v7746
      %8505 = vst.msk [vmem:[%s170 + $0x1520] sm:$0xff] %vm7828, %v7747
      %8506 = vst.msk [vmem:[%s170 + $0x1528] sm:$0xff] %vm7828, %v7748
      %8507 = vst.msk [vmem:[%s170 + $0x1530] sm:$0xff] %vm7828, %v7749
      %8508 = vst.msk [vmem:[%s170 + $0x1538] sm:$0xff] %vm7828, %v7750
      %8509 = vst.msk [vmem:[%s170 + $0x1540] sm:$0xff] %vm7828, %v7751
      %8510 = vst.msk [vmem:[%s170 + $0x1548] sm:$0xff] %vm7828, %v7752
      %8511 = vst.msk [vmem:[%s170 + $0x1550] sm:$0xff] %vm7828, %v7753
      %8512 = vst.msk [vmem:[%s170 + $0x1558] sm:$0xff] %vm7828, %v7754
      %8513 = vst.msk [vmem:[%s170 + $0x1560] sm:$0xff] %vm7828, %v7755
      %8514 = vst.msk [vmem:[%s170 + $0x1568] sm:$0xff] %vm7828, %v7756
      %8515 = vst.msk [vmem:[%s170 + $0x1570] sm:$0xff] %vm7828, %v7757
      %8516 = vst.msk [vmem:[%s170 + $0x1578] sm:$0xff] %vm7828, %v7758
      %8517 = vst.msk [vmem:[%s170 + $0x1580] sm:$0xff] %vm7828, %v7759
      %8518 = vst.msk [vmem:[%s170 + $0x1588] sm:$0xff] %vm7828, %v7760
      %8519 = vst.msk [vmem:[%s170 + $0x1590] sm:$0xff] %vm7828, %v7761
      %8520 = vst.msk [vmem:[%s170 + $0x1598] sm:$0xff] %vm7828, %v7762
      %8521 = vst.msk [vmem:[%s170 + $0x15a0] sm:$0xff] %vm7828, %v7763
      %8522 = vst.msk [vmem:[%s170 + $0x15a8] sm:$0xff] %vm7828, %v7764
      %8523 = vst.msk [vmem:[%s170 + $0x15b0] sm:$0xff] %vm7828, %v7765
      %8524 = vst.msk [vmem:[%s170 + $0x15b8] sm:$0xff] %vm7828, %v7766
      %8525 = vst.msk [vmem:[%s170 + $0x15c0] sm:$0xff] %vm7828, %v7767
      %8526 = vst.msk [vmem:[%s170 + $0x15c8] sm:$0xff] %vm7828, %v7768
      %8527 = vst.msk [vmem:[%s170 + $0x15d0] sm:$0xff] %vm7828, %v7769
      %8528 = vst.msk [vmem:[%s170 + $0x15d8] sm:$0xff] %vm7828, %v7770
      %8529 = vst.msk [vmem:[%s170 + $0x15e0] sm:$0xff] %vm7828, %v7771
      %8530 = vst.msk [vmem:[%s170 + $0x15e8] sm:$0xff] %vm7828, %v7772
      %8531 = vst.msk [vmem:[%s170 + $0x15f0] sm:$0xff] %vm7828, %v7773
      %8532 = vst.msk [vmem:[%s170 + $0x15f8] sm:$0xff] %vm7828, %v7774
      %8533 = vst.msk [vmem:[%s170 + $0x1600] sm:$0xff] %vm7828, %v7775
      %8534 = vst.msk [vmem:[%s170 + $0x1608] sm:$0xff] %vm7828, %v7776
      %8535 = vst.msk [vmem:[%s170 + $0x1610] sm:$0xff] %vm7828, %v7777
      %8536 = vst.msk [vmem:[%s170 + $0x1618] sm:$0xff] %vm7828, %v7778
      %8537 = vst.msk [vmem:[%s170 + $0x1620] sm:$0xff] %vm7828, %v7779
      %8538 = vst.msk [vmem:[%s170 + $0x1628] sm:$0xff] %vm7828, %v7780
      %8539 = vst.msk [vmem:[%s170 + $0x1630] sm:$0xff] %vm7828, %v7781
      %8540 = vst.msk [vmem:[%s170 + $0x1638] sm:$0xff] %vm7828, %v7782
      %8541 = vst.msk [vmem:[%s170 + $0x1640] sm:$0xff] %vm7828, %v7783
      %8542 = vst.msk [vmem:[%s170 + $0x1648] sm:$0xff] %vm7828, %v7784
      %8543 = vst.msk [vmem:[%s170 + $0x1650] sm:$0xff] %vm7828, %v7785
      %8544 = vst.msk [vmem:[%s170 + $0x1658] sm:$0xff] %vm7828, %v7786
      %8545 = vst.msk [vmem:[%s170 + $0x1660] sm:$0xff] %vm7828, %v7787
      %8546 = vst.msk [vmem:[%s170 + $0x1668] sm:$0xff] %vm7828, %v7788
      %8547 = vst.msk [vmem:[%s170 + $0x1670] sm:$0xff] %vm7828, %v7789
      %8548 = vst.msk [vmem:[%s170 + $0x1678] sm:$0xff] %vm7828, %v7790
      %8549 = vst.msk [vmem:[%s170 + $0x1680] sm:$0xff] %vm7828, %v7791
      %8550 = vst.msk [vmem:[%s170 + $0x1688] sm:$0xff] %vm7828, %v7792
      %8551 = vst.msk [vmem:[%s170 + $0x1690] sm:$0xff] %vm7828, %v7793
      %8552 = vst.msk [vmem:[%s170 + $0x1698] sm:$0xff] %vm7828, %v7794
      %8553 = vst.msk [vmem:[%s170 + $0x16a0] sm:$0xff] %vm7828, %v7795
      %8554 = vst.msk [vmem:[%s170 + $0x16a8] sm:$0xff] %vm7828, %v7796
      %8555 = vst.msk [vmem:[%s170 + $0x16b0] sm:$0xff] %vm7828, %v7797
      %8556 = vst.msk [vmem:[%s170 + $0x16b8] sm:$0xff] %vm7828, %v7798
      %8557 = vst.msk [vmem:[%s170 + $0x16c0] sm:$0xff] %vm7828, %v7799
      %8558 = vst.msk [vmem:[%s170 + $0x16c8] sm:$0xff] %vm7828, %v7800
      %8559 = vst.msk [vmem:[%s170 + $0x16d0] sm:$0xff] %vm7828, %v7801
      %8560 = vst.msk [vmem:[%s170 + $0x16d8] sm:$0xff] %vm7828, %v7802
      %8561 = vst.msk [vmem:[%s170 + $0x16e0] sm:$0xff] %vm7828, %v7803
      %8562 = vst.msk [vmem:[%s170 + $0x16e8] sm:$0xff] %vm7828, %v7804
      %8563 = vst.msk [vmem:[%s170 + $0x16f0] sm:$0xff] %vm7828, %v7805
      %8564 = vst.msk [vmem:[%s170 + $0x16f8] sm:$0xff] %vm7828, %v7806
      %8565 = vst.msk [vmem:[%s170 + $0x1700] sm:$0xff] %vm7828, %v7807
      %8566 = vst.msk [vmem:[%s170 + $0x1708] sm:$0xff] %vm7828, %v7808
      %8567 = vst.msk [vmem:[%s170 + $0x1710] sm:$0xff] %vm7828, %v7809
      %8568 = vst.msk [vmem:[%s170 + $0x1718] sm:$0xff] %vm7828, %v7810
      %8569 = vst.msk [vmem:[%s170 + $0x1720] sm:$0xff] %vm7828, %v7811
      %8570 = vst.msk [vmem:[%s170 + $0x1728] sm:$0xff] %vm7828, %v7812
      %8571 = vst.msk [vmem:[%s170 + $0x1730] sm:$0xff] %vm7828, %v7813
      %8572 = vst.msk [vmem:[%s170 + $0x1738] sm:$0xff] %vm7828, %v7814
      %8573 = vst.msk [vmem:[%s170 + $0x1740] sm:$0xff] %vm7828, %v7815
      %8574 = vst.msk [vmem:[%s170 + $0x1748] sm:$0xff] %vm7828, %v7816
      %8575 = vst.msk [vmem:[%s170 + $0x1750] sm:$0xff] %vm7828, %v7817
      %8576 = vst.msk [vmem:[%s170 + $0x1758] sm:$0xff] %vm7828, %v7818
      %8577 = vst.msk [vmem:[%s170 + $0x1760] sm:$0xff] %vm7828, %v7819
      %8578 = vst.msk [vmem:[%s170 + $0x1768] sm:$0xff] %vm7828, %v7820
      %8579 = vst.msk [vmem:[%s170 + $0x1770] sm:$0xff] %vm7828, %v7821
      %8580 = vst.msk [vmem:[%s170 + $0x1778] sm:$0xff] %vm7828, %v7822
      %8581 = vst.msk [vmem:[%s170 + $0x1780] sm:$0xff] %vm7828, %v7823
      %8582 = vst.msk [vmem:[%s170 + $0x1788] sm:$0xff] %vm7828, %v7824
      %8583 = vst.msk [vmem:[%s170 + $0x1790] sm:$0xff] %vm7828, %v7825
      %8584 = vst.msk [vmem:[%s170 + $0x1798] sm:$0xff] %vm7828, %v7826
      %vm8585 = vcmask 517120
      %8586 = vst.msk [vmem:[%s170 + $0x17a0] sm:$0x3] %vm8585, %v7827
      %p8587 = scmp.lt.s32.totalorder %s14, 3
      %s8588 = scalar_select %p8587, %s14, 3
      %s8589 = smul.addr %s8588, 757
      %s8590 = smul.addr %s8589, 8
      %s8591 = scalar_lea.vmem %s3, %s8590
      // Predicated region
      $region33: #{tpu_custom_call.1} parent=31 // pred_check
        %p8592 = pneg %p100
      $region34: #{tpu_custom_call.1} parent=31 // pred_check_branch
        %8594 = sbr.rel (%p8592) target = $region36
      $region35: #{tpu_custom_call.1} parent=31 // pred_region
        _
      $region36: #{tpu_custom_call.1} parent=31 // pred_fallthru
        _
    $region32: #{tpu_custom_call.1} parent=5 // pred_fallthru
      _
    %p8595 = scmp.le.s32.totalorder 2, %s9
    // Predicated region
    $region37: #{tpu_custom_call.1} parent=5 // pred_check
      %p8596 = pneg %p8595
    $region38: #{tpu_custom_call.1} parent=5 // pred_check_branch
      %8598 = sbr.rel (%p8596) target = $region40
    $region39: #{tpu_custom_call.1} parent=5 // pred_region
      %s8599 = ssub.s32 %s9, 2
      // Predicated region
      $region41: #{tpu_custom_call.1} parent=39 // pred_check
        %p8600 = pneg %p106
      $region42: #{tpu_custom_call.1} parent=39 // pred_check_branch
        %8602 = sbr.rel (%p8600) target = $region44
      $region43: #{tpu_custom_call.1} parent=39 // pred_region
        %p8603 = scmp.lt.s32.totalorder %s15, 3
        %s8604 = scalar_select %p8603, %s15, 3
        %s8605 = smul.addr %s8604, 757
        %s8606 = smul.addr %s8605, 8
        %s8607 = scalar_lea.vmem %s3, %s8606
      $region44: #{tpu_custom_call.1} parent=39 // pred_fallthru
        _
    $region40: #{tpu_custom_call.1} parent=5 // pred_fallthru
      _
  $region6: #{tpu_custom_call.1} parent=0 // loop_footer
    %s13 = sadd.s32 1, %s9
  $region7: #{tpu_custom_call.1} parent=0 // loop_footer_branch
    %8 = sbr.rel target = $region3
  $region8: #{tpu_custom_call.1} parent=0 // loop_exit
    _

</llo_original>
